<compile_context>
chip_gen: v7x
topology: tpu7x:2x2x1
jax: 0.10.0
libtpu: 0.0.40
codegen_flags: <defaults>
</compile_context>

<pallas_src>
import functools

import jax
import jax.numpy as jnp
from jax.experimental import pallas as pl
from jax.experimental.pallas import tpu as pltpu


def _round_up(x, m):
    return (x + m - 1) // m * m


# ----------------------------------------------------------------------------
# Pallas kernel: bf16 matmul (fp32 accumulate) + fused BN shift / residual / ReLU
# ----------------------------------------------------------------------------
def _mm_kernel(x_ref, w_ref, shift_ref, *rest, relu, has_res):
    if has_res:
        res_ref, o_ref, acc_ref = rest
    else:
        res_ref = None
        o_ref, acc_ref = rest

    k = pl.program_id(2)

    @pl.when(k == 0)
    def _():
        acc_ref[...] = jnp.zeros_like(acc_ref)

    # bf16 x bf16 -> fp32 on the MXU
    acc_ref[...] += jnp.dot(x_ref[...], w_ref[...],
                            preferred_element_type=jnp.float32)

    @pl.when(k == pl.num_programs(2) - 1)
    def _():
        out = acc_ref[...] + shift_ref[...]          # BN shift (scale folded into W)
        if has_res:
            out = out + res_ref[...].astype(jnp.float32)
        if relu:
            out = jnp.maximum(out, 0.0)
        o_ref[...] = out.astype(o_ref.dtype)


def _k_tiling(K):
    """Return (Kp, tk): padded reduction length and K-tile (128/256-aligned)."""
    if K <= 2048:
        Kp = _round_up(K, 128)
        return Kp, Kp                    # whole reduction in a single K-block
    Kp = _round_up(K, 256)
    q = Kp // 256
    for d in range(min(q, 8), 0, -1):    # tk up to 2048, must divide Kp
        if q % d == 0:
            return Kp, 256 * d
    return Kp, 256


def fused_matmul(x_bf16, w, shift, residual=None, relu=False,
                 out_dtype=jnp.float32):
    """out = maybe_relu(x @ w + shift [+ residual]).

    x_bf16 : (M, Kp) bf16 patches, already zero-padded along K to Kp.
    w      : (K, N) fp32 weights with BN scale folded in, K <= Kp.
    shift  : (N,) fp32 BN shift / bias.
    """
    M, Kp = x_bf16.shape
    K, N = w.shape
    assert K <= Kp
    _, tk = _k_tiling(Kp)
    assert Kp % tk == 0

    tm = min(256, _round_up(M, 16))
    Mp = _round_up(M, tm)

    if N % 128 == 0:
        tn, Np = min(256, N), N
    elif N < 128:
        tn, Np = N, N                    # block == full dim: no pad, no slice
    else:
        tn, Np = 128, _round_up(N, 128)

    xp = x_bf16 if Mp == M else jnp.pad(x_bf16, ((0, Mp - M), (0, 0)))
    wp = jnp.pad(w, ((0, Kp - K), (0, Np - N))).astype(jnp.bfloat16)
    sh = shift.reshape(1, -1).astype(jnp.float32)
    if Np != N:
        sh = jnp.pad(sh, ((0, 0), (0, Np - N)))

    has_res = residual is not None
    operands = [xp, wp, sh]
    in_specs = [
        pl.BlockSpec((tm, tk), lambda i, j, k: (i, k)),
        pl.BlockSpec((tk, tn), lambda i, j, k: (k, j)),
        pl.BlockSpec((1, tn), lambda i, j, k: (0, j)),   # k-invariant: fetched once per (i,j)
    ]
    if has_res:
        rp = residual.astype(jnp.float32)
        if (Mp, Np) != (M, N):
            rp = jnp.pad(rp, ((0, Mp - M), (0, Np - N)))
        operands.append(rp)
        in_specs.append(pl.BlockSpec((tm, tn), lambda i, j, k: (i, j)))

    kernel = functools.partial(_mm_kernel, relu=relu, has_res=has_res)

    out = pl.pallas_call(
        kernel,
        out_shape=jax.ShapeDtypeStruct((Mp, Np), out_dtype),
        grid_spec=pltpu.PrefetchScalarGridSpec(
            num_scalar_prefetch=0,
            grid=(Mp // tm, Np // tn, Kp // tk),
            in_specs=in_specs,
            out_specs=pl.BlockSpec((tm, tn), lambda i, j, k: (i, j)),
            scratch_shapes=[pltpu.VMEM((tm, tn), jnp.float32)],
        ),
        compiler_params=pltpu.CompilerParams(
            dimension_semantics=("parallel", "parallel", "arbitrary")),
    )(*operands)

    if (Mp, Np) != (M, N):
        out = out[:M, :N]
    return out


# ----------------------------------------------------------------------------
# Conv3d (im2col glue, bf16, K-pre-padded) + fused BN / residual / ReLU
# ----------------------------------------------------------------------------
def _im2col(x, kshape, stride, padding, pad_cols=0, dtype=jnp.bfloat16):
    # x: (N, D, H, W, C) channels-last
    N, D, H, W, C = x.shape
    kd, kh, kw = kshape
    sd, sh, sw = stride
    pd, ph, pw = padding
    xp = jnp.pad(x, ((0, 0), (pd, pd), (ph, ph), (pw, pw), (0, 0))).astype(dtype)
    Do = (D + 2 * pd - kd) // sd + 1
    Ho = (H + 2 * ph - kh) // sh + 1
    Wo = (W + 2 * pw - kw) // sw + 1
    cols = []
    for a in range(kd):
        for b in range(kh):
            for c in range(kw):
                cols.append(xp[:,
                               a:a + (Do - 1) * sd + 1:sd,
                               b:b + (Ho - 1) * sh + 1:sh,
                               c:c + (Wo - 1) * sw + 1:sw, :])
    if pad_cols:
        cols.append(jnp.zeros((N, Do, Ho, Wo, pad_cols), dtype))
    patches = jnp.concatenate(cols, axis=-1)   # (N, Do, Ho, Wo, kd*kh*kw*C + pad)
    K = kd * kh * kw * C + pad_cols
    return patches.reshape(N * Do * Ho * Wo, K), (N, Do, Ho, Wo)


def conv3d_bn(x, w, bn, stride, padding, relu=True, residual=None,
              out_dtype=jnp.float32):
    # w in PyTorch layout: (Cout, Cin, kd, kh, kw); bn = (gamma, beta, mean, var)
    Cout, Cin, kd, kh, kw = w.shape
    K = kd * kh * kw * Cin
    Kp, _ = _k_tiling(K)

    x2d, (n, Do, Ho, Wo) = _im2col(x, (kd, kh, kw), stride, padding,
                                   pad_cols=Kp - K, dtype=jnp.bfloat16)

    gamma, beta, mean, var = bn
    inv = gamma * jax.lax.rsqrt(var + 1e-5)
    shift = beta - mean * inv
    # fold BN scale into the (small) weight matrix on the host side
    w2d = jnp.transpose(w, (2, 3, 4, 1, 0)).reshape(K, Cout) * inv[None, :]

    res2d = None if residual is None else residual.reshape(n * Do * Ho * Wo, Cout)
    out = fused_matmul(x2d, w2d, shift, residual=res2d, relu=relu,
                       out_dtype=out_dtype)
    return out.reshape(n, Do, Ho, Wo, Cout)


# ----------------------------------------------------------------------------
# BasicBlock forward (PyTorch NCDHW in / NCDHW out)
# ----------------------------------------------------------------------------
@functools.partial(jax.jit, static_argnames=("stride",))
def basic_block_forward(x_ncdhw, blk, stride):
    """relu( bn2(conv2( relu(bn1(conv1(x))) )) + downsample(x) )"""
    x = jnp.transpose(x_ncdhw, (0, 2, 3, 4, 1)).astype(jnp.float32)   # -> NDHWC

    # conv1 + bn1 + relu; bf16 intermediate halves conv2's im2col HBM traffic
    out = conv3d_bn(x, blk['conv1_w'], blk['bn1'],
                    (stride,) * 3, (1, 1, 1), relu=True,
                    out_dtype=jnp.bfloat16)

    identity = x
    if 'ds_w' in blk:                      # downsample: 1x1x1 conv (stride) + BN
        identity = conv3d_bn(x, blk['ds_w'], blk['ds_bn'],
                             (stride,) * 3, (0, 0, 0), relu=False,
                             out_dtype=jnp.float32)

    # conv2 + bn2; residual add and final ReLU fused into the same kernel
    out = conv3d_bn(out, blk['conv2_w'], blk['bn2'],
                    (1, 1, 1), (1, 1, 1), relu=True, residual=identity,
                    out_dtype=jnp.float32)
    return jnp.transpose(out, (0, 4, 1, 2, 3))                         # -> NCDHW


# ----------------------------------------------------------------------------
# Parameter init (mirrors VideoResNet._initialize_weights, deterministic)
# ----------------------------------------------------------------------------
def _kaiming_conv(key, cout, cin, kd, kh, kw):
    fan_out = cout * kd * kh * kw                      # mode='fan_out', relu
    std = (2.0 / fan_out) ** 0.5
    return std * jax.random.normal(key, (cout, cin, kd, kh, kw), jnp.float32)


def _bn_params(c):
    # (gamma=1, beta=0, running_mean=0, running_var=1)
    return (jnp.ones((c,), jnp.float32), jnp.zeros((c,), jnp.float32),
            jnp.zeros((c,), jnp.float32), jnp.ones((c,), jnp.float32))


def init_basic_block(key, inplanes, planes, stride):
    k1, k2, k3 = jax.random.split(key, 3)
    blk = {
        'conv1_w': _kaiming_conv(k1, planes, inplanes, 3, 3, 3),
        'bn1': _bn_params(planes),
        'conv2_w': _kaiming_conv(k2, planes, planes, 3, 3, 3),
        'bn2': _bn_params(planes),
    }
    if stride != 1 or inplanes != planes:
        blk['ds_w'] = _kaiming_conv(k3, planes, inplanes, 1, 1, 1)
        blk['ds_bn'] = _bn_params(planes)
    return blk


# ----------------------------------------------------------------------------
# Plain-JAX fp32 reference (correctness check)
# ----------------------------------------------------------------------------
def _ref_conv_bn(x, w, bn, stride, padding, relu=True, residual=None):
    w_dhwio = jnp.transpose(w, (2, 3, 4, 1, 0))
    out = jax.lax.conv_general_dilated(
        x, w_dhwio, window_strides=stride,
        padding=[(p, p) for p in padding],
        dimension_numbers=('NDHWC', 'DHWIO', 'NDHWC'))
    gamma, beta, mean, var = bn
    out = (out - mean) * (gamma * jax.lax.rsqrt(var + 1e-5)) + beta
    if residual is not None:
        out = out + residual
    if relu:
        out = jnp.maximum(out, 0.0)
    return out


def _ref_basic_block(x_ndhwc, blk, stride):
    out = _ref_conv_bn(x_ndhwc, blk['conv1_w'], blk['bn1'],
                       (stride,) * 3, (1, 1, 1), relu=True)
    identity = x_ndhwc
    if 'ds_w' in blk:
        identity = _ref_conv_bn(x_ndhwc, blk['ds_w'], blk['ds_bn'],
                                (stride,) * 3, (0, 0, 0), relu=False)
    return _ref_conv_bn(out, blk['conv2_w'], blk['bn2'],
                        (1, 1, 1), (1, 1, 1), relu=True, residual=identity)


if __name__ == "__main__":
    key = jax.random.PRNGKey(0)
    kx, kb1, kb2 = jax.random.split(key, 3)

    # small clip (PyTorch NCDHW): batch=2, C=64, T=8, H=W=16
    x = jax.random.normal(kx, (2, 64, 8, 16, 16), jnp.float32)

    blk1 = init_basic_block(kb1, 64, 64, stride=1)    # identity block
    blk2 = init_basic_block(kb2, 64, 128, stride=2)   # block with downsample

    y1 = basic_block_forward(x, blk1, stride=1)
    y2 = basic_block_forward(y1, blk2, stride=2)
    jax.block_until_ready((y1, y2))

    assert y1.shape == (2, 64, 8, 16, 16)
    assert y2.shape == (2, 128, 4, 8, 8)

    # correctness vs plain-JAX fp32 reference (loose tol: bf16 MXU operands)
    r1 = _ref_basic_block(jnp.transpose(x, (0, 2, 3, 4, 1)), blk1, 1)
    r2 = _ref_basic_block(r1, blk2, 2)
    ref = jnp.transpose(r2, (0, 4, 1, 2, 3))
    err = float(jnp.max(jnp.abs(y2 - ref)) / (jnp.max(jnp.abs(ref)) + 1e-6))
    assert err < 0.1, f"relative error too large: {err}"

    print("KERNEL_OK")
</pallas_src>

<mosaic_0001>
module attributes {stable_mosaic.version = 11 : i64} {
  func.func @_mm_kernel(%arg0: i32, %arg1: i32, %arg2: i32, %arg3: memref<256x1792xbf16, #tpu.memory_space<vmem>>, %arg4: memref<1792x64xbf16, #tpu.memory_space<vmem>>, %arg5: memref<1x64xf32, #tpu.memory_space<vmem>>, %arg6: memref<256x64xbf16, #tpu.memory_space<vmem>>, %arg7: memref<256x64xf32, #tpu.memory_space<vmem>>) attributes {dimension_semantics = [#tpu.dimension_semantics<parallel>, #tpu.dimension_semantics<parallel>, #tpu.dimension_semantics<arbitrary>], iteration_bounds = array<i64: 16, 1, 1>, scalar_prefetch = 0 : i64, scratch_operands = 1 : i64, tpu.core_type = #tpu.core_type<tc>, window_params = [{transform_indices = @transform_0, window_bounds = array<i64: 256, 1792>}, {transform_indices = @transform_1, window_bounds = array<i64: 1792, 64>}, {transform_indices = @transform_2, window_bounds = array<i64: 1, 64>}, {transform_indices = @transform_3, window_bounds = array<i64: 256, 64>}]} {
    %c0_i32 = arith.constant 0 : i32
    %0 = arith.cmpi eq, %arg2, %c0_i32 : i32
    %1 = arith.extui %0 : i1 to i32
    %c0_i32_0 = arith.constant 0 : i32
    %2 = arith.cmpi ne, %1, %c0_i32_0 : i32
    scf.if %2 {
      %cst_10 = arith.constant 0.000000e+00 : f32
      %12 = vector.broadcast %cst_10 : f32 to vector<256x64xf32>
      %c0_11 = arith.constant 0 : index
      %c0_12 = arith.constant 0 : index
      %13 = vector.load %arg7[%c0_11, %c0_12] : memref<256x64xf32, #tpu.memory_space<vmem>>, vector<256x64xf32>
      tpu.vector_store %arg7[%c0_11, %c0_12], %12 {strides = array<i32>} : memref<256x64xf32, #tpu.memory_space<vmem>>, vector<256x64xf32>,
    } else {
    }
    %c0 = arith.constant 0 : index
    %c0_1 = arith.constant 0 : index
    %3 = vector.load %arg7[%c0, %c0_1] : memref<256x64xf32, #tpu.memory_space<vmem>>, vector<256x64xf32>
    %c0_2 = arith.constant 0 : index
    %c0_3 = arith.constant 0 : index
    %4 = vector.load %arg3[%c0_2, %c0_3] : memref<256x1792xbf16, #tpu.memory_space<vmem>>, vector<256x1792xbf16>
    %c0_4 = arith.constant 0 : index
    %c0_5 = arith.constant 0 : index
    %5 = vector.load %arg4[%c0_4, %c0_5] : memref<1792x64xbf16, #tpu.memory_space<vmem>>, vector<1792x64xbf16>
    %cst = arith.constant dense<0.000000e+00> : vector<256x64xf32>
    %6 = tpu.matmul %4, %5, %cst {dimension_numbers = #tpu.dot_dimension_numbers<[1], [0], [0], [1], [0, 0, 1, 1], [], []>} : vector<256x1792xbf16>, vector<1792x64xbf16>, vector<256x64xf32> -> vector<256x64xf32>
    %7 = arith.addf %3, %6 : vector<256x64xf32>
    %c0_6 = arith.constant 0 : index
    %c0_7 = arith.constant 0 : index
    %8 = vector.load %arg7[%c0_6, %c0_7] : memref<256x64xf32, #tpu.memory_space<vmem>>, vector<256x64xf32>
    tpu.vector_store %arg7[%c0_6, %c0_7], %7 {strides = array<i32>} : memref<256x64xf32, #tpu.memory_space<vmem>>, vector<256x64xf32>,
    %c0_i32_8 = arith.constant 0 : i32
    %9 = arith.cmpi eq, %arg2, %c0_i32_8 : i32
    %10 = arith.extui %9 : i1 to i32
    %c0_i32_9 = arith.constant 0 : i32
    %11 = arith.cmpi ne, %10, %c0_i32_9 : i32
    scf.if %11 {
      %c0_10 = arith.constant 0 : index
      %c0_11 = arith.constant 0 : index
      %12 = vector.load %arg7[%c0_10, %c0_11] : memref<256x64xf32, #tpu.memory_space<vmem>>, vector<256x64xf32>
      %c0_12 = arith.constant 0 : index
      %c0_13 = arith.constant 0 : index
      %13 = vector.load %arg5[%c0_12, %c0_13] : memref<1x64xf32, #tpu.memory_space<vmem>>, vector<1x64xf32>
      %14 = vector.broadcast %13 : vector<1x64xf32> to vector<256x64xf32>
      %15 = arith.addf %12, %14 : vector<256x64xf32>
      %cst_14 = arith.constant 0.000000e+00 : f32
      %16 = vector.broadcast %cst_14 : f32 to vector<256x64xf32>
      %17 = arith.maximumf %15, %16 : vector<256x64xf32>
      %18 = arith.truncf %17 : vector<256x64xf32> to vector<256x64xbf16>
      %c0_15 = arith.constant 0 : index
      %c0_16 = arith.constant 0 : index
      %19 = vector.load %arg6[%c0_15, %c0_16] : memref<256x64xbf16, #tpu.memory_space<vmem>>, vector<256x64xbf16>
      tpu.vector_store %arg6[%c0_15, %c0_16], %18 {strides = array<i32>} : memref<256x64xbf16, #tpu.memory_space<vmem>>, vector<256x64xbf16>,
    } else {
    }
    return
  }
  func.func @transform_0(%arg0: i32, %arg1: i32, %arg2: i32) -> (i32, i32) {
    %c0_i32 = arith.constant 0 : i32
    return %arg0, %arg2 : i32, i32
  }
  func.func @transform_1(%arg0: i32, %arg1: i32, %arg2: i32) -> (i32, i32) {
    %c0_i32 = arith.constant 0 : i32
    return %arg2, %arg1 : i32, i32
  }
  func.func @transform_2(%arg0: i32, %arg1: i32, %arg2: i32) -> (i32, i32) {
    %c0_i32 = arith.constant 0 : i32
    %c0_i32_0 = arith.constant 0 : i32
    return %c0_i32, %arg1 : i32, i32
  }
  func.func @transform_3(%arg0: i32, %arg1: i32, %arg2: i32) -> (i32, i32) {
    %c0_i32 = arith.constant 0 : i32
    return %arg0, %arg1 : i32, i32
  }
}

module attributes {stable_mosaic.version = 11 : i64} {
  func.func @_mm_kernel(%arg0: i32, %arg1: i32, %arg2: i32, %arg3: memref<256x1792xbf16, #tpu.memory_space<vmem>>, %arg4: memref<1792x64xbf16, #tpu.memory_space<vmem>>, %arg5: memref<1x64xf32, #tpu.memory_space<vmem>>, %arg6: memref<256x64xf32, #tpu.memory_space<vmem>>, %arg7: memref<256x64xf32, #tpu.memory_space<vmem>>, %arg8: memref<256x64xf32, #tpu.memory_space<vmem>>) attributes {dimension_semantics = [#tpu.dimension_semantics<parallel>, #tpu.dimension_semantics<parallel>, #tpu.dimension_semantics<arbitrary>], iteration_bounds = array<i64: 16, 1, 1>, scalar_prefetch = 0 : i64, scratch_operands = 1 : i64, tpu.core_type = #tpu.core_type<tc>, window_params = [{transform_indices = @transform_0, window_bounds = array<i64: 256, 1792>}, {transform_indices = @transform_1, window_bounds = array<i64: 1792, 64>}, {transform_indices = @transform_2, window_bounds = array<i64: 1, 64>}, {transform_indices = @transform_3, window_bounds = array<i64: 256, 64>}, {transform_indices = @transform_4, window_bounds = array<i64: 256, 64>}]} {
    %c0_i32 = arith.constant 0 : i32
    %0 = arith.cmpi eq, %arg2, %c0_i32 : i32
    %1 = arith.extui %0 : i1 to i32
    %c0_i32_0 = arith.constant 0 : i32
    %2 = arith.cmpi ne, %1, %c0_i32_0 : i32
    scf.if %2 {
      %cst_10 = arith.constant 0.000000e+00 : f32
      %12 = vector.broadcast %cst_10 : f32 to vector<256x64xf32>
      %c0_11 = arith.constant 0 : index
      %c0_12 = arith.constant 0 : index
      %13 = vector.load %arg8[%c0_11, %c0_12] : memref<256x64xf32, #tpu.memory_space<vmem>>, vector<256x64xf32>
      tpu.vector_store %arg8[%c0_11, %c0_12], %12 {strides = array<i32>} : memref<256x64xf32, #tpu.memory_space<vmem>>, vector<256x64xf32>,
    } else {
    }
    %c0 = arith.constant 0 : index
    %c0_1 = arith.constant 0 : index
    %3 = vector.load %arg8[%c0, %c0_1] : memref<256x64xf32, #tpu.memory_space<vmem>>, vector<256x64xf32>
    %c0_2 = arith.constant 0 : index
    %c0_3 = arith.constant 0 : index
    %4 = vector.load %arg3[%c0_2, %c0_3] : memref<256x1792xbf16, #tpu.memory_space<vmem>>, vector<256x1792xbf16>
    %c0_4 = arith.constant 0 : index
    %c0_5 = arith.constant 0 : index
    %5 = vector.load %arg4[%c0_4, %c0_5] : memref<1792x64xbf16, #tpu.memory_space<vmem>>, vector<1792x64xbf16>
    %cst = arith.constant dense<0.000000e+00> : vector<256x64xf32>
    %6 = tpu.matmul %4, %5, %cst {dimension_numbers = #tpu.dot_dimension_numbers<[1], [0], [0], [1], [0, 0, 1, 1], [], []>} : vector<256x1792xbf16>, vector<1792x64xbf16>, vector<256x64xf32> -> vector<256x64xf32>
    %7 = arith.addf %3, %6 : vector<256x64xf32>
    %c0_6 = arith.constant 0 : index
    %c0_7 = arith.constant 0 : index
    %8 = vector.load %arg8[%c0_6, %c0_7] : memref<256x64xf32, #tpu.memory_space<vmem>>, vector<256x64xf32>
    tpu.vector_store %arg8[%c0_6, %c0_7], %7 {strides = array<i32>} : memref<256x64xf32, #tpu.memory_space<vmem>>, vector<256x64xf32>,
    %c0_i32_8 = arith.constant 0 : i32
    %9 = arith.cmpi eq, %arg2, %c0_i32_8 : i32
    %10 = arith.extui %9 : i1 to i32
    %c0_i32_9 = arith.constant 0 : i32
    %11 = arith.cmpi ne, %10, %c0_i32_9 : i32
    scf.if %11 {
      %c0_10 = arith.constant 0 : index
      %c0_11 = arith.constant 0 : index
      %12 = vector.load %arg8[%c0_10, %c0_11] : memref<256x64xf32, #tpu.memory_space<vmem>>, vector<256x64xf32>
      %c0_12 = arith.constant 0 : index
      %c0_13 = arith.constant 0 : index
      %13 = vector.load %arg5[%c0_12, %c0_13] : memref<1x64xf32, #tpu.memory_space<vmem>>, vector<1x64xf32>
      %14 = vector.broadcast %13 : vector<1x64xf32> to vector<256x64xf32>
      %15 = arith.addf %12, %14 : vector<256x64xf32>
      %c0_14 = arith.constant 0 : index
      %c0_15 = arith.constant 0 : index
      %16 = vector.load %arg6[%c0_14, %c0_15] : memref<256x64xf32, #tpu.memory_space<vmem>>, vector<256x64xf32>
      %17 = arith.addf %15, %16 : vector<256x64xf32>
      %cst_16 = arith.constant 0.000000e+00 : f32
      %18 = vector.broadcast %cst_16 : f32 to vector<256x64xf32>
      %19 = arith.maximumf %17, %18 : vector<256x64xf32>
      %c0_17 = arith.constant 0 : index
      %c0_18 = arith.constant 0 : index
      %20 = vector.load %arg7[%c0_17, %c0_18] : memref<256x64xf32, #tpu.memory_space<vmem>>, vector<256x64xf32>
      tpu.vector_store %arg7[%c0_17, %c0_18], %19 {strides = array<i32>} : memref<256x64xf32, #tpu.memory_space<vmem>>, vector<256x64xf32>,
    } else {
    }
    return
  }
  func.func @transform_0(%arg0: i32, %arg1: i32, %arg2: i32) -> (i32, i32) {
    %c0_i32 = arith.constant 0 : i32
    return %arg0, %arg2 : i32, i32
  }
  func.func @transform_1(%arg0: i32, %arg1: i32, %arg2: i32) -> (i32, i32) {
    %c0_i32 = arith.constant 0 : i32
    return %arg2, %arg1 : i32, i32
  }
  func.func @transform_2(%arg0: i32, %arg1: i32, %arg2: i32) -> (i32, i32) {
    %c0_i32 = arith.constant 0 : i32
    %c0_i32_0 = arith.constant 0 : i32
    return %c0_i32, %arg1 : i32, i32
  }
  func.func @transform_3(%arg0: i32, %arg1: i32, %arg2: i32) -> (i32, i32) {
    %c0_i32 = arith.constant 0 : i32
    return %arg0, %arg1 : i32, i32
  }
  func.func @transform_4(%arg0: i32, %arg1: i32, %arg2: i32) -> (i32, i32) {
    %c0_i32 = arith.constant 0 : i32
    return %arg0, %arg1 : i32, i32
  }
}

</mosaic_0001>

<llo_original>
// kernel: basic_block_forward.2
$region0: #{basic_block_forward.2}
  #allocation0 [shape = 'u32[]', space=smem, size = 0x4, offset = 0x4, fixed_abs, tag = 'smem constant byte address 0x4 - core index']
  #allocation1 [shape = 'u32[144,128]{1,0:T(1,128)}', space=vmem, size = 0x12000, scoped, tag = 'internal scratch']
  #allocation2 [shape = 'f32[256,64]{1,0:T(8,128)}', space=vmem, size = 0x20000, scoped, tag = 'scratch operand']
  %s0 = inlined_call_operand.vmem [shape: bf16[4096,1792], index: 0, kind: input, shape index: {}]
  %s1 = inlined_call_operand.vmem [shape: bf16[1792,64], index: 1, kind: input, shape index: {}]
  %s2 = inlined_call_operand.vmem [shape: f32[1,64], index: 2, kind: input, shape index: {}]
  %s3 = inlined_call_operand.vmem [shape: bf16[4096,64], index: 3, kind: output, shape index: {}]
  %s4 = sld [smem:[#allocation0]]
  $region53: #{basic_block_forward.2} parent=0
    _
  %s6 = ssub.s32 1, %s4
  %s7 = scalar_select 0, %s6, %s4
  loop: start=0, step=1, limit=18
  $region2: #{basic_block_forward.2} parent=0 // loop_pre_header
    _
  $region3: #{basic_block_forward.2} parent=0 // loop_header
    %s9 = sphi 0, %s13
    %p10 = scmp.ge.s32.totalorder %s9, 18
    %s16 = sphi 0, %s35
    %s17 = sphi 0, %s31
    %s18 = sphi 0, %s27
    %s19 = sphi 0, %s16
    %s20 = sphi 0, %s17
    %s21 = sphi 0, %s18
    %s22 = sphi 0, %s19
    %s23 = sphi 0, %s20
    %s24 = sphi 0, %s21
    %s40 = sphi 0, %s42
    %s43 = sphi 0, %s40
    %s44 = sphi 0, %s43
    %s60 = sphi 0, %s44
    %s68 = sphi 0, %s70
    %s71 = sphi 0, %s68
    %s72 = sphi 0, %s71
    %s88 = sphi 0, %s72
    %s94 = sphi 0, %s96
    %s97 = sphi 0, %s94
    %s98 = sphi 0, %s97
    %s114 = sphi 0, %s98
    %s122 = sphi 0, %s124
    %s125 = sphi 0, %s122
    %s126 = sphi 0, %s125
    %s142 = sphi 0, %s126
  $region4: #{basic_block_forward.2} parent=0 // loop_header_branch
    %12 = sbr.rel (%p10) target = $region8
  $region5: #{basic_block_forward.2} parent=0 // loop_body
    %s14 = ssub.s32 %s9, 1
    %s15 = ssub.s32 %s9, 2
    %s25 = sadd.s32 1, %s18
    %p26 = scmp.ge.s32.totalorder %s25, 1
    %s27 = scalar_select %p26, 0, %s25
    %s28 = sadd.s32 1, %s17
    %s29 = scalar_select %p26, %s28, %s17
    %p30 = scmp.ge.s32.totalorder %s29, 1
    %s31 = scalar_select %p30, 0, %s29
    %s32 = sadd.s32 1, %s16
    %s33 = scalar_select %p30, %s32, %s16
    %p34 = scmp.ge.s32.totalorder %s33, 16
    %s35 = scalar_select %p34, 0, %s33
    %s36 = ssub.s32 %s16, %s35
    %s37 = ssub.s32 %s18, %s27
    %s38 = sor.u32 %s36, %s37
    %p39 = scmp.eq.s32.totalorder %s38, 0
    %s41 = sadd.s32 %s40, 1
    %s42 = scalar_select %p39, %s40, %s41
    %p45 = pneg %p39
    %p46 = scmp.eq.s32.totalorder %s9, 15
    %p47 = por %p45, %p46
    %p48 = scmp.ne.s32.totalorder %s40, %s43
    %p49 = scmp.eq.s32.totalorder %s9, 0
    %p50 = por %p48, %p49
    %p51 = scmp.ne.s32.totalorder %s40, %s43
    %p52 = scmp.eq.s32.totalorder %s14, 15
    %p53 = por %p51, %p52
    %p54 = scmp.ne.s32.totalorder %s43, %s44
    %p55 = scmp.eq.s32.totalorder %s14, 0
    %p56 = por %p54, %p55
    %p57 = scmp.ne.s32.totalorder %s43, %s44
    %p58 = scmp.eq.s32.totalorder %s15, 15
    %p59 = por %p57, %p58
    %p61 = scmp.ne.s32.totalorder %s44, %s60
    %p62 = scmp.eq.s32.totalorder %s15, 0
    %p63 = por %p61, %p62
    %s64 = ssub.s32 %s18, %s27
    %s65 = ssub.s32 %s17, %s31
    %s66 = sor.u32 %s64, %s65
    %p67 = scmp.eq.s32.totalorder %s66, 0
    %s69 = sadd.s32 %s68, 1
    %s70 = scalar_select %p67, %s68, %s69
    %p73 = pneg %p67
    %p74 = scmp.eq.s32.totalorder %s9, 15
    %p75 = por %p73, %p74
    %p76 = scmp.ne.s32.totalorder %s68, %s71
    %p77 = scmp.eq.s32.totalorder %s9, 0
    %p78 = por %p76, %p77
    %p79 = scmp.ne.s32.totalorder %s68, %s71
    %p80 = scmp.eq.s32.totalorder %s14, 15
    %p81 = por %p79, %p80
    %p82 = scmp.ne.s32.totalorder %s71, %s72
    %p83 = scmp.eq.s32.totalorder %s14, 0
    %p84 = por %p82, %p83
    %p85 = scmp.ne.s32.totalorder %s71, %s72
    %p86 = scmp.eq.s32.totalorder %s15, 15
    %p87 = por %p85, %p86
    %p89 = scmp.ne.s32.totalorder %s72, %s88
    %p90 = scmp.eq.s32.totalorder %s15, 0
    %p91 = por %p89, %p90
    %s92 = ssub.s32 %s17, %s31
    %p93 = scmp.eq.s32.totalorder %s92, 0
    %s95 = sadd.s32 %s94, 1
    %s96 = scalar_select %p93, %s94, %s95
    %p99 = pneg %p93
    %p100 = scmp.eq.s32.totalorder %s9, 15
    %p101 = por %p99, %p100
    %p102 = scmp.ne.s32.totalorder %s94, %s97
    %p103 = scmp.eq.s32.totalorder %s9, 0
    %p104 = por %p102, %p103
    %p105 = scmp.ne.s32.totalorder %s94, %s97
    %p106 = scmp.eq.s32.totalorder %s14, 15
    %p107 = por %p105, %p106
    %p108 = scmp.ne.s32.totalorder %s97, %s98
    %p109 = scmp.eq.s32.totalorder %s14, 0
    %p110 = por %p108, %p109
    %p111 = scmp.ne.s32.totalorder %s97, %s98
    %p112 = scmp.eq.s32.totalorder %s15, 15
    %p113 = por %p111, %p112
    %p115 = scmp.ne.s32.totalorder %s98, %s114
    %p116 = scmp.eq.s32.totalorder %s15, 0
    %p117 = por %p115, %p116
    %s118 = ssub.s32 %s16, %s35
    %s119 = ssub.s32 %s17, %s31
    %s120 = sor.u32 %s118, %s119
    %p121 = scmp.eq.s32.totalorder %s120, 0
    %s123 = sadd.s32 %s122, 1
    %s124 = scalar_select %p121, %s122, %s123
    %p127 = pneg %p121
    %p128 = scmp.eq.s32.totalorder %s9, 15
    %p129 = por %p127, %p128
    %p130 = scmp.ne.s32.totalorder %s122, %s125
    %p131 = scmp.eq.s32.totalorder %s9, 0
    %p132 = por %p130, %p131
    %p133 = scmp.ne.s32.totalorder %s122, %s125
    %p134 = scmp.eq.s32.totalorder %s14, 15
    %p135 = por %p133, %p134
    %p136 = scmp.ne.s32.totalorder %s125, %s126
    %p137 = scmp.eq.s32.totalorder %s14, 0
    %p138 = por %p136, %p137
    %p139 = scmp.ne.s32.totalorder %s125, %s126
    %p140 = scmp.eq.s32.totalorder %s15, 15
    %p141 = por %p139, %p140
    %p143 = scmp.ne.s32.totalorder %s126, %s142
    %p144 = scmp.eq.s32.totalorder %s15, 0
    %p145 = por %p143, %p144
    %p146 = scmp.le.s32.totalorder 1, %s9
    %p147 = scmp.lt.s32.totalorder %s9, 17
    %p148 = pnand %p146, %p147
    %p149 = pneg %p148
    // Predicated region
    $region9: #{basic_block_forward.2} parent=5 // pred_check
      _
    $region10: #{basic_block_forward.2} parent=5 // pred_check_branch
      %151 = sbr.rel (%p148) target = $region12
    $region11: #{basic_block_forward.2} parent=5 // pred_region
      %s152 = ssub.s32 %s9, 1
      // Predicated region
      $region13: #{basic_block_forward.2} parent=11 // pred_check
        %p153 = pneg %p84
      $region14: #{basic_block_forward.2} parent=11 // pred_check_branch
        %155 = sbr.rel (%p153) target = $region16
      $region15: #{basic_block_forward.2} parent=11 // pred_region
        %s156 = smul.u32 224, %s21
        %p157 = scmp.lt.s32.totalorder %s156, 223
        %s158 = scalar_select %p157, %s156, 223
        %p159 = scmp.lt.s32.totalorder %s20, 0
        %s160 = scalar_select %p159, %s20, 0
        %s161 = sadd.s32 %s160, %s158
        %s162 = smul.addr %s161, 4
        %s163 = scalar_lea.vmem %s1, %s162
        %s164 = smul.u32 224, %s21
      $region16: #{basic_block_forward.2} parent=11 // pred_fallthru
        _
      // Predicated region
      $region17: #{basic_block_forward.2} parent=11 // pred_check
        %p165 = pneg %p110
      $region18: #{basic_block_forward.2} parent=11 // pred_check_branch
        %167 = sbr.rel (%p165) target = $region20
      $region19: #{basic_block_forward.2} parent=11 // pred_region
        %p168 = scmp.lt.s32.totalorder %s20, 0
        %s169 = scalar_select %p168, %s20, 0
        %s170 = scalar_lea.vmem %s2, %s169
      $region20: #{basic_block_forward.2} parent=11 // pred_fallthru
        _
    $region12: #{basic_block_forward.2} parent=5 // pred_fallthru
      _
    %p171 = scmp.lt.s32.totalorder %s9, 16
    // Predicated region
    $region21: #{basic_block_forward.2} parent=5 // pred_check
      %p172 = pneg %p171
    $region22: #{basic_block_forward.2} parent=5 // pred_check_branch
      %174 = sbr.rel (%p172) target = $region24
    $region23: #{basic_block_forward.2} parent=5 // pred_region
      // Predicated region
      $region25: #{basic_block_forward.2} parent=23 // pred_check
        %p175 = pneg %p50
      $region26: #{basic_block_forward.2} parent=23 // pred_check_branch
        %177 = sbr.rel (%p175) target = $region28
      $region27: #{basic_block_forward.2} parent=23 // pred_region
        %s178 = smul.u32 32, %s16
        %s179 = smul.u32 14, %s18
        %p180 = scmp.lt.s32.totalorder %s178, 511
        %s181 = scalar_select %p180, %s178, 511
        %p182 = scmp.lt.s32.totalorder %s179, 13
        %s183 = scalar_select %p182, %s179, 13
        %s184 = smul.addr %s181, 14
        %s185 = sadd.s32 %s183, %s184
        %s186 = smul.addr %s185, 4
        %s187 = scalar_lea.vmem %s0, %s186
        %s188 = smul.u32 32, %s16
        %s189 = smul.u32 14, %s18
      $region28: #{basic_block_forward.2} parent=23 // pred_fallthru
        _
    $region24: #{basic_block_forward.2} parent=5 // pred_fallthru
      _
    %p190 = scmp.le.s32.totalorder 1, %s9
    %p191 = scmp.lt.s32.totalorder %s9, 17
    %p192 = pnand %p190, %p191
    %p193 = pneg %p192
    // Predicated region
    $region29: #{basic_block_forward.2} parent=5 // pred_check
      _
    $region30: #{basic_block_forward.2} parent=5 // pred_check_branch
      %195 = sbr.rel (%p192) target = $region32
    $region31: #{basic_block_forward.2} parent=5 // pred_region
      %s196 = ssub.s32 %s9, 1
      %s197 = smul.u32 32, %s19
      %s198 = smul.u32 14, %s21
      %p199 = scmp.lt.s32.totalorder %s197, 511
      %s200 = scalar_select %p199, %s197, 511
      %p201 = scmp.lt.s32.totalorder %s198, 13
      %s202 = scalar_select %p201, %s198, 13
      %s203 = smul.addr %s200, 14
      %s204 = sadd.s32 %s202, %s203
      %s205 = smul.addr %s204, 4
      %s206 = scalar_lea.vmem %s0, %s205
      %p207 = pneg %p56
      %p208 = pneg %p53
      %s209 = smul.u32 224, %s21
      %p210 = scmp.lt.s32.totalorder %s209, 223
      %s211 = scalar_select %p210, %s209, 223
      %p212 = scmp.lt.s32.totalorder %s20, 0
      %s213 = scalar_select %p212, %s20, 0
      %s214 = sadd.s32 %s213, %s211
      %s215 = smul.addr %s214, 4
      %s216 = scalar_lea.vmem %s1, %s215
      %p217 = pneg %p84
      %p218 = pneg %p81
      %p219 = scmp.lt.s32.totalorder %s20, 0
      %s220 = scalar_select %p219, %s20, 0
      %s221 = scalar_lea.vmem %s2, %s220
      %p222 = pneg %p110
      %p223 = pneg %p107
      %p224 = pneg %p138
      %p225 = pneg %p135
      %s226 = smul.u32 32, %s19
      %p227 = scmp.lt.s32.totalorder %s226, 511
      %s228 = scalar_select %p227, %s226, 511
      %p229 = scmp.lt.s32.totalorder %s20, 0
      %s230 = scalar_select %p229, %s20, 0
      %s231 = sadd.s32 %s230, %s228
      %s232 = smul.addr %s231, 4
      %s233 = scalar_lea.vmem %s3, %s232
      %s234 = smul.u32 32, %s19
      %s235 = smul.u32 14, %s21
      %p236 = scmp.lt.s32.totalorder %s234, 511
      %s237 = scalar_select %p236, %s234, 511
      %p238 = scmp.lt.s32.totalorder %s235, 13
      %s239 = scalar_select %p238, %s235, 13
      %s240 = smul.addr %s237, 14
      %s241 = sadd.s32 %s239, %s240
      %s242 = smul.addr %s241, 4
      %s243 = scalar_lea.vmem %s0, %s242
      %s244 = smul.u32 32, %s19
      %s245 = smul.u32 14, %s21
      %s246 = smul.u32 224, %s21
      %p247 = scmp.lt.s32.totalorder %s246, 223
      %s248 = scalar_select %p247, %s246, 223
      %p249 = scmp.lt.s32.totalorder %s20, 0
      %s250 = scalar_select %p249, %s20, 0
      %s251 = sadd.s32 %s250, %s248
      %s252 = smul.addr %s251, 4
      %s253 = scalar_lea.vmem %s1, %s252
      %s254 = smul.u32 224, %s21
      %p255 = scmp.lt.s32.totalorder %s20, 0
      %s256 = scalar_select %p255, %s20, 0
      %s257 = scalar_lea.vmem %s2, %s256
      %s258 = smul.u32 32, %s19
      %p259 = scmp.lt.s32.totalorder %s258, 511
      %s260 = scalar_select %p259, %s258, 511
      %p261 = scmp.lt.s32.totalorder %s20, 0
      %s262 = scalar_select %p261, %s20, 0
      %s263 = sadd.s32 %s262, %s260
      %s264 = smul.addr %s263, 4
      %s265 = scalar_lea.vmem %s3, %s264
      %s266 = smul.u32 32, %s19
      %p268 = scmp.eq.s32.totalorder %s21, 0
      // Predicated region
      $region33: #{basic_block_forward.2} parent=31 // pred_check
        %p269 = pneg %p268
      $region34: #{basic_block_forward.2} parent=31 // pred_check_branch
        %271 = sbr.rel (%p269) target = $region36
      $region35: #{basic_block_forward.2} parent=31 // pred_region
        %vm272 = vcmask 523264
        %273 = vst.msk [vmem:[#allocation2] sm:$0xff] %vm272, 0.0
        %274 = vst.msk [vmem:[#allocation2 + $0x8] sm:$0xff] %vm272, 0.0
        %275 = vst.msk [vmem:[#allocation2 + $0x10] sm:$0xff] %vm272, 0.0
        %276 = vst.msk [vmem:[#allocation2 + $0x18] sm:$0xff] %vm272, 0.0
        %277 = vst.msk [vmem:[#allocation2 + $0x20] sm:$0xff] %vm272, 0.0
        %278 = vst.msk [vmem:[#allocation2 + $0x28] sm:$0xff] %vm272, 0.0
        %279 = vst.msk [vmem:[#allocation2 + $0x30] sm:$0xff] %vm272, 0.0
        %280 = vst.msk [vmem:[#allocation2 + $0x38] sm:$0xff] %vm272, 0.0
        %281 = vst.msk [vmem:[#allocation2 + $0x40] sm:$0xff] %vm272, 0.0
        %282 = vst.msk [vmem:[#allocation2 + $0x48] sm:$0xff] %vm272, 0.0
        %283 = vst.msk [vmem:[#allocation2 + $0x50] sm:$0xff] %vm272, 0.0
        %284 = vst.msk [vmem:[#allocation2 + $0x58] sm:$0xff] %vm272, 0.0
        %285 = vst.msk [vmem:[#allocation2 + $0x60] sm:$0xff] %vm272, 0.0
        %286 = vst.msk [vmem:[#allocation2 + $0x68] sm:$0xff] %vm272, 0.0
        %287 = vst.msk [vmem:[#allocation2 + $0x70] sm:$0xff] %vm272, 0.0
        %288 = vst.msk [vmem:[#allocation2 + $0x78] sm:$0xff] %vm272, 0.0
        %289 = vst.msk [vmem:[#allocation2 + $0x80] sm:$0xff] %vm272, 0.0
        %290 = vst.msk [vmem:[#allocation2 + $0x88] sm:$0xff] %vm272, 0.0
        %291 = vst.msk [vmem:[#allocation2 + $0x90] sm:$0xff] %vm272, 0.0
        %292 = vst.msk [vmem:[#allocation2 + $0x98] sm:$0xff] %vm272, 0.0
        %293 = vst.msk [vmem:[#allocation2 + $0xa0] sm:$0xff] %vm272, 0.0
        %294 = vst.msk [vmem:[#allocation2 + $0xa8] sm:$0xff] %vm272, 0.0
        %295 = vst.msk [vmem:[#allocation2 + $0xb0] sm:$0xff] %vm272, 0.0
        %296 = vst.msk [vmem:[#allocation2 + $0xb8] sm:$0xff] %vm272, 0.0
        %297 = vst.msk [vmem:[#allocation2 + $0xc0] sm:$0xff] %vm272, 0.0
        %298 = vst.msk [vmem:[#allocation2 + $0xc8] sm:$0xff] %vm272, 0.0
        %299 = vst.msk [vmem:[#allocation2 + $0xd0] sm:$0xff] %vm272, 0.0
        %300 = vst.msk [vmem:[#allocation2 + $0xd8] sm:$0xff] %vm272, 0.0
        %301 = vst.msk [vmem:[#allocation2 + $0xe0] sm:$0xff] %vm272, 0.0
        %302 = vst.msk [vmem:[#allocation2 + $0xe8] sm:$0xff] %vm272, 0.0
        %303 = vst.msk [vmem:[#allocation2 + $0xf0] sm:$0xff] %vm272, 0.0
        %304 = vst.msk [vmem:[#allocation2 + $0xf8] sm:$0xff] %vm272, 0.0
      $region36: #{basic_block_forward.2} parent=31 // pred_fallthru
        _
      %v305 = vld [vmem:[#allocation2] sm:$0xff]
      %v306 = vld [vmem:[#allocation2 + $0x8] sm:$0xff]
      %v307 = vld [vmem:[#allocation2 + $0x10] sm:$0xff]
      %v308 = vld [vmem:[#allocation2 + $0x18] sm:$0xff]
      %v309 = vld [vmem:[#allocation2 + $0x20] sm:$0xff]
      %v310 = vld [vmem:[#allocation2 + $0x28] sm:$0xff]
      %v311 = vld [vmem:[#allocation2 + $0x30] sm:$0xff]
      %v312 = vld [vmem:[#allocation2 + $0x38] sm:$0xff]
      %v313 = vld [vmem:[#allocation2 + $0x40] sm:$0xff]
      %v314 = vld [vmem:[#allocation2 + $0x48] sm:$0xff]
      %v315 = vld [vmem:[#allocation2 + $0x50] sm:$0xff]
      %v316 = vld [vmem:[#allocation2 + $0x58] sm:$0xff]
      %v317 = vld [vmem:[#allocation2 + $0x60] sm:$0xff]
      %v318 = vld [vmem:[#allocation2 + $0x68] sm:$0xff]
      %v319 = vld [vmem:[#allocation2 + $0x70] sm:$0xff]
      %v320 = vld [vmem:[#allocation2 + $0x78] sm:$0xff]
      %v321 = vld [vmem:[#allocation2 + $0x80] sm:$0xff]
      %v322 = vld [vmem:[#allocation2 + $0x88] sm:$0xff]
      %v323 = vld [vmem:[#allocation2 + $0x90] sm:$0xff]
      %v324 = vld [vmem:[#allocation2 + $0x98] sm:$0xff]
      %v325 = vld [vmem:[#allocation2 + $0xa0] sm:$0xff]
      %v326 = vld [vmem:[#allocation2 + $0xa8] sm:$0xff]
      %v327 = vld [vmem:[#allocation2 + $0xb0] sm:$0xff]
      %v328 = vld [vmem:[#allocation2 + $0xb8] sm:$0xff]
      %v329 = vld [vmem:[#allocation2 + $0xc0] sm:$0xff]
      %v330 = vld [vmem:[#allocation2 + $0xc8] sm:$0xff]
      %v331 = vld [vmem:[#allocation2 + $0xd0] sm:$0xff]
      %v332 = vld [vmem:[#allocation2 + $0xd8] sm:$0xff]
      %v333 = vld [vmem:[#allocation2 + $0xe0] sm:$0xff]
      %v334 = vld [vmem:[#allocation2 + $0xe8] sm:$0xff]
      %v335 = vld [vmem:[#allocation2 + $0xf0] sm:$0xff]
      %v336 = vld [vmem:[#allocation2 + $0xf8] sm:$0xff]
      %v337 = vld [vmem:[%s243] sm:$0xff]
      %v338 = vld [vmem:[%s243 + $0x8] sm:$0xff]
      %v339 = vld [vmem:[%s243 + $0x10] sm:$0xff]
      %v340 = vld [vmem:[%s243 + $0x18] sm:$0xff]
      %v341 = vld [vmem:[%s243 + $0x20] sm:$0xff]
      %v342 = vld [vmem:[%s243 + $0x28] sm:$0xff]
      %v343 = vld [vmem:[%s243 + $0x30] sm:$0xff]
      %v344 = vld [vmem:[%s243 + $0x38] sm:$0xff]
      %v345 = vld [vmem:[%s243 + $0x40] sm:$0xff]
      %v346 = vld [vmem:[%s243 + $0x48] sm:$0xff]
      %v347 = vld [vmem:[%s243 + $0x50] sm:$0xff]
      %v348 = vld [vmem:[%s243 + $0x58] sm:$0xff]
      %v349 = vld [vmem:[%s243 + $0x60] sm:$0xff]
      %v350 = vld [vmem:[%s243 + $0x68] sm:$0xff]
      %v351 = vld [vmem:[%s243 + $0x70] sm:$0xff]
      %v352 = vld [vmem:[%s243 + $0x78] sm:$0xff]
      %v353 = vld [vmem:[%s243 + $0x80] sm:$0xff]
      %v354 = vld [vmem:[%s243 + $0x88] sm:$0xff]
      %v355 = vld [vmem:[%s243 + $0x90] sm:$0xff]
      %v356 = vld [vmem:[%s243 + $0x98] sm:$0xff]
      %v357 = vld [vmem:[%s243 + $0xa0] sm:$0xff]
      %v358 = vld [vmem:[%s243 + $0xa8] sm:$0xff]
      %v359 = vld [vmem:[%s243 + $0xb0] sm:$0xff]
      %v360 = vld [vmem:[%s243 + $0xb8] sm:$0xff]
      %v361 = vld [vmem:[%s243 + $0xc0] sm:$0xff]
      %v362 = vld [vmem:[%s243 + $0xc8] sm:$0xff]
      %v363 = vld [vmem:[%s243 + $0xd0] sm:$0xff]
      %v364 = vld [vmem:[%s243 + $0xd8] sm:$0xff]
      %v365 = vld [vmem:[%s243 + $0xe0] sm:$0xff]
      %v366 = vld [vmem:[%s243 + $0xe8] sm:$0xff]
      %v367 = vld [vmem:[%s243 + $0xf0] sm:$0xff]
      %v368 = vld [vmem:[%s243 + $0xf8] sm:$0xff]
      %v369 = vld [vmem:[%s243 + $0x100] sm:$0xff]
      %v370 = vld [vmem:[%s243 + $0x108] sm:$0xff]
      %v371 = vld [vmem:[%s243 + $0x110] sm:$0xff]
      %v372 = vld [vmem:[%s243 + $0x118] sm:$0xff]
      %v373 = vld [vmem:[%s243 + $0x120] sm:$0xff]
      %v374 = vld [vmem:[%s243 + $0x128] sm:$0xff]
      %v375 = vld [vmem:[%s243 + $0x130] sm:$0xff]
      %v376 = vld [vmem:[%s243 + $0x138] sm:$0xff]
      %v377 = vld [vmem:[%s243 + $0x140] sm:$0xff]
      %v378 = vld [vmem:[%s243 + $0x148] sm:$0xff]
      %v379 = vld [vmem:[%s243 + $0x150] sm:$0xff]
      %v380 = vld [vmem:[%s243 + $0x158] sm:$0xff]
      %v381 = vld [vmem:[%s243 + $0x160] sm:$0xff]
      %v382 = vld [vmem:[%s243 + $0x168] sm:$0xff]
      %v383 = vld [vmem:[%s243 + $0x170] sm:$0xff]
      %v384 = vld [vmem:[%s243 + $0x178] sm:$0xff]
      %v385 = vld [vmem:[%s243 + $0x180] sm:$0xff]
      %v386 = vld [vmem:[%s243 + $0x188] sm:$0xff]
      %v387 = vld [vmem:[%s243 + $0x190] sm:$0xff]
      %v388 = vld [vmem:[%s243 + $0x198] sm:$0xff]
      %v389 = vld [vmem:[%s243 + $0x1a0] sm:$0xff]
      %v390 = vld [vmem:[%s243 + $0x1a8] sm:$0xff]
      %v391 = vld [vmem:[%s243 + $0x1b0] sm:$0xff]
      %v392 = vld [vmem:[%s243 + $0x1b8] sm:$0xff]
      %v393 = vld [vmem:[%s243 + $0x1c0] sm:$0xff]
      %v394 = vld [vmem:[%s243 + $0x1c8] sm:$0xff]
      %v395 = vld [vmem:[%s243 + $0x1d0] sm:$0xff]
      %v396 = vld [vmem:[%s243 + $0x1d8] sm:$0xff]
      %v397 = vld [vmem:[%s243 + $0x1e0] sm:$0xff]
      %v398 = vld [vmem:[%s243 + $0x1e8] sm:$0xff]
      %v399 = vld [vmem:[%s243 + $0x1f0] sm:$0xff]
      %v400 = vld [vmem:[%s243 + $0x1f8] sm:$0xff]
      %v401 = vld [vmem:[%s243 + $0x200] sm:$0xff]
      %v402 = vld [vmem:[%s243 + $0x208] sm:$0xff]
      %v403 = vld [vmem:[%s243 + $0x210] sm:$0xff]
      %v404 = vld [vmem:[%s243 + $0x218] sm:$0xff]
      %v405 = vld [vmem:[%s243 + $0x220] sm:$0xff]
      %v406 = vld [vmem:[%s243 + $0x228] sm:$0xff]
      %v407 = vld [vmem:[%s243 + $0x230] sm:$0xff]
      %v408 = vld [vmem:[%s243 + $0x238] sm:$0xff]
      %v409 = vld [vmem:[%s243 + $0x240] sm:$0xff]
      %v410 = vld [vmem:[%s243 + $0x248] sm:$0xff]
      %v411 = vld [vmem:[%s243 + $0x250] sm:$0xff]
      %v412 = vld [vmem:[%s243 + $0x258] sm:$0xff]
      %v413 = vld [vmem:[%s243 + $0x260] sm:$0xff]
      %v414 = vld [vmem:[%s243 + $0x268] sm:$0xff]
      %v415 = vld [vmem:[%s243 + $0x270] sm:$0xff]
      %v416 = vld [vmem:[%s243 + $0x278] sm:$0xff]
      %v417 = vld [vmem:[%s243 + $0x280] sm:$0xff]
      %v418 = vld [vmem:[%s243 + $0x288] sm:$0xff]
      %v419 = vld [vmem:[%s243 + $0x290] sm:$0xff]
      %v420 = vld [vmem:[%s243 + $0x298] sm:$0xff]
      %v421 = vld [vmem:[%s243 + $0x2a0] sm:$0xff]
      %v422 = vld [vmem:[%s243 + $0x2a8] sm:$0xff]
      %v423 = vld [vmem:[%s243 + $0x2b0] sm:$0xff]
      %v424 = vld [vmem:[%s243 + $0x2b8] sm:$0xff]
      %v425 = vld [vmem:[%s243 + $0x2c0] sm:$0xff]
      %v426 = vld [vmem:[%s243 + $0x2c8] sm:$0xff]
      %v427 = vld [vmem:[%s243 + $0x2d0] sm:$0xff]
      %v428 = vld [vmem:[%s243 + $0x2d8] sm:$0xff]
      %v429 = vld [vmem:[%s243 + $0x2e0] sm:$0xff]
      %v430 = vld [vmem:[%s243 + $0x2e8] sm:$0xff]
      %v431 = vld [vmem:[%s243 + $0x2f0] sm:$0xff]
      %v432 = vld [vmem:[%s243 + $0x2f8] sm:$0xff]
      %v433 = vld [vmem:[%s243 + $0x300] sm:$0xff]
      %v434 = vld [vmem:[%s243 + $0x308] sm:$0xff]
      %v435 = vld [vmem:[%s243 + $0x310] sm:$0xff]
      %v436 = vld [vmem:[%s243 + $0x318] sm:$0xff]
      %v437 = vld [vmem:[%s243 + $0x320] sm:$0xff]
      %v438 = vld [vmem:[%s243 + $0x328] sm:$0xff]
      %v439 = vld [vmem:[%s243 + $0x330] sm:$0xff]
      %v440 = vld [vmem:[%s243 + $0x338] sm:$0xff]
      %v441 = vld [vmem:[%s243 + $0x340] sm:$0xff]
      %v442 = vld [vmem:[%s243 + $0x348] sm:$0xff]
      %v443 = vld [vmem:[%s243 + $0x350] sm:$0xff]
      %v444 = vld [vmem:[%s243 + $0x358] sm:$0xff]
      %v445 = vld [vmem:[%s243 + $0x360] sm:$0xff]
      %v446 = vld [vmem:[%s243 + $0x368] sm:$0xff]
      %v447 = vld [vmem:[%s243 + $0x370] sm:$0xff]
      %v448 = vld [vmem:[%s243 + $0x378] sm:$0xff]
      %v449 = vld [vmem:[%s243 + $0x380] sm:$0xff]
      %v450 = vld [vmem:[%s243 + $0x388] sm:$0xff]
      %v451 = vld [vmem:[%s243 + $0x390] sm:$0xff]
      %v452 = vld [vmem:[%s243 + $0x398] sm:$0xff]
      %v453 = vld [vmem:[%s243 + $0x3a0] sm:$0xff]
      %v454 = vld [vmem:[%s243 + $0x3a8] sm:$0xff]
      %v455 = vld [vmem:[%s243 + $0x3b0] sm:$0xff]
      %v456 = vld [vmem:[%s243 + $0x3b8] sm:$0xff]
      %v457 = vld [vmem:[%s243 + $0x3c0] sm:$0xff]
      %v458 = vld [vmem:[%s243 + $0x3c8] sm:$0xff]
      %v459 = vld [vmem:[%s243 + $0x3d0] sm:$0xff]
      %v460 = vld [vmem:[%s243 + $0x3d8] sm:$0xff]
      %v461 = vld [vmem:[%s243 + $0x3e0] sm:$0xff]
      %v462 = vld [vmem:[%s243 + $0x3e8] sm:$0xff]
      %v463 = vld [vmem:[%s243 + $0x3f0] sm:$0xff]
      %v464 = vld [vmem:[%s243 + $0x3f8] sm:$0xff]
      %v465 = vld [vmem:[%s243 + $0x400] sm:$0xff]
      %v466 = vld [vmem:[%s243 + $0x408] sm:$0xff]
      %v467 = vld [vmem:[%s243 + $0x410] sm:$0xff]
      %v468 = vld [vmem:[%s243 + $0x418] sm:$0xff]
      %v469 = vld [vmem:[%s243 + $0x420] sm:$0xff]
      %v470 = vld [vmem:[%s243 + $0x428] sm:$0xff]
      %v471 = vld [vmem:[%s243 + $0x430] sm:$0xff]
      %v472 = vld [vmem:[%s243 + $0x438] sm:$0xff]
      %v473 = vld [vmem:[%s243 + $0x440] sm:$0xff]
      %v474 = vld [vmem:[%s243 + $0x448] sm:$0xff]
      %v475 = vld [vmem:[%s243 + $0x450] sm:$0xff]
      %v476 = vld [vmem:[%s243 + $0x458] sm:$0xff]
      %v477 = vld [vmem:[%s243 + $0x460] sm:$0xff]
      %v478 = vld [vmem:[%s243 + $0x468] sm:$0xff]
      %v479 = vld [vmem:[%s243 + $0x470] sm:$0xff]
      %v480 = vld [vmem:[%s243 + $0x478] sm:$0xff]
      %v481 = vld [vmem:[%s243 + $0x480] sm:$0xff]
      %v482 = vld [vmem:[%s243 + $0x488] sm:$0xff]
      %v483 = vld [vmem:[%s243 + $0x490] sm:$0xff]
      %v484 = vld [vmem:[%s243 + $0x498] sm:$0xff]
      %v485 = vld [vmem:[%s243 + $0x4a0] sm:$0xff]
      %v486 = vld [vmem:[%s243 + $0x4a8] sm:$0xff]
      %v487 = vld [vmem:[%s243 + $0x4b0] sm:$0xff]
      %v488 = vld [vmem:[%s243 + $0x4b8] sm:$0xff]
      %v489 = vld [vmem:[%s243 + $0x4c0] sm:$0xff]
      %v490 = vld [vmem:[%s243 + $0x4c8] sm:$0xff]
      %v491 = vld [vmem:[%s243 + $0x4d0] sm:$0xff]
      %v492 = vld [vmem:[%s243 + $0x4d8] sm:$0xff]
      %v493 = vld [vmem:[%s243 + $0x4e0] sm:$0xff]
      %v494 = vld [vmem:[%s243 + $0x4e8] sm:$0xff]
      %v495 = vld [vmem:[%s243 + $0x4f0] sm:$0xff]
      %v496 = vld [vmem:[%s243 + $0x4f8] sm:$0xff]
      %v497 = vld [vmem:[%s243 + $0x500] sm:$0xff]
      %v498 = vld [vmem:[%s243 + $0x508] sm:$0xff]
      %v499 = vld [vmem:[%s243 + $0x510] sm:$0xff]
      %v500 = vld [vmem:[%s243 + $0x518] sm:$0xff]
      %v501 = vld [vmem:[%s243 + $0x520] sm:$0xff]
      %v502 = vld [vmem:[%s243 + $0x528] sm:$0xff]
      %v503 = vld [vmem:[%s243 + $0x530] sm:$0xff]
      %v504 = vld [vmem:[%s243 + $0x538] sm:$0xff]
      %v505 = vld [vmem:[%s243 + $0x540] sm:$0xff]
      %v506 = vld [vmem:[%s243 + $0x548] sm:$0xff]
      %v507 = vld [vmem:[%s243 + $0x550] sm:$0xff]
      %v508 = vld [vmem:[%s243 + $0x558] sm:$0xff]
      %v509 = vld [vmem:[%s243 + $0x560] sm:$0xff]
      %v510 = vld [vmem:[%s243 + $0x568] sm:$0xff]
      %v511 = vld [vmem:[%s243 + $0x570] sm:$0xff]
      %v512 = vld [vmem:[%s243 + $0x578] sm:$0xff]
      %v513 = vld [vmem:[%s243 + $0x580] sm:$0xff]
      %v514 = vld [vmem:[%s243 + $0x588] sm:$0xff]
      %v515 = vld [vmem:[%s243 + $0x590] sm:$0xff]
      %v516 = vld [vmem:[%s243 + $0x598] sm:$0xff]
      %v517 = vld [vmem:[%s243 + $0x5a0] sm:$0xff]
      %v518 = vld [vmem:[%s243 + $0x5a8] sm:$0xff]
      %v519 = vld [vmem:[%s243 + $0x5b0] sm:$0xff]
      %v520 = vld [vmem:[%s243 + $0x5b8] sm:$0xff]
      %v521 = vld [vmem:[%s243 + $0x5c0] sm:$0xff]
      %v522 = vld [vmem:[%s243 + $0x5c8] sm:$0xff]
      %v523 = vld [vmem:[%s243 + $0x5d0] sm:$0xff]
      %v524 = vld [vmem:[%s243 + $0x5d8] sm:$0xff]
      %v525 = vld [vmem:[%s243 + $0x5e0] sm:$0xff]
      %v526 = vld [vmem:[%s243 + $0x5e8] sm:$0xff]
      %v527 = vld [vmem:[%s243 + $0x5f0] sm:$0xff]
      %v528 = vld [vmem:[%s243 + $0x5f8] sm:$0xff]
      %v529 = vld [vmem:[%s243 + $0x600] sm:$0xff]
      %v530 = vld [vmem:[%s243 + $0x608] sm:$0xff]
      %v531 = vld [vmem:[%s243 + $0x610] sm:$0xff]
      %v532 = vld [vmem:[%s243 + $0x618] sm:$0xff]
      %v533 = vld [vmem:[%s243 + $0x620] sm:$0xff]
      %v534 = vld [vmem:[%s243 + $0x628] sm:$0xff]
      %v535 = vld [vmem:[%s243 + $0x630] sm:$0xff]
      %v536 = vld [vmem:[%s243 + $0x638] sm:$0xff]
      %v537 = vld [vmem:[%s243 + $0x640] sm:$0xff]
      %v538 = vld [vmem:[%s243 + $0x648] sm:$0xff]
      %v539 = vld [vmem:[%s243 + $0x650] sm:$0xff]
      %v540 = vld [vmem:[%s243 + $0x658] sm:$0xff]
      %v541 = vld [vmem:[%s243 + $0x660] sm:$0xff]
      %v542 = vld [vmem:[%s243 + $0x668] sm:$0xff]
      %v543 = vld [vmem:[%s243 + $0x670] sm:$0xff]
      %v544 = vld [vmem:[%s243 + $0x678] sm:$0xff]
      %v545 = vld [vmem:[%s243 + $0x680] sm:$0xff]
      %v546 = vld [vmem:[%s243 + $0x688] sm:$0xff]
      %v547 = vld [vmem:[%s243 + $0x690] sm:$0xff]
      %v548 = vld [vmem:[%s243 + $0x698] sm:$0xff]
      %v549 = vld [vmem:[%s243 + $0x6a0] sm:$0xff]
      %v550 = vld [vmem:[%s243 + $0x6a8] sm:$0xff]
      %v551 = vld [vmem:[%s243 + $0x6b0] sm:$0xff]
      %v552 = vld [vmem:[%s243 + $0x6b8] sm:$0xff]
      %v553 = vld [vmem:[%s243 + $0x6c0] sm:$0xff]
      %v554 = vld [vmem:[%s243 + $0x6c8] sm:$0xff]
      %v555 = vld [vmem:[%s243 + $0x6d0] sm:$0xff]
      %v556 = vld [vmem:[%s243 + $0x6d8] sm:$0xff]
      %v557 = vld [vmem:[%s243 + $0x6e0] sm:$0xff]
      %v558 = vld [vmem:[%s243 + $0x6e8] sm:$0xff]
      %v559 = vld [vmem:[%s243 + $0x6f0] sm:$0xff]
      %v560 = vld [vmem:[%s243 + $0x6f8] sm:$0xff]
      %v561 = vld [vmem:[%s253] sm:$0xf]
      %v562 = vld [vmem:[%s253 + $0x4] sm:$0xf]
      %v563 = vld [vmem:[%s253 + $0x8] sm:$0xf]
      %v564 = vld [vmem:[%s253 + $0xc] sm:$0xf]
      %v565 = vld [vmem:[%s253 + $0x10] sm:$0xf]
      %v566 = vld [vmem:[%s253 + $0x14] sm:$0xf]
      %v567 = vld [vmem:[%s253 + $0x18] sm:$0xf]
      %v568 = vld [vmem:[%s253 + $0x1c] sm:$0xf]
      %v569 = vld [vmem:[%s253 + $0x20] sm:$0xf]
      %v570 = vld [vmem:[%s253 + $0x24] sm:$0xf]
      %v571 = vld [vmem:[%s253 + $0x28] sm:$0xf]
      %v572 = vld [vmem:[%s253 + $0x2c] sm:$0xf]
      %v573 = vld [vmem:[%s253 + $0x30] sm:$0xf]
      %v574 = vld [vmem:[%s253 + $0x34] sm:$0xf]
      %v575 = vld [vmem:[%s253 + $0x38] sm:$0xf]
      %v576 = vld [vmem:[%s253 + $0x3c] sm:$0xf]
      %v577 = vld [vmem:[%s253 + $0x40] sm:$0xf]
      %v578 = vld [vmem:[%s253 + $0x44] sm:$0xf]
      %v579 = vld [vmem:[%s253 + $0x48] sm:$0xf]
      %v580 = vld [vmem:[%s253 + $0x4c] sm:$0xf]
      %v581 = vld [vmem:[%s253 + $0x50] sm:$0xf]
      %v582 = vld [vmem:[%s253 + $0x54] sm:$0xf]
      %v583 = vld [vmem:[%s253 + $0x58] sm:$0xf]
      %v584 = vld [vmem:[%s253 + $0x5c] sm:$0xf]
      %v585 = vld [vmem:[%s253 + $0x60] sm:$0xf]
      %v586 = vld [vmem:[%s253 + $0x64] sm:$0xf]
      %v587 = vld [vmem:[%s253 + $0x68] sm:$0xf]
      %v588 = vld [vmem:[%s253 + $0x6c] sm:$0xf]
      %v589 = vld [vmem:[%s253 + $0x70] sm:$0xf]
      %v590 = vld [vmem:[%s253 + $0x74] sm:$0xf]
      %v591 = vld [vmem:[%s253 + $0x78] sm:$0xf]
      %v592 = vld [vmem:[%s253 + $0x7c] sm:$0xf]
      %v593 = vld [vmem:[%s253 + $0x80] sm:$0xf]
      %v594 = vld [vmem:[%s253 + $0x84] sm:$0xf]
      %v595 = vld [vmem:[%s253 + $0x88] sm:$0xf]
      %v596 = vld [vmem:[%s253 + $0x8c] sm:$0xf]
      %v597 = vld [vmem:[%s253 + $0x90] sm:$0xf]
      %v598 = vld [vmem:[%s253 + $0x94] sm:$0xf]
      %v599 = vld [vmem:[%s253 + $0x98] sm:$0xf]
      %v600 = vld [vmem:[%s253 + $0x9c] sm:$0xf]
      %v601 = vld [vmem:[%s253 + $0xa0] sm:$0xf]
      %v602 = vld [vmem:[%s253 + $0xa4] sm:$0xf]
      %v603 = vld [vmem:[%s253 + $0xa8] sm:$0xf]
      %v604 = vld [vmem:[%s253 + $0xac] sm:$0xf]
      %v605 = vld [vmem:[%s253 + $0xb0] sm:$0xf]
      %v606 = vld [vmem:[%s253 + $0xb4] sm:$0xf]
      %v607 = vld [vmem:[%s253 + $0xb8] sm:$0xf]
      %v608 = vld [vmem:[%s253 + $0xbc] sm:$0xf]
      %v609 = vld [vmem:[%s253 + $0xc0] sm:$0xf]
      %v610 = vld [vmem:[%s253 + $0xc4] sm:$0xf]
      %v611 = vld [vmem:[%s253 + $0xc8] sm:$0xf]
      %v612 = vld [vmem:[%s253 + $0xcc] sm:$0xf]
      %v613 = vld [vmem:[%s253 + $0xd0] sm:$0xf]
      %v614 = vld [vmem:[%s253 + $0xd4] sm:$0xf]
      %v615 = vld [vmem:[%s253 + $0xd8] sm:$0xf]
      %v616 = vld [vmem:[%s253 + $0xdc] sm:$0xf]
      %v617 = vld [vmem:[%s253 + $0xe0] sm:$0xf]
      %v618 = vld [vmem:[%s253 + $0xe4] sm:$0xf]
      %v619 = vld [vmem:[%s253 + $0xe8] sm:$0xf]
      %v620 = vld [vmem:[%s253 + $0xec] sm:$0xf]
      %v621 = vld [vmem:[%s253 + $0xf0] sm:$0xf]
      %v622 = vld [vmem:[%s253 + $0xf4] sm:$0xf]
      %v623 = vld [vmem:[%s253 + $0xf8] sm:$0xf]
      %v624 = vld [vmem:[%s253 + $0xfc] sm:$0xf]
      %v625 = vld [vmem:[%s253 + $0x100] sm:$0xf]
      %v626 = vld [vmem:[%s253 + $0x104] sm:$0xf]
      %v627 = vld [vmem:[%s253 + $0x108] sm:$0xf]
      %v628 = vld [vmem:[%s253 + $0x10c] sm:$0xf]
      %v629 = vld [vmem:[%s253 + $0x110] sm:$0xf]
      %v630 = vld [vmem:[%s253 + $0x114] sm:$0xf]
      %v631 = vld [vmem:[%s253 + $0x118] sm:$0xf]
      %v632 = vld [vmem:[%s253 + $0x11c] sm:$0xf]
      %v633 = vld [vmem:[%s253 + $0x120] sm:$0xf]
      %v634 = vld [vmem:[%s253 + $0x124] sm:$0xf]
      %v635 = vld [vmem:[%s253 + $0x128] sm:$0xf]
      %v636 = vld [vmem:[%s253 + $0x12c] sm:$0xf]
      %v637 = vld [vmem:[%s253 + $0x130] sm:$0xf]
      %v638 = vld [vmem:[%s253 + $0x134] sm:$0xf]
      %v639 = vld [vmem:[%s253 + $0x138] sm:$0xf]
      %v640 = vld [vmem:[%s253 + $0x13c] sm:$0xf]
      %v641 = vld [vmem:[%s253 + $0x140] sm:$0xf]
      %v642 = vld [vmem:[%s253 + $0x144] sm:$0xf]
      %v643 = vld [vmem:[%s253 + $0x148] sm:$0xf]
      %v644 = vld [vmem:[%s253 + $0x14c] sm:$0xf]
      %v645 = vld [vmem:[%s253 + $0x150] sm:$0xf]
      %v646 = vld [vmem:[%s253 + $0x154] sm:$0xf]
      %v647 = vld [vmem:[%s253 + $0x158] sm:$0xf]
      %v648 = vld [vmem:[%s253 + $0x15c] sm:$0xf]
      %v649 = vld [vmem:[%s253 + $0x160] sm:$0xf]
      %v650 = vld [vmem:[%s253 + $0x164] sm:$0xf]
      %v651 = vld [vmem:[%s253 + $0x168] sm:$0xf]
      %v652 = vld [vmem:[%s253 + $0x16c] sm:$0xf]
      %v653 = vld [vmem:[%s253 + $0x170] sm:$0xf]
      %v654 = vld [vmem:[%s253 + $0x174] sm:$0xf]
      %v655 = vld [vmem:[%s253 + $0x178] sm:$0xf]
      %v656 = vld [vmem:[%s253 + $0x17c] sm:$0xf]
      %v657 = vld [vmem:[%s253 + $0x180] sm:$0xf]
      %v658 = vld [vmem:[%s253 + $0x184] sm:$0xf]
      %v659 = vld [vmem:[%s253 + $0x188] sm:$0xf]
      %v660 = vld [vmem:[%s253 + $0x18c] sm:$0xf]
      %v661 = vld [vmem:[%s253 + $0x190] sm:$0xf]
      %v662 = vld [vmem:[%s253 + $0x194] sm:$0xf]
      %v663 = vld [vmem:[%s253 + $0x198] sm:$0xf]
      %v664 = vld [vmem:[%s253 + $0x19c] sm:$0xf]
      %v665 = vld [vmem:[%s253 + $0x1a0] sm:$0xf]
      %v666 = vld [vmem:[%s253 + $0x1a4] sm:$0xf]
      %v667 = vld [vmem:[%s253 + $0x1a8] sm:$0xf]
      %v668 = vld [vmem:[%s253 + $0x1ac] sm:$0xf]
      %v669 = vld [vmem:[%s253 + $0x1b0] sm:$0xf]
      %v670 = vld [vmem:[%s253 + $0x1b4] sm:$0xf]
      %v671 = vld [vmem:[%s253 + $0x1b8] sm:$0xf]
      %v672 = vld [vmem:[%s253 + $0x1bc] sm:$0xf]
      %v673 = vld [vmem:[%s253 + $0x1c0] sm:$0xf]
      %v674 = vld [vmem:[%s253 + $0x1c4] sm:$0xf]
      %v675 = vld [vmem:[%s253 + $0x1c8] sm:$0xf]
      %v676 = vld [vmem:[%s253 + $0x1cc] sm:$0xf]
      %v677 = vld [vmem:[%s253 + $0x1d0] sm:$0xf]
      %v678 = vld [vmem:[%s253 + $0x1d4] sm:$0xf]
      %v679 = vld [vmem:[%s253 + $0x1d8] sm:$0xf]
      %v680 = vld [vmem:[%s253 + $0x1dc] sm:$0xf]
      %v681 = vld [vmem:[%s253 + $0x1e0] sm:$0xf]
      %v682 = vld [vmem:[%s253 + $0x1e4] sm:$0xf]
      %v683 = vld [vmem:[%s253 + $0x1e8] sm:$0xf]
      %v684 = vld [vmem:[%s253 + $0x1ec] sm:$0xf]
      %v685 = vld [vmem:[%s253 + $0x1f0] sm:$0xf]
      %v686 = vld [vmem:[%s253 + $0x1f4] sm:$0xf]
      %v687 = vld [vmem:[%s253 + $0x1f8] sm:$0xf]
      %v688 = vld [vmem:[%s253 + $0x1fc] sm:$0xf]
      %v689 = vld [vmem:[%s253 + $0x200] sm:$0xf]
      %v690 = vld [vmem:[%s253 + $0x204] sm:$0xf]
      %v691 = vld [vmem:[%s253 + $0x208] sm:$0xf]
      %v692 = vld [vmem:[%s253 + $0x20c] sm:$0xf]
      %v693 = vld [vmem:[%s253 + $0x210] sm:$0xf]
      %v694 = vld [vmem:[%s253 + $0x214] sm:$0xf]
      %v695 = vld [vmem:[%s253 + $0x218] sm:$0xf]
      %v696 = vld [vmem:[%s253 + $0x21c] sm:$0xf]
      %v697 = vld [vmem:[%s253 + $0x220] sm:$0xf]
      %v698 = vld [vmem:[%s253 + $0x224] sm:$0xf]
      %v699 = vld [vmem:[%s253 + $0x228] sm:$0xf]
      %v700 = vld [vmem:[%s253 + $0x22c] sm:$0xf]
      %v701 = vld [vmem:[%s253 + $0x230] sm:$0xf]
      %v702 = vld [vmem:[%s253 + $0x234] sm:$0xf]
      %v703 = vld [vmem:[%s253 + $0x238] sm:$0xf]
      %v704 = vld [vmem:[%s253 + $0x23c] sm:$0xf]
      %v705 = vld [vmem:[%s253 + $0x240] sm:$0xf]
      %v706 = vld [vmem:[%s253 + $0x244] sm:$0xf]
      %v707 = vld [vmem:[%s253 + $0x248] sm:$0xf]
      %v708 = vld [vmem:[%s253 + $0x24c] sm:$0xf]
      %v709 = vld [vmem:[%s253 + $0x250] sm:$0xf]
      %v710 = vld [vmem:[%s253 + $0x254] sm:$0xf]
      %v711 = vld [vmem:[%s253 + $0x258] sm:$0xf]
      %v712 = vld [vmem:[%s253 + $0x25c] sm:$0xf]
      %v713 = vld [vmem:[%s253 + $0x260] sm:$0xf]
      %v714 = vld [vmem:[%s253 + $0x264] sm:$0xf]
      %v715 = vld [vmem:[%s253 + $0x268] sm:$0xf]
      %v716 = vld [vmem:[%s253 + $0x26c] sm:$0xf]
      %v717 = vld [vmem:[%s253 + $0x270] sm:$0xf]
      %v718 = vld [vmem:[%s253 + $0x274] sm:$0xf]
      %v719 = vld [vmem:[%s253 + $0x278] sm:$0xf]
      %v720 = vld [vmem:[%s253 + $0x27c] sm:$0xf]
      %v721 = vld [vmem:[%s253 + $0x280] sm:$0xf]
      %v722 = vld [vmem:[%s253 + $0x284] sm:$0xf]
      %v723 = vld [vmem:[%s253 + $0x288] sm:$0xf]
      %v724 = vld [vmem:[%s253 + $0x28c] sm:$0xf]
      %v725 = vld [vmem:[%s253 + $0x290] sm:$0xf]
      %v726 = vld [vmem:[%s253 + $0x294] sm:$0xf]
      %v727 = vld [vmem:[%s253 + $0x298] sm:$0xf]
      %v728 = vld [vmem:[%s253 + $0x29c] sm:$0xf]
      %v729 = vld [vmem:[%s253 + $0x2a0] sm:$0xf]
      %v730 = vld [vmem:[%s253 + $0x2a4] sm:$0xf]
      %v731 = vld [vmem:[%s253 + $0x2a8] sm:$0xf]
      %v732 = vld [vmem:[%s253 + $0x2ac] sm:$0xf]
      %v733 = vld [vmem:[%s253 + $0x2b0] sm:$0xf]
      %v734 = vld [vmem:[%s253 + $0x2b4] sm:$0xf]
      %v735 = vld [vmem:[%s253 + $0x2b8] sm:$0xf]
      %v736 = vld [vmem:[%s253 + $0x2bc] sm:$0xf]
      %v737 = vld [vmem:[%s253 + $0x2c0] sm:$0xf]
      %v738 = vld [vmem:[%s253 + $0x2c4] sm:$0xf]
      %v739 = vld [vmem:[%s253 + $0x2c8] sm:$0xf]
      %v740 = vld [vmem:[%s253 + $0x2cc] sm:$0xf]
      %v741 = vld [vmem:[%s253 + $0x2d0] sm:$0xf]
      %v742 = vld [vmem:[%s253 + $0x2d4] sm:$0xf]
      %v743 = vld [vmem:[%s253 + $0x2d8] sm:$0xf]
      %v744 = vld [vmem:[%s253 + $0x2dc] sm:$0xf]
      %v745 = vld [vmem:[%s253 + $0x2e0] sm:$0xf]
      %v746 = vld [vmem:[%s253 + $0x2e4] sm:$0xf]
      %v747 = vld [vmem:[%s253 + $0x2e8] sm:$0xf]
      %v748 = vld [vmem:[%s253 + $0x2ec] sm:$0xf]
      %v749 = vld [vmem:[%s253 + $0x2f0] sm:$0xf]
      %v750 = vld [vmem:[%s253 + $0x2f4] sm:$0xf]
      %v751 = vld [vmem:[%s253 + $0x2f8] sm:$0xf]
      %v752 = vld [vmem:[%s253 + $0x2fc] sm:$0xf]
      %v753 = vld [vmem:[%s253 + $0x300] sm:$0xf]
      %v754 = vld [vmem:[%s253 + $0x304] sm:$0xf]
      %v755 = vld [vmem:[%s253 + $0x308] sm:$0xf]
      %v756 = vld [vmem:[%s253 + $0x30c] sm:$0xf]
      %v757 = vld [vmem:[%s253 + $0x310] sm:$0xf]
      %v758 = vld [vmem:[%s253 + $0x314] sm:$0xf]
      %v759 = vld [vmem:[%s253 + $0x318] sm:$0xf]
      %v760 = vld [vmem:[%s253 + $0x31c] sm:$0xf]
      %v761 = vld [vmem:[%s253 + $0x320] sm:$0xf]
      %v762 = vld [vmem:[%s253 + $0x324] sm:$0xf]
      %v763 = vld [vmem:[%s253 + $0x328] sm:$0xf]
      %v764 = vld [vmem:[%s253 + $0x32c] sm:$0xf]
      %v765 = vld [vmem:[%s253 + $0x330] sm:$0xf]
      %v766 = vld [vmem:[%s253 + $0x334] sm:$0xf]
      %v767 = vld [vmem:[%s253 + $0x338] sm:$0xf]
      %v768 = vld [vmem:[%s253 + $0x33c] sm:$0xf]
      %v769 = vld [vmem:[%s253 + $0x340] sm:$0xf]
      %v770 = vld [vmem:[%s253 + $0x344] sm:$0xf]
      %v771 = vld [vmem:[%s253 + $0x348] sm:$0xf]
      %v772 = vld [vmem:[%s253 + $0x34c] sm:$0xf]
      %v773 = vld [vmem:[%s253 + $0x350] sm:$0xf]
      %v774 = vld [vmem:[%s253 + $0x354] sm:$0xf]
      %v775 = vld [vmem:[%s253 + $0x358] sm:$0xf]
      %v776 = vld [vmem:[%s253 + $0x35c] sm:$0xf]
      %v777 = vld [vmem:[%s253 + $0x360] sm:$0xf]
      %v778 = vld [vmem:[%s253 + $0x364] sm:$0xf]
      %v779 = vld [vmem:[%s253 + $0x368] sm:$0xf]
      %v780 = vld [vmem:[%s253 + $0x36c] sm:$0xf]
      %v781 = vld [vmem:[%s253 + $0x370] sm:$0xf]
      %v782 = vld [vmem:[%s253 + $0x374] sm:$0xf]
      %v783 = vld [vmem:[%s253 + $0x378] sm:$0xf]
      %v784 = vld [vmem:[%s253 + $0x37c] sm:$0xf]
      %v1009 = vunpack.c.l.b16 %v337
      %v1010 = vunpack.c.h.b16 %v337
      %v1011 = vunpack.c.l.b16 %v338
      %v1012 = vunpack.c.h.b16 %v338
      %v1013 = vunpack.c.l.b16 %v339
      %v1014 = vunpack.c.h.b16 %v339
      %v1015 = vunpack.c.l.b16 %v340
      %v1016 = vunpack.c.h.b16 %v340
      %v1017 = vunpack.c.l.b16 %v341
      %v1018 = vunpack.c.h.b16 %v341
      %v1019 = vunpack.c.l.b16 %v342
      %v1020 = vunpack.c.h.b16 %v342
      %v1021 = vunpack.c.l.b16 %v343
      %v1022 = vunpack.c.h.b16 %v343
      %v1023 = vunpack.c.l.b16 %v344
      %v1024 = vunpack.c.h.b16 %v344
      %v1025 = vunpack.c.l.b16 %v345
      %v1026 = vunpack.c.h.b16 %v345
      %v1027 = vunpack.c.l.b16 %v346
      %v1028 = vunpack.c.h.b16 %v346
      %v1029 = vunpack.c.l.b16 %v347
      %v1030 = vunpack.c.h.b16 %v347
      %v1031 = vunpack.c.l.b16 %v348
      %v1032 = vunpack.c.h.b16 %v348
      %v1033 = vunpack.c.l.b16 %v349
      %v1034 = vunpack.c.h.b16 %v349
      %v1035 = vunpack.c.l.b16 %v350
      %v1036 = vunpack.c.h.b16 %v350
      %v1037 = vunpack.c.l.b16 %v351
      %v1038 = vunpack.c.h.b16 %v351
      %v1039 = vunpack.c.l.b16 %v352
      %v1040 = vunpack.c.h.b16 %v352
      %v1041 = vunpack.c.l.b16 %v353
      %v1042 = vunpack.c.h.b16 %v353
      %v1043 = vunpack.c.l.b16 %v354
      %v1044 = vunpack.c.h.b16 %v354
      %v1045 = vunpack.c.l.b16 %v355
      %v1046 = vunpack.c.h.b16 %v355
      %v1047 = vunpack.c.l.b16 %v356
      %v1048 = vunpack.c.h.b16 %v356
      %v1049 = vunpack.c.l.b16 %v357
      %v1050 = vunpack.c.h.b16 %v357
      %v1051 = vunpack.c.l.b16 %v358
      %v1052 = vunpack.c.h.b16 %v358
      %v1053 = vunpack.c.l.b16 %v359
      %v1054 = vunpack.c.h.b16 %v359
      %v1055 = vunpack.c.l.b16 %v360
      %v1056 = vunpack.c.h.b16 %v360
      %v1057 = vunpack.c.l.b16 %v361
      %v1058 = vunpack.c.h.b16 %v361
      %v1059 = vunpack.c.l.b16 %v362
      %v1060 = vunpack.c.h.b16 %v362
      %v1061 = vunpack.c.l.b16 %v363
      %v1062 = vunpack.c.h.b16 %v363
      %v1063 = vunpack.c.l.b16 %v364
      %v1064 = vunpack.c.h.b16 %v364
      %v1065 = vunpack.c.l.b16 %v365
      %v1066 = vunpack.c.h.b16 %v365
      %v1067 = vunpack.c.l.b16 %v366
      %v1068 = vunpack.c.h.b16 %v366
      %v1069 = vunpack.c.l.b16 %v367
      %v1070 = vunpack.c.h.b16 %v367
      %v1071 = vunpack.c.l.b16 %v368
      %v1072 = vunpack.c.h.b16 %v368
      %v1073 = vunpack.c.l.b16 %v369
      %v1074 = vunpack.c.h.b16 %v369
      %v1075 = vunpack.c.l.b16 %v370
      %v1076 = vunpack.c.h.b16 %v370
      %v1077 = vunpack.c.l.b16 %v371
      %v1078 = vunpack.c.h.b16 %v371
      %v1079 = vunpack.c.l.b16 %v372
      %v1080 = vunpack.c.h.b16 %v372
      %v1081 = vunpack.c.l.b16 %v373
      %v1082 = vunpack.c.h.b16 %v373
      %v1083 = vunpack.c.l.b16 %v374
      %v1084 = vunpack.c.h.b16 %v374
      %v1085 = vunpack.c.l.b16 %v375
      %v1086 = vunpack.c.h.b16 %v375
      %v1087 = vunpack.c.l.b16 %v376
      %v1088 = vunpack.c.h.b16 %v376
      %v1089 = vunpack.c.l.b16 %v377
      %v1090 = vunpack.c.h.b16 %v377
      %v1091 = vunpack.c.l.b16 %v378
      %v1092 = vunpack.c.h.b16 %v378
      %v1093 = vunpack.c.l.b16 %v379
      %v1094 = vunpack.c.h.b16 %v379
      %v1095 = vunpack.c.l.b16 %v380
      %v1096 = vunpack.c.h.b16 %v380
      %v1097 = vunpack.c.l.b16 %v381
      %v1098 = vunpack.c.h.b16 %v381
      %v1099 = vunpack.c.l.b16 %v382
      %v1100 = vunpack.c.h.b16 %v382
      %v1101 = vunpack.c.l.b16 %v383
      %v1102 = vunpack.c.h.b16 %v383
      %v1103 = vunpack.c.l.b16 %v384
      %v1104 = vunpack.c.h.b16 %v384
      %v1105 = vunpack.c.l.b16 %v385
      %v1106 = vunpack.c.h.b16 %v385
      %v1107 = vunpack.c.l.b16 %v386
      %v1108 = vunpack.c.h.b16 %v386
      %v1109 = vunpack.c.l.b16 %v387
      %v1110 = vunpack.c.h.b16 %v387
      %v1111 = vunpack.c.l.b16 %v388
      %v1112 = vunpack.c.h.b16 %v388
      %v1113 = vunpack.c.l.b16 %v389
      %v1114 = vunpack.c.h.b16 %v389
      %v1115 = vunpack.c.l.b16 %v390
      %v1116 = vunpack.c.h.b16 %v390
      %v1117 = vunpack.c.l.b16 %v391
      %v1118 = vunpack.c.h.b16 %v391
      %v1119 = vunpack.c.l.b16 %v392
      %v1120 = vunpack.c.h.b16 %v392
      %v1121 = vunpack.c.l.b16 %v393
      %v1122 = vunpack.c.h.b16 %v393
      %v1123 = vunpack.c.l.b16 %v394
      %v1124 = vunpack.c.h.b16 %v394
      %v1125 = vunpack.c.l.b16 %v395
      %v1126 = vunpack.c.h.b16 %v395
      %v1127 = vunpack.c.l.b16 %v396
      %v1128 = vunpack.c.h.b16 %v396
      %v1129 = vunpack.c.l.b16 %v397
      %v1130 = vunpack.c.h.b16 %v397
      %v1131 = vunpack.c.l.b16 %v398
      %v1132 = vunpack.c.h.b16 %v398
      %v1133 = vunpack.c.l.b16 %v399
      %v1134 = vunpack.c.h.b16 %v399
      %v1135 = vunpack.c.l.b16 %v400
      %v1136 = vunpack.c.h.b16 %v400
      %v1137 = vunpack.c.l.b16 %v401
      %v1138 = vunpack.c.h.b16 %v401
      %v1139 = vunpack.c.l.b16 %v402
      %v1140 = vunpack.c.h.b16 %v402
      %v1141 = vunpack.c.l.b16 %v403
      %v1142 = vunpack.c.h.b16 %v403
      %v1143 = vunpack.c.l.b16 %v404
      %v1144 = vunpack.c.h.b16 %v404
      %v1145 = vunpack.c.l.b16 %v405
      %v1146 = vunpack.c.h.b16 %v405
      %v1147 = vunpack.c.l.b16 %v406
      %v1148 = vunpack.c.h.b16 %v406
      %v1149 = vunpack.c.l.b16 %v407
      %v1150 = vunpack.c.h.b16 %v407
      %v1151 = vunpack.c.l.b16 %v408
      %v1152 = vunpack.c.h.b16 %v408
      %v1153 = vunpack.c.l.b16 %v409
      %v1154 = vunpack.c.h.b16 %v409
      %v1155 = vunpack.c.l.b16 %v410
      %v1156 = vunpack.c.h.b16 %v410
      %v1157 = vunpack.c.l.b16 %v411
      %v1158 = vunpack.c.h.b16 %v411
      %v1159 = vunpack.c.l.b16 %v412
      %v1160 = vunpack.c.h.b16 %v412
      %v1161 = vunpack.c.l.b16 %v413
      %v1162 = vunpack.c.h.b16 %v413
      %v1163 = vunpack.c.l.b16 %v414
      %v1164 = vunpack.c.h.b16 %v414
      %v1165 = vunpack.c.l.b16 %v415
      %v1166 = vunpack.c.h.b16 %v415
      %v1167 = vunpack.c.l.b16 %v416
      %v1168 = vunpack.c.h.b16 %v416
      %v1169 = vunpack.c.l.b16 %v417
      %v1170 = vunpack.c.h.b16 %v417
      %v1171 = vunpack.c.l.b16 %v418
      %v1172 = vunpack.c.h.b16 %v418
      %v1173 = vunpack.c.l.b16 %v419
      %v1174 = vunpack.c.h.b16 %v419
      %v1175 = vunpack.c.l.b16 %v420
      %v1176 = vunpack.c.h.b16 %v420
      %v1177 = vunpack.c.l.b16 %v421
      %v1178 = vunpack.c.h.b16 %v421
      %v1179 = vunpack.c.l.b16 %v422
      %v1180 = vunpack.c.h.b16 %v422
      %v1181 = vunpack.c.l.b16 %v423
      %v1182 = vunpack.c.h.b16 %v423
      %v1183 = vunpack.c.l.b16 %v424
      %v1184 = vunpack.c.h.b16 %v424
      %v1185 = vunpack.c.l.b16 %v425
      %v1186 = vunpack.c.h.b16 %v425
      %v1187 = vunpack.c.l.b16 %v426
      %v1188 = vunpack.c.h.b16 %v426
      %v1189 = vunpack.c.l.b16 %v427
      %v1190 = vunpack.c.h.b16 %v427
      %v1191 = vunpack.c.l.b16 %v428
      %v1192 = vunpack.c.h.b16 %v428
      %v1193 = vunpack.c.l.b16 %v429
      %v1194 = vunpack.c.h.b16 %v429
      %v1195 = vunpack.c.l.b16 %v430
      %v1196 = vunpack.c.h.b16 %v430
      %v1197 = vunpack.c.l.b16 %v431
      %v1198 = vunpack.c.h.b16 %v431
      %v1199 = vunpack.c.l.b16 %v432
      %v1200 = vunpack.c.h.b16 %v432
      %v1201 = vunpack.c.l.b16 %v433
      %v1202 = vunpack.c.h.b16 %v433
      %v1203 = vunpack.c.l.b16 %v434
      %v1204 = vunpack.c.h.b16 %v434
      %v1205 = vunpack.c.l.b16 %v435
      %v1206 = vunpack.c.h.b16 %v435
      %v1207 = vunpack.c.l.b16 %v436
      %v1208 = vunpack.c.h.b16 %v436
      %v1209 = vunpack.c.l.b16 %v437
      %v1210 = vunpack.c.h.b16 %v437
      %v1211 = vunpack.c.l.b16 %v438
      %v1212 = vunpack.c.h.b16 %v438
      %v1213 = vunpack.c.l.b16 %v439
      %v1214 = vunpack.c.h.b16 %v439
      %v1215 = vunpack.c.l.b16 %v440
      %v1216 = vunpack.c.h.b16 %v440
      %v1217 = vunpack.c.l.b16 %v441
      %v1218 = vunpack.c.h.b16 %v441
      %v1219 = vunpack.c.l.b16 %v442
      %v1220 = vunpack.c.h.b16 %v442
      %v1221 = vunpack.c.l.b16 %v443
      %v1222 = vunpack.c.h.b16 %v443
      %v1223 = vunpack.c.l.b16 %v444
      %v1224 = vunpack.c.h.b16 %v444
      %v1225 = vunpack.c.l.b16 %v445
      %v1226 = vunpack.c.h.b16 %v445
      %v1227 = vunpack.c.l.b16 %v446
      %v1228 = vunpack.c.h.b16 %v446
      %v1229 = vunpack.c.l.b16 %v447
      %v1230 = vunpack.c.h.b16 %v447
      %v1231 = vunpack.c.l.b16 %v448
      %v1232 = vunpack.c.h.b16 %v448
      %v1233 = vunpack.c.l.b16 %v449
      %v1234 = vunpack.c.h.b16 %v449
      %v1235 = vunpack.c.l.b16 %v450
      %v1236 = vunpack.c.h.b16 %v450
      %v1237 = vunpack.c.l.b16 %v451
      %v1238 = vunpack.c.h.b16 %v451
      %v1239 = vunpack.c.l.b16 %v452
      %v1240 = vunpack.c.h.b16 %v452
      %v1241 = vunpack.c.l.b16 %v453
      %v1242 = vunpack.c.h.b16 %v453
      %v1243 = vunpack.c.l.b16 %v454
      %v1244 = vunpack.c.h.b16 %v454
      %v1245 = vunpack.c.l.b16 %v455
      %v1246 = vunpack.c.h.b16 %v455
      %v1247 = vunpack.c.l.b16 %v456
      %v1248 = vunpack.c.h.b16 %v456
      %v1249 = vunpack.c.l.b16 %v457
      %v1250 = vunpack.c.h.b16 %v457
      %v1251 = vunpack.c.l.b16 %v458
      %v1252 = vunpack.c.h.b16 %v458
      %v1253 = vunpack.c.l.b16 %v459
      %v1254 = vunpack.c.h.b16 %v459
      %v1255 = vunpack.c.l.b16 %v460
      %v1256 = vunpack.c.h.b16 %v460
      %v1257 = vunpack.c.l.b16 %v461
      %v1258 = vunpack.c.h.b16 %v461
      %v1259 = vunpack.c.l.b16 %v462
      %v1260 = vunpack.c.h.b16 %v462
      %v1261 = vunpack.c.l.b16 %v463
      %v1262 = vunpack.c.h.b16 %v463
      %v1263 = vunpack.c.l.b16 %v464
      %v1264 = vunpack.c.h.b16 %v464
      %v1265 = vunpack.c.l.b16 %v465
      %v1266 = vunpack.c.h.b16 %v465
      %v1267 = vunpack.c.l.b16 %v466
      %v1268 = vunpack.c.h.b16 %v466
      %v1269 = vunpack.c.l.b16 %v467
      %v1270 = vunpack.c.h.b16 %v467
      %v1271 = vunpack.c.l.b16 %v468
      %v1272 = vunpack.c.h.b16 %v468
      %v1273 = vunpack.c.l.b16 %v469
      %v1274 = vunpack.c.h.b16 %v469
      %v1275 = vunpack.c.l.b16 %v470
      %v1276 = vunpack.c.h.b16 %v470
      %v1277 = vunpack.c.l.b16 %v471
      %v1278 = vunpack.c.h.b16 %v471
      %v1279 = vunpack.c.l.b16 %v472
      %v1280 = vunpack.c.h.b16 %v472
      %v1281 = vunpack.c.l.b16 %v473
      %v1282 = vunpack.c.h.b16 %v473
      %v1283 = vunpack.c.l.b16 %v474
      %v1284 = vunpack.c.h.b16 %v474
      %v1285 = vunpack.c.l.b16 %v475
      %v1286 = vunpack.c.h.b16 %v475
      %v1287 = vunpack.c.l.b16 %v476
      %v1288 = vunpack.c.h.b16 %v476
      %v1289 = vunpack.c.l.b16 %v477
      %v1290 = vunpack.c.h.b16 %v477
      %v1291 = vunpack.c.l.b16 %v478
      %v1292 = vunpack.c.h.b16 %v478
      %v1293 = vunpack.c.l.b16 %v479
      %v1294 = vunpack.c.h.b16 %v479
      %v1295 = vunpack.c.l.b16 %v480
      %v1296 = vunpack.c.h.b16 %v480
      %v1297 = vunpack.c.l.b16 %v481
      %v1298 = vunpack.c.h.b16 %v481
      %v1299 = vunpack.c.l.b16 %v482
      %v1300 = vunpack.c.h.b16 %v482
      %v1301 = vunpack.c.l.b16 %v483
      %v1302 = vunpack.c.h.b16 %v483
      %v1303 = vunpack.c.l.b16 %v484
      %v1304 = vunpack.c.h.b16 %v484
      %v1305 = vunpack.c.l.b16 %v485
      %v1306 = vunpack.c.h.b16 %v485
      %v1307 = vunpack.c.l.b16 %v486
      %v1308 = vunpack.c.h.b16 %v486
      %v1309 = vunpack.c.l.b16 %v487
      %v1310 = vunpack.c.h.b16 %v487
      %v1311 = vunpack.c.l.b16 %v488
      %v1312 = vunpack.c.h.b16 %v488
      %v1313 = vunpack.c.l.b16 %v489
      %v1314 = vunpack.c.h.b16 %v489
      %v1315 = vunpack.c.l.b16 %v490
      %v1316 = vunpack.c.h.b16 %v490
      %v1317 = vunpack.c.l.b16 %v491
      %v1318 = vunpack.c.h.b16 %v491
      %v1319 = vunpack.c.l.b16 %v492
      %v1320 = vunpack.c.h.b16 %v492
      %v1321 = vunpack.c.l.b16 %v493
      %v1322 = vunpack.c.h.b16 %v493
      %v1323 = vunpack.c.l.b16 %v494
      %v1324 = vunpack.c.h.b16 %v494
      %v1325 = vunpack.c.l.b16 %v495
      %v1326 = vunpack.c.h.b16 %v495
      %v1327 = vunpack.c.l.b16 %v496
      %v1328 = vunpack.c.h.b16 %v496
      %v1329 = vunpack.c.l.b16 %v497
      %v1330 = vunpack.c.h.b16 %v497
      %v1331 = vunpack.c.l.b16 %v498
      %v1332 = vunpack.c.h.b16 %v498
      %v1333 = vunpack.c.l.b16 %v499
      %v1334 = vunpack.c.h.b16 %v499
      %v1335 = vunpack.c.l.b16 %v500
      %v1336 = vunpack.c.h.b16 %v500
      %v1337 = vunpack.c.l.b16 %v501
      %v1338 = vunpack.c.h.b16 %v501
      %v1339 = vunpack.c.l.b16 %v502
      %v1340 = vunpack.c.h.b16 %v502
      %v1341 = vunpack.c.l.b16 %v503
      %v1342 = vunpack.c.h.b16 %v503
      %v1343 = vunpack.c.l.b16 %v504
      %v1344 = vunpack.c.h.b16 %v504
      %v1345 = vunpack.c.l.b16 %v505
      %v1346 = vunpack.c.h.b16 %v505
      %v1347 = vunpack.c.l.b16 %v506
      %v1348 = vunpack.c.h.b16 %v506
      %v1349 = vunpack.c.l.b16 %v507
      %v1350 = vunpack.c.h.b16 %v507
      %v1351 = vunpack.c.l.b16 %v508
      %v1352 = vunpack.c.h.b16 %v508
      %v1353 = vunpack.c.l.b16 %v509
      %v1354 = vunpack.c.h.b16 %v509
      %v1355 = vunpack.c.l.b16 %v510
      %v1356 = vunpack.c.h.b16 %v510
      %v1357 = vunpack.c.l.b16 %v511
      %v1358 = vunpack.c.h.b16 %v511
      %v1359 = vunpack.c.l.b16 %v512
      %v1360 = vunpack.c.h.b16 %v512
      %v1361 = vunpack.c.l.b16 %v513
      %v1362 = vunpack.c.h.b16 %v513
      %v1363 = vunpack.c.l.b16 %v514
      %v1364 = vunpack.c.h.b16 %v514
      %v1365 = vunpack.c.l.b16 %v515
      %v1366 = vunpack.c.h.b16 %v515
      %v1367 = vunpack.c.l.b16 %v516
      %v1368 = vunpack.c.h.b16 %v516
      %v1369 = vunpack.c.l.b16 %v517
      %v1370 = vunpack.c.h.b16 %v517
      %v1371 = vunpack.c.l.b16 %v518
      %v1372 = vunpack.c.h.b16 %v518
      %v1373 = vunpack.c.l.b16 %v519
      %v1374 = vunpack.c.h.b16 %v519
      %v1375 = vunpack.c.l.b16 %v520
      %v1376 = vunpack.c.h.b16 %v520
      %v1377 = vunpack.c.l.b16 %v521
      %v1378 = vunpack.c.h.b16 %v521
      %v1379 = vunpack.c.l.b16 %v522
      %v1380 = vunpack.c.h.b16 %v522
      %v1381 = vunpack.c.l.b16 %v523
      %v1382 = vunpack.c.h.b16 %v523
      %v1383 = vunpack.c.l.b16 %v524
      %v1384 = vunpack.c.h.b16 %v524
      %v1385 = vunpack.c.l.b16 %v525
      %v1386 = vunpack.c.h.b16 %v525
      %v1387 = vunpack.c.l.b16 %v526
      %v1388 = vunpack.c.h.b16 %v526
      %v1389 = vunpack.c.l.b16 %v527
      %v1390 = vunpack.c.h.b16 %v527
      %v1391 = vunpack.c.l.b16 %v528
      %v1392 = vunpack.c.h.b16 %v528
      %v1393 = vunpack.c.l.b16 %v529
      %v1394 = vunpack.c.h.b16 %v529
      %v1395 = vunpack.c.l.b16 %v530
      %v1396 = vunpack.c.h.b16 %v530
      %v1397 = vunpack.c.l.b16 %v531
      %v1398 = vunpack.c.h.b16 %v531
      %v1399 = vunpack.c.l.b16 %v532
      %v1400 = vunpack.c.h.b16 %v532
      %v1401 = vunpack.c.l.b16 %v533
      %v1402 = vunpack.c.h.b16 %v533
      %v1403 = vunpack.c.l.b16 %v534
      %v1404 = vunpack.c.h.b16 %v534
      %v1405 = vunpack.c.l.b16 %v535
      %v1406 = vunpack.c.h.b16 %v535
      %v1407 = vunpack.c.l.b16 %v536
      %v1408 = vunpack.c.h.b16 %v536
      %v1409 = vunpack.c.l.b16 %v537
      %v1410 = vunpack.c.h.b16 %v537
      %v1411 = vunpack.c.l.b16 %v538
      %v1412 = vunpack.c.h.b16 %v538
      %v1413 = vunpack.c.l.b16 %v539
      %v1414 = vunpack.c.h.b16 %v539
      %v1415 = vunpack.c.l.b16 %v540
      %v1416 = vunpack.c.h.b16 %v540
      %v1417 = vunpack.c.l.b16 %v541
      %v1418 = vunpack.c.h.b16 %v541
      %v1419 = vunpack.c.l.b16 %v542
      %v1420 = vunpack.c.h.b16 %v542
      %v1421 = vunpack.c.l.b16 %v543
      %v1422 = vunpack.c.h.b16 %v543
      %v1423 = vunpack.c.l.b16 %v544
      %v1424 = vunpack.c.h.b16 %v544
      %v1425 = vunpack.c.l.b16 %v545
      %v1426 = vunpack.c.h.b16 %v545
      %v1427 = vunpack.c.l.b16 %v546
      %v1428 = vunpack.c.h.b16 %v546
      %v1429 = vunpack.c.l.b16 %v547
      %v1430 = vunpack.c.h.b16 %v547
      %v1431 = vunpack.c.l.b16 %v548
      %v1432 = vunpack.c.h.b16 %v548
      %v1433 = vunpack.c.l.b16 %v549
      %v1434 = vunpack.c.h.b16 %v549
      %v1435 = vunpack.c.l.b16 %v550
      %v1436 = vunpack.c.h.b16 %v550
      %v1437 = vunpack.c.l.b16 %v551
      %v1438 = vunpack.c.h.b16 %v551
      %v1439 = vunpack.c.l.b16 %v552
      %v1440 = vunpack.c.h.b16 %v552
      %v1441 = vunpack.c.l.b16 %v553
      %v1442 = vunpack.c.h.b16 %v553
      %v1443 = vunpack.c.l.b16 %v554
      %v1444 = vunpack.c.h.b16 %v554
      %v1445 = vunpack.c.l.b16 %v555
      %v1446 = vunpack.c.h.b16 %v555
      %v1447 = vunpack.c.l.b16 %v556
      %v1448 = vunpack.c.h.b16 %v556
      %v1449 = vunpack.c.l.b16 %v557
      %v1450 = vunpack.c.h.b16 %v557
      %v1451 = vunpack.c.l.b16 %v558
      %v1452 = vunpack.c.h.b16 %v558
      %v1453 = vunpack.c.l.b16 %v559
      %v1454 = vunpack.c.h.b16 %v559
      %v1455 = vunpack.c.l.b16 %v560
      %v1456 = vunpack.c.h.b16 %v560
      %v1457 = vpack.c.b16 %v1023, %v1009
      %v1458 = vpack.c.b16 %v1024, %v1010
      %v1459 = vpack.c.b16 %v1025, %v1011
      %v1460 = vpack.c.b16 %v1026, %v1012
      %v1461 = vpack.c.b16 %v1027, %v1013
      %v1462 = vpack.c.b16 %v1028, %v1014
      %v1463 = vpack.c.b16 %v1029, %v1015
      %v1464 = vpack.c.b16 %v1030, %v1016
      %v1465 = vpack.c.b16 %v1031, %v1017
      %v1466 = vpack.c.b16 %v1032, %v1018
      %v1467 = vpack.c.b16 %v1033, %v1019
      %v1468 = vpack.c.b16 %v1034, %v1020
      %v1469 = vpack.c.b16 %v1035, %v1021
      %v1470 = vpack.c.b16 %v1036, %v1022
      %v1471 = vpack.c.b16 %v1051, %v1037
      %v1472 = vpack.c.b16 %v1052, %v1038
      %v1473 = vpack.c.b16 %v1053, %v1039
      %v1474 = vpack.c.b16 %v1054, %v1040
      %v1475 = vpack.c.b16 %v1055, %v1041
      %v1476 = vpack.c.b16 %v1056, %v1042
      %v1477 = vpack.c.b16 %v1057, %v1043
      %v1478 = vpack.c.b16 %v1058, %v1044
      %v1479 = vpack.c.b16 %v1059, %v1045
      %v1480 = vpack.c.b16 %v1060, %v1046
      %v1481 = vpack.c.b16 %v1061, %v1047
      %v1482 = vpack.c.b16 %v1062, %v1048
      %v1483 = vpack.c.b16 %v1063, %v1049
      %v1484 = vpack.c.b16 %v1064, %v1050
      %v1485 = vpack.c.b16 %v1079, %v1065
      %v1486 = vpack.c.b16 %v1080, %v1066
      %v1487 = vpack.c.b16 %v1081, %v1067
      %v1488 = vpack.c.b16 %v1082, %v1068
      %v1489 = vpack.c.b16 %v1083, %v1069
      %v1490 = vpack.c.b16 %v1084, %v1070
      %v1491 = vpack.c.b16 %v1085, %v1071
      %v1492 = vpack.c.b16 %v1086, %v1072
      %v1493 = vpack.c.b16 %v1087, %v1073
      %v1494 = vpack.c.b16 %v1088, %v1074
      %v1495 = vpack.c.b16 %v1089, %v1075
      %v1496 = vpack.c.b16 %v1090, %v1076
      %v1497 = vpack.c.b16 %v1091, %v1077
      %v1498 = vpack.c.b16 %v1092, %v1078
      %v1499 = vpack.c.b16 %v1107, %v1093
      %v1500 = vpack.c.b16 %v1108, %v1094
      %v1501 = vpack.c.b16 %v1109, %v1095
      %v1502 = vpack.c.b16 %v1110, %v1096
      %v1503 = vpack.c.b16 %v1111, %v1097
      %v1504 = vpack.c.b16 %v1112, %v1098
      %v1505 = vpack.c.b16 %v1113, %v1099
      %v1506 = vpack.c.b16 %v1114, %v1100
      %v1507 = vpack.c.b16 %v1115, %v1101
      %v1508 = vpack.c.b16 %v1116, %v1102
      %v1509 = vpack.c.b16 %v1117, %v1103
      %v1510 = vpack.c.b16 %v1118, %v1104
      %v1511 = vpack.c.b16 %v1119, %v1105
      %v1512 = vpack.c.b16 %v1120, %v1106
      %v1513 = vpack.c.b16 %v1135, %v1121
      %v1514 = vpack.c.b16 %v1136, %v1122
      %v1515 = vpack.c.b16 %v1137, %v1123
      %v1516 = vpack.c.b16 %v1138, %v1124
      %v1517 = vpack.c.b16 %v1139, %v1125
      %v1518 = vpack.c.b16 %v1140, %v1126
      %v1519 = vpack.c.b16 %v1141, %v1127
      %v1520 = vpack.c.b16 %v1142, %v1128
      %v1521 = vpack.c.b16 %v1143, %v1129
      %v1522 = vpack.c.b16 %v1144, %v1130
      %v1523 = vpack.c.b16 %v1145, %v1131
      %v1524 = vpack.c.b16 %v1146, %v1132
      %v1525 = vpack.c.b16 %v1147, %v1133
      %v1526 = vpack.c.b16 %v1148, %v1134
      %v1527 = vpack.c.b16 %v1163, %v1149
      %v1528 = vpack.c.b16 %v1164, %v1150
      %v1529 = vpack.c.b16 %v1165, %v1151
      %v1530 = vpack.c.b16 %v1166, %v1152
      %v1531 = vpack.c.b16 %v1167, %v1153
      %v1532 = vpack.c.b16 %v1168, %v1154
      %v1533 = vpack.c.b16 %v1169, %v1155
      %v1534 = vpack.c.b16 %v1170, %v1156
      %v1535 = vpack.c.b16 %v1171, %v1157
      %v1536 = vpack.c.b16 %v1172, %v1158
      %v1537 = vpack.c.b16 %v1173, %v1159
      %v1538 = vpack.c.b16 %v1174, %v1160
      %v1539 = vpack.c.b16 %v1175, %v1161
      %v1540 = vpack.c.b16 %v1176, %v1162
      %v1541 = vpack.c.b16 %v1191, %v1177
      %v1542 = vpack.c.b16 %v1192, %v1178
      %v1543 = vpack.c.b16 %v1193, %v1179
      %v1544 = vpack.c.b16 %v1194, %v1180
      %v1545 = vpack.c.b16 %v1195, %v1181
      %v1546 = vpack.c.b16 %v1196, %v1182
      %v1547 = vpack.c.b16 %v1197, %v1183
      %v1548 = vpack.c.b16 %v1198, %v1184
      %v1549 = vpack.c.b16 %v1199, %v1185
      %v1550 = vpack.c.b16 %v1200, %v1186
      %v1551 = vpack.c.b16 %v1201, %v1187
      %v1552 = vpack.c.b16 %v1202, %v1188
      %v1553 = vpack.c.b16 %v1203, %v1189
      %v1554 = vpack.c.b16 %v1204, %v1190
      %v1555 = vpack.c.b16 %v1219, %v1205
      %v1556 = vpack.c.b16 %v1220, %v1206
      %v1557 = vpack.c.b16 %v1221, %v1207
      %v1558 = vpack.c.b16 %v1222, %v1208
      %v1559 = vpack.c.b16 %v1223, %v1209
      %v1560 = vpack.c.b16 %v1224, %v1210
      %v1561 = vpack.c.b16 %v1225, %v1211
      %v1562 = vpack.c.b16 %v1226, %v1212
      %v1563 = vpack.c.b16 %v1227, %v1213
      %v1564 = vpack.c.b16 %v1228, %v1214
      %v1565 = vpack.c.b16 %v1229, %v1215
      %v1566 = vpack.c.b16 %v1230, %v1216
      %v1567 = vpack.c.b16 %v1231, %v1217
      %v1568 = vpack.c.b16 %v1232, %v1218
      %v1569 = vpack.c.b16 %v1247, %v1233
      %v1570 = vpack.c.b16 %v1248, %v1234
      %v1571 = vpack.c.b16 %v1249, %v1235
      %v1572 = vpack.c.b16 %v1250, %v1236
      %v1573 = vpack.c.b16 %v1251, %v1237
      %v1574 = vpack.c.b16 %v1252, %v1238
      %v1575 = vpack.c.b16 %v1253, %v1239
      %v1576 = vpack.c.b16 %v1254, %v1240
      %v1577 = vpack.c.b16 %v1255, %v1241
      %v1578 = vpack.c.b16 %v1256, %v1242
      %v1579 = vpack.c.b16 %v1257, %v1243
      %v1580 = vpack.c.b16 %v1258, %v1244
      %v1581 = vpack.c.b16 %v1259, %v1245
      %v1582 = vpack.c.b16 %v1260, %v1246
      %v1583 = vpack.c.b16 %v1275, %v1261
      %v1584 = vpack.c.b16 %v1276, %v1262
      %v1585 = vpack.c.b16 %v1277, %v1263
      %v1586 = vpack.c.b16 %v1278, %v1264
      %v1587 = vpack.c.b16 %v1279, %v1265
      %v1588 = vpack.c.b16 %v1280, %v1266
      %v1589 = vpack.c.b16 %v1281, %v1267
      %v1590 = vpack.c.b16 %v1282, %v1268
      %v1591 = vpack.c.b16 %v1283, %v1269
      %v1592 = vpack.c.b16 %v1284, %v1270
      %v1593 = vpack.c.b16 %v1285, %v1271
      %v1594 = vpack.c.b16 %v1286, %v1272
      %v1595 = vpack.c.b16 %v1287, %v1273
      %v1596 = vpack.c.b16 %v1288, %v1274
      %v1597 = vpack.c.b16 %v1303, %v1289
      %v1598 = vpack.c.b16 %v1304, %v1290
      %v1599 = vpack.c.b16 %v1305, %v1291
      %v1600 = vpack.c.b16 %v1306, %v1292
      %v1601 = vpack.c.b16 %v1307, %v1293
      %v1602 = vpack.c.b16 %v1308, %v1294
      %v1603 = vpack.c.b16 %v1309, %v1295
      %v1604 = vpack.c.b16 %v1310, %v1296
      %v1605 = vpack.c.b16 %v1311, %v1297
      %v1606 = vpack.c.b16 %v1312, %v1298
      %v1607 = vpack.c.b16 %v1313, %v1299
      %v1608 = vpack.c.b16 %v1314, %v1300
      %v1609 = vpack.c.b16 %v1315, %v1301
      %v1610 = vpack.c.b16 %v1316, %v1302
      %v1611 = vpack.c.b16 %v1331, %v1317
      %v1612 = vpack.c.b16 %v1332, %v1318
      %v1613 = vpack.c.b16 %v1333, %v1319
      %v1614 = vpack.c.b16 %v1334, %v1320
      %v1615 = vpack.c.b16 %v1335, %v1321
      %v1616 = vpack.c.b16 %v1336, %v1322
      %v1617 = vpack.c.b16 %v1337, %v1323
      %v1618 = vpack.c.b16 %v1338, %v1324
      %v1619 = vpack.c.b16 %v1339, %v1325
      %v1620 = vpack.c.b16 %v1340, %v1326
      %v1621 = vpack.c.b16 %v1341, %v1327
      %v1622 = vpack.c.b16 %v1342, %v1328
      %v1623 = vpack.c.b16 %v1343, %v1329
      %v1624 = vpack.c.b16 %v1344, %v1330
      %v1625 = vpack.c.b16 %v1359, %v1345
      %v1626 = vpack.c.b16 %v1360, %v1346
      %v1627 = vpack.c.b16 %v1361, %v1347
      %v1628 = vpack.c.b16 %v1362, %v1348
      %v1629 = vpack.c.b16 %v1363, %v1349
      %v1630 = vpack.c.b16 %v1364, %v1350
      %v1631 = vpack.c.b16 %v1365, %v1351
      %v1632 = vpack.c.b16 %v1366, %v1352
      %v1633 = vpack.c.b16 %v1367, %v1353
      %v1634 = vpack.c.b16 %v1368, %v1354
      %v1635 = vpack.c.b16 %v1369, %v1355
      %v1636 = vpack.c.b16 %v1370, %v1356
      %v1637 = vpack.c.b16 %v1371, %v1357
      %v1638 = vpack.c.b16 %v1372, %v1358
      %v1639 = vpack.c.b16 %v1387, %v1373
      %v1640 = vpack.c.b16 %v1388, %v1374
      %v1641 = vpack.c.b16 %v1389, %v1375
      %v1642 = vpack.c.b16 %v1390, %v1376
      %v1643 = vpack.c.b16 %v1391, %v1377
      %v1644 = vpack.c.b16 %v1392, %v1378
      %v1645 = vpack.c.b16 %v1393, %v1379
      %v1646 = vpack.c.b16 %v1394, %v1380
      %v1647 = vpack.c.b16 %v1395, %v1381
      %v1648 = vpack.c.b16 %v1396, %v1382
      %v1649 = vpack.c.b16 %v1397, %v1383
      %v1650 = vpack.c.b16 %v1398, %v1384
      %v1651 = vpack.c.b16 %v1399, %v1385
      %v1652 = vpack.c.b16 %v1400, %v1386
      %v1653 = vpack.c.b16 %v1415, %v1401
      %v1654 = vpack.c.b16 %v1416, %v1402
      %v1655 = vpack.c.b16 %v1417, %v1403
      %v1656 = vpack.c.b16 %v1418, %v1404
      %v1657 = vpack.c.b16 %v1419, %v1405
      %v1658 = vpack.c.b16 %v1420, %v1406
      %v1659 = vpack.c.b16 %v1421, %v1407
      %v1660 = vpack.c.b16 %v1422, %v1408
      %v1661 = vpack.c.b16 %v1423, %v1409
      %v1662 = vpack.c.b16 %v1424, %v1410
      %v1663 = vpack.c.b16 %v1425, %v1411
      %v1664 = vpack.c.b16 %v1426, %v1412
      %v1665 = vpack.c.b16 %v1427, %v1413
      %v1666 = vpack.c.b16 %v1428, %v1414
      %v1667 = vpack.c.b16 %v1443, %v1429
      %v1668 = vpack.c.b16 %v1444, %v1430
      %v1669 = vpack.c.b16 %v1445, %v1431
      %v1670 = vpack.c.b16 %v1446, %v1432
      %v1671 = vpack.c.b16 %v1447, %v1433
      %v1672 = vpack.c.b16 %v1448, %v1434
      %v1673 = vpack.c.b16 %v1449, %v1435
      %v1674 = vpack.c.b16 %v1450, %v1436
      %v1675 = vpack.c.b16 %v1451, %v1437
      %v1676 = vpack.c.b16 %v1452, %v1438
      %v1677 = vpack.c.b16 %v1453, %v1439
      %v1678 = vpack.c.b16 %v1454, %v1440
      %v1679 = vpack.c.b16 %v1455, %v1441
      %v1680 = vpack.c.b16 %v1456, %v1442
      %v2129 = vunpack.c.l.b16 %v561
      %v2130 = vunpack.c.l.b16 %v562
      %v2131 = vunpack.c.l.b16 %v563
      %v2132 = vunpack.c.l.b16 %v564
      %v2133 = vunpack.c.l.b16 %v565
      %v2134 = vunpack.c.l.b16 %v566
      %v2135 = vunpack.c.l.b16 %v567
      %v2136 = vunpack.c.l.b16 %v568
      %v2137 = vunpack.c.l.b16 %v569
      %v2138 = vunpack.c.l.b16 %v570
      %v2139 = vunpack.c.l.b16 %v571
      %v2140 = vunpack.c.l.b16 %v572
      %v2141 = vunpack.c.l.b16 %v573
      %v2142 = vunpack.c.l.b16 %v574
      %v2143 = vunpack.c.l.b16 %v575
      %v2144 = vunpack.c.l.b16 %v576
      %v2145 = vunpack.c.l.b16 %v577
      %v2146 = vunpack.c.l.b16 %v578
      %v2147 = vunpack.c.l.b16 %v579
      %v2148 = vunpack.c.l.b16 %v580
      %v2149 = vunpack.c.l.b16 %v581
      %v2150 = vunpack.c.l.b16 %v582
      %v2151 = vunpack.c.l.b16 %v583
      %v2152 = vunpack.c.l.b16 %v584
      %v2153 = vunpack.c.l.b16 %v585
      %v2154 = vunpack.c.l.b16 %v586
      %v2155 = vunpack.c.l.b16 %v587
      %v2156 = vunpack.c.l.b16 %v588
      %v2157 = vunpack.c.l.b16 %v589
      %v2158 = vunpack.c.l.b16 %v590
      %v2159 = vunpack.c.l.b16 %v591
      %v2160 = vunpack.c.l.b16 %v592
      %v2161 = vunpack.c.l.b16 %v593
      %v2162 = vunpack.c.l.b16 %v594
      %v2163 = vunpack.c.l.b16 %v595
      %v2164 = vunpack.c.l.b16 %v596
      %v2165 = vunpack.c.l.b16 %v597
      %v2166 = vunpack.c.l.b16 %v598
      %v2167 = vunpack.c.l.b16 %v599
      %v2168 = vunpack.c.l.b16 %v600
      %v2169 = vunpack.c.l.b16 %v601
      %v2170 = vunpack.c.l.b16 %v602
      %v2171 = vunpack.c.l.b16 %v603
      %v2172 = vunpack.c.l.b16 %v604
      %v2173 = vunpack.c.l.b16 %v605
      %v2174 = vunpack.c.l.b16 %v606
      %v2175 = vunpack.c.l.b16 %v607
      %v2176 = vunpack.c.l.b16 %v608
      %v2177 = vunpack.c.l.b16 %v609
      %v2178 = vunpack.c.l.b16 %v610
      %v2179 = vunpack.c.l.b16 %v611
      %v2180 = vunpack.c.l.b16 %v612
      %v2181 = vunpack.c.l.b16 %v613
      %v2182 = vunpack.c.l.b16 %v614
      %v2183 = vunpack.c.l.b16 %v615
      %v2184 = vunpack.c.l.b16 %v616
      %v2185 = vunpack.c.l.b16 %v617
      %v2186 = vunpack.c.l.b16 %v618
      %v2187 = vunpack.c.l.b16 %v619
      %v2188 = vunpack.c.l.b16 %v620
      %v2189 = vunpack.c.l.b16 %v621
      %v2190 = vunpack.c.l.b16 %v622
      %v2191 = vunpack.c.l.b16 %v623
      %v2192 = vunpack.c.l.b16 %v624
      %v2193 = vunpack.c.l.b16 %v625
      %v2194 = vunpack.c.l.b16 %v626
      %v2195 = vunpack.c.l.b16 %v627
      %v2196 = vunpack.c.l.b16 %v628
      %v2197 = vunpack.c.l.b16 %v629
      %v2198 = vunpack.c.l.b16 %v630
      %v2199 = vunpack.c.l.b16 %v631
      %v2200 = vunpack.c.l.b16 %v632
      %v2201 = vunpack.c.l.b16 %v633
      %v2202 = vunpack.c.l.b16 %v634
      %v2203 = vunpack.c.l.b16 %v635
      %v2204 = vunpack.c.l.b16 %v636
      %v2205 = vunpack.c.l.b16 %v637
      %v2206 = vunpack.c.l.b16 %v638
      %v2207 = vunpack.c.l.b16 %v639
      %v2208 = vunpack.c.l.b16 %v640
      %v2209 = vunpack.c.l.b16 %v641
      %v2210 = vunpack.c.l.b16 %v642
      %v2211 = vunpack.c.l.b16 %v643
      %v2212 = vunpack.c.l.b16 %v644
      %v2213 = vunpack.c.l.b16 %v645
      %v2214 = vunpack.c.l.b16 %v646
      %v2215 = vunpack.c.l.b16 %v647
      %v2216 = vunpack.c.l.b16 %v648
      %v2217 = vunpack.c.l.b16 %v649
      %v2218 = vunpack.c.l.b16 %v650
      %v2219 = vunpack.c.l.b16 %v651
      %v2220 = vunpack.c.l.b16 %v652
      %v2221 = vunpack.c.l.b16 %v653
      %v2222 = vunpack.c.l.b16 %v654
      %v2223 = vunpack.c.l.b16 %v655
      %v2224 = vunpack.c.l.b16 %v656
      %v2225 = vunpack.c.l.b16 %v657
      %v2226 = vunpack.c.l.b16 %v658
      %v2227 = vunpack.c.l.b16 %v659
      %v2228 = vunpack.c.l.b16 %v660
      %v2229 = vunpack.c.l.b16 %v661
      %v2230 = vunpack.c.l.b16 %v662
      %v2231 = vunpack.c.l.b16 %v663
      %v2232 = vunpack.c.l.b16 %v664
      %v2233 = vunpack.c.l.b16 %v665
      %v2234 = vunpack.c.l.b16 %v666
      %v2235 = vunpack.c.l.b16 %v667
      %v2236 = vunpack.c.l.b16 %v668
      %v2237 = vunpack.c.l.b16 %v669
      %v2238 = vunpack.c.l.b16 %v670
      %v2239 = vunpack.c.l.b16 %v671
      %v2240 = vunpack.c.l.b16 %v672
      %v2241 = vunpack.c.l.b16 %v673
      %v2242 = vunpack.c.l.b16 %v674
      %v2243 = vunpack.c.l.b16 %v675
      %v2244 = vunpack.c.l.b16 %v676
      %v2245 = vunpack.c.l.b16 %v677
      %v2246 = vunpack.c.l.b16 %v678
      %v2247 = vunpack.c.l.b16 %v679
      %v2248 = vunpack.c.l.b16 %v680
      %v2249 = vunpack.c.l.b16 %v681
      %v2250 = vunpack.c.l.b16 %v682
      %v2251 = vunpack.c.l.b16 %v683
      %v2252 = vunpack.c.l.b16 %v684
      %v2253 = vunpack.c.l.b16 %v685
      %v2254 = vunpack.c.l.b16 %v686
      %v2255 = vunpack.c.l.b16 %v687
      %v2256 = vunpack.c.l.b16 %v688
      %v2257 = vunpack.c.l.b16 %v689
      %v2258 = vunpack.c.l.b16 %v690
      %v2259 = vunpack.c.l.b16 %v691
      %v2260 = vunpack.c.l.b16 %v692
      %v2261 = vunpack.c.l.b16 %v693
      %v2262 = vunpack.c.l.b16 %v694
      %v2263 = vunpack.c.l.b16 %v695
      %v2264 = vunpack.c.l.b16 %v696
      %v2265 = vunpack.c.l.b16 %v697
      %v2266 = vunpack.c.l.b16 %v698
      %v2267 = vunpack.c.l.b16 %v699
      %v2268 = vunpack.c.l.b16 %v700
      %v2269 = vunpack.c.l.b16 %v701
      %v2270 = vunpack.c.l.b16 %v702
      %v2271 = vunpack.c.l.b16 %v703
      %v2272 = vunpack.c.l.b16 %v704
      %v2273 = vunpack.c.l.b16 %v705
      %v2274 = vunpack.c.l.b16 %v706
      %v2275 = vunpack.c.l.b16 %v707
      %v2276 = vunpack.c.l.b16 %v708
      %v2277 = vunpack.c.l.b16 %v709
      %v2278 = vunpack.c.l.b16 %v710
      %v2279 = vunpack.c.l.b16 %v711
      %v2280 = vunpack.c.l.b16 %v712
      %v2281 = vunpack.c.l.b16 %v713
      %v2282 = vunpack.c.l.b16 %v714
      %v2283 = vunpack.c.l.b16 %v715
      %v2284 = vunpack.c.l.b16 %v716
      %v2285 = vunpack.c.l.b16 %v717
      %v2286 = vunpack.c.l.b16 %v718
      %v2287 = vunpack.c.l.b16 %v719
      %v2288 = vunpack.c.l.b16 %v720
      %v2289 = vunpack.c.l.b16 %v721
      %v2290 = vunpack.c.l.b16 %v722
      %v2291 = vunpack.c.l.b16 %v723
      %v2292 = vunpack.c.l.b16 %v724
      %v2293 = vunpack.c.l.b16 %v725
      %v2294 = vunpack.c.l.b16 %v726
      %v2295 = vunpack.c.l.b16 %v727
      %v2296 = vunpack.c.l.b16 %v728
      %v2297 = vunpack.c.l.b16 %v729
      %v2298 = vunpack.c.l.b16 %v730
      %v2299 = vunpack.c.l.b16 %v731
      %v2300 = vunpack.c.l.b16 %v732
      %v2301 = vunpack.c.l.b16 %v733
      %v2302 = vunpack.c.l.b16 %v734
      %v2303 = vunpack.c.l.b16 %v735
      %v2304 = vunpack.c.l.b16 %v736
      %v2305 = vunpack.c.l.b16 %v737
      %v2306 = vunpack.c.l.b16 %v738
      %v2307 = vunpack.c.l.b16 %v739
      %v2308 = vunpack.c.l.b16 %v740
      %v2309 = vunpack.c.l.b16 %v741
      %v2310 = vunpack.c.l.b16 %v742
      %v2311 = vunpack.c.l.b16 %v743
      %v2312 = vunpack.c.l.b16 %v744
      %v2313 = vunpack.c.l.b16 %v745
      %v2314 = vunpack.c.l.b16 %v746
      %v2315 = vunpack.c.l.b16 %v747
      %v2316 = vunpack.c.l.b16 %v748
      %v2317 = vunpack.c.l.b16 %v749
      %v2318 = vunpack.c.l.b16 %v750
      %v2319 = vunpack.c.l.b16 %v751
      %v2320 = vunpack.c.l.b16 %v752
      %v2321 = vunpack.c.l.b16 %v753
      %v2322 = vunpack.c.l.b16 %v754
      %v2323 = vunpack.c.l.b16 %v755
      %v2324 = vunpack.c.l.b16 %v756
      %v2325 = vunpack.c.l.b16 %v757
      %v2326 = vunpack.c.l.b16 %v758
      %v2327 = vunpack.c.l.b16 %v759
      %v2328 = vunpack.c.l.b16 %v760
      %v2329 = vunpack.c.l.b16 %v761
      %v2330 = vunpack.c.l.b16 %v762
      %v2331 = vunpack.c.l.b16 %v763
      %v2332 = vunpack.c.l.b16 %v764
      %v2333 = vunpack.c.l.b16 %v765
      %v2334 = vunpack.c.l.b16 %v766
      %v2335 = vunpack.c.l.b16 %v767
      %v2336 = vunpack.c.l.b16 %v768
      %v2337 = vunpack.c.l.b16 %v769
      %v2338 = vunpack.c.l.b16 %v770
      %v2339 = vunpack.c.l.b16 %v771
      %v2340 = vunpack.c.l.b16 %v772
      %v2341 = vunpack.c.l.b16 %v773
      %v2342 = vunpack.c.l.b16 %v774
      %v2343 = vunpack.c.l.b16 %v775
      %v2344 = vunpack.c.l.b16 %v776
      %v2345 = vunpack.c.l.b16 %v777
      %v2346 = vunpack.c.l.b16 %v778
      %v2347 = vunpack.c.l.b16 %v779
      %v2348 = vunpack.c.l.b16 %v780
      %v2349 = vunpack.c.l.b16 %v781
      %v2350 = vunpack.c.l.b16 %v782
      %v2351 = vunpack.c.l.b16 %v783
      %v2352 = vunpack.c.l.b16 %v784
      %v2353 = vpack.c.b16 %v2130, %v2129
      %v2354 = vpack.c.b16 %v2132, %v2131
      %v2355 = vpack.c.b16 %v2134, %v2133
      %v2356 = vpack.c.b16 %v2136, %v2135
      %v2357 = vpack.c.b16 %v2138, %v2137
      %v2358 = vpack.c.b16 %v2140, %v2139
      %v2359 = vpack.c.b16 %v2142, %v2141
      %v2360 = vpack.c.b16 %v2144, %v2143
      %v2361 = vpack.c.b16 %v2146, %v2145
      %v2362 = vpack.c.b16 %v2148, %v2147
      %v2363 = vpack.c.b16 %v2150, %v2149
      %v2364 = vpack.c.b16 %v2152, %v2151
      %v2365 = vpack.c.b16 %v2154, %v2153
      %v2366 = vpack.c.b16 %v2156, %v2155
      %v2367 = vpack.c.b16 %v2158, %v2157
      %v2368 = vpack.c.b16 %v2160, %v2159
      %v2369 = vpack.c.b16 %v2162, %v2161
      %v2370 = vpack.c.b16 %v2164, %v2163
      %v2371 = vpack.c.b16 %v2166, %v2165
      %v2372 = vpack.c.b16 %v2168, %v2167
      %v2373 = vpack.c.b16 %v2170, %v2169
      %v2374 = vpack.c.b16 %v2172, %v2171
      %v2375 = vpack.c.b16 %v2174, %v2173
      %v2376 = vpack.c.b16 %v2176, %v2175
      %v2377 = vpack.c.b16 %v2178, %v2177
      %v2378 = vpack.c.b16 %v2180, %v2179
      %v2379 = vpack.c.b16 %v2182, %v2181
      %v2380 = vpack.c.b16 %v2184, %v2183
      %v2381 = vpack.c.b16 %v2186, %v2185
      %v2382 = vpack.c.b16 %v2188, %v2187
      %v2383 = vpack.c.b16 %v2190, %v2189
      %v2384 = vpack.c.b16 %v2192, %v2191
      %v2385 = vpack.c.b16 %v2194, %v2193
      %v2386 = vpack.c.b16 %v2196, %v2195
      %v2387 = vpack.c.b16 %v2198, %v2197
      %v2388 = vpack.c.b16 %v2200, %v2199
      %v2389 = vpack.c.b16 %v2202, %v2201
      %v2390 = vpack.c.b16 %v2204, %v2203
      %v2391 = vpack.c.b16 %v2206, %v2205
      %v2392 = vpack.c.b16 %v2208, %v2207
      %v2393 = vpack.c.b16 %v2210, %v2209
      %v2394 = vpack.c.b16 %v2212, %v2211
      %v2395 = vpack.c.b16 %v2214, %v2213
      %v2396 = vpack.c.b16 %v2216, %v2215
      %v2397 = vpack.c.b16 %v2218, %v2217
      %v2398 = vpack.c.b16 %v2220, %v2219
      %v2399 = vpack.c.b16 %v2222, %v2221
      %v2400 = vpack.c.b16 %v2224, %v2223
      %v2401 = vpack.c.b16 %v2226, %v2225
      %v2402 = vpack.c.b16 %v2228, %v2227
      %v2403 = vpack.c.b16 %v2230, %v2229
      %v2404 = vpack.c.b16 %v2232, %v2231
      %v2405 = vpack.c.b16 %v2234, %v2233
      %v2406 = vpack.c.b16 %v2236, %v2235
      %v2407 = vpack.c.b16 %v2238, %v2237
      %v2408 = vpack.c.b16 %v2240, %v2239
      %v2409 = vpack.c.b16 %v2242, %v2241
      %v2410 = vpack.c.b16 %v2244, %v2243
      %v2411 = vpack.c.b16 %v2246, %v2245
      %v2412 = vpack.c.b16 %v2248, %v2247
      %v2413 = vpack.c.b16 %v2250, %v2249
      %v2414 = vpack.c.b16 %v2252, %v2251
      %v2415 = vpack.c.b16 %v2254, %v2253
      %v2416 = vpack.c.b16 %v2256, %v2255
      %v2417 = vpack.c.b16 %v2258, %v2257
      %v2418 = vpack.c.b16 %v2260, %v2259
      %v2419 = vpack.c.b16 %v2262, %v2261
      %v2420 = vpack.c.b16 %v2264, %v2263
      %v2421 = vpack.c.b16 %v2266, %v2265
      %v2422 = vpack.c.b16 %v2268, %v2267
      %v2423 = vpack.c.b16 %v2270, %v2269
      %v2424 = vpack.c.b16 %v2272, %v2271
      %v2425 = vpack.c.b16 %v2274, %v2273
      %v2426 = vpack.c.b16 %v2276, %v2275
      %v2427 = vpack.c.b16 %v2278, %v2277
      %v2428 = vpack.c.b16 %v2280, %v2279
      %v2429 = vpack.c.b16 %v2282, %v2281
      %v2430 = vpack.c.b16 %v2284, %v2283
      %v2431 = vpack.c.b16 %v2286, %v2285
      %v2432 = vpack.c.b16 %v2288, %v2287
      %v2433 = vpack.c.b16 %v2290, %v2289
      %v2434 = vpack.c.b16 %v2292, %v2291
      %v2435 = vpack.c.b16 %v2294, %v2293
      %v2436 = vpack.c.b16 %v2296, %v2295
      %v2437 = vpack.c.b16 %v2298, %v2297
      %v2438 = vpack.c.b16 %v2300, %v2299
      %v2439 = vpack.c.b16 %v2302, %v2301
      %v2440 = vpack.c.b16 %v2304, %v2303
      %v2441 = vpack.c.b16 %v2306, %v2305
      %v2442 = vpack.c.b16 %v2308, %v2307
      %v2443 = vpack.c.b16 %v2310, %v2309
      %v2444 = vpack.c.b16 %v2312, %v2311
      %v2445 = vpack.c.b16 %v2314, %v2313
      %v2446 = vpack.c.b16 %v2316, %v2315
      %v2447 = vpack.c.b16 %v2318, %v2317
      %v2448 = vpack.c.b16 %v2320, %v2319
      %v2449 = vpack.c.b16 %v2322, %v2321
      %v2450 = vpack.c.b16 %v2324, %v2323
      %v2451 = vpack.c.b16 %v2326, %v2325
      %v2452 = vpack.c.b16 %v2328, %v2327
      %v2453 = vpack.c.b16 %v2330, %v2329
      %v2454 = vpack.c.b16 %v2332, %v2331
      %v2455 = vpack.c.b16 %v2334, %v2333
      %v2456 = vpack.c.b16 %v2336, %v2335
      %v2457 = vpack.c.b16 %v2338, %v2337
      %v2458 = vpack.c.b16 %v2340, %v2339
      %v2459 = vpack.c.b16 %v2342, %v2341
      %v2460 = vpack.c.b16 %v2344, %v2343
      %v2461 = vpack.c.b16 %v2346, %v2345
      %v2462 = vpack.c.b16 %v2348, %v2347
      %v2463 = vpack.c.b16 %v2350, %v2349
      %v2464 = vpack.c.b16 %v2352, %v2351
      %2577 = vmatprep.subr.bf16.mxu0 0
      %2578 = vmatpush1.bf16.msra.mxu0 %v2353
      %2579 = vmatprep.subr.bf16.mxu0 0
      %2580 = vmatpush1.bf16.msra.mxu0 %v2354
      %2581 = vmatprep.subr.bf16.mxu0 0
      %2582 = vmatpush1.bf16.msra.mxu0 %v2355
      %2583 = vmatprep.subr.bf16.mxu0 0
      %2584 = vmatpush1.bf16.msra.mxu0 %v2356
      %2585 = vmatprep.subr.bf16.mxu0 0
      %2586 = vmatpush1.bf16.msra.mxu0 %v2357
      %2587 = vmatprep.subr.bf16.mxu0 0
      %2588 = vmatpush1.bf16.msra.mxu0 %v2358
      %2589 = vmatprep.subr.bf16.mxu0 0
      %2590 = vmatpush1.bf16.msra.mxu0 %v2359
      %2591 = vmatprep.subr.bf16.mxu0 0
      %2592 = vmatpush1.bf16.msra.mxu0 %v2360
      %2593 = vmatprep.subr.bf16.mxu0 0
      %2594 = vmatpush1.bf16.msra.mxu0 %v2361
      %2595 = vmatprep.subr.bf16.mxu0 0
      %2596 = vmatpush1.bf16.msra.mxu0 %v2362
      %2597 = vmatprep.subr.bf16.mxu0 0
      %2598 = vmatpush1.bf16.msra.mxu0 %v2363
      %2599 = vmatprep.subr.bf16.mxu0 0
      %2600 = vmatpush1.bf16.msra.mxu0 %v2364
      %2601 = vmatprep.subr.bf16.mxu0 0
      %2602 = vmatpush1.bf16.msra.mxu0 %v2365
      %2603 = vmatprep.subr.bf16.mxu0 0
      %2604 = vmatpush1.bf16.msra.mxu0 %v2366
      %2605 = vmatprep.subr.bf16.mxu0 0
      %2606 = vmatpush1.bf16.msra.mxu0 %v2367
      %2607 = vmatprep.subr.bf16.mxu0 0
      %2608 = vmatpush1.bf16.msra.mxu0 %v2368
      %2609 = vmatprep.mubr.bf16.mxu0 %v1458
      %2610 = vmatmul.mubr.bf16.gmra.mrb[0].mxu0 %v1457
      %v2611 = vpop.f32.mrb[0].mxu0
      %v2612 = vadd.f32 0.0, %v2611
      %v2613 = vpop.f32.mrb[0].mxu0
      %v2614 = vpop.f32.mrb[0].mxu0
      %v2615 = vadd.f32 0.0, %v2614
      %v2616 = vpop.f32.mrb[0].mxu0
      %2617 = vmatprep.mubr.bf16.mxu0 %v1472
      %2618 = vmatmul.mubr.bf16.gmra.mrb[0].mxu0 %v1471
      %v2619 = vpop.f32.mrb[0].mxu0
      %v2620 = vadd.f32 0.0, %v2619
      %v2621 = vpop.f32.mrb[0].mxu0
      %v2622 = vpop.f32.mrb[0].mxu0
      %v2623 = vadd.f32 0.0, %v2622
      %v2624 = vpop.f32.mrb[0].mxu0
      %2625 = vmatprep.mubr.bf16.mxu0 %v1486
      %2626 = vmatmul.mubr.bf16.gmra.mrb[0].mxu0 %v1485
      %v2627 = vpop.f32.mrb[0].mxu0
      %v2628 = vadd.f32 0.0, %v2627
      %v2629 = vpop.f32.mrb[0].mxu0
      %v2630 = vpop.f32.mrb[0].mxu0
      %v2631 = vadd.f32 0.0, %v2630
      %v2632 = vpop.f32.mrb[0].mxu0
      %2633 = vmatprep.mubr.bf16.mxu0 %v1500
      %2634 = vmatmul.mubr.bf16.gmra.mrb[0].mxu0 %v1499
      %v2635 = vpop.f32.mrb[0].mxu0
      %v2636 = vadd.f32 0.0, %v2635
      %v2637 = vpop.f32.mrb[0].mxu0
      %v2638 = vpop.f32.mrb[0].mxu0
      %v2639 = vadd.f32 0.0, %v2638
      %v2640 = vpop.f32.mrb[0].mxu0
      %2641 = vmatprep.mubr.bf16.mxu0 %v1514
      %2642 = vmatmul.mubr.bf16.gmra.mrb[0].mxu0 %v1513
      %v2643 = vpop.f32.mrb[0].mxu0
      %v2644 = vadd.f32 0.0, %v2643
      %v2645 = vpop.f32.mrb[0].mxu0
      %v2646 = vpop.f32.mrb[0].mxu0
      %v2647 = vadd.f32 0.0, %v2646
      %v2648 = vpop.f32.mrb[0].mxu0
      %2649 = vmatprep.mubr.bf16.mxu0 %v1528
      %2650 = vmatmul.mubr.bf16.gmra.mrb[0].mxu0 %v1527
      %v2651 = vpop.f32.mrb[0].mxu0
      %v2652 = vadd.f32 0.0, %v2651
      %v2653 = vpop.f32.mrb[0].mxu0
      %v2654 = vpop.f32.mrb[0].mxu0
      %v2655 = vadd.f32 0.0, %v2654
      %v2656 = vpop.f32.mrb[0].mxu0
      %2657 = vmatprep.mubr.bf16.mxu0 %v1542
      %2658 = vmatmul.mubr.bf16.gmra.mrb[0].mxu0 %v1541
      %v2659 = vpop.f32.mrb[0].mxu0
      %v2660 = vadd.f32 0.0, %v2659
      %v2661 = vpop.f32.mrb[0].mxu0
      %v2662 = vpop.f32.mrb[0].mxu0
      %v2663 = vadd.f32 0.0, %v2662
      %v2664 = vpop.f32.mrb[0].mxu0
      %2665 = vmatprep.mubr.bf16.mxu0 %v1556
      %2666 = vmatmul.mubr.bf16.gmra.mrb[0].mxu0 %v1555
      %v2667 = vpop.f32.mrb[0].mxu0
      %v2668 = vadd.f32 0.0, %v2667
      %v2669 = vpop.f32.mrb[0].mxu0
      %v2670 = vpop.f32.mrb[0].mxu0
      %v2671 = vadd.f32 0.0, %v2670
      %v2672 = vpop.f32.mrb[0].mxu0
      %2673 = vmatprep.mubr.bf16.mxu0 %v1570
      %2674 = vmatmul.mubr.bf16.gmra.mrb[0].mxu0 %v1569
      %v2675 = vpop.f32.mrb[0].mxu0
      %v2676 = vadd.f32 0.0, %v2675
      %v2677 = vpop.f32.mrb[0].mxu0
      %v2678 = vpop.f32.mrb[0].mxu0
      %v2679 = vadd.f32 0.0, %v2678
      %v2680 = vpop.f32.mrb[0].mxu0
      %2681 = vmatprep.mubr.bf16.mxu0 %v1584
      %2682 = vmatmul.mubr.bf16.gmra.mrb[0].mxu0 %v1583
      %v2683 = vpop.f32.mrb[0].mxu0
      %v2684 = vadd.f32 0.0, %v2683
      %v2685 = vpop.f32.mrb[0].mxu0
      %v2686 = vpop.f32.mrb[0].mxu0
      %v2687 = vadd.f32 0.0, %v2686
      %v2688 = vpop.f32.mrb[0].mxu0
      %2689 = vmatprep.mubr.bf16.mxu0 %v1598
      %2690 = vmatmul.mubr.bf16.gmra.mrb[0].mxu0 %v1597
      %v2691 = vpop.f32.mrb[0].mxu0
      %v2692 = vadd.f32 0.0, %v2691
      %v2693 = vpop.f32.mrb[0].mxu0
      %v2694 = vpop.f32.mrb[0].mxu0
      %v2695 = vadd.f32 0.0, %v2694
      %v2696 = vpop.f32.mrb[0].mxu0
      %2697 = vmatprep.mubr.bf16.mxu0 %v1612
      %2698 = vmatmul.mubr.bf16.gmra.mrb[0].mxu0 %v1611
      %v2699 = vpop.f32.mrb[0].mxu0
      %v2700 = vadd.f32 0.0, %v2699
      %v2701 = vpop.f32.mrb[0].mxu0
      %v2702 = vpop.f32.mrb[0].mxu0
      %v2703 = vadd.f32 0.0, %v2702
      %v2704 = vpop.f32.mrb[0].mxu0
      %2705 = vmatprep.mubr.bf16.mxu0 %v1626
      %2706 = vmatmul.mubr.bf16.gmra.mrb[0].mxu0 %v1625
      %v2707 = vpop.f32.mrb[0].mxu0
      %v2708 = vadd.f32 0.0, %v2707
      %v2709 = vpop.f32.mrb[0].mxu0
      %v2710 = vpop.f32.mrb[0].mxu0
      %v2711 = vadd.f32 0.0, %v2710
      %v2712 = vpop.f32.mrb[0].mxu0
      %2713 = vmatprep.mubr.bf16.mxu0 %v1640
      %2714 = vmatmul.mubr.bf16.gmra.mrb[0].mxu0 %v1639
      %v2715 = vpop.f32.mrb[0].mxu0
      %v2716 = vadd.f32 0.0, %v2715
      %v2717 = vpop.f32.mrb[0].mxu0
      %v2718 = vpop.f32.mrb[0].mxu0
      %v2719 = vadd.f32 0.0, %v2718
      %v2720 = vpop.f32.mrb[0].mxu0
      %2721 = vmatprep.mubr.bf16.mxu0 %v1654
      %2722 = vmatmul.mubr.bf16.gmra.mrb[0].mxu0 %v1653
      %v2723 = vpop.f32.mrb[0].mxu0
      %v2724 = vadd.f32 0.0, %v2723
      %v2725 = vpop.f32.mrb[0].mxu0
      %v2726 = vpop.f32.mrb[0].mxu0
      %v2727 = vadd.f32 0.0, %v2726
      %v2728 = vpop.f32.mrb[0].mxu0
      %2729 = vmatprep.mubr.bf16.mxu0 %v1668
      %2730 = vmatmul.mubr.bf16.gmra.mrb[0].mxu0 %v1667
      %v2731 = vpop.f32.mrb[0].mxu0
      %v2732 = vadd.f32 0.0, %v2731
      %v2733 = vpop.f32.mrb[0].mxu0
      %v2734 = vpop.f32.mrb[0].mxu0
      %v2735 = vadd.f32 0.0, %v2734
      %v2736 = vpop.f32.mrb[0].mxu0
      %2737 = vdwg.mxu0
      %2738 = vmatprep.subr.bf16.mxu0 0
      %2739 = vmatpush1.bf16.msra.mxu0 %v2369
      %2740 = vmatprep.subr.bf16.mxu0 0
      %2741 = vmatpush1.bf16.msra.mxu0 %v2370
      %2742 = vmatprep.subr.bf16.mxu0 0
      %2743 = vmatpush1.bf16.msra.mxu0 %v2371
      %2744 = vmatprep.subr.bf16.mxu0 0
      %2745 = vmatpush1.bf16.msra.mxu0 %v2372
      %2746 = vmatprep.subr.bf16.mxu0 0
      %2747 = vmatpush1.bf16.msra.mxu0 %v2373
      %2748 = vmatprep.subr.bf16.mxu0 0
      %2749 = vmatpush1.bf16.msra.mxu0 %v2374
      %2750 = vmatprep.subr.bf16.mxu0 0
      %2751 = vmatpush1.bf16.msra.mxu0 %v2375
      %2752 = vmatprep.subr.bf16.mxu0 0
      %2753 = vmatpush1.bf16.msra.mxu0 %v2376
      %2754 = vmatprep.subr.bf16.mxu0 0
      %2755 = vmatpush1.bf16.msra.mxu0 %v2377
      %2756 = vmatprep.subr.bf16.mxu0 0
      %2757 = vmatpush1.bf16.msra.mxu0 %v2378
      %2758 = vmatprep.subr.bf16.mxu0 0
      %2759 = vmatpush1.bf16.msra.mxu0 %v2379
      %2760 = vmatprep.subr.bf16.mxu0 0
      %2761 = vmatpush1.bf16.msra.mxu0 %v2380
      %2762 = vmatprep.subr.bf16.mxu0 0
      %2763 = vmatpush1.bf16.msra.mxu0 %v2381
      %2764 = vmatprep.subr.bf16.mxu0 0
      %2765 = vmatpush1.bf16.msra.mxu0 %v2382
      %2766 = vmatprep.subr.bf16.mxu0 0
      %2767 = vmatpush1.bf16.msra.mxu0 %v2383
      %2768 = vmatprep.subr.bf16.mxu0 0
      %2769 = vmatpush1.bf16.msra.mxu0 %v2384
      %2770 = vmatprep.mubr.bf16.mxu0 %v1460
      %2771 = vmatmul.mubr.bf16.gmra.mrb[0].mxu0 %v1459
      %v2772 = vpop.f32.mrb[0].mxu0
      %v2773 = vadd.f32 %v2612, %v2772
      %v2774 = vpop.f32.mrb[0].mxu0
      %v2775 = vpop.f32.mrb[0].mxu0
      %v2776 = vadd.f32 %v2615, %v2775
      %v2777 = vpop.f32.mrb[0].mxu0
      %2778 = vmatprep.mubr.bf16.mxu0 %v1474
      %2779 = vmatmul.mubr.bf16.gmra.mrb[0].mxu0 %v1473
      %v2780 = vpop.f32.mrb[0].mxu0
      %v2781 = vadd.f32 %v2620, %v2780
      %v2782 = vpop.f32.mrb[0].mxu0
      %v2783 = vpop.f32.mrb[0].mxu0
      %v2784 = vadd.f32 %v2623, %v2783
      %v2785 = vpop.f32.mrb[0].mxu0
      %2786 = vmatprep.mubr.bf16.mxu0 %v1488
      %2787 = vmatmul.mubr.bf16.gmra.mrb[0].mxu0 %v1487
      %v2788 = vpop.f32.mrb[0].mxu0
      %v2789 = vadd.f32 %v2628, %v2788
      %v2790 = vpop.f32.mrb[0].mxu0
      %v2791 = vpop.f32.mrb[0].mxu0
      %v2792 = vadd.f32 %v2631, %v2791
      %v2793 = vpop.f32.mrb[0].mxu0
      %2794 = vmatprep.mubr.bf16.mxu0 %v1502
      %2795 = vmatmul.mubr.bf16.gmra.mrb[0].mxu0 %v1501
      %v2796 = vpop.f32.mrb[0].mxu0
      %v2797 = vadd.f32 %v2636, %v2796
      %v2798 = vpop.f32.mrb[0].mxu0
      %v2799 = vpop.f32.mrb[0].mxu0
      %v2800 = vadd.f32 %v2639, %v2799
      %v2801 = vpop.f32.mrb[0].mxu0
      %2802 = vmatprep.mubr.bf16.mxu0 %v1516
      %2803 = vmatmul.mubr.bf16.gmra.mrb[0].mxu0 %v1515
      %v2804 = vpop.f32.mrb[0].mxu0
      %v2805 = vadd.f32 %v2644, %v2804
      %v2806 = vpop.f32.mrb[0].mxu0
      %v2807 = vpop.f32.mrb[0].mxu0
      %v2808 = vadd.f32 %v2647, %v2807
      %v2809 = vpop.f32.mrb[0].mxu0
      %2810 = vmatprep.mubr.bf16.mxu0 %v1530
      %2811 = vmatmul.mubr.bf16.gmra.mrb[0].mxu0 %v1529
      %v2812 = vpop.f32.mrb[0].mxu0
      %v2813 = vadd.f32 %v2652, %v2812
      %v2814 = vpop.f32.mrb[0].mxu0
      %v2815 = vpop.f32.mrb[0].mxu0
      %v2816 = vadd.f32 %v2655, %v2815
      %v2817 = vpop.f32.mrb[0].mxu0
      %2818 = vmatprep.mubr.bf16.mxu0 %v1544
      %2819 = vmatmul.mubr.bf16.gmra.mrb[0].mxu0 %v1543
      %v2820 = vpop.f32.mrb[0].mxu0
      %v2821 = vadd.f32 %v2660, %v2820
      %v2822 = vpop.f32.mrb[0].mxu0
      %v2823 = vpop.f32.mrb[0].mxu0
      %v2824 = vadd.f32 %v2663, %v2823
      %v2825 = vpop.f32.mrb[0].mxu0
      %2826 = vmatprep.mubr.bf16.mxu0 %v1558
      %2827 = vmatmul.mubr.bf16.gmra.mrb[0].mxu0 %v1557
      %v2828 = vpop.f32.mrb[0].mxu0
      %v2829 = vadd.f32 %v2668, %v2828
      %v2830 = vpop.f32.mrb[0].mxu0
      %v2831 = vpop.f32.mrb[0].mxu0
      %v2832 = vadd.f32 %v2671, %v2831
      %v2833 = vpop.f32.mrb[0].mxu0
      %2834 = vmatprep.mubr.bf16.mxu0 %v1572
      %2835 = vmatmul.mubr.bf16.gmra.mrb[0].mxu0 %v1571
      %v2836 = vpop.f32.mrb[0].mxu0
      %v2837 = vadd.f32 %v2676, %v2836
      %v2838 = vpop.f32.mrb[0].mxu0
      %v2839 = vpop.f32.mrb[0].mxu0
      %v2840 = vadd.f32 %v2679, %v2839
      %v2841 = vpop.f32.mrb[0].mxu0
      %2842 = vmatprep.mubr.bf16.mxu0 %v1586
      %2843 = vmatmul.mubr.bf16.gmra.mrb[0].mxu0 %v1585
      %v2844 = vpop.f32.mrb[0].mxu0
      %v2845 = vadd.f32 %v2684, %v2844
      %v2846 = vpop.f32.mrb[0].mxu0
      %v2847 = vpop.f32.mrb[0].mxu0
      %v2848 = vadd.f32 %v2687, %v2847
      %v2849 = vpop.f32.mrb[0].mxu0
      %2850 = vmatprep.mubr.bf16.mxu0 %v1600
      %2851 = vmatmul.mubr.bf16.gmra.mrb[0].mxu0 %v1599
      %v2852 = vpop.f32.mrb[0].mxu0
      %v2853 = vadd.f32 %v2692, %v2852
      %v2854 = vpop.f32.mrb[0].mxu0
      %v2855 = vpop.f32.mrb[0].mxu0
      %v2856 = vadd.f32 %v2695, %v2855
      %v2857 = vpop.f32.mrb[0].mxu0
      %2858 = vmatprep.mubr.bf16.mxu0 %v1614
      %2859 = vmatmul.mubr.bf16.gmra.mrb[0].mxu0 %v1613
      %v2860 = vpop.f32.mrb[0].mxu0
      %v2861 = vadd.f32 %v2700, %v2860
      %v2862 = vpop.f32.mrb[0].mxu0
      %v2863 = vpop.f32.mrb[0].mxu0
      %v2864 = vadd.f32 %v2703, %v2863
      %v2865 = vpop.f32.mrb[0].mxu0
      %2866 = vmatprep.mubr.bf16.mxu0 %v1628
      %2867 = vmatmul.mubr.bf16.gmra.mrb[0].mxu0 %v1627
      %v2868 = vpop.f32.mrb[0].mxu0
      %v2869 = vadd.f32 %v2708, %v2868
      %v2870 = vpop.f32.mrb[0].mxu0
      %v2871 = vpop.f32.mrb[0].mxu0
      %v2872 = vadd.f32 %v2711, %v2871
      %v2873 = vpop.f32.mrb[0].mxu0
      %2874 = vmatprep.mubr.bf16.mxu0 %v1642
      %2875 = vmatmul.mubr.bf16.gmra.mrb[0].mxu0 %v1641
      %v2876 = vpop.f32.mrb[0].mxu0
      %v2877 = vadd.f32 %v2716, %v2876
      %v2878 = vpop.f32.mrb[0].mxu0
      %v2879 = vpop.f32.mrb[0].mxu0
      %v2880 = vadd.f32 %v2719, %v2879
      %v2881 = vpop.f32.mrb[0].mxu0
      %2882 = vmatprep.mubr.bf16.mxu0 %v1656
      %2883 = vmatmul.mubr.bf16.gmra.mrb[0].mxu0 %v1655
      %v2884 = vpop.f32.mrb[0].mxu0
      %v2885 = vadd.f32 %v2724, %v2884
      %v2886 = vpop.f32.mrb[0].mxu0
      %v2887 = vpop.f32.mrb[0].mxu0
      %v2888 = vadd.f32 %v2727, %v2887
      %v2889 = vpop.f32.mrb[0].mxu0
      %2890 = vmatprep.mubr.bf16.mxu0 %v1670
      %2891 = vmatmul.mubr.bf16.gmra.mrb[0].mxu0 %v1669
      %v2892 = vpop.f32.mrb[0].mxu0
      %v2893 = vadd.f32 %v2732, %v2892
      %v2894 = vpop.f32.mrb[0].mxu0
      %v2895 = vpop.f32.mrb[0].mxu0
      %v2896 = vadd.f32 %v2735, %v2895
      %v2897 = vpop.f32.mrb[0].mxu0
      %2898 = vdwg.mxu0
      %2899 = vmatprep.subr.bf16.mxu0 0
      %2900 = vmatpush1.bf16.msra.mxu0 %v2385
      %2901 = vmatprep.subr.bf16.mxu0 0
      %2902 = vmatpush1.bf16.msra.mxu0 %v2386
      %2903 = vmatprep.subr.bf16.mxu0 0
      %2904 = vmatpush1.bf16.msra.mxu0 %v2387
      %2905 = vmatprep.subr.bf16.mxu0 0
      %2906 = vmatpush1.bf16.msra.mxu0 %v2388
      %2907 = vmatprep.subr.bf16.mxu0 0
      %2908 = vmatpush1.bf16.msra.mxu0 %v2389
      %2909 = vmatprep.subr.bf16.mxu0 0
      %2910 = vmatpush1.bf16.msra.mxu0 %v2390
      %2911 = vmatprep.subr.bf16.mxu0 0
      %2912 = vmatpush1.bf16.msra.mxu0 %v2391
      %2913 = vmatprep.subr.bf16.mxu0 0
      %2914 = vmatpush1.bf16.msra.mxu0 %v2392
      %2915 = vmatprep.subr.bf16.mxu0 0
      %2916 = vmatpush1.bf16.msra.mxu0 %v2393
      %2917 = vmatprep.subr.bf16.mxu0 0
      %2918 = vmatpush1.bf16.msra.mxu0 %v2394
      %2919 = vmatprep.subr.bf16.mxu0 0
      %2920 = vmatpush1.bf16.msra.mxu0 %v2395
      %2921 = vmatprep.subr.bf16.mxu0 0
      %2922 = vmatpush1.bf16.msra.mxu0 %v2396
      %2923 = vmatprep.subr.bf16.mxu0 0
      %2924 = vmatpush1.bf16.msra.mxu0 %v2397
      %2925 = vmatprep.subr.bf16.mxu0 0
      %2926 = vmatpush1.bf16.msra.mxu0 %v2398
      %2927 = vmatprep.subr.bf16.mxu0 0
      %2928 = vmatpush1.bf16.msra.mxu0 %v2399
      %2929 = vmatprep.subr.bf16.mxu0 0
      %2930 = vmatpush1.bf16.msra.mxu0 %v2400
      %2931 = vmatprep.mubr.bf16.mxu0 %v1462
      %2932 = vmatmul.mubr.bf16.gmra.mrb[0].mxu0 %v1461
      %v2933 = vpop.f32.mrb[0].mxu0
      %v2934 = vadd.f32 %v2773, %v2933
      %v2935 = vpop.f32.mrb[0].mxu0
      %v2936 = vpop.f32.mrb[0].mxu0
      %v2937 = vadd.f32 %v2776, %v2936
      %v2938 = vpop.f32.mrb[0].mxu0
      %2939 = vmatprep.mubr.bf16.mxu0 %v1476
      %2940 = vmatmul.mubr.bf16.gmra.mrb[0].mxu0 %v1475
      %v2941 = vpop.f32.mrb[0].mxu0
      %v2942 = vadd.f32 %v2781, %v2941
      %v2943 = vpop.f32.mrb[0].mxu0
      %v2944 = vpop.f32.mrb[0].mxu0
      %v2945 = vadd.f32 %v2784, %v2944
      %v2946 = vpop.f32.mrb[0].mxu0
      %2947 = vmatprep.mubr.bf16.mxu0 %v1490
      %2948 = vmatmul.mubr.bf16.gmra.mrb[0].mxu0 %v1489
      %v2949 = vpop.f32.mrb[0].mxu0
      %v2950 = vadd.f32 %v2789, %v2949
      %v2951 = vpop.f32.mrb[0].mxu0
      %v2952 = vpop.f32.mrb[0].mxu0
      %v2953 = vadd.f32 %v2792, %v2952
      %v2954 = vpop.f32.mrb[0].mxu0
      %2955 = vmatprep.mubr.bf16.mxu0 %v1504
      %2956 = vmatmul.mubr.bf16.gmra.mrb[0].mxu0 %v1503
      %v2957 = vpop.f32.mrb[0].mxu0
      %v2958 = vadd.f32 %v2797, %v2957
      %v2959 = vpop.f32.mrb[0].mxu0
      %v2960 = vpop.f32.mrb[0].mxu0
      %v2961 = vadd.f32 %v2800, %v2960
      %v2962 = vpop.f32.mrb[0].mxu0
      %2963 = vmatprep.mubr.bf16.mxu0 %v1518
      %2964 = vmatmul.mubr.bf16.gmra.mrb[0].mxu0 %v1517
      %v2965 = vpop.f32.mrb[0].mxu0
      %v2966 = vadd.f32 %v2805, %v2965
      %v2967 = vpop.f32.mrb[0].mxu0
      %v2968 = vpop.f32.mrb[0].mxu0
      %v2969 = vadd.f32 %v2808, %v2968
      %v2970 = vpop.f32.mrb[0].mxu0
      %2971 = vmatprep.mubr.bf16.mxu0 %v1532
      %2972 = vmatmul.mubr.bf16.gmra.mrb[0].mxu0 %v1531
      %v2973 = vpop.f32.mrb[0].mxu0
      %v2974 = vadd.f32 %v2813, %v2973
      %v2975 = vpop.f32.mrb[0].mxu0
      %v2976 = vpop.f32.mrb[0].mxu0
      %v2977 = vadd.f32 %v2816, %v2976
      %v2978 = vpop.f32.mrb[0].mxu0
      %2979 = vmatprep.mubr.bf16.mxu0 %v1546
      %2980 = vmatmul.mubr.bf16.gmra.mrb[0].mxu0 %v1545
      %v2981 = vpop.f32.mrb[0].mxu0
      %v2982 = vadd.f32 %v2821, %v2981
      %v2983 = vpop.f32.mrb[0].mxu0
      %v2984 = vpop.f32.mrb[0].mxu0
      %v2985 = vadd.f32 %v2824, %v2984
      %v2986 = vpop.f32.mrb[0].mxu0
      %2987 = vmatprep.mubr.bf16.mxu0 %v1560
      %2988 = vmatmul.mubr.bf16.gmra.mrb[0].mxu0 %v1559
      %v2989 = vpop.f32.mrb[0].mxu0
      %v2990 = vadd.f32 %v2829, %v2989
      %v2991 = vpop.f32.mrb[0].mxu0
      %v2992 = vpop.f32.mrb[0].mxu0
      %v2993 = vadd.f32 %v2832, %v2992
      %v2994 = vpop.f32.mrb[0].mxu0
      %2995 = vmatprep.mubr.bf16.mxu0 %v1574
      %2996 = vmatmul.mubr.bf16.gmra.mrb[0].mxu0 %v1573
      %v2997 = vpop.f32.mrb[0].mxu0
      %v2998 = vadd.f32 %v2837, %v2997
      %v2999 = vpop.f32.mrb[0].mxu0
      %v3000 = vpop.f32.mrb[0].mxu0
      %v3001 = vadd.f32 %v2840, %v3000
      %v3002 = vpop.f32.mrb[0].mxu0
      %3003 = vmatprep.mubr.bf16.mxu0 %v1588
      %3004 = vmatmul.mubr.bf16.gmra.mrb[0].mxu0 %v1587
      %v3005 = vpop.f32.mrb[0].mxu0
      %v3006 = vadd.f32 %v2845, %v3005
      %v3007 = vpop.f32.mrb[0].mxu0
      %v3008 = vpop.f32.mrb[0].mxu0
      %v3009 = vadd.f32 %v2848, %v3008
      %v3010 = vpop.f32.mrb[0].mxu0
      %3011 = vmatprep.mubr.bf16.mxu0 %v1602
      %3012 = vmatmul.mubr.bf16.gmra.mrb[0].mxu0 %v1601
      %v3013 = vpop.f32.mrb[0].mxu0
      %v3014 = vadd.f32 %v2853, %v3013
      %v3015 = vpop.f32.mrb[0].mxu0
      %v3016 = vpop.f32.mrb[0].mxu0
      %v3017 = vadd.f32 %v2856, %v3016
      %v3018 = vpop.f32.mrb[0].mxu0
      %3019 = vmatprep.mubr.bf16.mxu0 %v1616
      %3020 = vmatmul.mubr.bf16.gmra.mrb[0].mxu0 %v1615
      %v3021 = vpop.f32.mrb[0].mxu0
      %v3022 = vadd.f32 %v2861, %v3021
      %v3023 = vpop.f32.mrb[0].mxu0
      %v3024 = vpop.f32.mrb[0].mxu0
      %v3025 = vadd.f32 %v2864, %v3024
      %v3026 = vpop.f32.mrb[0].mxu0
      %3027 = vmatprep.mubr.bf16.mxu0 %v1630
      %3028 = vmatmul.mubr.bf16.gmra.mrb[0].mxu0 %v1629
      %v3029 = vpop.f32.mrb[0].mxu0
      %v3030 = vadd.f32 %v2869, %v3029
      %v3031 = vpop.f32.mrb[0].mxu0
      %v3032 = vpop.f32.mrb[0].mxu0
      %v3033 = vadd.f32 %v2872, %v3032
      %v3034 = vpop.f32.mrb[0].mxu0
      %3035 = vmatprep.mubr.bf16.mxu0 %v1644
      %3036 = vmatmul.mubr.bf16.gmra.mrb[0].mxu0 %v1643
      %v3037 = vpop.f32.mrb[0].mxu0
      %v3038 = vadd.f32 %v2877, %v3037
      %v3039 = vpop.f32.mrb[0].mxu0
      %v3040 = vpop.f32.mrb[0].mxu0
      %v3041 = vadd.f32 %v2880, %v3040
      %v3042 = vpop.f32.mrb[0].mxu0
      %3043 = vmatprep.mubr.bf16.mxu0 %v1658
      %3044 = vmatmul.mubr.bf16.gmra.mrb[0].mxu0 %v1657
      %v3045 = vpop.f32.mrb[0].mxu0
      %v3046 = vadd.f32 %v2885, %v3045
      %v3047 = vpop.f32.mrb[0].mxu0
      %v3048 = vpop.f32.mrb[0].mxu0
      %v3049 = vadd.f32 %v2888, %v3048
      %v3050 = vpop.f32.mrb[0].mxu0
      %3051 = vmatprep.mubr.bf16.mxu0 %v1672
      %3052 = vmatmul.mubr.bf16.gmra.mrb[0].mxu0 %v1671
      %v3053 = vpop.f32.mrb[0].mxu0
      %v3054 = vadd.f32 %v2893, %v3053
      %v3055 = vpop.f32.mrb[0].mxu0
      %v3056 = vpop.f32.mrb[0].mxu0
      %v3057 = vadd.f32 %v2896, %v3056
      %v3058 = vpop.f32.mrb[0].mxu0
      %3059 = vdwg.mxu0
      %3060 = vmatprep.subr.bf16.mxu0 0
      %3061 = vmatpush1.bf16.msra.mxu0 %v2401
      %3062 = vmatprep.subr.bf16.mxu0 0
      %3063 = vmatpush1.bf16.msra.mxu0 %v2402
      %3064 = vmatprep.subr.bf16.mxu0 0
      %3065 = vmatpush1.bf16.msra.mxu0 %v2403
      %3066 = vmatprep.subr.bf16.mxu0 0
      %3067 = vmatpush1.bf16.msra.mxu0 %v2404
      %3068 = vmatprep.subr.bf16.mxu0 0
      %3069 = vmatpush1.bf16.msra.mxu0 %v2405
      %3070 = vmatprep.subr.bf16.mxu0 0
      %3071 = vmatpush1.bf16.msra.mxu0 %v2406
      %3072 = vmatprep.subr.bf16.mxu0 0
      %3073 = vmatpush1.bf16.msra.mxu0 %v2407
      %3074 = vmatprep.subr.bf16.mxu0 0
      %3075 = vmatpush1.bf16.msra.mxu0 %v2408
      %3076 = vmatprep.subr.bf16.mxu0 0
      %3077 = vmatpush1.bf16.msra.mxu0 %v2409
      %3078 = vmatprep.subr.bf16.mxu0 0
      %3079 = vmatpush1.bf16.msra.mxu0 %v2410
      %3080 = vmatprep.subr.bf16.mxu0 0
      %3081 = vmatpush1.bf16.msra.mxu0 %v2411
      %3082 = vmatprep.subr.bf16.mxu0 0
      %3083 = vmatpush1.bf16.msra.mxu0 %v2412
      %3084 = vmatprep.subr.bf16.mxu0 0
      %3085 = vmatpush1.bf16.msra.mxu0 %v2413
      %3086 = vmatprep.subr.bf16.mxu0 0
      %3087 = vmatpush1.bf16.msra.mxu0 %v2414
      %3088 = vmatprep.subr.bf16.mxu0 0
      %3089 = vmatpush1.bf16.msra.mxu0 %v2415
      %3090 = vmatprep.subr.bf16.mxu0 0
      %3091 = vmatpush1.bf16.msra.mxu0 %v2416
      %3092 = vmatprep.mubr.bf16.mxu0 %v1464
      %3093 = vmatmul.mubr.bf16.gmra.mrb[0].mxu0 %v1463
      %v3094 = vpop.f32.mrb[0].mxu0
      %v3095 = vadd.f32 %v2934, %v3094
      %v3096 = vpop.f32.mrb[0].mxu0
      %v3097 = vpop.f32.mrb[0].mxu0
      %v3098 = vadd.f32 %v2937, %v3097
      %v3099 = vpop.f32.mrb[0].mxu0
      %3100 = vmatprep.mubr.bf16.mxu0 %v1478
      %3101 = vmatmul.mubr.bf16.gmra.mrb[0].mxu0 %v1477
      %v3102 = vpop.f32.mrb[0].mxu0
      %v3103 = vadd.f32 %v2942, %v3102
      %v3104 = vpop.f32.mrb[0].mxu0
      %v3105 = vpop.f32.mrb[0].mxu0
      %v3106 = vadd.f32 %v2945, %v3105
      %v3107 = vpop.f32.mrb[0].mxu0
      %3108 = vmatprep.mubr.bf16.mxu0 %v1492
      %3109 = vmatmul.mubr.bf16.gmra.mrb[0].mxu0 %v1491
      %v3110 = vpop.f32.mrb[0].mxu0
      %v3111 = vadd.f32 %v2950, %v3110
      %v3112 = vpop.f32.mrb[0].mxu0
      %v3113 = vpop.f32.mrb[0].mxu0
      %v3114 = vadd.f32 %v2953, %v3113
      %v3115 = vpop.f32.mrb[0].mxu0
      %3116 = vmatprep.mubr.bf16.mxu0 %v1506
      %3117 = vmatmul.mubr.bf16.gmra.mrb[0].mxu0 %v1505
      %v3118 = vpop.f32.mrb[0].mxu0
      %v3119 = vadd.f32 %v2958, %v3118
      %v3120 = vpop.f32.mrb[0].mxu0
      %v3121 = vpop.f32.mrb[0].mxu0
      %v3122 = vadd.f32 %v2961, %v3121
      %v3123 = vpop.f32.mrb[0].mxu0
      %3124 = vmatprep.mubr.bf16.mxu0 %v1520
      %3125 = vmatmul.mubr.bf16.gmra.mrb[0].mxu0 %v1519
      %v3126 = vpop.f32.mrb[0].mxu0
      %v3127 = vadd.f32 %v2966, %v3126
      %v3128 = vpop.f32.mrb[0].mxu0
      %v3129 = vpop.f32.mrb[0].mxu0
      %v3130 = vadd.f32 %v2969, %v3129
      %v3131 = vpop.f32.mrb[0].mxu0
      %3132 = vmatprep.mubr.bf16.mxu0 %v1534
      %3133 = vmatmul.mubr.bf16.gmra.mrb[0].mxu0 %v1533
      %v3134 = vpop.f32.mrb[0].mxu0
      %v3135 = vadd.f32 %v2974, %v3134
      %v3136 = vpop.f32.mrb[0].mxu0
      %v3137 = vpop.f32.mrb[0].mxu0
      %v3138 = vadd.f32 %v2977, %v3137
      %v3139 = vpop.f32.mrb[0].mxu0
      %3140 = vmatprep.mubr.bf16.mxu0 %v1548
      %3141 = vmatmul.mubr.bf16.gmra.mrb[0].mxu0 %v1547
      %v3142 = vpop.f32.mrb[0].mxu0
      %v3143 = vadd.f32 %v2982, %v3142
      %v3144 = vpop.f32.mrb[0].mxu0
      %v3145 = vpop.f32.mrb[0].mxu0
      %v3146 = vadd.f32 %v2985, %v3145
      %v3147 = vpop.f32.mrb[0].mxu0
      %3148 = vmatprep.mubr.bf16.mxu0 %v1562
      %3149 = vmatmul.mubr.bf16.gmra.mrb[0].mxu0 %v1561
      %v3150 = vpop.f32.mrb[0].mxu0
      %v3151 = vadd.f32 %v2990, %v3150
      %v3152 = vpop.f32.mrb[0].mxu0
      %v3153 = vpop.f32.mrb[0].mxu0
      %v3154 = vadd.f32 %v2993, %v3153
      %v3155 = vpop.f32.mrb[0].mxu0
      %3156 = vmatprep.mubr.bf16.mxu0 %v1576
      %3157 = vmatmul.mubr.bf16.gmra.mrb[0].mxu0 %v1575
      %v3158 = vpop.f32.mrb[0].mxu0
      %v3159 = vadd.f32 %v2998, %v3158
      %v3160 = vpop.f32.mrb[0].mxu0
      %v3161 = vpop.f32.mrb[0].mxu0
      %v3162 = vadd.f32 %v3001, %v3161
      %v3163 = vpop.f32.mrb[0].mxu0
      %3164 = vmatprep.mubr.bf16.mxu0 %v1590
      %3165 = vmatmul.mubr.bf16.gmra.mrb[0].mxu0 %v1589
      %v3166 = vpop.f32.mrb[0].mxu0
      %v3167 = vadd.f32 %v3006, %v3166
      %v3168 = vpop.f32.mrb[0].mxu0
      %v3169 = vpop.f32.mrb[0].mxu0
      %v3170 = vadd.f32 %v3009, %v3169
      %v3171 = vpop.f32.mrb[0].mxu0
      %3172 = vmatprep.mubr.bf16.mxu0 %v1604
      %3173 = vmatmul.mubr.bf16.gmra.mrb[0].mxu0 %v1603
      %v3174 = vpop.f32.mrb[0].mxu0
      %v3175 = vadd.f32 %v3014, %v3174
      %v3176 = vpop.f32.mrb[0].mxu0
      %v3177 = vpop.f32.mrb[0].mxu0
      %v3178 = vadd.f32 %v3017, %v3177
      %v3179 = vpop.f32.mrb[0].mxu0
      %3180 = vmatprep.mubr.bf16.mxu0 %v1618
      %3181 = vmatmul.mubr.bf16.gmra.mrb[0].mxu0 %v1617
      %v3182 = vpop.f32.mrb[0].mxu0
      %v3183 = vadd.f32 %v3022, %v3182
      %v3184 = vpop.f32.mrb[0].mxu0
      %v3185 = vpop.f32.mrb[0].mxu0
      %v3186 = vadd.f32 %v3025, %v3185
      %v3187 = vpop.f32.mrb[0].mxu0
      %3188 = vmatprep.mubr.bf16.mxu0 %v1632
      %3189 = vmatmul.mubr.bf16.gmra.mrb[0].mxu0 %v1631
      %v3190 = vpop.f32.mrb[0].mxu0
      %v3191 = vadd.f32 %v3030, %v3190
      %v3192 = vpop.f32.mrb[0].mxu0
      %v3193 = vpop.f32.mrb[0].mxu0
      %v3194 = vadd.f32 %v3033, %v3193
      %v3195 = vpop.f32.mrb[0].mxu0
      %3196 = vmatprep.mubr.bf16.mxu0 %v1646
      %3197 = vmatmul.mubr.bf16.gmra.mrb[0].mxu0 %v1645
      %v3198 = vpop.f32.mrb[0].mxu0
      %v3199 = vadd.f32 %v3038, %v3198
      %v3200 = vpop.f32.mrb[0].mxu0
      %v3201 = vpop.f32.mrb[0].mxu0
      %v3202 = vadd.f32 %v3041, %v3201
      %v3203 = vpop.f32.mrb[0].mxu0
      %3204 = vmatprep.mubr.bf16.mxu0 %v1660
      %3205 = vmatmul.mubr.bf16.gmra.mrb[0].mxu0 %v1659
      %v3206 = vpop.f32.mrb[0].mxu0
      %v3207 = vadd.f32 %v3046, %v3206
      %v3208 = vpop.f32.mrb[0].mxu0
      %v3209 = vpop.f32.mrb[0].mxu0
      %v3210 = vadd.f32 %v3049, %v3209
      %v3211 = vpop.f32.mrb[0].mxu0
      %3212 = vmatprep.mubr.bf16.mxu0 %v1674
      %3213 = vmatmul.mubr.bf16.gmra.mrb[0].mxu0 %v1673
      %v3214 = vpop.f32.mrb[0].mxu0
      %v3215 = vadd.f32 %v3054, %v3214
      %v3216 = vpop.f32.mrb[0].mxu0
      %v3217 = vpop.f32.mrb[0].mxu0
      %v3218 = vadd.f32 %v3057, %v3217
      %v3219 = vpop.f32.mrb[0].mxu0
      %3220 = vdwg.mxu0
      %3221 = vmatprep.subr.bf16.mxu0 0
      %3222 = vmatpush1.bf16.msra.mxu0 %v2417
      %3223 = vmatprep.subr.bf16.mxu0 0
      %3224 = vmatpush1.bf16.msra.mxu0 %v2418
      %3225 = vmatprep.subr.bf16.mxu0 0
      %3226 = vmatpush1.bf16.msra.mxu0 %v2419
      %3227 = vmatprep.subr.bf16.mxu0 0
      %3228 = vmatpush1.bf16.msra.mxu0 %v2420
      %3229 = vmatprep.subr.bf16.mxu0 0
      %3230 = vmatpush1.bf16.msra.mxu0 %v2421
      %3231 = vmatprep.subr.bf16.mxu0 0
      %3232 = vmatpush1.bf16.msra.mxu0 %v2422
      %3233 = vmatprep.subr.bf16.mxu0 0
      %3234 = vmatpush1.bf16.msra.mxu0 %v2423
      %3235 = vmatprep.subr.bf16.mxu0 0
      %3236 = vmatpush1.bf16.msra.mxu0 %v2424
      %3237 = vmatprep.subr.bf16.mxu0 0
      %3238 = vmatpush1.bf16.msra.mxu0 %v2425
      %3239 = vmatprep.subr.bf16.mxu0 0
      %3240 = vmatpush1.bf16.msra.mxu0 %v2426
      %3241 = vmatprep.subr.bf16.mxu0 0
      %3242 = vmatpush1.bf16.msra.mxu0 %v2427
      %3243 = vmatprep.subr.bf16.mxu0 0
      %3244 = vmatpush1.bf16.msra.mxu0 %v2428
      %3245 = vmatprep.subr.bf16.mxu0 0
      %3246 = vmatpush1.bf16.msra.mxu0 %v2429
      %3247 = vmatprep.subr.bf16.mxu0 0
      %3248 = vmatpush1.bf16.msra.mxu0 %v2430
      %3249 = vmatprep.subr.bf16.mxu0 0
      %3250 = vmatpush1.bf16.msra.mxu0 %v2431
      %3251 = vmatprep.subr.bf16.mxu0 0
      %3252 = vmatpush1.bf16.msra.mxu0 %v2432
      %3253 = vmatprep.mubr.bf16.mxu0 %v1466
      %3254 = vmatmul.mubr.bf16.gmra.mrb[0].mxu0 %v1465
      %v3255 = vpop.f32.mrb[0].mxu0
      %v3256 = vadd.f32 %v3095, %v3255
      %v3257 = vpop.f32.mrb[0].mxu0
      %v3258 = vpop.f32.mrb[0].mxu0
      %v3259 = vadd.f32 %v3098, %v3258
      %v3260 = vpop.f32.mrb[0].mxu0
      %3261 = vmatprep.mubr.bf16.mxu0 %v1480
      %3262 = vmatmul.mubr.bf16.gmra.mrb[0].mxu0 %v1479
      %v3263 = vpop.f32.mrb[0].mxu0
      %v3264 = vadd.f32 %v3103, %v3263
      %v3265 = vpop.f32.mrb[0].mxu0
      %v3266 = vpop.f32.mrb[0].mxu0
      %v3267 = vadd.f32 %v3106, %v3266
      %v3268 = vpop.f32.mrb[0].mxu0
      %3269 = vmatprep.mubr.bf16.mxu0 %v1494
      %3270 = vmatmul.mubr.bf16.gmra.mrb[0].mxu0 %v1493
      %v3271 = vpop.f32.mrb[0].mxu0
      %v3272 = vadd.f32 %v3111, %v3271
      %v3273 = vpop.f32.mrb[0].mxu0
      %v3274 = vpop.f32.mrb[0].mxu0
      %v3275 = vadd.f32 %v3114, %v3274
      %v3276 = vpop.f32.mrb[0].mxu0
      %3277 = vmatprep.mubr.bf16.mxu0 %v1508
      %3278 = vmatmul.mubr.bf16.gmra.mrb[0].mxu0 %v1507
      %v3279 = vpop.f32.mrb[0].mxu0
      %v3280 = vadd.f32 %v3119, %v3279
      %v3281 = vpop.f32.mrb[0].mxu0
      %v3282 = vpop.f32.mrb[0].mxu0
      %v3283 = vadd.f32 %v3122, %v3282
      %v3284 = vpop.f32.mrb[0].mxu0
      %3285 = vmatprep.mubr.bf16.mxu0 %v1522
      %3286 = vmatmul.mubr.bf16.gmra.mrb[0].mxu0 %v1521
      %v3287 = vpop.f32.mrb[0].mxu0
      %v3288 = vadd.f32 %v3127, %v3287
      %v3289 = vpop.f32.mrb[0].mxu0
      %v3290 = vpop.f32.mrb[0].mxu0
      %v3291 = vadd.f32 %v3130, %v3290
      %v3292 = vpop.f32.mrb[0].mxu0
      %3293 = vmatprep.mubr.bf16.mxu0 %v1536
      %3294 = vmatmul.mubr.bf16.gmra.mrb[0].mxu0 %v1535
      %v3295 = vpop.f32.mrb[0].mxu0
      %v3296 = vadd.f32 %v3135, %v3295
      %v3297 = vpop.f32.mrb[0].mxu0
      %v3298 = vpop.f32.mrb[0].mxu0
      %v3299 = vadd.f32 %v3138, %v3298
      %v3300 = vpop.f32.mrb[0].mxu0
      %3301 = vmatprep.mubr.bf16.mxu0 %v1550
      %3302 = vmatmul.mubr.bf16.gmra.mrb[0].mxu0 %v1549
      %v3303 = vpop.f32.mrb[0].mxu0
      %v3304 = vadd.f32 %v3143, %v3303
      %v3305 = vpop.f32.mrb[0].mxu0
      %v3306 = vpop.f32.mrb[0].mxu0
      %v3307 = vadd.f32 %v3146, %v3306
      %v3308 = vpop.f32.mrb[0].mxu0
      %3309 = vmatprep.mubr.bf16.mxu0 %v1564
      %3310 = vmatmul.mubr.bf16.gmra.mrb[0].mxu0 %v1563
      %v3311 = vpop.f32.mrb[0].mxu0
      %v3312 = vadd.f32 %v3151, %v3311
      %v3313 = vpop.f32.mrb[0].mxu0
      %v3314 = vpop.f32.mrb[0].mxu0
      %v3315 = vadd.f32 %v3154, %v3314
      %v3316 = vpop.f32.mrb[0].mxu0
      %3317 = vmatprep.mubr.bf16.mxu0 %v1578
      %3318 = vmatmul.mubr.bf16.gmra.mrb[0].mxu0 %v1577
      %v3319 = vpop.f32.mrb[0].mxu0
      %v3320 = vadd.f32 %v3159, %v3319
      %v3321 = vpop.f32.mrb[0].mxu0
      %v3322 = vpop.f32.mrb[0].mxu0
      %v3323 = vadd.f32 %v3162, %v3322
      %v3324 = vpop.f32.mrb[0].mxu0
      %3325 = vmatprep.mubr.bf16.mxu0 %v1592
      %3326 = vmatmul.mubr.bf16.gmra.mrb[0].mxu0 %v1591
      %v3327 = vpop.f32.mrb[0].mxu0
      %v3328 = vadd.f32 %v3167, %v3327
      %v3329 = vpop.f32.mrb[0].mxu0
      %v3330 = vpop.f32.mrb[0].mxu0
      %v3331 = vadd.f32 %v3170, %v3330
      %v3332 = vpop.f32.mrb[0].mxu0
      %3333 = vmatprep.mubr.bf16.mxu0 %v1606
      %3334 = vmatmul.mubr.bf16.gmra.mrb[0].mxu0 %v1605
      %v3335 = vpop.f32.mrb[0].mxu0
      %v3336 = vadd.f32 %v3175, %v3335
      %v3337 = vpop.f32.mrb[0].mxu0
      %v3338 = vpop.f32.mrb[0].mxu0
      %v3339 = vadd.f32 %v3178, %v3338
      %v3340 = vpop.f32.mrb[0].mxu0
      %3341 = vmatprep.mubr.bf16.mxu0 %v1620
      %3342 = vmatmul.mubr.bf16.gmra.mrb[0].mxu0 %v1619
      %v3343 = vpop.f32.mrb[0].mxu0
      %v3344 = vadd.f32 %v3183, %v3343
      %v3345 = vpop.f32.mrb[0].mxu0
      %v3346 = vpop.f32.mrb[0].mxu0
      %v3347 = vadd.f32 %v3186, %v3346
      %v3348 = vpop.f32.mrb[0].mxu0
      %3349 = vmatprep.mubr.bf16.mxu0 %v1634
      %3350 = vmatmul.mubr.bf16.gmra.mrb[0].mxu0 %v1633
      %v3351 = vpop.f32.mrb[0].mxu0
      %v3352 = vadd.f32 %v3191, %v3351
      %v3353 = vpop.f32.mrb[0].mxu0
      %v3354 = vpop.f32.mrb[0].mxu0
      %v3355 = vadd.f32 %v3194, %v3354
      %v3356 = vpop.f32.mrb[0].mxu0
      %3357 = vmatprep.mubr.bf16.mxu0 %v1648
      %3358 = vmatmul.mubr.bf16.gmra.mrb[0].mxu0 %v1647
      %v3359 = vpop.f32.mrb[0].mxu0
      %v3360 = vadd.f32 %v3199, %v3359
      %v3361 = vpop.f32.mrb[0].mxu0
      %v3362 = vpop.f32.mrb[0].mxu0
      %v3363 = vadd.f32 %v3202, %v3362
      %v3364 = vpop.f32.mrb[0].mxu0
      %3365 = vmatprep.mubr.bf16.mxu0 %v1662
      %3366 = vmatmul.mubr.bf16.gmra.mrb[0].mxu0 %v1661
      %v3367 = vpop.f32.mrb[0].mxu0
      %v3368 = vadd.f32 %v3207, %v3367
      %v3369 = vpop.f32.mrb[0].mxu0
      %v3370 = vpop.f32.mrb[0].mxu0
      %v3371 = vadd.f32 %v3210, %v3370
      %v3372 = vpop.f32.mrb[0].mxu0
      %3373 = vmatprep.mubr.bf16.mxu0 %v1676
      %3374 = vmatmul.mubr.bf16.gmra.mrb[0].mxu0 %v1675
      %v3375 = vpop.f32.mrb[0].mxu0
      %v3376 = vadd.f32 %v3215, %v3375
      %v3377 = vpop.f32.mrb[0].mxu0
      %v3378 = vpop.f32.mrb[0].mxu0
      %v3379 = vadd.f32 %v3218, %v3378
      %v3380 = vpop.f32.mrb[0].mxu0
      %3381 = vdwg.mxu0
      %3382 = vmatprep.subr.bf16.mxu0 0
      %3383 = vmatpush1.bf16.msra.mxu0 %v2433
      %3384 = vmatprep.subr.bf16.mxu0 0
      %3385 = vmatpush1.bf16.msra.mxu0 %v2434
      %3386 = vmatprep.subr.bf16.mxu0 0
      %3387 = vmatpush1.bf16.msra.mxu0 %v2435
      %3388 = vmatprep.subr.bf16.mxu0 0
      %3389 = vmatpush1.bf16.msra.mxu0 %v2436
      %3390 = vmatprep.subr.bf16.mxu0 0
      %3391 = vmatpush1.bf16.msra.mxu0 %v2437
      %3392 = vmatprep.subr.bf16.mxu0 0
      %3393 = vmatpush1.bf16.msra.mxu0 %v2438
      %3394 = vmatprep.subr.bf16.mxu0 0
      %3395 = vmatpush1.bf16.msra.mxu0 %v2439
      %3396 = vmatprep.subr.bf16.mxu0 0
      %3397 = vmatpush1.bf16.msra.mxu0 %v2440
      %3398 = vmatprep.subr.bf16.mxu0 0
      %3399 = vmatpush1.bf16.msra.mxu0 %v2441
      %3400 = vmatprep.subr.bf16.mxu0 0
      %3401 = vmatpush1.bf16.msra.mxu0 %v2442
      %3402 = vmatprep.subr.bf16.mxu0 0
      %3403 = vmatpush1.bf16.msra.mxu0 %v2443
      %3404 = vmatprep.subr.bf16.mxu0 0
      %3405 = vmatpush1.bf16.msra.mxu0 %v2444
      %3406 = vmatprep.subr.bf16.mxu0 0
      %3407 = vmatpush1.bf16.msra.mxu0 %v2445
      %3408 = vmatprep.subr.bf16.mxu0 0
      %3409 = vmatpush1.bf16.msra.mxu0 %v2446
      %3410 = vmatprep.subr.bf16.mxu0 0
      %3411 = vmatpush1.bf16.msra.mxu0 %v2447
      %3412 = vmatprep.subr.bf16.mxu0 0
      %3413 = vmatpush1.bf16.msra.mxu0 %v2448
      %3414 = vmatprep.mubr.bf16.mxu0 %v1468
      %3415 = vmatmul.mubr.bf16.gmra.mrb[0].mxu0 %v1467
      %v3416 = vpop.f32.mrb[0].mxu0
      %v3417 = vadd.f32 %v3256, %v3416
      %v3418 = vpop.f32.mrb[0].mxu0
      %v3419 = vpop.f32.mrb[0].mxu0
      %v3420 = vadd.f32 %v3259, %v3419
      %v3421 = vpop.f32.mrb[0].mxu0
      %3422 = vmatprep.mubr.bf16.mxu0 %v1482
      %3423 = vmatmul.mubr.bf16.gmra.mrb[0].mxu0 %v1481
      %v3424 = vpop.f32.mrb[0].mxu0
      %v3425 = vadd.f32 %v3264, %v3424
      %v3426 = vpop.f32.mrb[0].mxu0
      %v3427 = vpop.f32.mrb[0].mxu0
      %v3428 = vadd.f32 %v3267, %v3427
      %v3429 = vpop.f32.mrb[0].mxu0
      %3430 = vmatprep.mubr.bf16.mxu0 %v1496
      %3431 = vmatmul.mubr.bf16.gmra.mrb[0].mxu0 %v1495
      %v3432 = vpop.f32.mrb[0].mxu0
      %v3433 = vadd.f32 %v3272, %v3432
      %v3434 = vpop.f32.mrb[0].mxu0
      %v3435 = vpop.f32.mrb[0].mxu0
      %v3436 = vadd.f32 %v3275, %v3435
      %v3437 = vpop.f32.mrb[0].mxu0
      %3438 = vmatprep.mubr.bf16.mxu0 %v1510
      %3439 = vmatmul.mubr.bf16.gmra.mrb[0].mxu0 %v1509
      %v3440 = vpop.f32.mrb[0].mxu0
      %v3441 = vadd.f32 %v3280, %v3440
      %v3442 = vpop.f32.mrb[0].mxu0
      %v3443 = vpop.f32.mrb[0].mxu0
      %v3444 = vadd.f32 %v3283, %v3443
      %v3445 = vpop.f32.mrb[0].mxu0
      %3446 = vmatprep.mubr.bf16.mxu0 %v1524
      %3447 = vmatmul.mubr.bf16.gmra.mrb[0].mxu0 %v1523
      %v3448 = vpop.f32.mrb[0].mxu0
      %v3449 = vadd.f32 %v3288, %v3448
      %v3450 = vpop.f32.mrb[0].mxu0
      %v3451 = vpop.f32.mrb[0].mxu0
      %v3452 = vadd.f32 %v3291, %v3451
      %v3453 = vpop.f32.mrb[0].mxu0
      %3454 = vmatprep.mubr.bf16.mxu0 %v1538
      %3455 = vmatmul.mubr.bf16.gmra.mrb[0].mxu0 %v1537
      %v3456 = vpop.f32.mrb[0].mxu0
      %v3457 = vadd.f32 %v3296, %v3456
      %v3458 = vpop.f32.mrb[0].mxu0
      %v3459 = vpop.f32.mrb[0].mxu0
      %v3460 = vadd.f32 %v3299, %v3459
      %v3461 = vpop.f32.mrb[0].mxu0
      %3462 = vmatprep.mubr.bf16.mxu0 %v1552
      %3463 = vmatmul.mubr.bf16.gmra.mrb[0].mxu0 %v1551
      %v3464 = vpop.f32.mrb[0].mxu0
      %v3465 = vadd.f32 %v3304, %v3464
      %v3466 = vpop.f32.mrb[0].mxu0
      %v3467 = vpop.f32.mrb[0].mxu0
      %v3468 = vadd.f32 %v3307, %v3467
      %v3469 = vpop.f32.mrb[0].mxu0
      %3470 = vmatprep.mubr.bf16.mxu0 %v1566
      %3471 = vmatmul.mubr.bf16.gmra.mrb[0].mxu0 %v1565
      %v3472 = vpop.f32.mrb[0].mxu0
      %v3473 = vadd.f32 %v3312, %v3472
      %v3474 = vpop.f32.mrb[0].mxu0
      %v3475 = vpop.f32.mrb[0].mxu0
      %v3476 = vadd.f32 %v3315, %v3475
      %v3477 = vpop.f32.mrb[0].mxu0
      %3478 = vmatprep.mubr.bf16.mxu0 %v1580
      %3479 = vmatmul.mubr.bf16.gmra.mrb[0].mxu0 %v1579
      %v3480 = vpop.f32.mrb[0].mxu0
      %v3481 = vadd.f32 %v3320, %v3480
      %v3482 = vpop.f32.mrb[0].mxu0
      %v3483 = vpop.f32.mrb[0].mxu0
      %v3484 = vadd.f32 %v3323, %v3483
      %v3485 = vpop.f32.mrb[0].mxu0
      %3486 = vmatprep.mubr.bf16.mxu0 %v1594
      %3487 = vmatmul.mubr.bf16.gmra.mrb[0].mxu0 %v1593
      %v3488 = vpop.f32.mrb[0].mxu0
      %v3489 = vadd.f32 %v3328, %v3488
      %v3490 = vpop.f32.mrb[0].mxu0
      %v3491 = vpop.f32.mrb[0].mxu0
      %v3492 = vadd.f32 %v3331, %v3491
      %v3493 = vpop.f32.mrb[0].mxu0
      %3494 = vmatprep.mubr.bf16.mxu0 %v1608
      %3495 = vmatmul.mubr.bf16.gmra.mrb[0].mxu0 %v1607
      %v3496 = vpop.f32.mrb[0].mxu0
      %v3497 = vadd.f32 %v3336, %v3496
      %v3498 = vpop.f32.mrb[0].mxu0
      %v3499 = vpop.f32.mrb[0].mxu0
      %v3500 = vadd.f32 %v3339, %v3499
      %v3501 = vpop.f32.mrb[0].mxu0
      %3502 = vmatprep.mubr.bf16.mxu0 %v1622
      %3503 = vmatmul.mubr.bf16.gmra.mrb[0].mxu0 %v1621
      %v3504 = vpop.f32.mrb[0].mxu0
      %v3505 = vadd.f32 %v3344, %v3504
      %v3506 = vpop.f32.mrb[0].mxu0
      %v3507 = vpop.f32.mrb[0].mxu0
      %v3508 = vadd.f32 %v3347, %v3507
      %v3509 = vpop.f32.mrb[0].mxu0
      %3510 = vmatprep.mubr.bf16.mxu0 %v1636
      %3511 = vmatmul.mubr.bf16.gmra.mrb[0].mxu0 %v1635
      %v3512 = vpop.f32.mrb[0].mxu0
      %v3513 = vadd.f32 %v3352, %v3512
      %v3514 = vpop.f32.mrb[0].mxu0
      %v3515 = vpop.f32.mrb[0].mxu0
      %v3516 = vadd.f32 %v3355, %v3515
      %v3517 = vpop.f32.mrb[0].mxu0
      %3518 = vmatprep.mubr.bf16.mxu0 %v1650
      %3519 = vmatmul.mubr.bf16.gmra.mrb[0].mxu0 %v1649
      %v3520 = vpop.f32.mrb[0].mxu0
      %v3521 = vadd.f32 %v3360, %v3520
      %v3522 = vpop.f32.mrb[0].mxu0
      %v3523 = vpop.f32.mrb[0].mxu0
      %v3524 = vadd.f32 %v3363, %v3523
      %v3525 = vpop.f32.mrb[0].mxu0
      %3526 = vmatprep.mubr.bf16.mxu0 %v1664
      %3527 = vmatmul.mubr.bf16.gmra.mrb[0].mxu0 %v1663
      %v3528 = vpop.f32.mrb[0].mxu0
      %v3529 = vadd.f32 %v3368, %v3528
      %v3530 = vpop.f32.mrb[0].mxu0
      %v3531 = vpop.f32.mrb[0].mxu0
      %v3532 = vadd.f32 %v3371, %v3531
      %v3533 = vpop.f32.mrb[0].mxu0
      %3534 = vmatprep.mubr.bf16.mxu0 %v1678
      %3535 = vmatmul.mubr.bf16.gmra.mrb[0].mxu0 %v1677
      %v3536 = vpop.f32.mrb[0].mxu0
      %v3537 = vadd.f32 %v3376, %v3536
      %v3538 = vpop.f32.mrb[0].mxu0
      %v3539 = vpop.f32.mrb[0].mxu0
      %v3540 = vadd.f32 %v3379, %v3539
      %v3541 = vpop.f32.mrb[0].mxu0
      %3542 = vdwg.mxu0
      %3543 = vmatprep.subr.bf16.mxu0 0
      %3544 = vmatpush1.bf16.msra.mxu0 %v2449
      %3545 = vmatprep.subr.bf16.mxu0 0
      %3546 = vmatpush1.bf16.msra.mxu0 %v2450
      %3547 = vmatprep.subr.bf16.mxu0 0
      %3548 = vmatpush1.bf16.msra.mxu0 %v2451
      %3549 = vmatprep.subr.bf16.mxu0 0
      %3550 = vmatpush1.bf16.msra.mxu0 %v2452
      %3551 = vmatprep.subr.bf16.mxu0 0
      %3552 = vmatpush1.bf16.msra.mxu0 %v2453
      %3553 = vmatprep.subr.bf16.mxu0 0
      %3554 = vmatpush1.bf16.msra.mxu0 %v2454
      %3555 = vmatprep.subr.bf16.mxu0 0
      %3556 = vmatpush1.bf16.msra.mxu0 %v2455
      %3557 = vmatprep.subr.bf16.mxu0 0
      %3558 = vmatpush1.bf16.msra.mxu0 %v2456
      %3559 = vmatprep.subr.bf16.mxu0 0
      %3560 = vmatpush1.bf16.msra.mxu0 %v2457
      %3561 = vmatprep.subr.bf16.mxu0 0
      %3562 = vmatpush1.bf16.msra.mxu0 %v2458
      %3563 = vmatprep.subr.bf16.mxu0 0
      %3564 = vmatpush1.bf16.msra.mxu0 %v2459
      %3565 = vmatprep.subr.bf16.mxu0 0
      %3566 = vmatpush1.bf16.msra.mxu0 %v2460
      %3567 = vmatprep.subr.bf16.mxu0 0
      %3568 = vmatpush1.bf16.msra.mxu0 %v2461
      %3569 = vmatprep.subr.bf16.mxu0 0
      %3570 = vmatpush1.bf16.msra.mxu0 %v2462
      %3571 = vmatprep.subr.bf16.mxu0 0
      %3572 = vmatpush1.bf16.msra.mxu0 %v2463
      %3573 = vmatprep.subr.bf16.mxu0 0
      %3574 = vmatpush1.bf16.msra.mxu0 %v2464
      %3575 = vmatprep.mubr.bf16.mxu0 %v1470
      %3576 = vmatmul.mubr.bf16.gmra.mrb[0].mxu0 %v1469
      %v3577 = vpop.f32.mrb[0].mxu0
      %v3578 = vadd.f32 %v3417, %v3577
      %v3579 = vpop.f32.mrb[0].mxu0
      %v3580 = vpop.f32.mrb[0].mxu0
      %v3581 = vadd.f32 %v3420, %v3580
      %v3582 = vpop.f32.mrb[0].mxu0
      %3583 = vmatprep.mubr.bf16.mxu0 %v1484
      %3584 = vmatmul.mubr.bf16.gmra.mrb[0].mxu0 %v1483
      %v3585 = vpop.f32.mrb[0].mxu0
      %v3586 = vadd.f32 %v3425, %v3585
      %v3587 = vpop.f32.mrb[0].mxu0
      %v3588 = vpop.f32.mrb[0].mxu0
      %v3589 = vadd.f32 %v3428, %v3588
      %v3590 = vpop.f32.mrb[0].mxu0
      %3591 = vmatprep.mubr.bf16.mxu0 %v1498
      %3592 = vmatmul.mubr.bf16.gmra.mrb[0].mxu0 %v1497
      %v3593 = vpop.f32.mrb[0].mxu0
      %v3594 = vadd.f32 %v3433, %v3593
      %v3595 = vpop.f32.mrb[0].mxu0
      %v3596 = vpop.f32.mrb[0].mxu0
      %v3597 = vadd.f32 %v3436, %v3596
      %v3598 = vpop.f32.mrb[0].mxu0
      %3599 = vmatprep.mubr.bf16.mxu0 %v1512
      %3600 = vmatmul.mubr.bf16.gmra.mrb[0].mxu0 %v1511
      %v3601 = vpop.f32.mrb[0].mxu0
      %v3602 = vadd.f32 %v3441, %v3601
      %v3603 = vpop.f32.mrb[0].mxu0
      %v3604 = vpop.f32.mrb[0].mxu0
      %v3605 = vadd.f32 %v3444, %v3604
      %v3606 = vpop.f32.mrb[0].mxu0
      %3607 = vmatprep.mubr.bf16.mxu0 %v1526
      %3608 = vmatmul.mubr.bf16.gmra.mrb[0].mxu0 %v1525
      %v3609 = vpop.f32.mrb[0].mxu0
      %v3610 = vadd.f32 %v3449, %v3609
      %v3611 = vpop.f32.mrb[0].mxu0
      %v3612 = vpop.f32.mrb[0].mxu0
      %v3613 = vadd.f32 %v3452, %v3612
      %v3614 = vpop.f32.mrb[0].mxu0
      %3615 = vmatprep.mubr.bf16.mxu0 %v1540
      %3616 = vmatmul.mubr.bf16.gmra.mrb[0].mxu0 %v1539
      %v3617 = vpop.f32.mrb[0].mxu0
      %v3618 = vadd.f32 %v3457, %v3617
      %v3619 = vpop.f32.mrb[0].mxu0
      %v3620 = vpop.f32.mrb[0].mxu0
      %v3621 = vadd.f32 %v3460, %v3620
      %v3622 = vpop.f32.mrb[0].mxu0
      %3623 = vmatprep.mubr.bf16.mxu0 %v1554
      %3624 = vmatmul.mubr.bf16.gmra.mrb[0].mxu0 %v1553
      %v3625 = vpop.f32.mrb[0].mxu0
      %v3626 = vadd.f32 %v3465, %v3625
      %v3627 = vpop.f32.mrb[0].mxu0
      %v3628 = vpop.f32.mrb[0].mxu0
      %v3629 = vadd.f32 %v3468, %v3628
      %v3630 = vpop.f32.mrb[0].mxu0
      %3631 = vmatprep.mubr.bf16.mxu0 %v1568
      %3632 = vmatmul.mubr.bf16.gmra.mrb[0].mxu0 %v1567
      %v3633 = vpop.f32.mrb[0].mxu0
      %v3634 = vadd.f32 %v3473, %v3633
      %v3635 = vpop.f32.mrb[0].mxu0
      %v3636 = vpop.f32.mrb[0].mxu0
      %v3637 = vadd.f32 %v3476, %v3636
      %v3638 = vpop.f32.mrb[0].mxu0
      %3639 = vmatprep.mubr.bf16.mxu0 %v1582
      %3640 = vmatmul.mubr.bf16.gmra.mrb[0].mxu0 %v1581
      %v3641 = vpop.f32.mrb[0].mxu0
      %v3642 = vadd.f32 %v3481, %v3641
      %v3643 = vpop.f32.mrb[0].mxu0
      %v3644 = vpop.f32.mrb[0].mxu0
      %v3645 = vadd.f32 %v3484, %v3644
      %v3646 = vpop.f32.mrb[0].mxu0
      %3647 = vmatprep.mubr.bf16.mxu0 %v1596
      %3648 = vmatmul.mubr.bf16.gmra.mrb[0].mxu0 %v1595
      %v3649 = vpop.f32.mrb[0].mxu0
      %v3650 = vadd.f32 %v3489, %v3649
      %v3651 = vpop.f32.mrb[0].mxu0
      %v3652 = vpop.f32.mrb[0].mxu0
      %v3653 = vadd.f32 %v3492, %v3652
      %v3654 = vpop.f32.mrb[0].mxu0
      %3655 = vmatprep.mubr.bf16.mxu0 %v1610
      %3656 = vmatmul.mubr.bf16.gmra.mrb[0].mxu0 %v1609
      %v3657 = vpop.f32.mrb[0].mxu0
      %v3658 = vadd.f32 %v3497, %v3657
      %v3659 = vpop.f32.mrb[0].mxu0
      %v3660 = vpop.f32.mrb[0].mxu0
      %v3661 = vadd.f32 %v3500, %v3660
      %v3662 = vpop.f32.mrb[0].mxu0
      %3663 = vmatprep.mubr.bf16.mxu0 %v1624
      %3664 = vmatmul.mubr.bf16.gmra.mrb[0].mxu0 %v1623
      %v3665 = vpop.f32.mrb[0].mxu0
      %v3666 = vadd.f32 %v3505, %v3665
      %v3667 = vpop.f32.mrb[0].mxu0
      %v3668 = vpop.f32.mrb[0].mxu0
      %v3669 = vadd.f32 %v3508, %v3668
      %v3670 = vpop.f32.mrb[0].mxu0
      %3671 = vmatprep.mubr.bf16.mxu0 %v1638
      %3672 = vmatmul.mubr.bf16.gmra.mrb[0].mxu0 %v1637
      %v3673 = vpop.f32.mrb[0].mxu0
      %v3674 = vadd.f32 %v3513, %v3673
      %v3675 = vpop.f32.mrb[0].mxu0
      %v3676 = vpop.f32.mrb[0].mxu0
      %v3677 = vadd.f32 %v3516, %v3676
      %v3678 = vpop.f32.mrb[0].mxu0
      %3679 = vmatprep.mubr.bf16.mxu0 %v1652
      %3680 = vmatmul.mubr.bf16.gmra.mrb[0].mxu0 %v1651
      %v3681 = vpop.f32.mrb[0].mxu0
      %v3682 = vadd.f32 %v3521, %v3681
      %v3683 = vpop.f32.mrb[0].mxu0
      %v3684 = vpop.f32.mrb[0].mxu0
      %v3685 = vadd.f32 %v3524, %v3684
      %v3686 = vpop.f32.mrb[0].mxu0
      %3687 = vmatprep.mubr.bf16.mxu0 %v1666
      %3688 = vmatmul.mubr.bf16.gmra.mrb[0].mxu0 %v1665
      %v3689 = vpop.f32.mrb[0].mxu0
      %v3690 = vadd.f32 %v3529, %v3689
      %v3691 = vpop.f32.mrb[0].mxu0
      %v3692 = vpop.f32.mrb[0].mxu0
      %v3693 = vadd.f32 %v3532, %v3692
      %v3694 = vpop.f32.mrb[0].mxu0
      %3695 = vmatprep.mubr.bf16.mxu0 %v1680
      %3696 = vmatmul.mubr.bf16.gmra.mrb[0].mxu0 %v1679
      %v3697 = vpop.f32.mrb[0].mxu0
      %v3698 = vadd.f32 %v3537, %v3697
      %v3699 = vpop.f32.mrb[0].mxu0
      %v3700 = vpop.f32.mrb[0].mxu0
      %v3701 = vadd.f32 %v3540, %v3700
      %v3702 = vpop.f32.mrb[0].mxu0
      %3703 = vdwg.mxu0
      %v3704 = vadd.f32 %v305, %v3578
      %v3705 = vadd.f32 %v306, %v3581
      %v3706 = vadd.f32 %v307, %v3586
      %v3707 = vadd.f32 %v308, %v3589
      %v3708 = vadd.f32 %v309, %v3594
      %v3709 = vadd.f32 %v310, %v3597
      %v3710 = vadd.f32 %v311, %v3602
      %v3711 = vadd.f32 %v312, %v3605
      %v3712 = vadd.f32 %v313, %v3610
      %v3713 = vadd.f32 %v314, %v3613
      %v3714 = vadd.f32 %v315, %v3618
      %v3715 = vadd.f32 %v316, %v3621
      %v3716 = vadd.f32 %v317, %v3626
      %v3717 = vadd.f32 %v318, %v3629
      %v3718 = vadd.f32 %v319, %v3634
      %v3719 = vadd.f32 %v320, %v3637
      %v3720 = vadd.f32 %v321, %v3642
      %v3721 = vadd.f32 %v322, %v3645
      %v3722 = vadd.f32 %v323, %v3650
      %v3723 = vadd.f32 %v324, %v3653
      %v3724 = vadd.f32 %v325, %v3658
      %v3725 = vadd.f32 %v326, %v3661
      %v3726 = vadd.f32 %v327, %v3666
      %v3727 = vadd.f32 %v328, %v3669
      %v3728 = vadd.f32 %v329, %v3674
      %v3729 = vadd.f32 %v330, %v3677
      %v3730 = vadd.f32 %v331, %v3682
      %v3731 = vadd.f32 %v332, %v3685
      %v3732 = vadd.f32 %v333, %v3690
      %v3733 = vadd.f32 %v334, %v3693
      %v3734 = vadd.f32 %v335, %v3698
      %v3735 = vadd.f32 %v336, %v3701
      %vm3736 = vcmask 523264
      %3737 = vst.msk [vmem:[#allocation2] sm:$0xff] %vm3736, %v3704
      %3738 = vst.msk [vmem:[#allocation2 + $0x8] sm:$0xff] %vm3736, %v3705
      %3739 = vst.msk [vmem:[#allocation2 + $0x10] sm:$0xff] %vm3736, %v3706
      %3740 = vst.msk [vmem:[#allocation2 + $0x18] sm:$0xff] %vm3736, %v3707
      %3741 = vst.msk [vmem:[#allocation2 + $0x20] sm:$0xff] %vm3736, %v3708
      %3742 = vst.msk [vmem:[#allocation2 + $0x28] sm:$0xff] %vm3736, %v3709
      %3743 = vst.msk [vmem:[#allocation2 + $0x30] sm:$0xff] %vm3736, %v3710
      %3744 = vst.msk [vmem:[#allocation2 + $0x38] sm:$0xff] %vm3736, %v3711
      %3745 = vst.msk [vmem:[#allocation2 + $0x40] sm:$0xff] %vm3736, %v3712
      %3746 = vst.msk [vmem:[#allocation2 + $0x48] sm:$0xff] %vm3736, %v3713
      %3747 = vst.msk [vmem:[#allocation2 + $0x50] sm:$0xff] %vm3736, %v3714
      %3748 = vst.msk [vmem:[#allocation2 + $0x58] sm:$0xff] %vm3736, %v3715
      %3749 = vst.msk [vmem:[#allocation2 + $0x60] sm:$0xff] %vm3736, %v3716
      %3750 = vst.msk [vmem:[#allocation2 + $0x68] sm:$0xff] %vm3736, %v3717
      %3751 = vst.msk [vmem:[#allocation2 + $0x70] sm:$0xff] %vm3736, %v3718
      %3752 = vst.msk [vmem:[#allocation2 + $0x78] sm:$0xff] %vm3736, %v3719
      %3753 = vst.msk [vmem:[#allocation2 + $0x80] sm:$0xff] %vm3736, %v3720
      %3754 = vst.msk [vmem:[#allocation2 + $0x88] sm:$0xff] %vm3736, %v3721
      %3755 = vst.msk [vmem:[#allocation2 + $0x90] sm:$0xff] %vm3736, %v3722
      %3756 = vst.msk [vmem:[#allocation2 + $0x98] sm:$0xff] %vm3736, %v3723
      %3757 = vst.msk [vmem:[#allocation2 + $0xa0] sm:$0xff] %vm3736, %v3724
      %3758 = vst.msk [vmem:[#allocation2 + $0xa8] sm:$0xff] %vm3736, %v3725
      %3759 = vst.msk [vmem:[#allocation2 + $0xb0] sm:$0xff] %vm3736, %v3726
      %3760 = vst.msk [vmem:[#allocation2 + $0xb8] sm:$0xff] %vm3736, %v3727
      %3761 = vst.msk [vmem:[#allocation2 + $0xc0] sm:$0xff] %vm3736, %v3728
      %3762 = vst.msk [vmem:[#allocation2 + $0xc8] sm:$0xff] %vm3736, %v3729
      %3763 = vst.msk [vmem:[#allocation2 + $0xd0] sm:$0xff] %vm3736, %v3730
      %3764 = vst.msk [vmem:[#allocation2 + $0xd8] sm:$0xff] %vm3736, %v3731
      %3765 = vst.msk [vmem:[#allocation2 + $0xe0] sm:$0xff] %vm3736, %v3732
      %3766 = vst.msk [vmem:[#allocation2 + $0xe8] sm:$0xff] %vm3736, %v3733
      %3767 = vst.msk [vmem:[#allocation2 + $0xf0] sm:$0xff] %vm3736, %v3734
      %3768 = vst.msk [vmem:[#allocation2 + $0xf8] sm:$0xff] %vm3736, %v3735
      // Predicated region
      $region37: #{basic_block_forward.2} parent=31 // pred_check
        %p3769 = pneg %p268
      $region38: #{basic_block_forward.2} parent=31 // pred_check_branch
        %3771 = sbr.rel (%p3769) target = $region40
      $region39: #{basic_block_forward.2} parent=31 // pred_region
        %v3772 = vld [vmem:[#allocation2] sm:$0xff]
        %v3773 = vld [vmem:[#allocation2 + $0x8] sm:$0xff]
        %v3774 = vld [vmem:[#allocation2 + $0x10] sm:$0xff]
        %v3775 = vld [vmem:[#allocation2 + $0x18] sm:$0xff]
        %v3776 = vld [vmem:[#allocation2 + $0x20] sm:$0xff]
        %v3777 = vld [vmem:[#allocation2 + $0x28] sm:$0xff]
        %v3778 = vld [vmem:[#allocation2 + $0x30] sm:$0xff]
        %v3779 = vld [vmem:[#allocation2 + $0x38] sm:$0xff]
        %v3780 = vld [vmem:[#allocation2 + $0x40] sm:$0xff]
        %v3781 = vld [vmem:[#allocation2 + $0x48] sm:$0xff]
        %v3782 = vld [vmem:[#allocation2 + $0x50] sm:$0xff]
        %v3783 = vld [vmem:[#allocation2 + $0x58] sm:$0xff]
        %v3784 = vld [vmem:[#allocation2 + $0x60] sm:$0xff]
        %v3785 = vld [vmem:[#allocation2 + $0x68] sm:$0xff]
        %v3786 = vld [vmem:[#allocation2 + $0x70] sm:$0xff]
        %v3787 = vld [vmem:[#allocation2 + $0x78] sm:$0xff]
        %v3788 = vld [vmem:[#allocation2 + $0x80] sm:$0xff]
        %v3789 = vld [vmem:[#allocation2 + $0x88] sm:$0xff]
        %v3790 = vld [vmem:[#allocation2 + $0x90] sm:$0xff]
        %v3791 = vld [vmem:[#allocation2 + $0x98] sm:$0xff]
        %v3792 = vld [vmem:[#allocation2 + $0xa0] sm:$0xff]
        %v3793 = vld [vmem:[#allocation2 + $0xa8] sm:$0xff]
        %v3794 = vld [vmem:[#allocation2 + $0xb0] sm:$0xff]
        %v3795 = vld [vmem:[#allocation2 + $0xb8] sm:$0xff]
        %v3796 = vld [vmem:[#allocation2 + $0xc0] sm:$0xff]
        %v3797 = vld [vmem:[#allocation2 + $0xc8] sm:$0xff]
        %v3798 = vld [vmem:[#allocation2 + $0xd0] sm:$0xff]
        %v3799 = vld [vmem:[#allocation2 + $0xd8] sm:$0xff]
        %v3800 = vld [vmem:[#allocation2 + $0xe0] sm:$0xff]
        %v3801 = vld [vmem:[#allocation2 + $0xe8] sm:$0xff]
        %v3802 = vld [vmem:[#allocation2 + $0xf0] sm:$0xff]
        %v3803 = vld [vmem:[#allocation2 + $0xf8] sm:$0xff]
        %v3804 = vld [vmem:[%s257] sm:$0x1]
        %v3806 = vlaneseq
        %v3807 = vshrl.u32 %v3806, 7
        %v3808 = vsub.s32 0, %v3807
        %v3809 = vrot.slane %v3804, %v3808
        %v3811 = vadd.f32 %v3772, %v3809
        %v3812 = vadd.f32 %v3773, %v3809
        %v3813 = vadd.f32 %v3774, %v3809
        %v3814 = vadd.f32 %v3775, %v3809
        %v3815 = vadd.f32 %v3776, %v3809
        %v3816 = vadd.f32 %v3777, %v3809
        %v3817 = vadd.f32 %v3778, %v3809
        %v3818 = vadd.f32 %v3779, %v3809
        %v3819 = vadd.f32 %v3780, %v3809
        %v3820 = vadd.f32 %v3781, %v3809
        %v3821 = vadd.f32 %v3782, %v3809
        %v3822 = vadd.f32 %v3783, %v3809
        %v3823 = vadd.f32 %v3784, %v3809
        %v3824 = vadd.f32 %v3785, %v3809
        %v3825 = vadd.f32 %v3786, %v3809
        %v3826 = vadd.f32 %v3787, %v3809
        %v3827 = vadd.f32 %v3788, %v3809
        %v3828 = vadd.f32 %v3789, %v3809
        %v3829 = vadd.f32 %v3790, %v3809
        %v3830 = vadd.f32 %v3791, %v3809
        %v3831 = vadd.f32 %v3792, %v3809
        %v3832 = vadd.f32 %v3793, %v3809
        %v3833 = vadd.f32 %v3794, %v3809
        %v3834 = vadd.f32 %v3795, %v3809
        %v3835 = vadd.f32 %v3796, %v3809
        %v3836 = vadd.f32 %v3797, %v3809
        %v3837 = vadd.f32 %v3798, %v3809
        %v3838 = vadd.f32 %v3799, %v3809
        %v3839 = vadd.f32 %v3800, %v3809
        %v3840 = vadd.f32 %v3801, %v3809
        %v3841 = vadd.f32 %v3802, %v3809
        %v3842 = vadd.f32 %v3803, %v3809
        %v3843 = vmax.f32 %v3811, 0.0
        %v3844 = vmax.f32 %v3812, 0.0
        %v3845 = vmax.f32 %v3813, 0.0
        %v3846 = vmax.f32 %v3814, 0.0
        %v3847 = vmax.f32 %v3815, 0.0
        %v3848 = vmax.f32 %v3816, 0.0
        %v3849 = vmax.f32 %v3817, 0.0
        %v3850 = vmax.f32 %v3818, 0.0
        %v3851 = vmax.f32 %v3819, 0.0
        %v3852 = vmax.f32 %v3820, 0.0
        %v3853 = vmax.f32 %v3821, 0.0
        %v3854 = vmax.f32 %v3822, 0.0
        %v3855 = vmax.f32 %v3823, 0.0
        %v3856 = vmax.f32 %v3824, 0.0
        %v3857 = vmax.f32 %v3825, 0.0
        %v3858 = vmax.f32 %v3826, 0.0
        %v3859 = vmax.f32 %v3827, 0.0
        %v3860 = vmax.f32 %v3828, 0.0
        %v3861 = vmax.f32 %v3829, 0.0
        %v3862 = vmax.f32 %v3830, 0.0
        %v3863 = vmax.f32 %v3831, 0.0
        %v3864 = vmax.f32 %v3832, 0.0
        %v3865 = vmax.f32 %v3833, 0.0
        %v3866 = vmax.f32 %v3834, 0.0
        %v3867 = vmax.f32 %v3835, 0.0
        %v3868 = vmax.f32 %v3836, 0.0
        %v3869 = vmax.f32 %v3837, 0.0
        %v3870 = vmax.f32 %v3838, 0.0
        %v3871 = vmax.f32 %v3839, 0.0
        %v3872 = vmax.f32 %v3840, 0.0
        %v3873 = vmax.f32 %v3841, 0.0
        %v3874 = vmax.f32 %v3842, 0.0
        %v3875 = vpack.c.bf16 %v3844, %v3843
        %v3876 = vpack.c.bf16 %v3846, %v3845
        %v3877 = vpack.c.bf16 %v3848, %v3847
        %v3878 = vpack.c.bf16 %v3850, %v3849
        %v3879 = vpack.c.bf16 %v3852, %v3851
        %v3880 = vpack.c.bf16 %v3854, %v3853
        %v3881 = vpack.c.bf16 %v3856, %v3855
        %v3882 = vpack.c.bf16 %v3858, %v3857
        %v3883 = vpack.c.bf16 %v3860, %v3859
        %v3884 = vpack.c.bf16 %v3862, %v3861
        %v3885 = vpack.c.bf16 %v3864, %v3863
        %v3886 = vpack.c.bf16 %v3866, %v3865
        %v3887 = vpack.c.bf16 %v3868, %v3867
        %v3888 = vpack.c.bf16 %v3870, %v3869
        %v3889 = vpack.c.bf16 %v3872, %v3871
        %v3890 = vpack.c.bf16 %v3874, %v3873
        %v3907 = vunpack.c.l.b16 %v3875
        %v3908 = vunpack.c.h.b16 %v3875
        %v3909 = vunpack.c.l.b16 %v3876
        %v3910 = vunpack.c.h.b16 %v3876
        %v3911 = vunpack.c.l.b16 %v3877
        %v3912 = vunpack.c.h.b16 %v3877
        %v3913 = vunpack.c.l.b16 %v3878
        %v3914 = vunpack.c.h.b16 %v3878
        %v3915 = vunpack.c.l.b16 %v3879
        %v3916 = vunpack.c.h.b16 %v3879
        %v3917 = vunpack.c.l.b16 %v3880
        %v3918 = vunpack.c.h.b16 %v3880
        %v3919 = vunpack.c.l.b16 %v3881
        %v3920 = vunpack.c.h.b16 %v3881
        %v3921 = vunpack.c.l.b16 %v3882
        %v3922 = vunpack.c.h.b16 %v3882
        %v3923 = vunpack.c.l.b16 %v3883
        %v3924 = vunpack.c.h.b16 %v3883
        %v3925 = vunpack.c.l.b16 %v3884
        %v3926 = vunpack.c.h.b16 %v3884
        %v3927 = vunpack.c.l.b16 %v3885
        %v3928 = vunpack.c.h.b16 %v3885
        %v3929 = vunpack.c.l.b16 %v3886
        %v3930 = vunpack.c.h.b16 %v3886
        %v3931 = vunpack.c.l.b16 %v3887
        %v3932 = vunpack.c.h.b16 %v3887
        %v3933 = vunpack.c.l.b16 %v3888
        %v3934 = vunpack.c.h.b16 %v3888
        %v3935 = vunpack.c.l.b16 %v3889
        %v3936 = vunpack.c.h.b16 %v3889
        %v3937 = vunpack.c.l.b16 %v3890
        %v3938 = vunpack.c.h.b16 %v3890
        %v3939 = vpack.c.b16 %v3907, %v3907
        %v3940 = vpack.c.b16 %v3908, %v3908
        %v3941 = vpack.c.b16 %v3909, %v3909
        %v3942 = vpack.c.b16 %v3910, %v3910
        %v3943 = vpack.c.b16 %v3911, %v3911
        %v3944 = vpack.c.b16 %v3912, %v3912
        %v3945 = vpack.c.b16 %v3913, %v3913
        %v3946 = vpack.c.b16 %v3914, %v3914
        %v3947 = vpack.c.b16 %v3915, %v3915
        %v3948 = vpack.c.b16 %v3916, %v3916
        %v3949 = vpack.c.b16 %v3917, %v3917
        %v3950 = vpack.c.b16 %v3918, %v3918
        %v3951 = vpack.c.b16 %v3919, %v3919
        %v3952 = vpack.c.b16 %v3920, %v3920
        %v3953 = vpack.c.b16 %v3921, %v3921
        %v3954 = vpack.c.b16 %v3922, %v3922
        %v3955 = vpack.c.b16 %v3923, %v3923
        %v3956 = vpack.c.b16 %v3924, %v3924
        %v3957 = vpack.c.b16 %v3925, %v3925
        %v3958 = vpack.c.b16 %v3926, %v3926
        %v3959 = vpack.c.b16 %v3927, %v3927
        %v3960 = vpack.c.b16 %v3928, %v3928
        %v3961 = vpack.c.b16 %v3929, %v3929
        %v3962 = vpack.c.b16 %v3930, %v3930
        %v3963 = vpack.c.b16 %v3931, %v3931
        %v3964 = vpack.c.b16 %v3932, %v3932
        %v3965 = vpack.c.b16 %v3933, %v3933
        %v3966 = vpack.c.b16 %v3934, %v3934
        %v3967 = vpack.c.b16 %v3935, %v3935
        %v3968 = vpack.c.b16 %v3936, %v3936
        %v3969 = vpack.c.b16 %v3937, %v3937
        %v3970 = vpack.c.b16 %v3938, %v3938
        %vm4003 = vcmask 519168
        %4004 = vst.msk [vmem:[%s265] sm:$0xf] %vm4003, %v3939
        %4005 = vst.msk [vmem:[%s265 + $0x4] sm:$0xf] %vm4003, %v3940
        %4006 = vst.msk [vmem:[%s265 + $0x8] sm:$0xf] %vm4003, %v3941
        %4007 = vst.msk [vmem:[%s265 + $0xc] sm:$0xf] %vm4003, %v3942
        %4008 = vst.msk [vmem:[%s265 + $0x10] sm:$0xf] %vm4003, %v3943
        %4009 = vst.msk [vmem:[%s265 + $0x14] sm:$0xf] %vm4003, %v3944
        %4010 = vst.msk [vmem:[%s265 + $0x18] sm:$0xf] %vm4003, %v3945
        %4011 = vst.msk [vmem:[%s265 + $0x1c] sm:$0xf] %vm4003, %v3946
        %4012 = vst.msk [vmem:[%s265 + $0x20] sm:$0xf] %vm4003, %v3947
        %4013 = vst.msk [vmem:[%s265 + $0x24] sm:$0xf] %vm4003, %v3948
        %4014 = vst.msk [vmem:[%s265 + $0x28] sm:$0xf] %vm4003, %v3949
        %4015 = vst.msk [vmem:[%s265 + $0x2c] sm:$0xf] %vm4003, %v3950
        %4016 = vst.msk [vmem:[%s265 + $0x30] sm:$0xf] %vm4003, %v3951
        %4017 = vst.msk [vmem:[%s265 + $0x34] sm:$0xf] %vm4003, %v3952
        %4018 = vst.msk [vmem:[%s265 + $0x38] sm:$0xf] %vm4003, %v3953
        %4019 = vst.msk [vmem:[%s265 + $0x3c] sm:$0xf] %vm4003, %v3954
        %4020 = vst.msk [vmem:[%s265 + $0x40] sm:$0xf] %vm4003, %v3955
        %4021 = vst.msk [vmem:[%s265 + $0x44] sm:$0xf] %vm4003, %v3956
        %4022 = vst.msk [vmem:[%s265 + $0x48] sm:$0xf] %vm4003, %v3957
        %4023 = vst.msk [vmem:[%s265 + $0x4c] sm:$0xf] %vm4003, %v3958
        %4024 = vst.msk [vmem:[%s265 + $0x50] sm:$0xf] %vm4003, %v3959
        %4025 = vst.msk [vmem:[%s265 + $0x54] sm:$0xf] %vm4003, %v3960
        %4026 = vst.msk [vmem:[%s265 + $0x58] sm:$0xf] %vm4003, %v3961
        %4027 = vst.msk [vmem:[%s265 + $0x5c] sm:$0xf] %vm4003, %v3962
        %4028 = vst.msk [vmem:[%s265 + $0x60] sm:$0xf] %vm4003, %v3963
        %4029 = vst.msk [vmem:[%s265 + $0x64] sm:$0xf] %vm4003, %v3964
        %4030 = vst.msk [vmem:[%s265 + $0x68] sm:$0xf] %vm4003, %v3965
        %4031 = vst.msk [vmem:[%s265 + $0x6c] sm:$0xf] %vm4003, %v3966
        %4032 = vst.msk [vmem:[%s265 + $0x70] sm:$0xf] %vm4003, %v3967
        %4033 = vst.msk [vmem:[%s265 + $0x74] sm:$0xf] %vm4003, %v3968
        %4034 = vst.msk [vmem:[%s265 + $0x78] sm:$0xf] %vm4003, %v3969
        %4035 = vst.msk [vmem:[%s265 + $0x7c] sm:$0xf] %vm4003, %v3970
      $region40: #{basic_block_forward.2} parent=31 // pred_fallthru
        _
      %s4036 = smul.u32 32, %s19
      %p4037 = scmp.lt.s32.totalorder %s4036, 511
      %s4038 = scalar_select %p4037, %s4036, 511
      %p4039 = scmp.lt.s32.totalorder %s20, 0
      %s4040 = scalar_select %p4039, %s20, 0
      %s4041 = sadd.s32 %s4040, %s4038
      %s4042 = smul.addr %s4041, 4
      %s4043 = scalar_lea.vmem %s3, %s4042
      // Predicated region
      $region41: #{basic_block_forward.2} parent=31 // pred_check
        %p4044 = pneg %p135
      $region42: #{basic_block_forward.2} parent=31 // pred_check_branch
        %4046 = sbr.rel (%p4044) target = $region44
      $region43: #{basic_block_forward.2} parent=31 // pred_region
        %s4047 = smul.u32 32, %s19
      $region44: #{basic_block_forward.2} parent=31 // pred_fallthru
        _
    $region32: #{basic_block_forward.2} parent=5 // pred_fallthru
      _
    %p4048 = scmp.le.s32.totalorder 2, %s9
    // Predicated region
    $region45: #{basic_block_forward.2} parent=5 // pred_check
      %p4049 = pneg %p4048
    $region46: #{basic_block_forward.2} parent=5 // pred_check_branch
      %4051 = sbr.rel (%p4049) target = $region48
    $region47: #{basic_block_forward.2} parent=5 // pred_region
      %s4052 = ssub.s32 %s9, 2
      // Predicated region
      $region49: #{basic_block_forward.2} parent=47 // pred_check
        %p4053 = pneg %p141
      $region50: #{basic_block_forward.2} parent=47 // pred_check_branch
        %4055 = sbr.rel (%p4053) target = $region52
      $region51: #{basic_block_forward.2} parent=47 // pred_region
        %s4056 = smul.u32 32, %s22
        %p4057 = scmp.lt.s32.totalorder %s4056, 511
        %s4058 = scalar_select %p4057, %s4056, 511
        %p4059 = scmp.lt.s32.totalorder %s23, 0
        %s4060 = scalar_select %p4059, %s23, 0
        %s4061 = sadd.s32 %s4060, %s4058
        %s4062 = smul.addr %s4061, 4
        %s4063 = scalar_lea.vmem %s3, %s4062
      $region52: #{basic_block_forward.2} parent=47 // pred_fallthru
        _
    $region48: #{basic_block_forward.2} parent=5 // pred_fallthru
      _
  $region6: #{basic_block_forward.2} parent=0 // loop_footer
    %s13 = sadd.s32 1, %s9
  $region7: #{basic_block_forward.2} parent=0 // loop_footer_branch
    %8 = sbr.rel target = $region3
  $region8: #{basic_block_forward.2} parent=0 // loop_exit
    _

// kernel: basic_block_forward.3
$region0: #{basic_block_forward.3}
  #allocation0 [shape = 'u32[]', space=smem, size = 0x4, offset = 0x4, fixed_abs, tag = 'smem constant byte address 0x4 - core index']
  #allocation1 [shape = 'u32[144,128]{1,0:T(1,128)}', space=vmem, size = 0x12000, scoped, tag = 'internal scratch']
  #allocation2 [shape = 'f32[256,64]{1,0:T(8,128)}', space=vmem, size = 0x20000, scoped, tag = 'scratch operand']
  %s0 = inlined_call_operand.vmem [shape: bf16[4096,1792], index: 0, kind: input, shape index: {}]
  %s1 = inlined_call_operand.vmem [shape: bf16[1792,64], index: 1, kind: input, shape index: {}]
  %s2 = inlined_call_operand.vmem [shape: f32[1,64], index: 2, kind: input, shape index: {}]
  %s3 = inlined_call_operand.vmem [shape: f32[4096,64], index: 3, kind: input, shape index: {}]
  %s4 = inlined_call_operand.hbm [shape: f32[4096,64], index: 4, kind: output, shape index: {}]
  %s5 = sld [smem:[#allocation0]]
  $region57: #{basic_block_forward.3} parent=0
    _
  %s7 = ssub.s32 1, %s5
  %s8 = scalar_select 0, %s7, %s5
  $region1: #{basic_block_forward.3} parent=0
    #allocation3 [shape = 'u8[262144]{0}', space=vmem, size = 0x40000, scoped, tag = 'output window, operand 0']
    #allocation4 [shape = 's32[2]{0}', space=sflag, size = 0x8, scoped, tag = 'scoped memory for basic_block_forward.3']
    %9 = vsyncpa [#allocation4], 0
    %s10 = scalar_lea.sflag [#allocation4], 1
    %11 = vsyncpa %s10, 0
    loop: start=0, step=1, limit=18
    $region2: #{basic_block_forward.3} parent=1 // loop_pre_header
      _
    $region3: #{basic_block_forward.3} parent=1 // loop_header
      %s13 = sphi 0, %s17
      %p14 = scmp.ge.s32.totalorder %s13, 18
      %s20 = sphi 0, %s39
      %s21 = sphi 0, %s35
      %s22 = sphi 0, %s31
      %s23 = sphi 0, %s20
      %s24 = sphi 0, %s21
      %s25 = sphi 0, %s22
      %s26 = sphi 0, %s23
      %s27 = sphi 0, %s24
      %s28 = sphi 0, %s25
      %s44 = sphi 0, %s46
      %s47 = sphi 0, %s44
      %s48 = sphi 0, %s47
      %s64 = sphi 0, %s48
      %s72 = sphi 0, %s74
      %s75 = sphi 0, %s72
      %s76 = sphi 0, %s75
      %s92 = sphi 0, %s76
      %s98 = sphi 0, %s100
      %s101 = sphi 0, %s98
      %s102 = sphi 0, %s101
      %s118 = sphi 0, %s102
      %s126 = sphi 0, %s128
      %s129 = sphi 0, %s126
      %s130 = sphi 0, %s129
      %s146 = sphi 0, %s130
      %s154 = sphi 0, %s156
      %s157 = sphi 0, %s154
      %s158 = sphi 0, %s157
      %s174 = sphi 0, %s158
    $region4: #{basic_block_forward.3} parent=1 // loop_header_branch
      %16 = sbr.rel (%p14) target = $region8
    $region5: #{basic_block_forward.3} parent=1 // loop_body
      %s18 = ssub.s32 %s13, 1
      %s19 = ssub.s32 %s13, 2
      %s29 = sadd.s32 1, %s22
      %p30 = scmp.ge.s32.totalorder %s29, 1
      %s31 = scalar_select %p30, 0, %s29
      %s32 = sadd.s32 1, %s21
      %s33 = scalar_select %p30, %s32, %s21
      %p34 = scmp.ge.s32.totalorder %s33, 1
      %s35 = scalar_select %p34, 0, %s33
      %s36 = sadd.s32 1, %s20
      %s37 = scalar_select %p34, %s36, %s20
      %p38 = scmp.ge.s32.totalorder %s37, 16
      %s39 = scalar_select %p38, 0, %s37
      %s40 = ssub.s32 %s20, %s39
      %s41 = ssub.s32 %s22, %s31
      %s42 = sor.u32 %s40, %s41
      %p43 = scmp.eq.s32.totalorder %s42, 0
      %s45 = sadd.s32 %s44, 1
      %s46 = scalar_select %p43, %s44, %s45
      %p49 = pneg %p43
      %p50 = scmp.eq.s32.totalorder %s13, 15
      %p51 = por %p49, %p50
      %p52 = scmp.ne.s32.totalorder %s44, %s47
      %p53 = scmp.eq.s32.totalorder %s13, 0
      %p54 = por %p52, %p53
      %p55 = scmp.ne.s32.totalorder %s44, %s47
      %p56 = scmp.eq.s32.totalorder %s18, 15
      %p57 = por %p55, %p56
      %p58 = scmp.ne.s32.totalorder %s47, %s48
      %p59 = scmp.eq.s32.totalorder %s18, 0
      %p60 = por %p58, %p59
      %p61 = scmp.ne.s32.totalorder %s47, %s48
      %p62 = scmp.eq.s32.totalorder %s19, 15
      %p63 = por %p61, %p62
      %p65 = scmp.ne.s32.totalorder %s48, %s64
      %p66 = scmp.eq.s32.totalorder %s19, 0
      %p67 = por %p65, %p66
      %s68 = ssub.s32 %s22, %s31
      %s69 = ssub.s32 %s21, %s35
      %s70 = sor.u32 %s68, %s69
      %p71 = scmp.eq.s32.totalorder %s70, 0
      %s73 = sadd.s32 %s72, 1
      %s74 = scalar_select %p71, %s72, %s73
      %p77 = pneg %p71
      %p78 = scmp.eq.s32.totalorder %s13, 15
      %p79 = por %p77, %p78
      %p80 = scmp.ne.s32.totalorder %s72, %s75
      %p81 = scmp.eq.s32.totalorder %s13, 0
      %p82 = por %p80, %p81
      %p83 = scmp.ne.s32.totalorder %s72, %s75
      %p84 = scmp.eq.s32.totalorder %s18, 15
      %p85 = por %p83, %p84
      %p86 = scmp.ne.s32.totalorder %s75, %s76
      %p87 = scmp.eq.s32.totalorder %s18, 0
      %p88 = por %p86, %p87
      %p89 = scmp.ne.s32.totalorder %s75, %s76
      %p90 = scmp.eq.s32.totalorder %s19, 15
      %p91 = por %p89, %p90
      %p93 = scmp.ne.s32.totalorder %s76, %s92
      %p94 = scmp.eq.s32.totalorder %s19, 0
      %p95 = por %p93, %p94
      %s96 = ssub.s32 %s21, %s35
      %p97 = scmp.eq.s32.totalorder %s96, 0
      %s99 = sadd.s32 %s98, 1
      %s100 = scalar_select %p97, %s98, %s99
      %p103 = pneg %p97
      %p104 = scmp.eq.s32.totalorder %s13, 15
      %p105 = por %p103, %p104
      %p106 = scmp.ne.s32.totalorder %s98, %s101
      %p107 = scmp.eq.s32.totalorder %s13, 0
      %p108 = por %p106, %p107
      %p109 = scmp.ne.s32.totalorder %s98, %s101
      %p110 = scmp.eq.s32.totalorder %s18, 15
      %p111 = por %p109, %p110
      %p112 = scmp.ne.s32.totalorder %s101, %s102
      %p113 = scmp.eq.s32.totalorder %s18, 0
      %p114 = por %p112, %p113
      %p115 = scmp.ne.s32.totalorder %s101, %s102
      %p116 = scmp.eq.s32.totalorder %s19, 15
      %p117 = por %p115, %p116
      %p119 = scmp.ne.s32.totalorder %s102, %s118
      %p120 = scmp.eq.s32.totalorder %s19, 0
      %p121 = por %p119, %p120
      %s122 = ssub.s32 %s20, %s39
      %s123 = ssub.s32 %s21, %s35
      %s124 = sor.u32 %s122, %s123
      %p125 = scmp.eq.s32.totalorder %s124, 0
      %s127 = sadd.s32 %s126, 1
      %s128 = scalar_select %p125, %s126, %s127
      %p131 = pneg %p125
      %p132 = scmp.eq.s32.totalorder %s13, 15
      %p133 = por %p131, %p132
      %p134 = scmp.ne.s32.totalorder %s126, %s129
      %p135 = scmp.eq.s32.totalorder %s13, 0
      %p136 = por %p134, %p135
      %p137 = scmp.ne.s32.totalorder %s126, %s129
      %p138 = scmp.eq.s32.totalorder %s18, 15
      %p139 = por %p137, %p138
      %p140 = scmp.ne.s32.totalorder %s129, %s130
      %p141 = scmp.eq.s32.totalorder %s18, 0
      %p142 = por %p140, %p141
      %p143 = scmp.ne.s32.totalorder %s129, %s130
      %p144 = scmp.eq.s32.totalorder %s19, 15
      %p145 = por %p143, %p144
      %p147 = scmp.ne.s32.totalorder %s130, %s146
      %p148 = scmp.eq.s32.totalorder %s19, 0
      %p149 = por %p147, %p148
      %s150 = ssub.s32 %s20, %s39
      %s151 = ssub.s32 %s21, %s35
      %s152 = sor.u32 %s150, %s151
      %p153 = scmp.eq.s32.totalorder %s152, 0
      %s155 = sadd.s32 %s154, 1
      %s156 = scalar_select %p153, %s154, %s155
      %p159 = pneg %p153
      %p160 = scmp.eq.s32.totalorder %s13, 15
      %p161 = por %p159, %p160
      %p162 = scmp.ne.s32.totalorder %s154, %s157
      %p163 = scmp.eq.s32.totalorder %s13, 0
      %p164 = por %p162, %p163
      %p165 = scmp.ne.s32.totalorder %s154, %s157
      %p166 = scmp.eq.s32.totalorder %s18, 15
      %p167 = por %p165, %p166
      %p168 = scmp.ne.s32.totalorder %s157, %s158
      %p169 = scmp.eq.s32.totalorder %s18, 0
      %p170 = por %p168, %p169
      %p171 = scmp.ne.s32.totalorder %s157, %s158
      %p172 = scmp.eq.s32.totalorder %s19, 15
      %p173 = por %p171, %p172
      %p175 = scmp.ne.s32.totalorder %s158, %s174
      %p176 = scmp.eq.s32.totalorder %s19, 0
      %p177 = por %p175, %p176
      %p178 = scmp.le.s32.totalorder 1, %s13
      %p179 = scmp.lt.s32.totalorder %s13, 17
      %p180 = pnand %p178, %p179
      %p181 = pneg %p180
      // Predicated region
      $region9: #{basic_block_forward.3} parent=5 // pred_check
        _
      $region10: #{basic_block_forward.3} parent=5 // pred_check_branch
        %183 = sbr.rel (%p180) target = $region12
      $region11: #{basic_block_forward.3} parent=5 // pred_region
        %s184 = ssub.s32 %s13, 1
        // Predicated region
        $region13: #{basic_block_forward.3} parent=11 // pred_check
          %p185 = pneg %p88
        $region14: #{basic_block_forward.3} parent=11 // pred_check_branch
          %187 = sbr.rel (%p185) target = $region16
        $region15: #{basic_block_forward.3} parent=11 // pred_region
          %s188 = smul.u32 224, %s25
          %p189 = scmp.lt.s32.totalorder %s188, 223
          %s190 = scalar_select %p189, %s188, 223
          %p191 = scmp.lt.s32.totalorder %s24, 0
          %s192 = scalar_select %p191, %s24, 0
          %s193 = sadd.s32 %s192, %s190
          %s194 = smul.addr %s193, 4
          %s195 = scalar_lea.vmem %s1, %s194
          %s196 = smul.u32 224, %s25
        $region16: #{basic_block_forward.3} parent=11 // pred_fallthru
          _
        // Predicated region
        $region17: #{basic_block_forward.3} parent=11 // pred_check
          %p197 = pneg %p114
        $region18: #{basic_block_forward.3} parent=11 // pred_check_branch
          %199 = sbr.rel (%p197) target = $region20
        $region19: #{basic_block_forward.3} parent=11 // pred_region
          %p200 = scmp.lt.s32.totalorder %s24, 0
          %s201 = scalar_select %p200, %s24, 0
          %s202 = scalar_lea.vmem %s2, %s201
        $region20: #{basic_block_forward.3} parent=11 // pred_fallthru
          _
      $region12: #{basic_block_forward.3} parent=5 // pred_fallthru
        _
      %p203 = scmp.lt.s32.totalorder %s13, 16
      // Predicated region
      $region21: #{basic_block_forward.3} parent=5 // pred_check
        %p204 = pneg %p203
      $region22: #{basic_block_forward.3} parent=5 // pred_check_branch
        %206 = sbr.rel (%p204) target = $region24
      $region23: #{basic_block_forward.3} parent=5 // pred_region
        // Predicated region
        $region25: #{basic_block_forward.3} parent=23 // pred_check
          %p207 = pneg %p54
        $region26: #{basic_block_forward.3} parent=23 // pred_check_branch
          %209 = sbr.rel (%p207) target = $region28
        $region27: #{basic_block_forward.3} parent=23 // pred_region
          %s210 = smul.u32 32, %s20
          %s211 = smul.u32 14, %s22
          %p212 = scmp.lt.s32.totalorder %s210, 511
          %s213 = scalar_select %p212, %s210, 511
          %p214 = scmp.lt.s32.totalorder %s211, 13
          %s215 = scalar_select %p214, %s211, 13
          %s216 = smul.addr %s213, 14
          %s217 = sadd.s32 %s215, %s216
          %s218 = smul.addr %s217, 4
          %s219 = scalar_lea.vmem %s0, %s218
          %s220 = smul.u32 32, %s20
          %s221 = smul.u32 14, %s22
        $region28: #{basic_block_forward.3} parent=23 // pred_fallthru
          _
        // Predicated region
        $region29: #{basic_block_forward.3} parent=23 // pred_check
          %p222 = pneg %p136
        $region30: #{basic_block_forward.3} parent=23 // pred_check_branch
          %224 = sbr.rel (%p222) target = $region32
        $region31: #{basic_block_forward.3} parent=23 // pred_region
          %s225 = smul.u32 32, %s20
          %p226 = scmp.lt.s32.totalorder %s225, 511
          %s227 = scalar_select %p226, %s225, 511
          %p228 = scmp.lt.s32.totalorder %s21, 0
          %s229 = scalar_select %p228, %s21, 0
          %s230 = sadd.s32 %s229, %s227
          %s231 = smul.addr %s230, 8
          %s232 = scalar_lea.vmem %s3, %s231
          %s233 = smul.u32 32, %s20
        $region32: #{basic_block_forward.3} parent=23 // pred_fallthru
          _
      $region24: #{basic_block_forward.3} parent=5 // pred_fallthru
        _
      %p234 = scmp.le.s32.totalorder 1, %s13
      %p235 = scmp.lt.s32.totalorder %s13, 17
      %p236 = pnand %p234, %p235
      %p237 = pneg %p236
      // Predicated region
      $region33: #{basic_block_forward.3} parent=5 // pred_check
        _
      $region34: #{basic_block_forward.3} parent=5 // pred_check_branch
        %239 = sbr.rel (%p236) target = $region36
      $region35: #{basic_block_forward.3} parent=5 // pred_region
        %s240 = ssub.s32 %s13, 1
        %s241 = smul.u32 32, %s23
        %s242 = smul.u32 14, %s25
        %p243 = scmp.lt.s32.totalorder %s241, 511
        %s244 = scalar_select %p243, %s241, 511
        %p245 = scmp.lt.s32.totalorder %s242, 13
        %s246 = scalar_select %p245, %s242, 13
        %s247 = smul.addr %s244, 14
        %s248 = sadd.s32 %s246, %s247
        %s249 = smul.addr %s248, 4
        %s250 = scalar_lea.vmem %s0, %s249
        %p251 = pneg %p60
        %p252 = pneg %p57
        %s253 = smul.u32 224, %s25
        %p254 = scmp.lt.s32.totalorder %s253, 223
        %s255 = scalar_select %p254, %s253, 223
        %p256 = scmp.lt.s32.totalorder %s24, 0
        %s257 = scalar_select %p256, %s24, 0
        %s258 = sadd.s32 %s257, %s255
        %s259 = smul.addr %s258, 4
        %s260 = scalar_lea.vmem %s1, %s259
        %p261 = pneg %p88
        %p262 = pneg %p85
        %p263 = scmp.lt.s32.totalorder %s24, 0
        %s264 = scalar_select %p263, %s24, 0
        %s265 = scalar_lea.vmem %s2, %s264
        %p266 = pneg %p114
        %p267 = pneg %p111
        %s268 = smul.u32 32, %s23
        %p269 = scmp.lt.s32.totalorder %s268, 511
        %s270 = scalar_select %p269, %s268, 511
        %p271 = scmp.lt.s32.totalorder %s24, 0
        %s272 = scalar_select %p271, %s24, 0
        %s273 = sadd.s32 %s272, %s270
        %s274 = smul.addr %s273, 8
        %s275 = scalar_lea.vmem %s3, %s274
        %p276 = pneg %p142
        %p277 = pneg %p139
        %p278 = pneg %p170
        %p279 = pneg %p167
        %s280 = sand.u32 %s157, 1
        %s281 = scalar_lea.sflag [#allocation4], %s280
        %s282 = sand.u32 %s157, 1
        %s283 = smul.addr %s282, 256
        %s284 = scalar_lea.vmem [#allocation3], %s283
        %s285 = smul.u32 32, %s23
        %s286 = smul.u32 14, %s25
        %p287 = scmp.lt.s32.totalorder %s285, 511
        %s288 = scalar_select %p287, %s285, 511
        %p289 = scmp.lt.s32.totalorder %s286, 13
        %s290 = scalar_select %p289, %s286, 13
        %s291 = smul.addr %s288, 14
        %s292 = sadd.s32 %s290, %s291
        %s293 = smul.addr %s292, 4
        %s294 = scalar_lea.vmem %s0, %s293
        %s295 = smul.u32 32, %s23
        %s296 = smul.u32 14, %s25
        %s297 = smul.u32 224, %s25
        %p298 = scmp.lt.s32.totalorder %s297, 223
        %s299 = scalar_select %p298, %s297, 223
        %p300 = scmp.lt.s32.totalorder %s24, 0
        %s301 = scalar_select %p300, %s24, 0
        %s302 = sadd.s32 %s301, %s299
        %s303 = smul.addr %s302, 4
        %s304 = scalar_lea.vmem %s1, %s303
        %s305 = smul.u32 224, %s25
        %p306 = scmp.lt.s32.totalorder %s24, 0
        %s307 = scalar_select %p306, %s24, 0
        %s308 = scalar_lea.vmem %s2, %s307
        %s309 = smul.u32 32, %s23
        %p310 = scmp.lt.s32.totalorder %s309, 511
        %s311 = scalar_select %p310, %s309, 511
        %p312 = scmp.lt.s32.totalorder %s24, 0
        %s313 = scalar_select %p312, %s24, 0
        %s314 = sadd.s32 %s313, %s311
        %s315 = smul.addr %s314, 8
        %s316 = scalar_lea.vmem %s3, %s315
        %s317 = smul.u32 32, %s23
        %s318 = smul.u32 32, %s23
        %p320 = scmp.eq.s32.totalorder %s25, 0
        // Predicated region
        $region37: #{basic_block_forward.3} parent=35 // pred_check
          %p321 = pneg %p320
        $region38: #{basic_block_forward.3} parent=35 // pred_check_branch
          %323 = sbr.rel (%p321) target = $region40
        $region39: #{basic_block_forward.3} parent=35 // pred_region
          %vm324 = vcmask 523264
          %325 = vst.msk [vmem:[#allocation2] sm:$0xff] %vm324, 0.0
          %326 = vst.msk [vmem:[#allocation2 + $0x8] sm:$0xff] %vm324, 0.0
          %327 = vst.msk [vmem:[#allocation2 + $0x10] sm:$0xff] %vm324, 0.0
          %328 = vst.msk [vmem:[#allocation2 + $0x18] sm:$0xff] %vm324, 0.0
          %329 = vst.msk [vmem:[#allocation2 + $0x20] sm:$0xff] %vm324, 0.0
          %330 = vst.msk [vmem:[#allocation2 + $0x28] sm:$0xff] %vm324, 0.0
          %331 = vst.msk [vmem:[#allocation2 + $0x30] sm:$0xff] %vm324, 0.0
          %332 = vst.msk [vmem:[#allocation2 + $0x38] sm:$0xff] %vm324, 0.0
          %333 = vst.msk [vmem:[#allocation2 + $0x40] sm:$0xff] %vm324, 0.0
          %334 = vst.msk [vmem:[#allocation2 + $0x48] sm:$0xff] %vm324, 0.0
          %335 = vst.msk [vmem:[#allocation2 + $0x50] sm:$0xff] %vm324, 0.0
          %336 = vst.msk [vmem:[#allocation2 + $0x58] sm:$0xff] %vm324, 0.0
          %337 = vst.msk [vmem:[#allocation2 + $0x60] sm:$0xff] %vm324, 0.0
          %338 = vst.msk [vmem:[#allocation2 + $0x68] sm:$0xff] %vm324, 0.0
          %339 = vst.msk [vmem:[#allocation2 + $0x70] sm:$0xff] %vm324, 0.0
          %340 = vst.msk [vmem:[#allocation2 + $0x78] sm:$0xff] %vm324, 0.0
          %341 = vst.msk [vmem:[#allocation2 + $0x80] sm:$0xff] %vm324, 0.0
          %342 = vst.msk [vmem:[#allocation2 + $0x88] sm:$0xff] %vm324, 0.0
          %343 = vst.msk [vmem:[#allocation2 + $0x90] sm:$0xff] %vm324, 0.0
          %344 = vst.msk [vmem:[#allocation2 + $0x98] sm:$0xff] %vm324, 0.0
          %345 = vst.msk [vmem:[#allocation2 + $0xa0] sm:$0xff] %vm324, 0.0
          %346 = vst.msk [vmem:[#allocation2 + $0xa8] sm:$0xff] %vm324, 0.0
          %347 = vst.msk [vmem:[#allocation2 + $0xb0] sm:$0xff] %vm324, 0.0
          %348 = vst.msk [vmem:[#allocation2 + $0xb8] sm:$0xff] %vm324, 0.0
          %349 = vst.msk [vmem:[#allocation2 + $0xc0] sm:$0xff] %vm324, 0.0
          %350 = vst.msk [vmem:[#allocation2 + $0xc8] sm:$0xff] %vm324, 0.0
          %351 = vst.msk [vmem:[#allocation2 + $0xd0] sm:$0xff] %vm324, 0.0
          %352 = vst.msk [vmem:[#allocation2 + $0xd8] sm:$0xff] %vm324, 0.0
          %353 = vst.msk [vmem:[#allocation2 + $0xe0] sm:$0xff] %vm324, 0.0
          %354 = vst.msk [vmem:[#allocation2 + $0xe8] sm:$0xff] %vm324, 0.0
          %355 = vst.msk [vmem:[#allocation2 + $0xf0] sm:$0xff] %vm324, 0.0
          %356 = vst.msk [vmem:[#allocation2 + $0xf8] sm:$0xff] %vm324, 0.0
        $region40: #{basic_block_forward.3} parent=35 // pred_fallthru
          _
        %v357 = vld [vmem:[#allocation2] sm:$0xff]
        %v358 = vld [vmem:[#allocation2 + $0x8] sm:$0xff]
        %v359 = vld [vmem:[#allocation2 + $0x10] sm:$0xff]
        %v360 = vld [vmem:[#allocation2 + $0x18] sm:$0xff]
        %v361 = vld [vmem:[#allocation2 + $0x20] sm:$0xff]
        %v362 = vld [vmem:[#allocation2 + $0x28] sm:$0xff]
        %v363 = vld [vmem:[#allocation2 + $0x30] sm:$0xff]
        %v364 = vld [vmem:[#allocation2 + $0x38] sm:$0xff]
        %v365 = vld [vmem:[#allocation2 + $0x40] sm:$0xff]
        %v366 = vld [vmem:[#allocation2 + $0x48] sm:$0xff]
        %v367 = vld [vmem:[#allocation2 + $0x50] sm:$0xff]
        %v368 = vld [vmem:[#allocation2 + $0x58] sm:$0xff]
        %v369 = vld [vmem:[#allocation2 + $0x60] sm:$0xff]
        %v370 = vld [vmem:[#allocation2 + $0x68] sm:$0xff]
        %v371 = vld [vmem:[#allocation2 + $0x70] sm:$0xff]
        %v372 = vld [vmem:[#allocation2 + $0x78] sm:$0xff]
        %v373 = vld [vmem:[#allocation2 + $0x80] sm:$0xff]
        %v374 = vld [vmem:[#allocation2 + $0x88] sm:$0xff]
        %v375 = vld [vmem:[#allocation2 + $0x90] sm:$0xff]
        %v376 = vld [vmem:[#allocation2 + $0x98] sm:$0xff]
        %v377 = vld [vmem:[#allocation2 + $0xa0] sm:$0xff]
        %v378 = vld [vmem:[#allocation2 + $0xa8] sm:$0xff]
        %v379 = vld [vmem:[#allocation2 + $0xb0] sm:$0xff]
        %v380 = vld [vmem:[#allocation2 + $0xb8] sm:$0xff]
        %v381 = vld [vmem:[#allocation2 + $0xc0] sm:$0xff]
        %v382 = vld [vmem:[#allocation2 + $0xc8] sm:$0xff]
        %v383 = vld [vmem:[#allocation2 + $0xd0] sm:$0xff]
        %v384 = vld [vmem:[#allocation2 + $0xd8] sm:$0xff]
        %v385 = vld [vmem:[#allocation2 + $0xe0] sm:$0xff]
        %v386 = vld [vmem:[#allocation2 + $0xe8] sm:$0xff]
        %v387 = vld [vmem:[#allocation2 + $0xf0] sm:$0xff]
        %v388 = vld [vmem:[#allocation2 + $0xf8] sm:$0xff]
        %v389 = vld [vmem:[%s294] sm:$0xff]
        %v390 = vld [vmem:[%s294 + $0x8] sm:$0xff]
        %v391 = vld [vmem:[%s294 + $0x10] sm:$0xff]
        %v392 = vld [vmem:[%s294 + $0x18] sm:$0xff]
        %v393 = vld [vmem:[%s294 + $0x20] sm:$0xff]
        %v394 = vld [vmem:[%s294 + $0x28] sm:$0xff]
        %v395 = vld [vmem:[%s294 + $0x30] sm:$0xff]
        %v396 = vld [vmem:[%s294 + $0x38] sm:$0xff]
        %v397 = vld [vmem:[%s294 + $0x40] sm:$0xff]
        %v398 = vld [vmem:[%s294 + $0x48] sm:$0xff]
        %v399 = vld [vmem:[%s294 + $0x50] sm:$0xff]
        %v400 = vld [vmem:[%s294 + $0x58] sm:$0xff]
        %v401 = vld [vmem:[%s294 + $0x60] sm:$0xff]
        %v402 = vld [vmem:[%s294 + $0x68] sm:$0xff]
        %v403 = vld [vmem:[%s294 + $0x70] sm:$0xff]
        %v404 = vld [vmem:[%s294 + $0x78] sm:$0xff]
        %v405 = vld [vmem:[%s294 + $0x80] sm:$0xff]
        %v406 = vld [vmem:[%s294 + $0x88] sm:$0xff]
        %v407 = vld [vmem:[%s294 + $0x90] sm:$0xff]
        %v408 = vld [vmem:[%s294 + $0x98] sm:$0xff]
        %v409 = vld [vmem:[%s294 + $0xa0] sm:$0xff]
        %v410 = vld [vmem:[%s294 + $0xa8] sm:$0xff]
        %v411 = vld [vmem:[%s294 + $0xb0] sm:$0xff]
        %v412 = vld [vmem:[%s294 + $0xb8] sm:$0xff]
        %v413 = vld [vmem:[%s294 + $0xc0] sm:$0xff]
        %v414 = vld [vmem:[%s294 + $0xc8] sm:$0xff]
        %v415 = vld [vmem:[%s294 + $0xd0] sm:$0xff]
        %v416 = vld [vmem:[%s294 + $0xd8] sm:$0xff]
        %v417 = vld [vmem:[%s294 + $0xe0] sm:$0xff]
        %v418 = vld [vmem:[%s294 + $0xe8] sm:$0xff]
        %v419 = vld [vmem:[%s294 + $0xf0] sm:$0xff]
        %v420 = vld [vmem:[%s294 + $0xf8] sm:$0xff]
        %v421 = vld [vmem:[%s294 + $0x100] sm:$0xff]
        %v422 = vld [vmem:[%s294 + $0x108] sm:$0xff]
        %v423 = vld [vmem:[%s294 + $0x110] sm:$0xff]
        %v424 = vld [vmem:[%s294 + $0x118] sm:$0xff]
        %v425 = vld [vmem:[%s294 + $0x120] sm:$0xff]
        %v426 = vld [vmem:[%s294 + $0x128] sm:$0xff]
        %v427 = vld [vmem:[%s294 + $0x130] sm:$0xff]
        %v428 = vld [vmem:[%s294 + $0x138] sm:$0xff]
        %v429 = vld [vmem:[%s294 + $0x140] sm:$0xff]
        %v430 = vld [vmem:[%s294 + $0x148] sm:$0xff]
        %v431 = vld [vmem:[%s294 + $0x150] sm:$0xff]
        %v432 = vld [vmem:[%s294 + $0x158] sm:$0xff]
        %v433 = vld [vmem:[%s294 + $0x160] sm:$0xff]
        %v434 = vld [vmem:[%s294 + $0x168] sm:$0xff]
        %v435 = vld [vmem:[%s294 + $0x170] sm:$0xff]
        %v436 = vld [vmem:[%s294 + $0x178] sm:$0xff]
        %v437 = vld [vmem:[%s294 + $0x180] sm:$0xff]
        %v438 = vld [vmem:[%s294 + $0x188] sm:$0xff]
        %v439 = vld [vmem:[%s294 + $0x190] sm:$0xff]
        %v440 = vld [vmem:[%s294 + $0x198] sm:$0xff]
        %v441 = vld [vmem:[%s294 + $0x1a0] sm:$0xff]
        %v442 = vld [vmem:[%s294 + $0x1a8] sm:$0xff]
        %v443 = vld [vmem:[%s294 + $0x1b0] sm:$0xff]
        %v444 = vld [vmem:[%s294 + $0x1b8] sm:$0xff]
        %v445 = vld [vmem:[%s294 + $0x1c0] sm:$0xff]
        %v446 = vld [vmem:[%s294 + $0x1c8] sm:$0xff]
        %v447 = vld [vmem:[%s294 + $0x1d0] sm:$0xff]
        %v448 = vld [vmem:[%s294 + $0x1d8] sm:$0xff]
        %v449 = vld [vmem:[%s294 + $0x1e0] sm:$0xff]
        %v450 = vld [vmem:[%s294 + $0x1e8] sm:$0xff]
        %v451 = vld [vmem:[%s294 + $0x1f0] sm:$0xff]
        %v452 = vld [vmem:[%s294 + $0x1f8] sm:$0xff]
        %v453 = vld [vmem:[%s294 + $0x200] sm:$0xff]
        %v454 = vld [vmem:[%s294 + $0x208] sm:$0xff]
        %v455 = vld [vmem:[%s294 + $0x210] sm:$0xff]
        %v456 = vld [vmem:[%s294 + $0x218] sm:$0xff]
        %v457 = vld [vmem:[%s294 + $0x220] sm:$0xff]
        %v458 = vld [vmem:[%s294 + $0x228] sm:$0xff]
        %v459 = vld [vmem:[%s294 + $0x230] sm:$0xff]
        %v460 = vld [vmem:[%s294 + $0x238] sm:$0xff]
        %v461 = vld [vmem:[%s294 + $0x240] sm:$0xff]
        %v462 = vld [vmem:[%s294 + $0x248] sm:$0xff]
        %v463 = vld [vmem:[%s294 + $0x250] sm:$0xff]
        %v464 = vld [vmem:[%s294 + $0x258] sm:$0xff]
        %v465 = vld [vmem:[%s294 + $0x260] sm:$0xff]
        %v466 = vld [vmem:[%s294 + $0x268] sm:$0xff]
        %v467 = vld [vmem:[%s294 + $0x270] sm:$0xff]
        %v468 = vld [vmem:[%s294 + $0x278] sm:$0xff]
        %v469 = vld [vmem:[%s294 + $0x280] sm:$0xff]
        %v470 = vld [vmem:[%s294 + $0x288] sm:$0xff]
        %v471 = vld [vmem:[%s294 + $0x290] sm:$0xff]
        %v472 = vld [vmem:[%s294 + $0x298] sm:$0xff]
        %v473 = vld [vmem:[%s294 + $0x2a0] sm:$0xff]
        %v474 = vld [vmem:[%s294 + $0x2a8] sm:$0xff]
        %v475 = vld [vmem:[%s294 + $0x2b0] sm:$0xff]
        %v476 = vld [vmem:[%s294 + $0x2b8] sm:$0xff]
        %v477 = vld [vmem:[%s294 + $0x2c0] sm:$0xff]
        %v478 = vld [vmem:[%s294 + $0x2c8] sm:$0xff]
        %v479 = vld [vmem:[%s294 + $0x2d0] sm:$0xff]
        %v480 = vld [vmem:[%s294 + $0x2d8] sm:$0xff]
        %v481 = vld [vmem:[%s294 + $0x2e0] sm:$0xff]
        %v482 = vld [vmem:[%s294 + $0x2e8] sm:$0xff]
        %v483 = vld [vmem:[%s294 + $0x2f0] sm:$0xff]
        %v484 = vld [vmem:[%s294 + $0x2f8] sm:$0xff]
        %v485 = vld [vmem:[%s294 + $0x300] sm:$0xff]
        %v486 = vld [vmem:[%s294 + $0x308] sm:$0xff]
        %v487 = vld [vmem:[%s294 + $0x310] sm:$0xff]
        %v488 = vld [vmem:[%s294 + $0x318] sm:$0xff]
        %v489 = vld [vmem:[%s294 + $0x320] sm:$0xff]
        %v490 = vld [vmem:[%s294 + $0x328] sm:$0xff]
        %v491 = vld [vmem:[%s294 + $0x330] sm:$0xff]
        %v492 = vld [vmem:[%s294 + $0x338] sm:$0xff]
        %v493 = vld [vmem:[%s294 + $0x340] sm:$0xff]
        %v494 = vld [vmem:[%s294 + $0x348] sm:$0xff]
        %v495 = vld [vmem:[%s294 + $0x350] sm:$0xff]
        %v496 = vld [vmem:[%s294 + $0x358] sm:$0xff]
        %v497 = vld [vmem:[%s294 + $0x360] sm:$0xff]
        %v498 = vld [vmem:[%s294 + $0x368] sm:$0xff]
        %v499 = vld [vmem:[%s294 + $0x370] sm:$0xff]
        %v500 = vld [vmem:[%s294 + $0x378] sm:$0xff]
        %v501 = vld [vmem:[%s294 + $0x380] sm:$0xff]
        %v502 = vld [vmem:[%s294 + $0x388] sm:$0xff]
        %v503 = vld [vmem:[%s294 + $0x390] sm:$0xff]
        %v504 = vld [vmem:[%s294 + $0x398] sm:$0xff]
        %v505 = vld [vmem:[%s294 + $0x3a0] sm:$0xff]
        %v506 = vld [vmem:[%s294 + $0x3a8] sm:$0xff]
        %v507 = vld [vmem:[%s294 + $0x3b0] sm:$0xff]
        %v508 = vld [vmem:[%s294 + $0x3b8] sm:$0xff]
        %v509 = vld [vmem:[%s294 + $0x3c0] sm:$0xff]
        %v510 = vld [vmem:[%s294 + $0x3c8] sm:$0xff]
        %v511 = vld [vmem:[%s294 + $0x3d0] sm:$0xff]
        %v512 = vld [vmem:[%s294 + $0x3d8] sm:$0xff]
        %v513 = vld [vmem:[%s294 + $0x3e0] sm:$0xff]
        %v514 = vld [vmem:[%s294 + $0x3e8] sm:$0xff]
        %v515 = vld [vmem:[%s294 + $0x3f0] sm:$0xff]
        %v516 = vld [vmem:[%s294 + $0x3f8] sm:$0xff]
        %v517 = vld [vmem:[%s294 + $0x400] sm:$0xff]
        %v518 = vld [vmem:[%s294 + $0x408] sm:$0xff]
        %v519 = vld [vmem:[%s294 + $0x410] sm:$0xff]
        %v520 = vld [vmem:[%s294 + $0x418] sm:$0xff]
        %v521 = vld [vmem:[%s294 + $0x420] sm:$0xff]
        %v522 = vld [vmem:[%s294 + $0x428] sm:$0xff]
        %v523 = vld [vmem:[%s294 + $0x430] sm:$0xff]
        %v524 = vld [vmem:[%s294 + $0x438] sm:$0xff]
        %v525 = vld [vmem:[%s294 + $0x440] sm:$0xff]
        %v526 = vld [vmem:[%s294 + $0x448] sm:$0xff]
        %v527 = vld [vmem:[%s294 + $0x450] sm:$0xff]
        %v528 = vld [vmem:[%s294 + $0x458] sm:$0xff]
        %v529 = vld [vmem:[%s294 + $0x460] sm:$0xff]
        %v530 = vld [vmem:[%s294 + $0x468] sm:$0xff]
        %v531 = vld [vmem:[%s294 + $0x470] sm:$0xff]
        %v532 = vld [vmem:[%s294 + $0x478] sm:$0xff]
        %v533 = vld [vmem:[%s294 + $0x480] sm:$0xff]
        %v534 = vld [vmem:[%s294 + $0x488] sm:$0xff]
        %v535 = vld [vmem:[%s294 + $0x490] sm:$0xff]
        %v536 = vld [vmem:[%s294 + $0x498] sm:$0xff]
        %v537 = vld [vmem:[%s294 + $0x4a0] sm:$0xff]
        %v538 = vld [vmem:[%s294 + $0x4a8] sm:$0xff]
        %v539 = vld [vmem:[%s294 + $0x4b0] sm:$0xff]
        %v540 = vld [vmem:[%s294 + $0x4b8] sm:$0xff]
        %v541 = vld [vmem:[%s294 + $0x4c0] sm:$0xff]
        %v542 = vld [vmem:[%s294 + $0x4c8] sm:$0xff]
        %v543 = vld [vmem:[%s294 + $0x4d0] sm:$0xff]
        %v544 = vld [vmem:[%s294 + $0x4d8] sm:$0xff]
        %v545 = vld [vmem:[%s294 + $0x4e0] sm:$0xff]
        %v546 = vld [vmem:[%s294 + $0x4e8] sm:$0xff]
        %v547 = vld [vmem:[%s294 + $0x4f0] sm:$0xff]
        %v548 = vld [vmem:[%s294 + $0x4f8] sm:$0xff]
        %v549 = vld [vmem:[%s294 + $0x500] sm:$0xff]
        %v550 = vld [vmem:[%s294 + $0x508] sm:$0xff]
        %v551 = vld [vmem:[%s294 + $0x510] sm:$0xff]
        %v552 = vld [vmem:[%s294 + $0x518] sm:$0xff]
        %v553 = vld [vmem:[%s294 + $0x520] sm:$0xff]
        %v554 = vld [vmem:[%s294 + $0x528] sm:$0xff]
        %v555 = vld [vmem:[%s294 + $0x530] sm:$0xff]
        %v556 = vld [vmem:[%s294 + $0x538] sm:$0xff]
        %v557 = vld [vmem:[%s294 + $0x540] sm:$0xff]
        %v558 = vld [vmem:[%s294 + $0x548] sm:$0xff]
        %v559 = vld [vmem:[%s294 + $0x550] sm:$0xff]
        %v560 = vld [vmem:[%s294 + $0x558] sm:$0xff]
        %v561 = vld [vmem:[%s294 + $0x560] sm:$0xff]
        %v562 = vld [vmem:[%s294 + $0x568] sm:$0xff]
        %v563 = vld [vmem:[%s294 + $0x570] sm:$0xff]
        %v564 = vld [vmem:[%s294 + $0x578] sm:$0xff]
        %v565 = vld [vmem:[%s294 + $0x580] sm:$0xff]
        %v566 = vld [vmem:[%s294 + $0x588] sm:$0xff]
        %v567 = vld [vmem:[%s294 + $0x590] sm:$0xff]
        %v568 = vld [vmem:[%s294 + $0x598] sm:$0xff]
        %v569 = vld [vmem:[%s294 + $0x5a0] sm:$0xff]
        %v570 = vld [vmem:[%s294 + $0x5a8] sm:$0xff]
        %v571 = vld [vmem:[%s294 + $0x5b0] sm:$0xff]
        %v572 = vld [vmem:[%s294 + $0x5b8] sm:$0xff]
        %v573 = vld [vmem:[%s294 + $0x5c0] sm:$0xff]
        %v574 = vld [vmem:[%s294 + $0x5c8] sm:$0xff]
        %v575 = vld [vmem:[%s294 + $0x5d0] sm:$0xff]
        %v576 = vld [vmem:[%s294 + $0x5d8] sm:$0xff]
        %v577 = vld [vmem:[%s294 + $0x5e0] sm:$0xff]
        %v578 = vld [vmem:[%s294 + $0x5e8] sm:$0xff]
        %v579 = vld [vmem:[%s294 + $0x5f0] sm:$0xff]
        %v580 = vld [vmem:[%s294 + $0x5f8] sm:$0xff]
        %v581 = vld [vmem:[%s294 + $0x600] sm:$0xff]
        %v582 = vld [vmem:[%s294 + $0x608] sm:$0xff]
        %v583 = vld [vmem:[%s294 + $0x610] sm:$0xff]
        %v584 = vld [vmem:[%s294 + $0x618] sm:$0xff]
        %v585 = vld [vmem:[%s294 + $0x620] sm:$0xff]
        %v586 = vld [vmem:[%s294 + $0x628] sm:$0xff]
        %v587 = vld [vmem:[%s294 + $0x630] sm:$0xff]
        %v588 = vld [vmem:[%s294 + $0x638] sm:$0xff]
        %v589 = vld [vmem:[%s294 + $0x640] sm:$0xff]
        %v590 = vld [vmem:[%s294 + $0x648] sm:$0xff]
        %v591 = vld [vmem:[%s294 + $0x650] sm:$0xff]
        %v592 = vld [vmem:[%s294 + $0x658] sm:$0xff]
        %v593 = vld [vmem:[%s294 + $0x660] sm:$0xff]
        %v594 = vld [vmem:[%s294 + $0x668] sm:$0xff]
        %v595 = vld [vmem:[%s294 + $0x670] sm:$0xff]
        %v596 = vld [vmem:[%s294 + $0x678] sm:$0xff]
        %v597 = vld [vmem:[%s294 + $0x680] sm:$0xff]
        %v598 = vld [vmem:[%s294 + $0x688] sm:$0xff]
        %v599 = vld [vmem:[%s294 + $0x690] sm:$0xff]
        %v600 = vld [vmem:[%s294 + $0x698] sm:$0xff]
        %v601 = vld [vmem:[%s294 + $0x6a0] sm:$0xff]
        %v602 = vld [vmem:[%s294 + $0x6a8] sm:$0xff]
        %v603 = vld [vmem:[%s294 + $0x6b0] sm:$0xff]
        %v604 = vld [vmem:[%s294 + $0x6b8] sm:$0xff]
        %v605 = vld [vmem:[%s294 + $0x6c0] sm:$0xff]
        %v606 = vld [vmem:[%s294 + $0x6c8] sm:$0xff]
        %v607 = vld [vmem:[%s294 + $0x6d0] sm:$0xff]
        %v608 = vld [vmem:[%s294 + $0x6d8] sm:$0xff]
        %v609 = vld [vmem:[%s294 + $0x6e0] sm:$0xff]
        %v610 = vld [vmem:[%s294 + $0x6e8] sm:$0xff]
        %v611 = vld [vmem:[%s294 + $0x6f0] sm:$0xff]
        %v612 = vld [vmem:[%s294 + $0x6f8] sm:$0xff]
        %v613 = vld [vmem:[%s304] sm:$0xf]
        %v614 = vld [vmem:[%s304 + $0x4] sm:$0xf]
        %v615 = vld [vmem:[%s304 + $0x8] sm:$0xf]
        %v616 = vld [vmem:[%s304 + $0xc] sm:$0xf]
        %v617 = vld [vmem:[%s304 + $0x10] sm:$0xf]
        %v618 = vld [vmem:[%s304 + $0x14] sm:$0xf]
        %v619 = vld [vmem:[%s304 + $0x18] sm:$0xf]
        %v620 = vld [vmem:[%s304 + $0x1c] sm:$0xf]
        %v621 = vld [vmem:[%s304 + $0x20] sm:$0xf]
        %v622 = vld [vmem:[%s304 + $0x24] sm:$0xf]
        %v623 = vld [vmem:[%s304 + $0x28] sm:$0xf]
        %v624 = vld [vmem:[%s304 + $0x2c] sm:$0xf]
        %v625 = vld [vmem:[%s304 + $0x30] sm:$0xf]
        %v626 = vld [vmem:[%s304 + $0x34] sm:$0xf]
        %v627 = vld [vmem:[%s304 + $0x38] sm:$0xf]
        %v628 = vld [vmem:[%s304 + $0x3c] sm:$0xf]
        %v629 = vld [vmem:[%s304 + $0x40] sm:$0xf]
        %v630 = vld [vmem:[%s304 + $0x44] sm:$0xf]
        %v631 = vld [vmem:[%s304 + $0x48] sm:$0xf]
        %v632 = vld [vmem:[%s304 + $0x4c] sm:$0xf]
        %v633 = vld [vmem:[%s304 + $0x50] sm:$0xf]
        %v634 = vld [vmem:[%s304 + $0x54] sm:$0xf]
        %v635 = vld [vmem:[%s304 + $0x58] sm:$0xf]
        %v636 = vld [vmem:[%s304 + $0x5c] sm:$0xf]
        %v637 = vld [vmem:[%s304 + $0x60] sm:$0xf]
        %v638 = vld [vmem:[%s304 + $0x64] sm:$0xf]
        %v639 = vld [vmem:[%s304 + $0x68] sm:$0xf]
        %v640 = vld [vmem:[%s304 + $0x6c] sm:$0xf]
        %v641 = vld [vmem:[%s304 + $0x70] sm:$0xf]
        %v642 = vld [vmem:[%s304 + $0x74] sm:$0xf]
        %v643 = vld [vmem:[%s304 + $0x78] sm:$0xf]
        %v644 = vld [vmem:[%s304 + $0x7c] sm:$0xf]
        %v645 = vld [vmem:[%s304 + $0x80] sm:$0xf]
        %v646 = vld [vmem:[%s304 + $0x84] sm:$0xf]
        %v647 = vld [vmem:[%s304 + $0x88] sm:$0xf]
        %v648 = vld [vmem:[%s304 + $0x8c] sm:$0xf]
        %v649 = vld [vmem:[%s304 + $0x90] sm:$0xf]
        %v650 = vld [vmem:[%s304 + $0x94] sm:$0xf]
        %v651 = vld [vmem:[%s304 + $0x98] sm:$0xf]
        %v652 = vld [vmem:[%s304 + $0x9c] sm:$0xf]
        %v653 = vld [vmem:[%s304 + $0xa0] sm:$0xf]
        %v654 = vld [vmem:[%s304 + $0xa4] sm:$0xf]
        %v655 = vld [vmem:[%s304 + $0xa8] sm:$0xf]
        %v656 = vld [vmem:[%s304 + $0xac] sm:$0xf]
        %v657 = vld [vmem:[%s304 + $0xb0] sm:$0xf]
        %v658 = vld [vmem:[%s304 + $0xb4] sm:$0xf]
        %v659 = vld [vmem:[%s304 + $0xb8] sm:$0xf]
        %v660 = vld [vmem:[%s304 + $0xbc] sm:$0xf]
        %v661 = vld [vmem:[%s304 + $0xc0] sm:$0xf]
        %v662 = vld [vmem:[%s304 + $0xc4] sm:$0xf]
        %v663 = vld [vmem:[%s304 + $0xc8] sm:$0xf]
        %v664 = vld [vmem:[%s304 + $0xcc] sm:$0xf]
        %v665 = vld [vmem:[%s304 + $0xd0] sm:$0xf]
        %v666 = vld [vmem:[%s304 + $0xd4] sm:$0xf]
        %v667 = vld [vmem:[%s304 + $0xd8] sm:$0xf]
        %v668 = vld [vmem:[%s304 + $0xdc] sm:$0xf]
        %v669 = vld [vmem:[%s304 + $0xe0] sm:$0xf]
        %v670 = vld [vmem:[%s304 + $0xe4] sm:$0xf]
        %v671 = vld [vmem:[%s304 + $0xe8] sm:$0xf]
        %v672 = vld [vmem:[%s304 + $0xec] sm:$0xf]
        %v673 = vld [vmem:[%s304 + $0xf0] sm:$0xf]
        %v674 = vld [vmem:[%s304 + $0xf4] sm:$0xf]
        %v675 = vld [vmem:[%s304 + $0xf8] sm:$0xf]
        %v676 = vld [vmem:[%s304 + $0xfc] sm:$0xf]
        %v677 = vld [vmem:[%s304 + $0x100] sm:$0xf]
        %v678 = vld [vmem:[%s304 + $0x104] sm:$0xf]
        %v679 = vld [vmem:[%s304 + $0x108] sm:$0xf]
        %v680 = vld [vmem:[%s304 + $0x10c] sm:$0xf]
        %v681 = vld [vmem:[%s304 + $0x110] sm:$0xf]
        %v682 = vld [vmem:[%s304 + $0x114] sm:$0xf]
        %v683 = vld [vmem:[%s304 + $0x118] sm:$0xf]
        %v684 = vld [vmem:[%s304 + $0x11c] sm:$0xf]
        %v685 = vld [vmem:[%s304 + $0x120] sm:$0xf]
        %v686 = vld [vmem:[%s304 + $0x124] sm:$0xf]
        %v687 = vld [vmem:[%s304 + $0x128] sm:$0xf]
        %v688 = vld [vmem:[%s304 + $0x12c] sm:$0xf]
        %v689 = vld [vmem:[%s304 + $0x130] sm:$0xf]
        %v690 = vld [vmem:[%s304 + $0x134] sm:$0xf]
        %v691 = vld [vmem:[%s304 + $0x138] sm:$0xf]
        %v692 = vld [vmem:[%s304 + $0x13c] sm:$0xf]
        %v693 = vld [vmem:[%s304 + $0x140] sm:$0xf]
        %v694 = vld [vmem:[%s304 + $0x144] sm:$0xf]
        %v695 = vld [vmem:[%s304 + $0x148] sm:$0xf]
        %v696 = vld [vmem:[%s304 + $0x14c] sm:$0xf]
        %v697 = vld [vmem:[%s304 + $0x150] sm:$0xf]
        %v698 = vld [vmem:[%s304 + $0x154] sm:$0xf]
        %v699 = vld [vmem:[%s304 + $0x158] sm:$0xf]
        %v700 = vld [vmem:[%s304 + $0x15c] sm:$0xf]
        %v701 = vld [vmem:[%s304 + $0x160] sm:$0xf]
        %v702 = vld [vmem:[%s304 + $0x164] sm:$0xf]
        %v703 = vld [vmem:[%s304 + $0x168] sm:$0xf]
        %v704 = vld [vmem:[%s304 + $0x16c] sm:$0xf]
        %v705 = vld [vmem:[%s304 + $0x170] sm:$0xf]
        %v706 = vld [vmem:[%s304 + $0x174] sm:$0xf]
        %v707 = vld [vmem:[%s304 + $0x178] sm:$0xf]
        %v708 = vld [vmem:[%s304 + $0x17c] sm:$0xf]
        %v709 = vld [vmem:[%s304 + $0x180] sm:$0xf]
        %v710 = vld [vmem:[%s304 + $0x184] sm:$0xf]
        %v711 = vld [vmem:[%s304 + $0x188] sm:$0xf]
        %v712 = vld [vmem:[%s304 + $0x18c] sm:$0xf]
        %v713 = vld [vmem:[%s304 + $0x190] sm:$0xf]
        %v714 = vld [vmem:[%s304 + $0x194] sm:$0xf]
        %v715 = vld [vmem:[%s304 + $0x198] sm:$0xf]
        %v716 = vld [vmem:[%s304 + $0x19c] sm:$0xf]
        %v717 = vld [vmem:[%s304 + $0x1a0] sm:$0xf]
        %v718 = vld [vmem:[%s304 + $0x1a4] sm:$0xf]
        %v719 = vld [vmem:[%s304 + $0x1a8] sm:$0xf]
        %v720 = vld [vmem:[%s304 + $0x1ac] sm:$0xf]
        %v721 = vld [vmem:[%s304 + $0x1b0] sm:$0xf]
        %v722 = vld [vmem:[%s304 + $0x1b4] sm:$0xf]
        %v723 = vld [vmem:[%s304 + $0x1b8] sm:$0xf]
        %v724 = vld [vmem:[%s304 + $0x1bc] sm:$0xf]
        %v725 = vld [vmem:[%s304 + $0x1c0] sm:$0xf]
        %v726 = vld [vmem:[%s304 + $0x1c4] sm:$0xf]
        %v727 = vld [vmem:[%s304 + $0x1c8] sm:$0xf]
        %v728 = vld [vmem:[%s304 + $0x1cc] sm:$0xf]
        %v729 = vld [vmem:[%s304 + $0x1d0] sm:$0xf]
        %v730 = vld [vmem:[%s304 + $0x1d4] sm:$0xf]
        %v731 = vld [vmem:[%s304 + $0x1d8] sm:$0xf]
        %v732 = vld [vmem:[%s304 + $0x1dc] sm:$0xf]
        %v733 = vld [vmem:[%s304 + $0x1e0] sm:$0xf]
        %v734 = vld [vmem:[%s304 + $0x1e4] sm:$0xf]
        %v735 = vld [vmem:[%s304 + $0x1e8] sm:$0xf]
        %v736 = vld [vmem:[%s304 + $0x1ec] sm:$0xf]
        %v737 = vld [vmem:[%s304 + $0x1f0] sm:$0xf]
        %v738 = vld [vmem:[%s304 + $0x1f4] sm:$0xf]
        %v739 = vld [vmem:[%s304 + $0x1f8] sm:$0xf]
        %v740 = vld [vmem:[%s304 + $0x1fc] sm:$0xf]
        %v741 = vld [vmem:[%s304 + $0x200] sm:$0xf]
        %v742 = vld [vmem:[%s304 + $0x204] sm:$0xf]
        %v743 = vld [vmem:[%s304 + $0x208] sm:$0xf]
        %v744 = vld [vmem:[%s304 + $0x20c] sm:$0xf]
        %v745 = vld [vmem:[%s304 + $0x210] sm:$0xf]
        %v746 = vld [vmem:[%s304 + $0x214] sm:$0xf]
        %v747 = vld [vmem:[%s304 + $0x218] sm:$0xf]
        %v748 = vld [vmem:[%s304 + $0x21c] sm:$0xf]
        %v749 = vld [vmem:[%s304 + $0x220] sm:$0xf]
        %v750 = vld [vmem:[%s304 + $0x224] sm:$0xf]
        %v751 = vld [vmem:[%s304 + $0x228] sm:$0xf]
        %v752 = vld [vmem:[%s304 + $0x22c] sm:$0xf]
        %v753 = vld [vmem:[%s304 + $0x230] sm:$0xf]
        %v754 = vld [vmem:[%s304 + $0x234] sm:$0xf]
        %v755 = vld [vmem:[%s304 + $0x238] sm:$0xf]
        %v756 = vld [vmem:[%s304 + $0x23c] sm:$0xf]
        %v757 = vld [vmem:[%s304 + $0x240] sm:$0xf]
        %v758 = vld [vmem:[%s304 + $0x244] sm:$0xf]
        %v759 = vld [vmem:[%s304 + $0x248] sm:$0xf]
        %v760 = vld [vmem:[%s304 + $0x24c] sm:$0xf]
        %v761 = vld [vmem:[%s304 + $0x250] sm:$0xf]
        %v762 = vld [vmem:[%s304 + $0x254] sm:$0xf]
        %v763 = vld [vmem:[%s304 + $0x258] sm:$0xf]
        %v764 = vld [vmem:[%s304 + $0x25c] sm:$0xf]
        %v765 = vld [vmem:[%s304 + $0x260] sm:$0xf]
        %v766 = vld [vmem:[%s304 + $0x264] sm:$0xf]
        %v767 = vld [vmem:[%s304 + $0x268] sm:$0xf]
        %v768 = vld [vmem:[%s304 + $0x26c] sm:$0xf]
        %v769 = vld [vmem:[%s304 + $0x270] sm:$0xf]
        %v770 = vld [vmem:[%s304 + $0x274] sm:$0xf]
        %v771 = vld [vmem:[%s304 + $0x278] sm:$0xf]
        %v772 = vld [vmem:[%s304 + $0x27c] sm:$0xf]
        %v773 = vld [vmem:[%s304 + $0x280] sm:$0xf]
        %v774 = vld [vmem:[%s304 + $0x284] sm:$0xf]
        %v775 = vld [vmem:[%s304 + $0x288] sm:$0xf]
        %v776 = vld [vmem:[%s304 + $0x28c] sm:$0xf]
        %v777 = vld [vmem:[%s304 + $0x290] sm:$0xf]
        %v778 = vld [vmem:[%s304 + $0x294] sm:$0xf]
        %v779 = vld [vmem:[%s304 + $0x298] sm:$0xf]
        %v780 = vld [vmem:[%s304 + $0x29c] sm:$0xf]
        %v781 = vld [vmem:[%s304 + $0x2a0] sm:$0xf]
        %v782 = vld [vmem:[%s304 + $0x2a4] sm:$0xf]
        %v783 = vld [vmem:[%s304 + $0x2a8] sm:$0xf]
        %v784 = vld [vmem:[%s304 + $0x2ac] sm:$0xf]
        %v785 = vld [vmem:[%s304 + $0x2b0] sm:$0xf]
        %v786 = vld [vmem:[%s304 + $0x2b4] sm:$0xf]
        %v787 = vld [vmem:[%s304 + $0x2b8] sm:$0xf]
        %v788 = vld [vmem:[%s304 + $0x2bc] sm:$0xf]
        %v789 = vld [vmem:[%s304 + $0x2c0] sm:$0xf]
        %v790 = vld [vmem:[%s304 + $0x2c4] sm:$0xf]
        %v791 = vld [vmem:[%s304 + $0x2c8] sm:$0xf]
        %v792 = vld [vmem:[%s304 + $0x2cc] sm:$0xf]
        %v793 = vld [vmem:[%s304 + $0x2d0] sm:$0xf]
        %v794 = vld [vmem:[%s304 + $0x2d4] sm:$0xf]
        %v795 = vld [vmem:[%s304 + $0x2d8] sm:$0xf]
        %v796 = vld [vmem:[%s304 + $0x2dc] sm:$0xf]
        %v797 = vld [vmem:[%s304 + $0x2e0] sm:$0xf]
        %v798 = vld [vmem:[%s304 + $0x2e4] sm:$0xf]
        %v799 = vld [vmem:[%s304 + $0x2e8] sm:$0xf]
        %v800 = vld [vmem:[%s304 + $0x2ec] sm:$0xf]
        %v801 = vld [vmem:[%s304 + $0x2f0] sm:$0xf]
        %v802 = vld [vmem:[%s304 + $0x2f4] sm:$0xf]
        %v803 = vld [vmem:[%s304 + $0x2f8] sm:$0xf]
        %v804 = vld [vmem:[%s304 + $0x2fc] sm:$0xf]
        %v805 = vld [vmem:[%s304 + $0x300] sm:$0xf]
        %v806 = vld [vmem:[%s304 + $0x304] sm:$0xf]
        %v807 = vld [vmem:[%s304 + $0x308] sm:$0xf]
        %v808 = vld [vmem:[%s304 + $0x30c] sm:$0xf]
        %v809 = vld [vmem:[%s304 + $0x310] sm:$0xf]
        %v810 = vld [vmem:[%s304 + $0x314] sm:$0xf]
        %v811 = vld [vmem:[%s304 + $0x318] sm:$0xf]
        %v812 = vld [vmem:[%s304 + $0x31c] sm:$0xf]
        %v813 = vld [vmem:[%s304 + $0x320] sm:$0xf]
        %v814 = vld [vmem:[%s304 + $0x324] sm:$0xf]
        %v815 = vld [vmem:[%s304 + $0x328] sm:$0xf]
        %v816 = vld [vmem:[%s304 + $0x32c] sm:$0xf]
        %v817 = vld [vmem:[%s304 + $0x330] sm:$0xf]
        %v818 = vld [vmem:[%s304 + $0x334] sm:$0xf]
        %v819 = vld [vmem:[%s304 + $0x338] sm:$0xf]
        %v820 = vld [vmem:[%s304 + $0x33c] sm:$0xf]
        %v821 = vld [vmem:[%s304 + $0x340] sm:$0xf]
        %v822 = vld [vmem:[%s304 + $0x344] sm:$0xf]
        %v823 = vld [vmem:[%s304 + $0x348] sm:$0xf]
        %v824 = vld [vmem:[%s304 + $0x34c] sm:$0xf]
        %v825 = vld [vmem:[%s304 + $0x350] sm:$0xf]
        %v826 = vld [vmem:[%s304 + $0x354] sm:$0xf]
        %v827 = vld [vmem:[%s304 + $0x358] sm:$0xf]
        %v828 = vld [vmem:[%s304 + $0x35c] sm:$0xf]
        %v829 = vld [vmem:[%s304 + $0x360] sm:$0xf]
        %v830 = vld [vmem:[%s304 + $0x364] sm:$0xf]
        %v831 = vld [vmem:[%s304 + $0x368] sm:$0xf]
        %v832 = vld [vmem:[%s304 + $0x36c] sm:$0xf]
        %v833 = vld [vmem:[%s304 + $0x370] sm:$0xf]
        %v834 = vld [vmem:[%s304 + $0x374] sm:$0xf]
        %v835 = vld [vmem:[%s304 + $0x378] sm:$0xf]
        %v836 = vld [vmem:[%s304 + $0x37c] sm:$0xf]
        %v1061 = vunpack.c.l.b16 %v389
        %v1062 = vunpack.c.h.b16 %v389
        %v1063 = vunpack.c.l.b16 %v390
        %v1064 = vunpack.c.h.b16 %v390
        %v1065 = vunpack.c.l.b16 %v391
        %v1066 = vunpack.c.h.b16 %v391
        %v1067 = vunpack.c.l.b16 %v392
        %v1068 = vunpack.c.h.b16 %v392
        %v1069 = vunpack.c.l.b16 %v393
        %v1070 = vunpack.c.h.b16 %v393
        %v1071 = vunpack.c.l.b16 %v394
        %v1072 = vunpack.c.h.b16 %v394
        %v1073 = vunpack.c.l.b16 %v395
        %v1074 = vunpack.c.h.b16 %v395
        %v1075 = vunpack.c.l.b16 %v396
        %v1076 = vunpack.c.h.b16 %v396
        %v1077 = vunpack.c.l.b16 %v397
        %v1078 = vunpack.c.h.b16 %v397
        %v1079 = vunpack.c.l.b16 %v398
        %v1080 = vunpack.c.h.b16 %v398
        %v1081 = vunpack.c.l.b16 %v399
        %v1082 = vunpack.c.h.b16 %v399
        %v1083 = vunpack.c.l.b16 %v400
        %v1084 = vunpack.c.h.b16 %v400
        %v1085 = vunpack.c.l.b16 %v401
        %v1086 = vunpack.c.h.b16 %v401
        %v1087 = vunpack.c.l.b16 %v402
        %v1088 = vunpack.c.h.b16 %v402
        %v1089 = vunpack.c.l.b16 %v403
        %v1090 = vunpack.c.h.b16 %v403
        %v1091 = vunpack.c.l.b16 %v404
        %v1092 = vunpack.c.h.b16 %v404
        %v1093 = vunpack.c.l.b16 %v405
        %v1094 = vunpack.c.h.b16 %v405
        %v1095 = vunpack.c.l.b16 %v406
        %v1096 = vunpack.c.h.b16 %v406
        %v1097 = vunpack.c.l.b16 %v407
        %v1098 = vunpack.c.h.b16 %v407
        %v1099 = vunpack.c.l.b16 %v408
        %v1100 = vunpack.c.h.b16 %v408
        %v1101 = vunpack.c.l.b16 %v409
        %v1102 = vunpack.c.h.b16 %v409
        %v1103 = vunpack.c.l.b16 %v410
        %v1104 = vunpack.c.h.b16 %v410
        %v1105 = vunpack.c.l.b16 %v411
        %v1106 = vunpack.c.h.b16 %v411
        %v1107 = vunpack.c.l.b16 %v412
        %v1108 = vunpack.c.h.b16 %v412
        %v1109 = vunpack.c.l.b16 %v413
        %v1110 = vunpack.c.h.b16 %v413
        %v1111 = vunpack.c.l.b16 %v414
        %v1112 = vunpack.c.h.b16 %v414
        %v1113 = vunpack.c.l.b16 %v415
        %v1114 = vunpack.c.h.b16 %v415
        %v1115 = vunpack.c.l.b16 %v416
        %v1116 = vunpack.c.h.b16 %v416
        %v1117 = vunpack.c.l.b16 %v417
        %v1118 = vunpack.c.h.b16 %v417
        %v1119 = vunpack.c.l.b16 %v418
        %v1120 = vunpack.c.h.b16 %v418
        %v1121 = vunpack.c.l.b16 %v419
        %v1122 = vunpack.c.h.b16 %v419
        %v1123 = vunpack.c.l.b16 %v420
        %v1124 = vunpack.c.h.b16 %v420
        %v1125 = vunpack.c.l.b16 %v421
        %v1126 = vunpack.c.h.b16 %v421
        %v1127 = vunpack.c.l.b16 %v422
        %v1128 = vunpack.c.h.b16 %v422
        %v1129 = vunpack.c.l.b16 %v423
        %v1130 = vunpack.c.h.b16 %v423
        %v1131 = vunpack.c.l.b16 %v424
        %v1132 = vunpack.c.h.b16 %v424
        %v1133 = vunpack.c.l.b16 %v425
        %v1134 = vunpack.c.h.b16 %v425
        %v1135 = vunpack.c.l.b16 %v426
        %v1136 = vunpack.c.h.b16 %v426
        %v1137 = vunpack.c.l.b16 %v427
        %v1138 = vunpack.c.h.b16 %v427
        %v1139 = vunpack.c.l.b16 %v428
        %v1140 = vunpack.c.h.b16 %v428
        %v1141 = vunpack.c.l.b16 %v429
        %v1142 = vunpack.c.h.b16 %v429
        %v1143 = vunpack.c.l.b16 %v430
        %v1144 = vunpack.c.h.b16 %v430
        %v1145 = vunpack.c.l.b16 %v431
        %v1146 = vunpack.c.h.b16 %v431
        %v1147 = vunpack.c.l.b16 %v432
        %v1148 = vunpack.c.h.b16 %v432
        %v1149 = vunpack.c.l.b16 %v433
        %v1150 = vunpack.c.h.b16 %v433
        %v1151 = vunpack.c.l.b16 %v434
        %v1152 = vunpack.c.h.b16 %v434
        %v1153 = vunpack.c.l.b16 %v435
        %v1154 = vunpack.c.h.b16 %v435
        %v1155 = vunpack.c.l.b16 %v436
        %v1156 = vunpack.c.h.b16 %v436
        %v1157 = vunpack.c.l.b16 %v437
        %v1158 = vunpack.c.h.b16 %v437
        %v1159 = vunpack.c.l.b16 %v438
        %v1160 = vunpack.c.h.b16 %v438
        %v1161 = vunpack.c.l.b16 %v439
        %v1162 = vunpack.c.h.b16 %v439
        %v1163 = vunpack.c.l.b16 %v440
        %v1164 = vunpack.c.h.b16 %v440
        %v1165 = vunpack.c.l.b16 %v441
        %v1166 = vunpack.c.h.b16 %v441
        %v1167 = vunpack.c.l.b16 %v442
        %v1168 = vunpack.c.h.b16 %v442
        %v1169 = vunpack.c.l.b16 %v443
        %v1170 = vunpack.c.h.b16 %v443
        %v1171 = vunpack.c.l.b16 %v444
        %v1172 = vunpack.c.h.b16 %v444
        %v1173 = vunpack.c.l.b16 %v445
        %v1174 = vunpack.c.h.b16 %v445
        %v1175 = vunpack.c.l.b16 %v446
        %v1176 = vunpack.c.h.b16 %v446
        %v1177 = vunpack.c.l.b16 %v447
        %v1178 = vunpack.c.h.b16 %v447
        %v1179 = vunpack.c.l.b16 %v448
        %v1180 = vunpack.c.h.b16 %v448
        %v1181 = vunpack.c.l.b16 %v449
        %v1182 = vunpack.c.h.b16 %v449
        %v1183 = vunpack.c.l.b16 %v450
        %v1184 = vunpack.c.h.b16 %v450
        %v1185 = vunpack.c.l.b16 %v451
        %v1186 = vunpack.c.h.b16 %v451
        %v1187 = vunpack.c.l.b16 %v452
        %v1188 = vunpack.c.h.b16 %v452
        %v1189 = vunpack.c.l.b16 %v453
        %v1190 = vunpack.c.h.b16 %v453
        %v1191 = vunpack.c.l.b16 %v454
        %v1192 = vunpack.c.h.b16 %v454
        %v1193 = vunpack.c.l.b16 %v455
        %v1194 = vunpack.c.h.b16 %v455
        %v1195 = vunpack.c.l.b16 %v456
        %v1196 = vunpack.c.h.b16 %v456
        %v1197 = vunpack.c.l.b16 %v457
        %v1198 = vunpack.c.h.b16 %v457
        %v1199 = vunpack.c.l.b16 %v458
        %v1200 = vunpack.c.h.b16 %v458
        %v1201 = vunpack.c.l.b16 %v459
        %v1202 = vunpack.c.h.b16 %v459
        %v1203 = vunpack.c.l.b16 %v460
        %v1204 = vunpack.c.h.b16 %v460
        %v1205 = vunpack.c.l.b16 %v461
        %v1206 = vunpack.c.h.b16 %v461
        %v1207 = vunpack.c.l.b16 %v462
        %v1208 = vunpack.c.h.b16 %v462
        %v1209 = vunpack.c.l.b16 %v463
        %v1210 = vunpack.c.h.b16 %v463
        %v1211 = vunpack.c.l.b16 %v464
        %v1212 = vunpack.c.h.b16 %v464
        %v1213 = vunpack.c.l.b16 %v465
        %v1214 = vunpack.c.h.b16 %v465
        %v1215 = vunpack.c.l.b16 %v466
        %v1216 = vunpack.c.h.b16 %v466
        %v1217 = vunpack.c.l.b16 %v467
        %v1218 = vunpack.c.h.b16 %v467
        %v1219 = vunpack.c.l.b16 %v468
        %v1220 = vunpack.c.h.b16 %v468
        %v1221 = vunpack.c.l.b16 %v469
        %v1222 = vunpack.c.h.b16 %v469
        %v1223 = vunpack.c.l.b16 %v470
        %v1224 = vunpack.c.h.b16 %v470
        %v1225 = vunpack.c.l.b16 %v471
        %v1226 = vunpack.c.h.b16 %v471
        %v1227 = vunpack.c.l.b16 %v472
        %v1228 = vunpack.c.h.b16 %v472
        %v1229 = vunpack.c.l.b16 %v473
        %v1230 = vunpack.c.h.b16 %v473
        %v1231 = vunpack.c.l.b16 %v474
        %v1232 = vunpack.c.h.b16 %v474
        %v1233 = vunpack.c.l.b16 %v475
        %v1234 = vunpack.c.h.b16 %v475
        %v1235 = vunpack.c.l.b16 %v476
        %v1236 = vunpack.c.h.b16 %v476
        %v1237 = vunpack.c.l.b16 %v477
        %v1238 = vunpack.c.h.b16 %v477
        %v1239 = vunpack.c.l.b16 %v478
        %v1240 = vunpack.c.h.b16 %v478
        %v1241 = vunpack.c.l.b16 %v479
        %v1242 = vunpack.c.h.b16 %v479
        %v1243 = vunpack.c.l.b16 %v480
        %v1244 = vunpack.c.h.b16 %v480
        %v1245 = vunpack.c.l.b16 %v481
        %v1246 = vunpack.c.h.b16 %v481
        %v1247 = vunpack.c.l.b16 %v482
        %v1248 = vunpack.c.h.b16 %v482
        %v1249 = vunpack.c.l.b16 %v483
        %v1250 = vunpack.c.h.b16 %v483
        %v1251 = vunpack.c.l.b16 %v484
        %v1252 = vunpack.c.h.b16 %v484
        %v1253 = vunpack.c.l.b16 %v485
        %v1254 = vunpack.c.h.b16 %v485
        %v1255 = vunpack.c.l.b16 %v486
        %v1256 = vunpack.c.h.b16 %v486
        %v1257 = vunpack.c.l.b16 %v487
        %v1258 = vunpack.c.h.b16 %v487
        %v1259 = vunpack.c.l.b16 %v488
        %v1260 = vunpack.c.h.b16 %v488
        %v1261 = vunpack.c.l.b16 %v489
        %v1262 = vunpack.c.h.b16 %v489
        %v1263 = vunpack.c.l.b16 %v490
        %v1264 = vunpack.c.h.b16 %v490
        %v1265 = vunpack.c.l.b16 %v491
        %v1266 = vunpack.c.h.b16 %v491
        %v1267 = vunpack.c.l.b16 %v492
        %v1268 = vunpack.c.h.b16 %v492
        %v1269 = vunpack.c.l.b16 %v493
        %v1270 = vunpack.c.h.b16 %v493
        %v1271 = vunpack.c.l.b16 %v494
        %v1272 = vunpack.c.h.b16 %v494
        %v1273 = vunpack.c.l.b16 %v495
        %v1274 = vunpack.c.h.b16 %v495
        %v1275 = vunpack.c.l.b16 %v496
        %v1276 = vunpack.c.h.b16 %v496
        %v1277 = vunpack.c.l.b16 %v497
        %v1278 = vunpack.c.h.b16 %v497
        %v1279 = vunpack.c.l.b16 %v498
        %v1280 = vunpack.c.h.b16 %v498
        %v1281 = vunpack.c.l.b16 %v499
        %v1282 = vunpack.c.h.b16 %v499
        %v1283 = vunpack.c.l.b16 %v500
        %v1284 = vunpack.c.h.b16 %v500
        %v1285 = vunpack.c.l.b16 %v501
        %v1286 = vunpack.c.h.b16 %v501
        %v1287 = vunpack.c.l.b16 %v502
        %v1288 = vunpack.c.h.b16 %v502
        %v1289 = vunpack.c.l.b16 %v503
        %v1290 = vunpack.c.h.b16 %v503
        %v1291 = vunpack.c.l.b16 %v504
        %v1292 = vunpack.c.h.b16 %v504
        %v1293 = vunpack.c.l.b16 %v505
        %v1294 = vunpack.c.h.b16 %v505
        %v1295 = vunpack.c.l.b16 %v506
        %v1296 = vunpack.c.h.b16 %v506
        %v1297 = vunpack.c.l.b16 %v507
        %v1298 = vunpack.c.h.b16 %v507
        %v1299 = vunpack.c.l.b16 %v508
        %v1300 = vunpack.c.h.b16 %v508
        %v1301 = vunpack.c.l.b16 %v509
        %v1302 = vunpack.c.h.b16 %v509
        %v1303 = vunpack.c.l.b16 %v510
        %v1304 = vunpack.c.h.b16 %v510
        %v1305 = vunpack.c.l.b16 %v511
        %v1306 = vunpack.c.h.b16 %v511
        %v1307 = vunpack.c.l.b16 %v512
        %v1308 = vunpack.c.h.b16 %v512
        %v1309 = vunpack.c.l.b16 %v513
        %v1310 = vunpack.c.h.b16 %v513
        %v1311 = vunpack.c.l.b16 %v514
        %v1312 = vunpack.c.h.b16 %v514
        %v1313 = vunpack.c.l.b16 %v515
        %v1314 = vunpack.c.h.b16 %v515
        %v1315 = vunpack.c.l.b16 %v516
        %v1316 = vunpack.c.h.b16 %v516
        %v1317 = vunpack.c.l.b16 %v517
        %v1318 = vunpack.c.h.b16 %v517
        %v1319 = vunpack.c.l.b16 %v518
        %v1320 = vunpack.c.h.b16 %v518
        %v1321 = vunpack.c.l.b16 %v519
        %v1322 = vunpack.c.h.b16 %v519
        %v1323 = vunpack.c.l.b16 %v520
        %v1324 = vunpack.c.h.b16 %v520
        %v1325 = vunpack.c.l.b16 %v521
        %v1326 = vunpack.c.h.b16 %v521
        %v1327 = vunpack.c.l.b16 %v522
        %v1328 = vunpack.c.h.b16 %v522
        %v1329 = vunpack.c.l.b16 %v523
        %v1330 = vunpack.c.h.b16 %v523
        %v1331 = vunpack.c.l.b16 %v524
        %v1332 = vunpack.c.h.b16 %v524
        %v1333 = vunpack.c.l.b16 %v525
        %v1334 = vunpack.c.h.b16 %v525
        %v1335 = vunpack.c.l.b16 %v526
        %v1336 = vunpack.c.h.b16 %v526
        %v1337 = vunpack.c.l.b16 %v527
        %v1338 = vunpack.c.h.b16 %v527
        %v1339 = vunpack.c.l.b16 %v528
        %v1340 = vunpack.c.h.b16 %v528
        %v1341 = vunpack.c.l.b16 %v529
        %v1342 = vunpack.c.h.b16 %v529
        %v1343 = vunpack.c.l.b16 %v530
        %v1344 = vunpack.c.h.b16 %v530
        %v1345 = vunpack.c.l.b16 %v531
        %v1346 = vunpack.c.h.b16 %v531
        %v1347 = vunpack.c.l.b16 %v532
        %v1348 = vunpack.c.h.b16 %v532
        %v1349 = vunpack.c.l.b16 %v533
        %v1350 = vunpack.c.h.b16 %v533
        %v1351 = vunpack.c.l.b16 %v534
        %v1352 = vunpack.c.h.b16 %v534
        %v1353 = vunpack.c.l.b16 %v535
        %v1354 = vunpack.c.h.b16 %v535
        %v1355 = vunpack.c.l.b16 %v536
        %v1356 = vunpack.c.h.b16 %v536
        %v1357 = vunpack.c.l.b16 %v537
        %v1358 = vunpack.c.h.b16 %v537
        %v1359 = vunpack.c.l.b16 %v538
        %v1360 = vunpack.c.h.b16 %v538
        %v1361 = vunpack.c.l.b16 %v539
        %v1362 = vunpack.c.h.b16 %v539
        %v1363 = vunpack.c.l.b16 %v540
        %v1364 = vunpack.c.h.b16 %v540
        %v1365 = vunpack.c.l.b16 %v541
        %v1366 = vunpack.c.h.b16 %v541
        %v1367 = vunpack.c.l.b16 %v542
        %v1368 = vunpack.c.h.b16 %v542
        %v1369 = vunpack.c.l.b16 %v543
        %v1370 = vunpack.c.h.b16 %v543
        %v1371 = vunpack.c.l.b16 %v544
        %v1372 = vunpack.c.h.b16 %v544
        %v1373 = vunpack.c.l.b16 %v545
        %v1374 = vunpack.c.h.b16 %v545
        %v1375 = vunpack.c.l.b16 %v546
        %v1376 = vunpack.c.h.b16 %v546
        %v1377 = vunpack.c.l.b16 %v547
        %v1378 = vunpack.c.h.b16 %v547
        %v1379 = vunpack.c.l.b16 %v548
        %v1380 = vunpack.c.h.b16 %v548
        %v1381 = vunpack.c.l.b16 %v549
        %v1382 = vunpack.c.h.b16 %v549
        %v1383 = vunpack.c.l.b16 %v550
        %v1384 = vunpack.c.h.b16 %v550
        %v1385 = vunpack.c.l.b16 %v551
        %v1386 = vunpack.c.h.b16 %v551
        %v1387 = vunpack.c.l.b16 %v552
        %v1388 = vunpack.c.h.b16 %v552
        %v1389 = vunpack.c.l.b16 %v553
        %v1390 = vunpack.c.h.b16 %v553
        %v1391 = vunpack.c.l.b16 %v554
        %v1392 = vunpack.c.h.b16 %v554
        %v1393 = vunpack.c.l.b16 %v555
        %v1394 = vunpack.c.h.b16 %v555
        %v1395 = vunpack.c.l.b16 %v556
        %v1396 = vunpack.c.h.b16 %v556
        %v1397 = vunpack.c.l.b16 %v557
        %v1398 = vunpack.c.h.b16 %v557
        %v1399 = vunpack.c.l.b16 %v558
        %v1400 = vunpack.c.h.b16 %v558
        %v1401 = vunpack.c.l.b16 %v559
        %v1402 = vunpack.c.h.b16 %v559
        %v1403 = vunpack.c.l.b16 %v560
        %v1404 = vunpack.c.h.b16 %v560
        %v1405 = vunpack.c.l.b16 %v561
        %v1406 = vunpack.c.h.b16 %v561
        %v1407 = vunpack.c.l.b16 %v562
        %v1408 = vunpack.c.h.b16 %v562
        %v1409 = vunpack.c.l.b16 %v563
        %v1410 = vunpack.c.h.b16 %v563
        %v1411 = vunpack.c.l.b16 %v564
        %v1412 = vunpack.c.h.b16 %v564
        %v1413 = vunpack.c.l.b16 %v565
        %v1414 = vunpack.c.h.b16 %v565
        %v1415 = vunpack.c.l.b16 %v566
        %v1416 = vunpack.c.h.b16 %v566
        %v1417 = vunpack.c.l.b16 %v567
        %v1418 = vunpack.c.h.b16 %v567
        %v1419 = vunpack.c.l.b16 %v568
        %v1420 = vunpack.c.h.b16 %v568
        %v1421 = vunpack.c.l.b16 %v569
        %v1422 = vunpack.c.h.b16 %v569
        %v1423 = vunpack.c.l.b16 %v570
        %v1424 = vunpack.c.h.b16 %v570
        %v1425 = vunpack.c.l.b16 %v571
        %v1426 = vunpack.c.h.b16 %v571
        %v1427 = vunpack.c.l.b16 %v572
        %v1428 = vunpack.c.h.b16 %v572
        %v1429 = vunpack.c.l.b16 %v573
        %v1430 = vunpack.c.h.b16 %v573
        %v1431 = vunpack.c.l.b16 %v574
        %v1432 = vunpack.c.h.b16 %v574
        %v1433 = vunpack.c.l.b16 %v575
        %v1434 = vunpack.c.h.b16 %v575
        %v1435 = vunpack.c.l.b16 %v576
        %v1436 = vunpack.c.h.b16 %v576
        %v1437 = vunpack.c.l.b16 %v577
        %v1438 = vunpack.c.h.b16 %v577
        %v1439 = vunpack.c.l.b16 %v578
        %v1440 = vunpack.c.h.b16 %v578
        %v1441 = vunpack.c.l.b16 %v579
        %v1442 = vunpack.c.h.b16 %v579
        %v1443 = vunpack.c.l.b16 %v580
        %v1444 = vunpack.c.h.b16 %v580
        %v1445 = vunpack.c.l.b16 %v581
        %v1446 = vunpack.c.h.b16 %v581
        %v1447 = vunpack.c.l.b16 %v582
        %v1448 = vunpack.c.h.b16 %v582
        %v1449 = vunpack.c.l.b16 %v583
        %v1450 = vunpack.c.h.b16 %v583
        %v1451 = vunpack.c.l.b16 %v584
        %v1452 = vunpack.c.h.b16 %v584
        %v1453 = vunpack.c.l.b16 %v585
        %v1454 = vunpack.c.h.b16 %v585
        %v1455 = vunpack.c.l.b16 %v586
        %v1456 = vunpack.c.h.b16 %v586
        %v1457 = vunpack.c.l.b16 %v587
        %v1458 = vunpack.c.h.b16 %v587
        %v1459 = vunpack.c.l.b16 %v588
        %v1460 = vunpack.c.h.b16 %v588
        %v1461 = vunpack.c.l.b16 %v589
        %v1462 = vunpack.c.h.b16 %v589
        %v1463 = vunpack.c.l.b16 %v590
        %v1464 = vunpack.c.h.b16 %v590
        %v1465 = vunpack.c.l.b16 %v591
        %v1466 = vunpack.c.h.b16 %v591
        %v1467 = vunpack.c.l.b16 %v592
        %v1468 = vunpack.c.h.b16 %v592
        %v1469 = vunpack.c.l.b16 %v593
        %v1470 = vunpack.c.h.b16 %v593
        %v1471 = vunpack.c.l.b16 %v594
        %v1472 = vunpack.c.h.b16 %v594
        %v1473 = vunpack.c.l.b16 %v595
        %v1474 = vunpack.c.h.b16 %v595
        %v1475 = vunpack.c.l.b16 %v596
        %v1476 = vunpack.c.h.b16 %v596
        %v1477 = vunpack.c.l.b16 %v597
        %v1478 = vunpack.c.h.b16 %v597
        %v1479 = vunpack.c.l.b16 %v598
        %v1480 = vunpack.c.h.b16 %v598
        %v1481 = vunpack.c.l.b16 %v599
        %v1482 = vunpack.c.h.b16 %v599
        %v1483 = vunpack.c.l.b16 %v600
        %v1484 = vunpack.c.h.b16 %v600
        %v1485 = vunpack.c.l.b16 %v601
        %v1486 = vunpack.c.h.b16 %v601
        %v1487 = vunpack.c.l.b16 %v602
        %v1488 = vunpack.c.h.b16 %v602
        %v1489 = vunpack.c.l.b16 %v603
        %v1490 = vunpack.c.h.b16 %v603
        %v1491 = vunpack.c.l.b16 %v604
        %v1492 = vunpack.c.h.b16 %v604
        %v1493 = vunpack.c.l.b16 %v605
        %v1494 = vunpack.c.h.b16 %v605
        %v1495 = vunpack.c.l.b16 %v606
        %v1496 = vunpack.c.h.b16 %v606
        %v1497 = vunpack.c.l.b16 %v607
        %v1498 = vunpack.c.h.b16 %v607
        %v1499 = vunpack.c.l.b16 %v608
        %v1500 = vunpack.c.h.b16 %v608
        %v1501 = vunpack.c.l.b16 %v609
        %v1502 = vunpack.c.h.b16 %v609
        %v1503 = vunpack.c.l.b16 %v610
        %v1504 = vunpack.c.h.b16 %v610
        %v1505 = vunpack.c.l.b16 %v611
        %v1506 = vunpack.c.h.b16 %v611
        %v1507 = vunpack.c.l.b16 %v612
        %v1508 = vunpack.c.h.b16 %v612
        %v1509 = vpack.c.b16 %v1075, %v1061
        %v1510 = vpack.c.b16 %v1076, %v1062
        %v1511 = vpack.c.b16 %v1077, %v1063
        %v1512 = vpack.c.b16 %v1078, %v1064
        %v1513 = vpack.c.b16 %v1079, %v1065
        %v1514 = vpack.c.b16 %v1080, %v1066
        %v1515 = vpack.c.b16 %v1081, %v1067
        %v1516 = vpack.c.b16 %v1082, %v1068
        %v1517 = vpack.c.b16 %v1083, %v1069
        %v1518 = vpack.c.b16 %v1084, %v1070
        %v1519 = vpack.c.b16 %v1085, %v1071
        %v1520 = vpack.c.b16 %v1086, %v1072
        %v1521 = vpack.c.b16 %v1087, %v1073
        %v1522 = vpack.c.b16 %v1088, %v1074
        %v1523 = vpack.c.b16 %v1103, %v1089
        %v1524 = vpack.c.b16 %v1104, %v1090
        %v1525 = vpack.c.b16 %v1105, %v1091
        %v1526 = vpack.c.b16 %v1106, %v1092
        %v1527 = vpack.c.b16 %v1107, %v1093
        %v1528 = vpack.c.b16 %v1108, %v1094
        %v1529 = vpack.c.b16 %v1109, %v1095
        %v1530 = vpack.c.b16 %v1110, %v1096
        %v1531 = vpack.c.b16 %v1111, %v1097
        %v1532 = vpack.c.b16 %v1112, %v1098
        %v1533 = vpack.c.b16 %v1113, %v1099
        %v1534 = vpack.c.b16 %v1114, %v1100
        %v1535 = vpack.c.b16 %v1115, %v1101
        %v1536 = vpack.c.b16 %v1116, %v1102
        %v1537 = vpack.c.b16 %v1131, %v1117
        %v1538 = vpack.c.b16 %v1132, %v1118
        %v1539 = vpack.c.b16 %v1133, %v1119
        %v1540 = vpack.c.b16 %v1134, %v1120
        %v1541 = vpack.c.b16 %v1135, %v1121
        %v1542 = vpack.c.b16 %v1136, %v1122
        %v1543 = vpack.c.b16 %v1137, %v1123
        %v1544 = vpack.c.b16 %v1138, %v1124
        %v1545 = vpack.c.b16 %v1139, %v1125
        %v1546 = vpack.c.b16 %v1140, %v1126
        %v1547 = vpack.c.b16 %v1141, %v1127
        %v1548 = vpack.c.b16 %v1142, %v1128
        %v1549 = vpack.c.b16 %v1143, %v1129
        %v1550 = vpack.c.b16 %v1144, %v1130
        %v1551 = vpack.c.b16 %v1159, %v1145
        %v1552 = vpack.c.b16 %v1160, %v1146
        %v1553 = vpack.c.b16 %v1161, %v1147
        %v1554 = vpack.c.b16 %v1162, %v1148
        %v1555 = vpack.c.b16 %v1163, %v1149
        %v1556 = vpack.c.b16 %v1164, %v1150
        %v1557 = vpack.c.b16 %v1165, %v1151
        %v1558 = vpack.c.b16 %v1166, %v1152
        %v1559 = vpack.c.b16 %v1167, %v1153
        %v1560 = vpack.c.b16 %v1168, %v1154
        %v1561 = vpack.c.b16 %v1169, %v1155
        %v1562 = vpack.c.b16 %v1170, %v1156
        %v1563 = vpack.c.b16 %v1171, %v1157
        %v1564 = vpack.c.b16 %v1172, %v1158
        %v1565 = vpack.c.b16 %v1187, %v1173
        %v1566 = vpack.c.b16 %v1188, %v1174
        %v1567 = vpack.c.b16 %v1189, %v1175
        %v1568 = vpack.c.b16 %v1190, %v1176
        %v1569 = vpack.c.b16 %v1191, %v1177
        %v1570 = vpack.c.b16 %v1192, %v1178
        %v1571 = vpack.c.b16 %v1193, %v1179
        %v1572 = vpack.c.b16 %v1194, %v1180
        %v1573 = vpack.c.b16 %v1195, %v1181
        %v1574 = vpack.c.b16 %v1196, %v1182
        %v1575 = vpack.c.b16 %v1197, %v1183
        %v1576 = vpack.c.b16 %v1198, %v1184
        %v1577 = vpack.c.b16 %v1199, %v1185
        %v1578 = vpack.c.b16 %v1200, %v1186
        %v1579 = vpack.c.b16 %v1215, %v1201
        %v1580 = vpack.c.b16 %v1216, %v1202
        %v1581 = vpack.c.b16 %v1217, %v1203
        %v1582 = vpack.c.b16 %v1218, %v1204
        %v1583 = vpack.c.b16 %v1219, %v1205
        %v1584 = vpack.c.b16 %v1220, %v1206
        %v1585 = vpack.c.b16 %v1221, %v1207
        %v1586 = vpack.c.b16 %v1222, %v1208
        %v1587 = vpack.c.b16 %v1223, %v1209
        %v1588 = vpack.c.b16 %v1224, %v1210
        %v1589 = vpack.c.b16 %v1225, %v1211
        %v1590 = vpack.c.b16 %v1226, %v1212
        %v1591 = vpack.c.b16 %v1227, %v1213
        %v1592 = vpack.c.b16 %v1228, %v1214
        %v1593 = vpack.c.b16 %v1243, %v1229
        %v1594 = vpack.c.b16 %v1244, %v1230
        %v1595 = vpack.c.b16 %v1245, %v1231
        %v1596 = vpack.c.b16 %v1246, %v1232
        %v1597 = vpack.c.b16 %v1247, %v1233
        %v1598 = vpack.c.b16 %v1248, %v1234
        %v1599 = vpack.c.b16 %v1249, %v1235
        %v1600 = vpack.c.b16 %v1250, %v1236
        %v1601 = vpack.c.b16 %v1251, %v1237
        %v1602 = vpack.c.b16 %v1252, %v1238
        %v1603 = vpack.c.b16 %v1253, %v1239
        %v1604 = vpack.c.b16 %v1254, %v1240
        %v1605 = vpack.c.b16 %v1255, %v1241
        %v1606 = vpack.c.b16 %v1256, %v1242
        %v1607 = vpack.c.b16 %v1271, %v1257
        %v1608 = vpack.c.b16 %v1272, %v1258
        %v1609 = vpack.c.b16 %v1273, %v1259
        %v1610 = vpack.c.b16 %v1274, %v1260
        %v1611 = vpack.c.b16 %v1275, %v1261
        %v1612 = vpack.c.b16 %v1276, %v1262
        %v1613 = vpack.c.b16 %v1277, %v1263
        %v1614 = vpack.c.b16 %v1278, %v1264
        %v1615 = vpack.c.b16 %v1279, %v1265
        %v1616 = vpack.c.b16 %v1280, %v1266
        %v1617 = vpack.c.b16 %v1281, %v1267
        %v1618 = vpack.c.b16 %v1282, %v1268
        %v1619 = vpack.c.b16 %v1283, %v1269
        %v1620 = vpack.c.b16 %v1284, %v1270
        %v1621 = vpack.c.b16 %v1299, %v1285
        %v1622 = vpack.c.b16 %v1300, %v1286
        %v1623 = vpack.c.b16 %v1301, %v1287
        %v1624 = vpack.c.b16 %v1302, %v1288
        %v1625 = vpack.c.b16 %v1303, %v1289
        %v1626 = vpack.c.b16 %v1304, %v1290
        %v1627 = vpack.c.b16 %v1305, %v1291
        %v1628 = vpack.c.b16 %v1306, %v1292
        %v1629 = vpack.c.b16 %v1307, %v1293
        %v1630 = vpack.c.b16 %v1308, %v1294
        %v1631 = vpack.c.b16 %v1309, %v1295
        %v1632 = vpack.c.b16 %v1310, %v1296
        %v1633 = vpack.c.b16 %v1311, %v1297
        %v1634 = vpack.c.b16 %v1312, %v1298
        %v1635 = vpack.c.b16 %v1327, %v1313
        %v1636 = vpack.c.b16 %v1328, %v1314
        %v1637 = vpack.c.b16 %v1329, %v1315
        %v1638 = vpack.c.b16 %v1330, %v1316
        %v1639 = vpack.c.b16 %v1331, %v1317
        %v1640 = vpack.c.b16 %v1332, %v1318
        %v1641 = vpack.c.b16 %v1333, %v1319
        %v1642 = vpack.c.b16 %v1334, %v1320
        %v1643 = vpack.c.b16 %v1335, %v1321
        %v1644 = vpack.c.b16 %v1336, %v1322
        %v1645 = vpack.c.b16 %v1337, %v1323
        %v1646 = vpack.c.b16 %v1338, %v1324
        %v1647 = vpack.c.b16 %v1339, %v1325
        %v1648 = vpack.c.b16 %v1340, %v1326
        %v1649 = vpack.c.b16 %v1355, %v1341
        %v1650 = vpack.c.b16 %v1356, %v1342
        %v1651 = vpack.c.b16 %v1357, %v1343
        %v1652 = vpack.c.b16 %v1358, %v1344
        %v1653 = vpack.c.b16 %v1359, %v1345
        %v1654 = vpack.c.b16 %v1360, %v1346
        %v1655 = vpack.c.b16 %v1361, %v1347
        %v1656 = vpack.c.b16 %v1362, %v1348
        %v1657 = vpack.c.b16 %v1363, %v1349
        %v1658 = vpack.c.b16 %v1364, %v1350
        %v1659 = vpack.c.b16 %v1365, %v1351
        %v1660 = vpack.c.b16 %v1366, %v1352
        %v1661 = vpack.c.b16 %v1367, %v1353
        %v1662 = vpack.c.b16 %v1368, %v1354
        %v1663 = vpack.c.b16 %v1383, %v1369
        %v1664 = vpack.c.b16 %v1384, %v1370
        %v1665 = vpack.c.b16 %v1385, %v1371
        %v1666 = vpack.c.b16 %v1386, %v1372
        %v1667 = vpack.c.b16 %v1387, %v1373
        %v1668 = vpack.c.b16 %v1388, %v1374
        %v1669 = vpack.c.b16 %v1389, %v1375
        %v1670 = vpack.c.b16 %v1390, %v1376
        %v1671 = vpack.c.b16 %v1391, %v1377
        %v1672 = vpack.c.b16 %v1392, %v1378
        %v1673 = vpack.c.b16 %v1393, %v1379
        %v1674 = vpack.c.b16 %v1394, %v1380
        %v1675 = vpack.c.b16 %v1395, %v1381
        %v1676 = vpack.c.b16 %v1396, %v1382
        %v1677 = vpack.c.b16 %v1411, %v1397
        %v1678 = vpack.c.b16 %v1412, %v1398
        %v1679 = vpack.c.b16 %v1413, %v1399
        %v1680 = vpack.c.b16 %v1414, %v1400
        %v1681 = vpack.c.b16 %v1415, %v1401
        %v1682 = vpack.c.b16 %v1416, %v1402
        %v1683 = vpack.c.b16 %v1417, %v1403
        %v1684 = vpack.c.b16 %v1418, %v1404
        %v1685 = vpack.c.b16 %v1419, %v1405
        %v1686 = vpack.c.b16 %v1420, %v1406
        %v1687 = vpack.c.b16 %v1421, %v1407
        %v1688 = vpack.c.b16 %v1422, %v1408
        %v1689 = vpack.c.b16 %v1423, %v1409
        %v1690 = vpack.c.b16 %v1424, %v1410
        %v1691 = vpack.c.b16 %v1439, %v1425
        %v1692 = vpack.c.b16 %v1440, %v1426
        %v1693 = vpack.c.b16 %v1441, %v1427
        %v1694 = vpack.c.b16 %v1442, %v1428
        %v1695 = vpack.c.b16 %v1443, %v1429
        %v1696 = vpack.c.b16 %v1444, %v1430
        %v1697 = vpack.c.b16 %v1445, %v1431
        %v1698 = vpack.c.b16 %v1446, %v1432
        %v1699 = vpack.c.b16 %v1447, %v1433
        %v1700 = vpack.c.b16 %v1448, %v1434
        %v1701 = vpack.c.b16 %v1449, %v1435
        %v1702 = vpack.c.b16 %v1450, %v1436
        %v1703 = vpack.c.b16 %v1451, %v1437
        %v1704 = vpack.c.b16 %v1452, %v1438
        %v1705 = vpack.c.b16 %v1467, %v1453
        %v1706 = vpack.c.b16 %v1468, %v1454
        %v1707 = vpack.c.b16 %v1469, %v1455
        %v1708 = vpack.c.b16 %v1470, %v1456
        %v1709 = vpack.c.b16 %v1471, %v1457
        %v1710 = vpack.c.b16 %v1472, %v1458
        %v1711 = vpack.c.b16 %v1473, %v1459
        %v1712 = vpack.c.b16 %v1474, %v1460
        %v1713 = vpack.c.b16 %v1475, %v1461
        %v1714 = vpack.c.b16 %v1476, %v1462
        %v1715 = vpack.c.b16 %v1477, %v1463
        %v1716 = vpack.c.b16 %v1478, %v1464
        %v1717 = vpack.c.b16 %v1479, %v1465
        %v1718 = vpack.c.b16 %v1480, %v1466
        %v1719 = vpack.c.b16 %v1495, %v1481
        %v1720 = vpack.c.b16 %v1496, %v1482
        %v1721 = vpack.c.b16 %v1497, %v1483
        %v1722 = vpack.c.b16 %v1498, %v1484
        %v1723 = vpack.c.b16 %v1499, %v1485
        %v1724 = vpack.c.b16 %v1500, %v1486
        %v1725 = vpack.c.b16 %v1501, %v1487
        %v1726 = vpack.c.b16 %v1502, %v1488
        %v1727 = vpack.c.b16 %v1503, %v1489
        %v1728 = vpack.c.b16 %v1504, %v1490
        %v1729 = vpack.c.b16 %v1505, %v1491
        %v1730 = vpack.c.b16 %v1506, %v1492
        %v1731 = vpack.c.b16 %v1507, %v1493
        %v1732 = vpack.c.b16 %v1508, %v1494
        %v2181 = vunpack.c.l.b16 %v613
        %v2182 = vunpack.c.l.b16 %v614
        %v2183 = vunpack.c.l.b16 %v615
        %v2184 = vunpack.c.l.b16 %v616
        %v2185 = vunpack.c.l.b16 %v617
        %v2186 = vunpack.c.l.b16 %v618
        %v2187 = vunpack.c.l.b16 %v619
        %v2188 = vunpack.c.l.b16 %v620
        %v2189 = vunpack.c.l.b16 %v621
        %v2190 = vunpack.c.l.b16 %v622
        %v2191 = vunpack.c.l.b16 %v623
        %v2192 = vunpack.c.l.b16 %v624
        %v2193 = vunpack.c.l.b16 %v625
        %v2194 = vunpack.c.l.b16 %v626
        %v2195 = vunpack.c.l.b16 %v627
        %v2196 = vunpack.c.l.b16 %v628
        %v2197 = vunpack.c.l.b16 %v629
        %v2198 = vunpack.c.l.b16 %v630
        %v2199 = vunpack.c.l.b16 %v631
        %v2200 = vunpack.c.l.b16 %v632
        %v2201 = vunpack.c.l.b16 %v633
        %v2202 = vunpack.c.l.b16 %v634
        %v2203 = vunpack.c.l.b16 %v635
        %v2204 = vunpack.c.l.b16 %v636
        %v2205 = vunpack.c.l.b16 %v637
        %v2206 = vunpack.c.l.b16 %v638
        %v2207 = vunpack.c.l.b16 %v639
        %v2208 = vunpack.c.l.b16 %v640
        %v2209 = vunpack.c.l.b16 %v641
        %v2210 = vunpack.c.l.b16 %v642
        %v2211 = vunpack.c.l.b16 %v643
        %v2212 = vunpack.c.l.b16 %v644
        %v2213 = vunpack.c.l.b16 %v645
        %v2214 = vunpack.c.l.b16 %v646
        %v2215 = vunpack.c.l.b16 %v647
        %v2216 = vunpack.c.l.b16 %v648
        %v2217 = vunpack.c.l.b16 %v649
        %v2218 = vunpack.c.l.b16 %v650
        %v2219 = vunpack.c.l.b16 %v651
        %v2220 = vunpack.c.l.b16 %v652
        %v2221 = vunpack.c.l.b16 %v653
        %v2222 = vunpack.c.l.b16 %v654
        %v2223 = vunpack.c.l.b16 %v655
        %v2224 = vunpack.c.l.b16 %v656
        %v2225 = vunpack.c.l.b16 %v657
        %v2226 = vunpack.c.l.b16 %v658
        %v2227 = vunpack.c.l.b16 %v659
        %v2228 = vunpack.c.l.b16 %v660
        %v2229 = vunpack.c.l.b16 %v661
        %v2230 = vunpack.c.l.b16 %v662
        %v2231 = vunpack.c.l.b16 %v663
        %v2232 = vunpack.c.l.b16 %v664
        %v2233 = vunpack.c.l.b16 %v665
        %v2234 = vunpack.c.l.b16 %v666
        %v2235 = vunpack.c.l.b16 %v667
        %v2236 = vunpack.c.l.b16 %v668
        %v2237 = vunpack.c.l.b16 %v669
        %v2238 = vunpack.c.l.b16 %v670
        %v2239 = vunpack.c.l.b16 %v671
        %v2240 = vunpack.c.l.b16 %v672
        %v2241 = vunpack.c.l.b16 %v673
        %v2242 = vunpack.c.l.b16 %v674
        %v2243 = vunpack.c.l.b16 %v675
        %v2244 = vunpack.c.l.b16 %v676
        %v2245 = vunpack.c.l.b16 %v677
        %v2246 = vunpack.c.l.b16 %v678
        %v2247 = vunpack.c.l.b16 %v679
        %v2248 = vunpack.c.l.b16 %v680
        %v2249 = vunpack.c.l.b16 %v681
        %v2250 = vunpack.c.l.b16 %v682
        %v2251 = vunpack.c.l.b16 %v683
        %v2252 = vunpack.c.l.b16 %v684
        %v2253 = vunpack.c.l.b16 %v685
        %v2254 = vunpack.c.l.b16 %v686
        %v2255 = vunpack.c.l.b16 %v687
        %v2256 = vunpack.c.l.b16 %v688
        %v2257 = vunpack.c.l.b16 %v689
        %v2258 = vunpack.c.l.b16 %v690
        %v2259 = vunpack.c.l.b16 %v691
        %v2260 = vunpack.c.l.b16 %v692
        %v2261 = vunpack.c.l.b16 %v693
        %v2262 = vunpack.c.l.b16 %v694
        %v2263 = vunpack.c.l.b16 %v695
        %v2264 = vunpack.c.l.b16 %v696
        %v2265 = vunpack.c.l.b16 %v697
        %v2266 = vunpack.c.l.b16 %v698
        %v2267 = vunpack.c.l.b16 %v699
        %v2268 = vunpack.c.l.b16 %v700
        %v2269 = vunpack.c.l.b16 %v701
        %v2270 = vunpack.c.l.b16 %v702
        %v2271 = vunpack.c.l.b16 %v703
        %v2272 = vunpack.c.l.b16 %v704
        %v2273 = vunpack.c.l.b16 %v705
        %v2274 = vunpack.c.l.b16 %v706
        %v2275 = vunpack.c.l.b16 %v707
        %v2276 = vunpack.c.l.b16 %v708
        %v2277 = vunpack.c.l.b16 %v709
        %v2278 = vunpack.c.l.b16 %v710
        %v2279 = vunpack.c.l.b16 %v711
        %v2280 = vunpack.c.l.b16 %v712
        %v2281 = vunpack.c.l.b16 %v713
        %v2282 = vunpack.c.l.b16 %v714
        %v2283 = vunpack.c.l.b16 %v715
        %v2284 = vunpack.c.l.b16 %v716
        %v2285 = vunpack.c.l.b16 %v717
        %v2286 = vunpack.c.l.b16 %v718
        %v2287 = vunpack.c.l.b16 %v719
        %v2288 = vunpack.c.l.b16 %v720
        %v2289 = vunpack.c.l.b16 %v721
        %v2290 = vunpack.c.l.b16 %v722
        %v2291 = vunpack.c.l.b16 %v723
        %v2292 = vunpack.c.l.b16 %v724
        %v2293 = vunpack.c.l.b16 %v725
        %v2294 = vunpack.c.l.b16 %v726
        %v2295 = vunpack.c.l.b16 %v727
        %v2296 = vunpack.c.l.b16 %v728
        %v2297 = vunpack.c.l.b16 %v729
        %v2298 = vunpack.c.l.b16 %v730
        %v2299 = vunpack.c.l.b16 %v731
        %v2300 = vunpack.c.l.b16 %v732
        %v2301 = vunpack.c.l.b16 %v733
        %v2302 = vunpack.c.l.b16 %v734
        %v2303 = vunpack.c.l.b16 %v735
        %v2304 = vunpack.c.l.b16 %v736
        %v2305 = vunpack.c.l.b16 %v737
        %v2306 = vunpack.c.l.b16 %v738
        %v2307 = vunpack.c.l.b16 %v739
        %v2308 = vunpack.c.l.b16 %v740
        %v2309 = vunpack.c.l.b16 %v741
        %v2310 = vunpack.c.l.b16 %v742
        %v2311 = vunpack.c.l.b16 %v743
        %v2312 = vunpack.c.l.b16 %v744
        %v2313 = vunpack.c.l.b16 %v745
        %v2314 = vunpack.c.l.b16 %v746
        %v2315 = vunpack.c.l.b16 %v747
        %v2316 = vunpack.c.l.b16 %v748
        %v2317 = vunpack.c.l.b16 %v749
        %v2318 = vunpack.c.l.b16 %v750
        %v2319 = vunpack.c.l.b16 %v751
        %v2320 = vunpack.c.l.b16 %v752
        %v2321 = vunpack.c.l.b16 %v753
        %v2322 = vunpack.c.l.b16 %v754
        %v2323 = vunpack.c.l.b16 %v755
        %v2324 = vunpack.c.l.b16 %v756
        %v2325 = vunpack.c.l.b16 %v757
        %v2326 = vunpack.c.l.b16 %v758
        %v2327 = vunpack.c.l.b16 %v759
        %v2328 = vunpack.c.l.b16 %v760
        %v2329 = vunpack.c.l.b16 %v761
        %v2330 = vunpack.c.l.b16 %v762
        %v2331 = vunpack.c.l.b16 %v763
        %v2332 = vunpack.c.l.b16 %v764
        %v2333 = vunpack.c.l.b16 %v765
        %v2334 = vunpack.c.l.b16 %v766
        %v2335 = vunpack.c.l.b16 %v767
        %v2336 = vunpack.c.l.b16 %v768
        %v2337 = vunpack.c.l.b16 %v769
        %v2338 = vunpack.c.l.b16 %v770
        %v2339 = vunpack.c.l.b16 %v771
        %v2340 = vunpack.c.l.b16 %v772
        %v2341 = vunpack.c.l.b16 %v773
        %v2342 = vunpack.c.l.b16 %v774
        %v2343 = vunpack.c.l.b16 %v775
        %v2344 = vunpack.c.l.b16 %v776
        %v2345 = vunpack.c.l.b16 %v777
        %v2346 = vunpack.c.l.b16 %v778
        %v2347 = vunpack.c.l.b16 %v779
        %v2348 = vunpack.c.l.b16 %v780
        %v2349 = vunpack.c.l.b16 %v781
        %v2350 = vunpack.c.l.b16 %v782
        %v2351 = vunpack.c.l.b16 %v783
        %v2352 = vunpack.c.l.b16 %v784
        %v2353 = vunpack.c.l.b16 %v785
        %v2354 = vunpack.c.l.b16 %v786
        %v2355 = vunpack.c.l.b16 %v787
        %v2356 = vunpack.c.l.b16 %v788
        %v2357 = vunpack.c.l.b16 %v789
        %v2358 = vunpack.c.l.b16 %v790
        %v2359 = vunpack.c.l.b16 %v791
        %v2360 = vunpack.c.l.b16 %v792
        %v2361 = vunpack.c.l.b16 %v793
        %v2362 = vunpack.c.l.b16 %v794
        %v2363 = vunpack.c.l.b16 %v795
        %v2364 = vunpack.c.l.b16 %v796
        %v2365 = vunpack.c.l.b16 %v797
        %v2366 = vunpack.c.l.b16 %v798
        %v2367 = vunpack.c.l.b16 %v799
        %v2368 = vunpack.c.l.b16 %v800
        %v2369 = vunpack.c.l.b16 %v801
        %v2370 = vunpack.c.l.b16 %v802
        %v2371 = vunpack.c.l.b16 %v803
        %v2372 = vunpack.c.l.b16 %v804
        %v2373 = vunpack.c.l.b16 %v805
        %v2374 = vunpack.c.l.b16 %v806
        %v2375 = vunpack.c.l.b16 %v807
        %v2376 = vunpack.c.l.b16 %v808
        %v2377 = vunpack.c.l.b16 %v809
        %v2378 = vunpack.c.l.b16 %v810
        %v2379 = vunpack.c.l.b16 %v811
        %v2380 = vunpack.c.l.b16 %v812
        %v2381 = vunpack.c.l.b16 %v813
        %v2382 = vunpack.c.l.b16 %v814
        %v2383 = vunpack.c.l.b16 %v815
        %v2384 = vunpack.c.l.b16 %v816
        %v2385 = vunpack.c.l.b16 %v817
        %v2386 = vunpack.c.l.b16 %v818
        %v2387 = vunpack.c.l.b16 %v819
        %v2388 = vunpack.c.l.b16 %v820
        %v2389 = vunpack.c.l.b16 %v821
        %v2390 = vunpack.c.l.b16 %v822
        %v2391 = vunpack.c.l.b16 %v823
        %v2392 = vunpack.c.l.b16 %v824
        %v2393 = vunpack.c.l.b16 %v825
        %v2394 = vunpack.c.l.b16 %v826
        %v2395 = vunpack.c.l.b16 %v827
        %v2396 = vunpack.c.l.b16 %v828
        %v2397 = vunpack.c.l.b16 %v829
        %v2398 = vunpack.c.l.b16 %v830
        %v2399 = vunpack.c.l.b16 %v831
        %v2400 = vunpack.c.l.b16 %v832
        %v2401 = vunpack.c.l.b16 %v833
        %v2402 = vunpack.c.l.b16 %v834
        %v2403 = vunpack.c.l.b16 %v835
        %v2404 = vunpack.c.l.b16 %v836
        %v2405 = vpack.c.b16 %v2182, %v2181
        %v2406 = vpack.c.b16 %v2184, %v2183
        %v2407 = vpack.c.b16 %v2186, %v2185
        %v2408 = vpack.c.b16 %v2188, %v2187
        %v2409 = vpack.c.b16 %v2190, %v2189
        %v2410 = vpack.c.b16 %v2192, %v2191
        %v2411 = vpack.c.b16 %v2194, %v2193
        %v2412 = vpack.c.b16 %v2196, %v2195
        %v2413 = vpack.c.b16 %v2198, %v2197
        %v2414 = vpack.c.b16 %v2200, %v2199
        %v2415 = vpack.c.b16 %v2202, %v2201
        %v2416 = vpack.c.b16 %v2204, %v2203
        %v2417 = vpack.c.b16 %v2206, %v2205
        %v2418 = vpack.c.b16 %v2208, %v2207
        %v2419 = vpack.c.b16 %v2210, %v2209
        %v2420 = vpack.c.b16 %v2212, %v2211
        %v2421 = vpack.c.b16 %v2214, %v2213
        %v2422 = vpack.c.b16 %v2216, %v2215
        %v2423 = vpack.c.b16 %v2218, %v2217
        %v2424 = vpack.c.b16 %v2220, %v2219
        %v2425 = vpack.c.b16 %v2222, %v2221
        %v2426 = vpack.c.b16 %v2224, %v2223
        %v2427 = vpack.c.b16 %v2226, %v2225
        %v2428 = vpack.c.b16 %v2228, %v2227
        %v2429 = vpack.c.b16 %v2230, %v2229
        %v2430 = vpack.c.b16 %v2232, %v2231
        %v2431 = vpack.c.b16 %v2234, %v2233
        %v2432 = vpack.c.b16 %v2236, %v2235
        %v2433 = vpack.c.b16 %v2238, %v2237
        %v2434 = vpack.c.b16 %v2240, %v2239
        %v2435 = vpack.c.b16 %v2242, %v2241
        %v2436 = vpack.c.b16 %v2244, %v2243
        %v2437 = vpack.c.b16 %v2246, %v2245
        %v2438 = vpack.c.b16 %v2248, %v2247
        %v2439 = vpack.c.b16 %v2250, %v2249
        %v2440 = vpack.c.b16 %v2252, %v2251
        %v2441 = vpack.c.b16 %v2254, %v2253
        %v2442 = vpack.c.b16 %v2256, %v2255
        %v2443 = vpack.c.b16 %v2258, %v2257
        %v2444 = vpack.c.b16 %v2260, %v2259
        %v2445 = vpack.c.b16 %v2262, %v2261
        %v2446 = vpack.c.b16 %v2264, %v2263
        %v2447 = vpack.c.b16 %v2266, %v2265
        %v2448 = vpack.c.b16 %v2268, %v2267
        %v2449 = vpack.c.b16 %v2270, %v2269
        %v2450 = vpack.c.b16 %v2272, %v2271
        %v2451 = vpack.c.b16 %v2274, %v2273
        %v2452 = vpack.c.b16 %v2276, %v2275
        %v2453 = vpack.c.b16 %v2278, %v2277
        %v2454 = vpack.c.b16 %v2280, %v2279
        %v2455 = vpack.c.b16 %v2282, %v2281
        %v2456 = vpack.c.b16 %v2284, %v2283
        %v2457 = vpack.c.b16 %v2286, %v2285
        %v2458 = vpack.c.b16 %v2288, %v2287
        %v2459 = vpack.c.b16 %v2290, %v2289
        %v2460 = vpack.c.b16 %v2292, %v2291
        %v2461 = vpack.c.b16 %v2294, %v2293
        %v2462 = vpack.c.b16 %v2296, %v2295
        %v2463 = vpack.c.b16 %v2298, %v2297
        %v2464 = vpack.c.b16 %v2300, %v2299
        %v2465 = vpack.c.b16 %v2302, %v2301
        %v2466 = vpack.c.b16 %v2304, %v2303
        %v2467 = vpack.c.b16 %v2306, %v2305
        %v2468 = vpack.c.b16 %v2308, %v2307
        %v2469 = vpack.c.b16 %v2310, %v2309
        %v2470 = vpack.c.b16 %v2312, %v2311
        %v2471 = vpack.c.b16 %v2314, %v2313
        %v2472 = vpack.c.b16 %v2316, %v2315
        %v2473 = vpack.c.b16 %v2318, %v2317
        %v2474 = vpack.c.b16 %v2320, %v2319
        %v2475 = vpack.c.b16 %v2322, %v2321
        %v2476 = vpack.c.b16 %v2324, %v2323
        %v2477 = vpack.c.b16 %v2326, %v2325
        %v2478 = vpack.c.b16 %v2328, %v2327
        %v2479 = vpack.c.b16 %v2330, %v2329
        %v2480 = vpack.c.b16 %v2332, %v2331
        %v2481 = vpack.c.b16 %v2334, %v2333
        %v2482 = vpack.c.b16 %v2336, %v2335
        %v2483 = vpack.c.b16 %v2338, %v2337
        %v2484 = vpack.c.b16 %v2340, %v2339
        %v2485 = vpack.c.b16 %v2342, %v2341
        %v2486 = vpack.c.b16 %v2344, %v2343
        %v2487 = vpack.c.b16 %v2346, %v2345
        %v2488 = vpack.c.b16 %v2348, %v2347
        %v2489 = vpack.c.b16 %v2350, %v2349
        %v2490 = vpack.c.b16 %v2352, %v2351
        %v2491 = vpack.c.b16 %v2354, %v2353
        %v2492 = vpack.c.b16 %v2356, %v2355
        %v2493 = vpack.c.b16 %v2358, %v2357
        %v2494 = vpack.c.b16 %v2360, %v2359
        %v2495 = vpack.c.b16 %v2362, %v2361
        %v2496 = vpack.c.b16 %v2364, %v2363
        %v2497 = vpack.c.b16 %v2366, %v2365
        %v2498 = vpack.c.b16 %v2368, %v2367
        %v2499 = vpack.c.b16 %v2370, %v2369
        %v2500 = vpack.c.b16 %v2372, %v2371
        %v2501 = vpack.c.b16 %v2374, %v2373
        %v2502 = vpack.c.b16 %v2376, %v2375
        %v2503 = vpack.c.b16 %v2378, %v2377
        %v2504 = vpack.c.b16 %v2380, %v2379
        %v2505 = vpack.c.b16 %v2382, %v2381
        %v2506 = vpack.c.b16 %v2384, %v2383
        %v2507 = vpack.c.b16 %v2386, %v2385
        %v2508 = vpack.c.b16 %v2388, %v2387
        %v2509 = vpack.c.b16 %v2390, %v2389
        %v2510 = vpack.c.b16 %v2392, %v2391
        %v2511 = vpack.c.b16 %v2394, %v2393
        %v2512 = vpack.c.b16 %v2396, %v2395
        %v2513 = vpack.c.b16 %v2398, %v2397
        %v2514 = vpack.c.b16 %v2400, %v2399
        %v2515 = vpack.c.b16 %v2402, %v2401
        %v2516 = vpack.c.b16 %v2404, %v2403
        %2629 = vmatprep.subr.bf16.mxu0 0
        %2630 = vmatpush1.bf16.msra.mxu0 %v2405
        %2631 = vmatprep.subr.bf16.mxu0 0
        %2632 = vmatpush1.bf16.msra.mxu0 %v2406
        %2633 = vmatprep.subr.bf16.mxu0 0
        %2634 = vmatpush1.bf16.msra.mxu0 %v2407
        %2635 = vmatprep.subr.bf16.mxu0 0
        %2636 = vmatpush1.bf16.msra.mxu0 %v2408
        %2637 = vmatprep.subr.bf16.mxu0 0
        %2638 = vmatpush1.bf16.msra.mxu0 %v2409
        %2639 = vmatprep.subr.bf16.mxu0 0
        %2640 = vmatpush1.bf16.msra.mxu0 %v2410
        %2641 = vmatprep.subr.bf16.mxu0 0
        %2642 = vmatpush1.bf16.msra.mxu0 %v2411
        %2643 = vmatprep.subr.bf16.mxu0 0
        %2644 = vmatpush1.bf16.msra.mxu0 %v2412
        %2645 = vmatprep.subr.bf16.mxu0 0
        %2646 = vmatpush1.bf16.msra.mxu0 %v2413
        %2647 = vmatprep.subr.bf16.mxu0 0
        %2648 = vmatpush1.bf16.msra.mxu0 %v2414
        %2649 = vmatprep.subr.bf16.mxu0 0
        %2650 = vmatpush1.bf16.msra.mxu0 %v2415
        %2651 = vmatprep.subr.bf16.mxu0 0
        %2652 = vmatpush1.bf16.msra.mxu0 %v2416
        %2653 = vmatprep.subr.bf16.mxu0 0
        %2654 = vmatpush1.bf16.msra.mxu0 %v2417
        %2655 = vmatprep.subr.bf16.mxu0 0
        %2656 = vmatpush1.bf16.msra.mxu0 %v2418
        %2657 = vmatprep.subr.bf16.mxu0 0
        %2658 = vmatpush1.bf16.msra.mxu0 %v2419
        %2659 = vmatprep.subr.bf16.mxu0 0
        %2660 = vmatpush1.bf16.msra.mxu0 %v2420
        %2661 = vmatprep.mubr.bf16.mxu0 %v1510
        %2662 = vmatmul.mubr.bf16.gmra.mrb[0].mxu0 %v1509
        %v2663 = vpop.f32.mrb[0].mxu0
        %v2664 = vadd.f32 0.0, %v2663
        %v2665 = vpop.f32.mrb[0].mxu0
        %v2666 = vpop.f32.mrb[0].mxu0
        %v2667 = vadd.f32 0.0, %v2666
        %v2668 = vpop.f32.mrb[0].mxu0
        %2669 = vmatprep.mubr.bf16.mxu0 %v1524
        %2670 = vmatmul.mubr.bf16.gmra.mrb[0].mxu0 %v1523
        %v2671 = vpop.f32.mrb[0].mxu0
        %v2672 = vadd.f32 0.0, %v2671
        %v2673 = vpop.f32.mrb[0].mxu0
        %v2674 = vpop.f32.mrb[0].mxu0
        %v2675 = vadd.f32 0.0, %v2674
        %v2676 = vpop.f32.mrb[0].mxu0
        %2677 = vmatprep.mubr.bf16.mxu0 %v1538
        %2678 = vmatmul.mubr.bf16.gmra.mrb[0].mxu0 %v1537
        %v2679 = vpop.f32.mrb[0].mxu0
        %v2680 = vadd.f32 0.0, %v2679
        %v2681 = vpop.f32.mrb[0].mxu0
        %v2682 = vpop.f32.mrb[0].mxu0
        %v2683 = vadd.f32 0.0, %v2682
        %v2684 = vpop.f32.mrb[0].mxu0
        %2685 = vmatprep.mubr.bf16.mxu0 %v1552
        %2686 = vmatmul.mubr.bf16.gmra.mrb[0].mxu0 %v1551
        %v2687 = vpop.f32.mrb[0].mxu0
        %v2688 = vadd.f32 0.0, %v2687
        %v2689 = vpop.f32.mrb[0].mxu0
        %v2690 = vpop.f32.mrb[0].mxu0
        %v2691 = vadd.f32 0.0, %v2690
        %v2692 = vpop.f32.mrb[0].mxu0
        %2693 = vmatprep.mubr.bf16.mxu0 %v1566
        %2694 = vmatmul.mubr.bf16.gmra.mrb[0].mxu0 %v1565
        %v2695 = vpop.f32.mrb[0].mxu0
        %v2696 = vadd.f32 0.0, %v2695
        %v2697 = vpop.f32.mrb[0].mxu0
        %v2698 = vpop.f32.mrb[0].mxu0
        %v2699 = vadd.f32 0.0, %v2698
        %v2700 = vpop.f32.mrb[0].mxu0
        %2701 = vmatprep.mubr.bf16.mxu0 %v1580
        %2702 = vmatmul.mubr.bf16.gmra.mrb[0].mxu0 %v1579
        %v2703 = vpop.f32.mrb[0].mxu0
        %v2704 = vadd.f32 0.0, %v2703
        %v2705 = vpop.f32.mrb[0].mxu0
        %v2706 = vpop.f32.mrb[0].mxu0
        %v2707 = vadd.f32 0.0, %v2706
        %v2708 = vpop.f32.mrb[0].mxu0
        %2709 = vmatprep.mubr.bf16.mxu0 %v1594
        %2710 = vmatmul.mubr.bf16.gmra.mrb[0].mxu0 %v1593
        %v2711 = vpop.f32.mrb[0].mxu0
        %v2712 = vadd.f32 0.0, %v2711
        %v2713 = vpop.f32.mrb[0].mxu0
        %v2714 = vpop.f32.mrb[0].mxu0
        %v2715 = vadd.f32 0.0, %v2714
        %v2716 = vpop.f32.mrb[0].mxu0
        %2717 = vmatprep.mubr.bf16.mxu0 %v1608
        %2718 = vmatmul.mubr.bf16.gmra.mrb[0].mxu0 %v1607
        %v2719 = vpop.f32.mrb[0].mxu0
        %v2720 = vadd.f32 0.0, %v2719
        %v2721 = vpop.f32.mrb[0].mxu0
        %v2722 = vpop.f32.mrb[0].mxu0
        %v2723 = vadd.f32 0.0, %v2722
        %v2724 = vpop.f32.mrb[0].mxu0
        %2725 = vmatprep.mubr.bf16.mxu0 %v1622
        %2726 = vmatmul.mubr.bf16.gmra.mrb[0].mxu0 %v1621
        %v2727 = vpop.f32.mrb[0].mxu0
        %v2728 = vadd.f32 0.0, %v2727
        %v2729 = vpop.f32.mrb[0].mxu0
        %v2730 = vpop.f32.mrb[0].mxu0
        %v2731 = vadd.f32 0.0, %v2730
        %v2732 = vpop.f32.mrb[0].mxu0
        %2733 = vmatprep.mubr.bf16.mxu0 %v1636
        %2734 = vmatmul.mubr.bf16.gmra.mrb[0].mxu0 %v1635
        %v2735 = vpop.f32.mrb[0].mxu0
        %v2736 = vadd.f32 0.0, %v2735
        %v2737 = vpop.f32.mrb[0].mxu0
        %v2738 = vpop.f32.mrb[0].mxu0
        %v2739 = vadd.f32 0.0, %v2738
        %v2740 = vpop.f32.mrb[0].mxu0
        %2741 = vmatprep.mubr.bf16.mxu0 %v1650
        %2742 = vmatmul.mubr.bf16.gmra.mrb[0].mxu0 %v1649
        %v2743 = vpop.f32.mrb[0].mxu0
        %v2744 = vadd.f32 0.0, %v2743
        %v2745 = vpop.f32.mrb[0].mxu0
        %v2746 = vpop.f32.mrb[0].mxu0
        %v2747 = vadd.f32 0.0, %v2746
        %v2748 = vpop.f32.mrb[0].mxu0
        %2749 = vmatprep.mubr.bf16.mxu0 %v1664
        %2750 = vmatmul.mubr.bf16.gmra.mrb[0].mxu0 %v1663
        %v2751 = vpop.f32.mrb[0].mxu0
        %v2752 = vadd.f32 0.0, %v2751
        %v2753 = vpop.f32.mrb[0].mxu0
        %v2754 = vpop.f32.mrb[0].mxu0
        %v2755 = vadd.f32 0.0, %v2754
        %v2756 = vpop.f32.mrb[0].mxu0
        %2757 = vmatprep.mubr.bf16.mxu0 %v1678
        %2758 = vmatmul.mubr.bf16.gmra.mrb[0].mxu0 %v1677
        %v2759 = vpop.f32.mrb[0].mxu0
        %v2760 = vadd.f32 0.0, %v2759
        %v2761 = vpop.f32.mrb[0].mxu0
        %v2762 = vpop.f32.mrb[0].mxu0
        %v2763 = vadd.f32 0.0, %v2762
        %v2764 = vpop.f32.mrb[0].mxu0
        %2765 = vmatprep.mubr.bf16.mxu0 %v1692
        %2766 = vmatmul.mubr.bf16.gmra.mrb[0].mxu0 %v1691
        %v2767 = vpop.f32.mrb[0].mxu0
        %v2768 = vadd.f32 0.0, %v2767
        %v2769 = vpop.f32.mrb[0].mxu0
        %v2770 = vpop.f32.mrb[0].mxu0
        %v2771 = vadd.f32 0.0, %v2770
        %v2772 = vpop.f32.mrb[0].mxu0
        %2773 = vmatprep.mubr.bf16.mxu0 %v1706
        %2774 = vmatmul.mubr.bf16.gmra.mrb[0].mxu0 %v1705
        %v2775 = vpop.f32.mrb[0].mxu0
        %v2776 = vadd.f32 0.0, %v2775
        %v2777 = vpop.f32.mrb[0].mxu0
        %v2778 = vpop.f32.mrb[0].mxu0
        %v2779 = vadd.f32 0.0, %v2778
        %v2780 = vpop.f32.mrb[0].mxu0
        %2781 = vmatprep.mubr.bf16.mxu0 %v1720
        %2782 = vmatmul.mubr.bf16.gmra.mrb[0].mxu0 %v1719
        %v2783 = vpop.f32.mrb[0].mxu0
        %v2784 = vadd.f32 0.0, %v2783
        %v2785 = vpop.f32.mrb[0].mxu0
        %v2786 = vpop.f32.mrb[0].mxu0
        %v2787 = vadd.f32 0.0, %v2786
        %v2788 = vpop.f32.mrb[0].mxu0
        %2789 = vdwg.mxu0
        %2790 = vmatprep.subr.bf16.mxu0 0
        %2791 = vmatpush1.bf16.msra.mxu0 %v2421
        %2792 = vmatprep.subr.bf16.mxu0 0
        %2793 = vmatpush1.bf16.msra.mxu0 %v2422
        %2794 = vmatprep.subr.bf16.mxu0 0
        %2795 = vmatpush1.bf16.msra.mxu0 %v2423
        %2796 = vmatprep.subr.bf16.mxu0 0
        %2797 = vmatpush1.bf16.msra.mxu0 %v2424
        %2798 = vmatprep.subr.bf16.mxu0 0
        %2799 = vmatpush1.bf16.msra.mxu0 %v2425
        %2800 = vmatprep.subr.bf16.mxu0 0
        %2801 = vmatpush1.bf16.msra.mxu0 %v2426
        %2802 = vmatprep.subr.bf16.mxu0 0
        %2803 = vmatpush1.bf16.msra.mxu0 %v2427
        %2804 = vmatprep.subr.bf16.mxu0 0
        %2805 = vmatpush1.bf16.msra.mxu0 %v2428
        %2806 = vmatprep.subr.bf16.mxu0 0
        %2807 = vmatpush1.bf16.msra.mxu0 %v2429
        %2808 = vmatprep.subr.bf16.mxu0 0
        %2809 = vmatpush1.bf16.msra.mxu0 %v2430
        %2810 = vmatprep.subr.bf16.mxu0 0
        %2811 = vmatpush1.bf16.msra.mxu0 %v2431
        %2812 = vmatprep.subr.bf16.mxu0 0
        %2813 = vmatpush1.bf16.msra.mxu0 %v2432
        %2814 = vmatprep.subr.bf16.mxu0 0
        %2815 = vmatpush1.bf16.msra.mxu0 %v2433
        %2816 = vmatprep.subr.bf16.mxu0 0
        %2817 = vmatpush1.bf16.msra.mxu0 %v2434
        %2818 = vmatprep.subr.bf16.mxu0 0
        %2819 = vmatpush1.bf16.msra.mxu0 %v2435
        %2820 = vmatprep.subr.bf16.mxu0 0
        %2821 = vmatpush1.bf16.msra.mxu0 %v2436
        %2822 = vmatprep.mubr.bf16.mxu0 %v1512
        %2823 = vmatmul.mubr.bf16.gmra.mrb[0].mxu0 %v1511
        %v2824 = vpop.f32.mrb[0].mxu0
        %v2825 = vadd.f32 %v2664, %v2824
        %v2826 = vpop.f32.mrb[0].mxu0
        %v2827 = vpop.f32.mrb[0].mxu0
        %v2828 = vadd.f32 %v2667, %v2827
        %v2829 = vpop.f32.mrb[0].mxu0
        %2830 = vmatprep.mubr.bf16.mxu0 %v1526
        %2831 = vmatmul.mubr.bf16.gmra.mrb[0].mxu0 %v1525
        %v2832 = vpop.f32.mrb[0].mxu0
        %v2833 = vadd.f32 %v2672, %v2832
        %v2834 = vpop.f32.mrb[0].mxu0
        %v2835 = vpop.f32.mrb[0].mxu0
        %v2836 = vadd.f32 %v2675, %v2835
        %v2837 = vpop.f32.mrb[0].mxu0
        %2838 = vmatprep.mubr.bf16.mxu0 %v1540
        %2839 = vmatmul.mubr.bf16.gmra.mrb[0].mxu0 %v1539
        %v2840 = vpop.f32.mrb[0].mxu0
        %v2841 = vadd.f32 %v2680, %v2840
        %v2842 = vpop.f32.mrb[0].mxu0
        %v2843 = vpop.f32.mrb[0].mxu0
        %v2844 = vadd.f32 %v2683, %v2843
        %v2845 = vpop.f32.mrb[0].mxu0
        %2846 = vmatprep.mubr.bf16.mxu0 %v1554
        %2847 = vmatmul.mubr.bf16.gmra.mrb[0].mxu0 %v1553
        %v2848 = vpop.f32.mrb[0].mxu0
        %v2849 = vadd.f32 %v2688, %v2848
        %v2850 = vpop.f32.mrb[0].mxu0
        %v2851 = vpop.f32.mrb[0].mxu0
        %v2852 = vadd.f32 %v2691, %v2851
        %v2853 = vpop.f32.mrb[0].mxu0
        %2854 = vmatprep.mubr.bf16.mxu0 %v1568
        %2855 = vmatmul.mubr.bf16.gmra.mrb[0].mxu0 %v1567
        %v2856 = vpop.f32.mrb[0].mxu0
        %v2857 = vadd.f32 %v2696, %v2856
        %v2858 = vpop.f32.mrb[0].mxu0
        %v2859 = vpop.f32.mrb[0].mxu0
        %v2860 = vadd.f32 %v2699, %v2859
        %v2861 = vpop.f32.mrb[0].mxu0
        %2862 = vmatprep.mubr.bf16.mxu0 %v1582
        %2863 = vmatmul.mubr.bf16.gmra.mrb[0].mxu0 %v1581
        %v2864 = vpop.f32.mrb[0].mxu0
        %v2865 = vadd.f32 %v2704, %v2864
        %v2866 = vpop.f32.mrb[0].mxu0
        %v2867 = vpop.f32.mrb[0].mxu0
        %v2868 = vadd.f32 %v2707, %v2867
        %v2869 = vpop.f32.mrb[0].mxu0
        %2870 = vmatprep.mubr.bf16.mxu0 %v1596
        %2871 = vmatmul.mubr.bf16.gmra.mrb[0].mxu0 %v1595
        %v2872 = vpop.f32.mrb[0].mxu0
        %v2873 = vadd.f32 %v2712, %v2872
        %v2874 = vpop.f32.mrb[0].mxu0
        %v2875 = vpop.f32.mrb[0].mxu0
        %v2876 = vadd.f32 %v2715, %v2875
        %v2877 = vpop.f32.mrb[0].mxu0
        %2878 = vmatprep.mubr.bf16.mxu0 %v1610
        %2879 = vmatmul.mubr.bf16.gmra.mrb[0].mxu0 %v1609
        %v2880 = vpop.f32.mrb[0].mxu0
        %v2881 = vadd.f32 %v2720, %v2880
        %v2882 = vpop.f32.mrb[0].mxu0
        %v2883 = vpop.f32.mrb[0].mxu0
        %v2884 = vadd.f32 %v2723, %v2883
        %v2885 = vpop.f32.mrb[0].mxu0
        %2886 = vmatprep.mubr.bf16.mxu0 %v1624
        %2887 = vmatmul.mubr.bf16.gmra.mrb[0].mxu0 %v1623
        %v2888 = vpop.f32.mrb[0].mxu0
        %v2889 = vadd.f32 %v2728, %v2888
        %v2890 = vpop.f32.mrb[0].mxu0
        %v2891 = vpop.f32.mrb[0].mxu0
        %v2892 = vadd.f32 %v2731, %v2891
        %v2893 = vpop.f32.mrb[0].mxu0
        %2894 = vmatprep.mubr.bf16.mxu0 %v1638
        %2895 = vmatmul.mubr.bf16.gmra.mrb[0].mxu0 %v1637
        %v2896 = vpop.f32.mrb[0].mxu0
        %v2897 = vadd.f32 %v2736, %v2896
        %v2898 = vpop.f32.mrb[0].mxu0
        %v2899 = vpop.f32.mrb[0].mxu0
        %v2900 = vadd.f32 %v2739, %v2899
        %v2901 = vpop.f32.mrb[0].mxu0
        %2902 = vmatprep.mubr.bf16.mxu0 %v1652
        %2903 = vmatmul.mubr.bf16.gmra.mrb[0].mxu0 %v1651
        %v2904 = vpop.f32.mrb[0].mxu0
        %v2905 = vadd.f32 %v2744, %v2904
        %v2906 = vpop.f32.mrb[0].mxu0
        %v2907 = vpop.f32.mrb[0].mxu0
        %v2908 = vadd.f32 %v2747, %v2907
        %v2909 = vpop.f32.mrb[0].mxu0
        %2910 = vmatprep.mubr.bf16.mxu0 %v1666
        %2911 = vmatmul.mubr.bf16.gmra.mrb[0].mxu0 %v1665
        %v2912 = vpop.f32.mrb[0].mxu0
        %v2913 = vadd.f32 %v2752, %v2912
        %v2914 = vpop.f32.mrb[0].mxu0
        %v2915 = vpop.f32.mrb[0].mxu0
        %v2916 = vadd.f32 %v2755, %v2915
        %v2917 = vpop.f32.mrb[0].mxu0
        %2918 = vmatprep.mubr.bf16.mxu0 %v1680
        %2919 = vmatmul.mubr.bf16.gmra.mrb[0].mxu0 %v1679
        %v2920 = vpop.f32.mrb[0].mxu0
        %v2921 = vadd.f32 %v2760, %v2920
        %v2922 = vpop.f32.mrb[0].mxu0
        %v2923 = vpop.f32.mrb[0].mxu0
        %v2924 = vadd.f32 %v2763, %v2923
        %v2925 = vpop.f32.mrb[0].mxu0
        %2926 = vmatprep.mubr.bf16.mxu0 %v1694
        %2927 = vmatmul.mubr.bf16.gmra.mrb[0].mxu0 %v1693
        %v2928 = vpop.f32.mrb[0].mxu0
        %v2929 = vadd.f32 %v2768, %v2928
        %v2930 = vpop.f32.mrb[0].mxu0
        %v2931 = vpop.f32.mrb[0].mxu0
        %v2932 = vadd.f32 %v2771, %v2931
        %v2933 = vpop.f32.mrb[0].mxu0
        %2934 = vmatprep.mubr.bf16.mxu0 %v1708
        %2935 = vmatmul.mubr.bf16.gmra.mrb[0].mxu0 %v1707
        %v2936 = vpop.f32.mrb[0].mxu0
        %v2937 = vadd.f32 %v2776, %v2936
        %v2938 = vpop.f32.mrb[0].mxu0
        %v2939 = vpop.f32.mrb[0].mxu0
        %v2940 = vadd.f32 %v2779, %v2939
        %v2941 = vpop.f32.mrb[0].mxu0
        %2942 = vmatprep.mubr.bf16.mxu0 %v1722
        %2943 = vmatmul.mubr.bf16.gmra.mrb[0].mxu0 %v1721
        %v2944 = vpop.f32.mrb[0].mxu0
        %v2945 = vadd.f32 %v2784, %v2944
        %v2946 = vpop.f32.mrb[0].mxu0
        %v2947 = vpop.f32.mrb[0].mxu0
        %v2948 = vadd.f32 %v2787, %v2947
        %v2949 = vpop.f32.mrb[0].mxu0
        %2950 = vdwg.mxu0
        %2951 = vmatprep.subr.bf16.mxu0 0
        %2952 = vmatpush1.bf16.msra.mxu0 %v2437
        %2953 = vmatprep.subr.bf16.mxu0 0
        %2954 = vmatpush1.bf16.msra.mxu0 %v2438
        %2955 = vmatprep.subr.bf16.mxu0 0
        %2956 = vmatpush1.bf16.msra.mxu0 %v2439
        %2957 = vmatprep.subr.bf16.mxu0 0
        %2958 = vmatpush1.bf16.msra.mxu0 %v2440
        %2959 = vmatprep.subr.bf16.mxu0 0
        %2960 = vmatpush1.bf16.msra.mxu0 %v2441
        %2961 = vmatprep.subr.bf16.mxu0 0
        %2962 = vmatpush1.bf16.msra.mxu0 %v2442
        %2963 = vmatprep.subr.bf16.mxu0 0
        %2964 = vmatpush1.bf16.msra.mxu0 %v2443
        %2965 = vmatprep.subr.bf16.mxu0 0
        %2966 = vmatpush1.bf16.msra.mxu0 %v2444
        %2967 = vmatprep.subr.bf16.mxu0 0
        %2968 = vmatpush1.bf16.msra.mxu0 %v2445
        %2969 = vmatprep.subr.bf16.mxu0 0
        %2970 = vmatpush1.bf16.msra.mxu0 %v2446
        %2971 = vmatprep.subr.bf16.mxu0 0
        %2972 = vmatpush1.bf16.msra.mxu0 %v2447
        %2973 = vmatprep.subr.bf16.mxu0 0
        %2974 = vmatpush1.bf16.msra.mxu0 %v2448
        %2975 = vmatprep.subr.bf16.mxu0 0
        %2976 = vmatpush1.bf16.msra.mxu0 %v2449
        %2977 = vmatprep.subr.bf16.mxu0 0
        %2978 = vmatpush1.bf16.msra.mxu0 %v2450
        %2979 = vmatprep.subr.bf16.mxu0 0
        %2980 = vmatpush1.bf16.msra.mxu0 %v2451
        %2981 = vmatprep.subr.bf16.mxu0 0
        %2982 = vmatpush1.bf16.msra.mxu0 %v2452
        %2983 = vmatprep.mubr.bf16.mxu0 %v1514
        %2984 = vmatmul.mubr.bf16.gmra.mrb[0].mxu0 %v1513
        %v2985 = vpop.f32.mrb[0].mxu0
        %v2986 = vadd.f32 %v2825, %v2985
        %v2987 = vpop.f32.mrb[0].mxu0
        %v2988 = vpop.f32.mrb[0].mxu0
        %v2989 = vadd.f32 %v2828, %v2988
        %v2990 = vpop.f32.mrb[0].mxu0
        %2991 = vmatprep.mubr.bf16.mxu0 %v1528
        %2992 = vmatmul.mubr.bf16.gmra.mrb[0].mxu0 %v1527
        %v2993 = vpop.f32.mrb[0].mxu0
        %v2994 = vadd.f32 %v2833, %v2993
        %v2995 = vpop.f32.mrb[0].mxu0
        %v2996 = vpop.f32.mrb[0].mxu0
        %v2997 = vadd.f32 %v2836, %v2996
        %v2998 = vpop.f32.mrb[0].mxu0
        %2999 = vmatprep.mubr.bf16.mxu0 %v1542
        %3000 = vmatmul.mubr.bf16.gmra.mrb[0].mxu0 %v1541
        %v3001 = vpop.f32.mrb[0].mxu0
        %v3002 = vadd.f32 %v2841, %v3001
        %v3003 = vpop.f32.mrb[0].mxu0
        %v3004 = vpop.f32.mrb[0].mxu0
        %v3005 = vadd.f32 %v2844, %v3004
        %v3006 = vpop.f32.mrb[0].mxu0
        %3007 = vmatprep.mubr.bf16.mxu0 %v1556
        %3008 = vmatmul.mubr.bf16.gmra.mrb[0].mxu0 %v1555
        %v3009 = vpop.f32.mrb[0].mxu0
        %v3010 = vadd.f32 %v2849, %v3009
        %v3011 = vpop.f32.mrb[0].mxu0
        %v3012 = vpop.f32.mrb[0].mxu0
        %v3013 = vadd.f32 %v2852, %v3012
        %v3014 = vpop.f32.mrb[0].mxu0
        %3015 = vmatprep.mubr.bf16.mxu0 %v1570
        %3016 = vmatmul.mubr.bf16.gmra.mrb[0].mxu0 %v1569
        %v3017 = vpop.f32.mrb[0].mxu0
        %v3018 = vadd.f32 %v2857, %v3017
        %v3019 = vpop.f32.mrb[0].mxu0
        %v3020 = vpop.f32.mrb[0].mxu0
        %v3021 = vadd.f32 %v2860, %v3020
        %v3022 = vpop.f32.mrb[0].mxu0
        %3023 = vmatprep.mubr.bf16.mxu0 %v1584
        %3024 = vmatmul.mubr.bf16.gmra.mrb[0].mxu0 %v1583
        %v3025 = vpop.f32.mrb[0].mxu0
        %v3026 = vadd.f32 %v2865, %v3025
        %v3027 = vpop.f32.mrb[0].mxu0
        %v3028 = vpop.f32.mrb[0].mxu0
        %v3029 = vadd.f32 %v2868, %v3028
        %v3030 = vpop.f32.mrb[0].mxu0
        %3031 = vmatprep.mubr.bf16.mxu0 %v1598
        %3032 = vmatmul.mubr.bf16.gmra.mrb[0].mxu0 %v1597
        %v3033 = vpop.f32.mrb[0].mxu0
        %v3034 = vadd.f32 %v2873, %v3033
        %v3035 = vpop.f32.mrb[0].mxu0
        %v3036 = vpop.f32.mrb[0].mxu0
        %v3037 = vadd.f32 %v2876, %v3036
        %v3038 = vpop.f32.mrb[0].mxu0
        %3039 = vmatprep.mubr.bf16.mxu0 %v1612
        %3040 = vmatmul.mubr.bf16.gmra.mrb[0].mxu0 %v1611
        %v3041 = vpop.f32.mrb[0].mxu0
        %v3042 = vadd.f32 %v2881, %v3041
        %v3043 = vpop.f32.mrb[0].mxu0
        %v3044 = vpop.f32.mrb[0].mxu0
        %v3045 = vadd.f32 %v2884, %v3044
        %v3046 = vpop.f32.mrb[0].mxu0
        %3047 = vmatprep.mubr.bf16.mxu0 %v1626
        %3048 = vmatmul.mubr.bf16.gmra.mrb[0].mxu0 %v1625
        %v3049 = vpop.f32.mrb[0].mxu0
        %v3050 = vadd.f32 %v2889, %v3049
        %v3051 = vpop.f32.mrb[0].mxu0
        %v3052 = vpop.f32.mrb[0].mxu0
        %v3053 = vadd.f32 %v2892, %v3052
        %v3054 = vpop.f32.mrb[0].mxu0
        %3055 = vmatprep.mubr.bf16.mxu0 %v1640
        %3056 = vmatmul.mubr.bf16.gmra.mrb[0].mxu0 %v1639
        %v3057 = vpop.f32.mrb[0].mxu0
        %v3058 = vadd.f32 %v2897, %v3057
        %v3059 = vpop.f32.mrb[0].mxu0
        %v3060 = vpop.f32.mrb[0].mxu0
        %v3061 = vadd.f32 %v2900, %v3060
        %v3062 = vpop.f32.mrb[0].mxu0
        %3063 = vmatprep.mubr.bf16.mxu0 %v1654
        %3064 = vmatmul.mubr.bf16.gmra.mrb[0].mxu0 %v1653
        %v3065 = vpop.f32.mrb[0].mxu0
        %v3066 = vadd.f32 %v2905, %v3065
        %v3067 = vpop.f32.mrb[0].mxu0
        %v3068 = vpop.f32.mrb[0].mxu0
        %v3069 = vadd.f32 %v2908, %v3068
        %v3070 = vpop.f32.mrb[0].mxu0
        %3071 = vmatprep.mubr.bf16.mxu0 %v1668
        %3072 = vmatmul.mubr.bf16.gmra.mrb[0].mxu0 %v1667
        %v3073 = vpop.f32.mrb[0].mxu0
        %v3074 = vadd.f32 %v2913, %v3073
        %v3075 = vpop.f32.mrb[0].mxu0
        %v3076 = vpop.f32.mrb[0].mxu0
        %v3077 = vadd.f32 %v2916, %v3076
        %v3078 = vpop.f32.mrb[0].mxu0
        %3079 = vmatprep.mubr.bf16.mxu0 %v1682
        %3080 = vmatmul.mubr.bf16.gmra.mrb[0].mxu0 %v1681
        %v3081 = vpop.f32.mrb[0].mxu0
        %v3082 = vadd.f32 %v2921, %v3081
        %v3083 = vpop.f32.mrb[0].mxu0
        %v3084 = vpop.f32.mrb[0].mxu0
        %v3085 = vadd.f32 %v2924, %v3084
        %v3086 = vpop.f32.mrb[0].mxu0
        %3087 = vmatprep.mubr.bf16.mxu0 %v1696
        %3088 = vmatmul.mubr.bf16.gmra.mrb[0].mxu0 %v1695
        %v3089 = vpop.f32.mrb[0].mxu0
        %v3090 = vadd.f32 %v2929, %v3089
        %v3091 = vpop.f32.mrb[0].mxu0
        %v3092 = vpop.f32.mrb[0].mxu0
        %v3093 = vadd.f32 %v2932, %v3092
        %v3094 = vpop.f32.mrb[0].mxu0
        %3095 = vmatprep.mubr.bf16.mxu0 %v1710
        %3096 = vmatmul.mubr.bf16.gmra.mrb[0].mxu0 %v1709
        %v3097 = vpop.f32.mrb[0].mxu0
        %v3098 = vadd.f32 %v2937, %v3097
        %v3099 = vpop.f32.mrb[0].mxu0
        %v3100 = vpop.f32.mrb[0].mxu0
        %v3101 = vadd.f32 %v2940, %v3100
        %v3102 = vpop.f32.mrb[0].mxu0
        %3103 = vmatprep.mubr.bf16.mxu0 %v1724
        %3104 = vmatmul.mubr.bf16.gmra.mrb[0].mxu0 %v1723
        %v3105 = vpop.f32.mrb[0].mxu0
        %v3106 = vadd.f32 %v2945, %v3105
        %v3107 = vpop.f32.mrb[0].mxu0
        %v3108 = vpop.f32.mrb[0].mxu0
        %v3109 = vadd.f32 %v2948, %v3108
        %v3110 = vpop.f32.mrb[0].mxu0
        %3111 = vdwg.mxu0
        %3112 = vmatprep.subr.bf16.mxu0 0
        %3113 = vmatpush1.bf16.msra.mxu0 %v2453
        %3114 = vmatprep.subr.bf16.mxu0 0
        %3115 = vmatpush1.bf16.msra.mxu0 %v2454
        %3116 = vmatprep.subr.bf16.mxu0 0
        %3117 = vmatpush1.bf16.msra.mxu0 %v2455
        %3118 = vmatprep.subr.bf16.mxu0 0
        %3119 = vmatpush1.bf16.msra.mxu0 %v2456
        %3120 = vmatprep.subr.bf16.mxu0 0
        %3121 = vmatpush1.bf16.msra.mxu0 %v2457
        %3122 = vmatprep.subr.bf16.mxu0 0
        %3123 = vmatpush1.bf16.msra.mxu0 %v2458
        %3124 = vmatprep.subr.bf16.mxu0 0
        %3125 = vmatpush1.bf16.msra.mxu0 %v2459
        %3126 = vmatprep.subr.bf16.mxu0 0
        %3127 = vmatpush1.bf16.msra.mxu0 %v2460
        %3128 = vmatprep.subr.bf16.mxu0 0
        %3129 = vmatpush1.bf16.msra.mxu0 %v2461
        %3130 = vmatprep.subr.bf16.mxu0 0
        %3131 = vmatpush1.bf16.msra.mxu0 %v2462
        %3132 = vmatprep.subr.bf16.mxu0 0
        %3133 = vmatpush1.bf16.msra.mxu0 %v2463
        %3134 = vmatprep.subr.bf16.mxu0 0
        %3135 = vmatpush1.bf16.msra.mxu0 %v2464
        %3136 = vmatprep.subr.bf16.mxu0 0
        %3137 = vmatpush1.bf16.msra.mxu0 %v2465
        %3138 = vmatprep.subr.bf16.mxu0 0
        %3139 = vmatpush1.bf16.msra.mxu0 %v2466
        %3140 = vmatprep.subr.bf16.mxu0 0
        %3141 = vmatpush1.bf16.msra.mxu0 %v2467
        %3142 = vmatprep.subr.bf16.mxu0 0
        %3143 = vmatpush1.bf16.msra.mxu0 %v2468
        %3144 = vmatprep.mubr.bf16.mxu0 %v1516
        %3145 = vmatmul.mubr.bf16.gmra.mrb[0].mxu0 %v1515
        %v3146 = vpop.f32.mrb[0].mxu0
        %v3147 = vadd.f32 %v2986, %v3146
        %v3148 = vpop.f32.mrb[0].mxu0
        %v3149 = vpop.f32.mrb[0].mxu0
        %v3150 = vadd.f32 %v2989, %v3149
        %v3151 = vpop.f32.mrb[0].mxu0
        %3152 = vmatprep.mubr.bf16.mxu0 %v1530
        %3153 = vmatmul.mubr.bf16.gmra.mrb[0].mxu0 %v1529
        %v3154 = vpop.f32.mrb[0].mxu0
        %v3155 = vadd.f32 %v2994, %v3154
        %v3156 = vpop.f32.mrb[0].mxu0
        %v3157 = vpop.f32.mrb[0].mxu0
        %v3158 = vadd.f32 %v2997, %v3157
        %v3159 = vpop.f32.mrb[0].mxu0
        %3160 = vmatprep.mubr.bf16.mxu0 %v1544
        %3161 = vmatmul.mubr.bf16.gmra.mrb[0].mxu0 %v1543
        %v3162 = vpop.f32.mrb[0].mxu0
        %v3163 = vadd.f32 %v3002, %v3162
        %v3164 = vpop.f32.mrb[0].mxu0
        %v3165 = vpop.f32.mrb[0].mxu0
        %v3166 = vadd.f32 %v3005, %v3165
        %v3167 = vpop.f32.mrb[0].mxu0
        %3168 = vmatprep.mubr.bf16.mxu0 %v1558
        %3169 = vmatmul.mubr.bf16.gmra.mrb[0].mxu0 %v1557
        %v3170 = vpop.f32.mrb[0].mxu0
        %v3171 = vadd.f32 %v3010, %v3170
        %v3172 = vpop.f32.mrb[0].mxu0
        %v3173 = vpop.f32.mrb[0].mxu0
        %v3174 = vadd.f32 %v3013, %v3173
        %v3175 = vpop.f32.mrb[0].mxu0
        %3176 = vmatprep.mubr.bf16.mxu0 %v1572
        %3177 = vmatmul.mubr.bf16.gmra.mrb[0].mxu0 %v1571
        %v3178 = vpop.f32.mrb[0].mxu0
        %v3179 = vadd.f32 %v3018, %v3178
        %v3180 = vpop.f32.mrb[0].mxu0
        %v3181 = vpop.f32.mrb[0].mxu0
        %v3182 = vadd.f32 %v3021, %v3181
        %v3183 = vpop.f32.mrb[0].mxu0
        %3184 = vmatprep.mubr.bf16.mxu0 %v1586
        %3185 = vmatmul.mubr.bf16.gmra.mrb[0].mxu0 %v1585
        %v3186 = vpop.f32.mrb[0].mxu0
        %v3187 = vadd.f32 %v3026, %v3186
        %v3188 = vpop.f32.mrb[0].mxu0
        %v3189 = vpop.f32.mrb[0].mxu0
        %v3190 = vadd.f32 %v3029, %v3189
        %v3191 = vpop.f32.mrb[0].mxu0
        %3192 = vmatprep.mubr.bf16.mxu0 %v1600
        %3193 = vmatmul.mubr.bf16.gmra.mrb[0].mxu0 %v1599
        %v3194 = vpop.f32.mrb[0].mxu0
        %v3195 = vadd.f32 %v3034, %v3194
        %v3196 = vpop.f32.mrb[0].mxu0
        %v3197 = vpop.f32.mrb[0].mxu0
        %v3198 = vadd.f32 %v3037, %v3197
        %v3199 = vpop.f32.mrb[0].mxu0
        %3200 = vmatprep.mubr.bf16.mxu0 %v1614
        %3201 = vmatmul.mubr.bf16.gmra.mrb[0].mxu0 %v1613
        %v3202 = vpop.f32.mrb[0].mxu0
        %v3203 = vadd.f32 %v3042, %v3202
        %v3204 = vpop.f32.mrb[0].mxu0
        %v3205 = vpop.f32.mrb[0].mxu0
        %v3206 = vadd.f32 %v3045, %v3205
        %v3207 = vpop.f32.mrb[0].mxu0
        %3208 = vmatprep.mubr.bf16.mxu0 %v1628
        %3209 = vmatmul.mubr.bf16.gmra.mrb[0].mxu0 %v1627
        %v3210 = vpop.f32.mrb[0].mxu0
        %v3211 = vadd.f32 %v3050, %v3210
        %v3212 = vpop.f32.mrb[0].mxu0
        %v3213 = vpop.f32.mrb[0].mxu0
        %v3214 = vadd.f32 %v3053, %v3213
        %v3215 = vpop.f32.mrb[0].mxu0
        %3216 = vmatprep.mubr.bf16.mxu0 %v1642
        %3217 = vmatmul.mubr.bf16.gmra.mrb[0].mxu0 %v1641
        %v3218 = vpop.f32.mrb[0].mxu0
        %v3219 = vadd.f32 %v3058, %v3218
        %v3220 = vpop.f32.mrb[0].mxu0
        %v3221 = vpop.f32.mrb[0].mxu0
        %v3222 = vadd.f32 %v3061, %v3221
        %v3223 = vpop.f32.mrb[0].mxu0
        %3224 = vmatprep.mubr.bf16.mxu0 %v1656
        %3225 = vmatmul.mubr.bf16.gmra.mrb[0].mxu0 %v1655
        %v3226 = vpop.f32.mrb[0].mxu0
        %v3227 = vadd.f32 %v3066, %v3226
        %v3228 = vpop.f32.mrb[0].mxu0
        %v3229 = vpop.f32.mrb[0].mxu0
        %v3230 = vadd.f32 %v3069, %v3229
        %v3231 = vpop.f32.mrb[0].mxu0
        %3232 = vmatprep.mubr.bf16.mxu0 %v1670
        %3233 = vmatmul.mubr.bf16.gmra.mrb[0].mxu0 %v1669
        %v3234 = vpop.f32.mrb[0].mxu0
        %v3235 = vadd.f32 %v3074, %v3234
        %v3236 = vpop.f32.mrb[0].mxu0
        %v3237 = vpop.f32.mrb[0].mxu0
        %v3238 = vadd.f32 %v3077, %v3237
        %v3239 = vpop.f32.mrb[0].mxu0
        %3240 = vmatprep.mubr.bf16.mxu0 %v1684
        %3241 = vmatmul.mubr.bf16.gmra.mrb[0].mxu0 %v1683
        %v3242 = vpop.f32.mrb[0].mxu0
        %v3243 = vadd.f32 %v3082, %v3242
        %v3244 = vpop.f32.mrb[0].mxu0
        %v3245 = vpop.f32.mrb[0].mxu0
        %v3246 = vadd.f32 %v3085, %v3245
        %v3247 = vpop.f32.mrb[0].mxu0
        %3248 = vmatprep.mubr.bf16.mxu0 %v1698
        %3249 = vmatmul.mubr.bf16.gmra.mrb[0].mxu0 %v1697
        %v3250 = vpop.f32.mrb[0].mxu0
        %v3251 = vadd.f32 %v3090, %v3250
        %v3252 = vpop.f32.mrb[0].mxu0
        %v3253 = vpop.f32.mrb[0].mxu0
        %v3254 = vadd.f32 %v3093, %v3253
        %v3255 = vpop.f32.mrb[0].mxu0
        %3256 = vmatprep.mubr.bf16.mxu0 %v1712
        %3257 = vmatmul.mubr.bf16.gmra.mrb[0].mxu0 %v1711
        %v3258 = vpop.f32.mrb[0].mxu0
        %v3259 = vadd.f32 %v3098, %v3258
        %v3260 = vpop.f32.mrb[0].mxu0
        %v3261 = vpop.f32.mrb[0].mxu0
        %v3262 = vadd.f32 %v3101, %v3261
        %v3263 = vpop.f32.mrb[0].mxu0
        %3264 = vmatprep.mubr.bf16.mxu0 %v1726
        %3265 = vmatmul.mubr.bf16.gmra.mrb[0].mxu0 %v1725
        %v3266 = vpop.f32.mrb[0].mxu0
        %v3267 = vadd.f32 %v3106, %v3266
        %v3268 = vpop.f32.mrb[0].mxu0
        %v3269 = vpop.f32.mrb[0].mxu0
        %v3270 = vadd.f32 %v3109, %v3269
        %v3271 = vpop.f32.mrb[0].mxu0
        %3272 = vdwg.mxu0
        %3273 = vmatprep.subr.bf16.mxu0 0
        %3274 = vmatpush1.bf16.msra.mxu0 %v2469
        %3275 = vmatprep.subr.bf16.mxu0 0
        %3276 = vmatpush1.bf16.msra.mxu0 %v2470
        %3277 = vmatprep.subr.bf16.mxu0 0
        %3278 = vmatpush1.bf16.msra.mxu0 %v2471
        %3279 = vmatprep.subr.bf16.mxu0 0
        %3280 = vmatpush1.bf16.msra.mxu0 %v2472
        %3281 = vmatprep.subr.bf16.mxu0 0
        %3282 = vmatpush1.bf16.msra.mxu0 %v2473
        %3283 = vmatprep.subr.bf16.mxu0 0
        %3284 = vmatpush1.bf16.msra.mxu0 %v2474
        %3285 = vmatprep.subr.bf16.mxu0 0
        %3286 = vmatpush1.bf16.msra.mxu0 %v2475
        %3287 = vmatprep.subr.bf16.mxu0 0
        %3288 = vmatpush1.bf16.msra.mxu0 %v2476
        %3289 = vmatprep.subr.bf16.mxu0 0
        %3290 = vmatpush1.bf16.msra.mxu0 %v2477
        %3291 = vmatprep.subr.bf16.mxu0 0
        %3292 = vmatpush1.bf16.msra.mxu0 %v2478
        %3293 = vmatprep.subr.bf16.mxu0 0
        %3294 = vmatpush1.bf16.msra.mxu0 %v2479
        %3295 = vmatprep.subr.bf16.mxu0 0
        %3296 = vmatpush1.bf16.msra.mxu0 %v2480
        %3297 = vmatprep.subr.bf16.mxu0 0
        %3298 = vmatpush1.bf16.msra.mxu0 %v2481
        %3299 = vmatprep.subr.bf16.mxu0 0
        %3300 = vmatpush1.bf16.msra.mxu0 %v2482
        %3301 = vmatprep.subr.bf16.mxu0 0
        %3302 = vmatpush1.bf16.msra.mxu0 %v2483
        %3303 = vmatprep.subr.bf16.mxu0 0
        %3304 = vmatpush1.bf16.msra.mxu0 %v2484
        %3305 = vmatprep.mubr.bf16.mxu0 %v1518
        %3306 = vmatmul.mubr.bf16.gmra.mrb[0].mxu0 %v1517
        %v3307 = vpop.f32.mrb[0].mxu0
        %v3308 = vadd.f32 %v3147, %v3307
        %v3309 = vpop.f32.mrb[0].mxu0
        %v3310 = vpop.f32.mrb[0].mxu0
        %v3311 = vadd.f32 %v3150, %v3310
        %v3312 = vpop.f32.mrb[0].mxu0
        %3313 = vmatprep.mubr.bf16.mxu0 %v1532
        %3314 = vmatmul.mubr.bf16.gmra.mrb[0].mxu0 %v1531
        %v3315 = vpop.f32.mrb[0].mxu0
        %v3316 = vadd.f32 %v3155, %v3315
        %v3317 = vpop.f32.mrb[0].mxu0
        %v3318 = vpop.f32.mrb[0].mxu0
        %v3319 = vadd.f32 %v3158, %v3318
        %v3320 = vpop.f32.mrb[0].mxu0
        %3321 = vmatprep.mubr.bf16.mxu0 %v1546
        %3322 = vmatmul.mubr.bf16.gmra.mrb[0].mxu0 %v1545
        %v3323 = vpop.f32.mrb[0].mxu0
        %v3324 = vadd.f32 %v3163, %v3323
        %v3325 = vpop.f32.mrb[0].mxu0
        %v3326 = vpop.f32.mrb[0].mxu0
        %v3327 = vadd.f32 %v3166, %v3326
        %v3328 = vpop.f32.mrb[0].mxu0
        %3329 = vmatprep.mubr.bf16.mxu0 %v1560
        %3330 = vmatmul.mubr.bf16.gmra.mrb[0].mxu0 %v1559
        %v3331 = vpop.f32.mrb[0].mxu0
        %v3332 = vadd.f32 %v3171, %v3331
        %v3333 = vpop.f32.mrb[0].mxu0
        %v3334 = vpop.f32.mrb[0].mxu0
        %v3335 = vadd.f32 %v3174, %v3334
        %v3336 = vpop.f32.mrb[0].mxu0
        %3337 = vmatprep.mubr.bf16.mxu0 %v1574
        %3338 = vmatmul.mubr.bf16.gmra.mrb[0].mxu0 %v1573
        %v3339 = vpop.f32.mrb[0].mxu0
        %v3340 = vadd.f32 %v3179, %v3339
        %v3341 = vpop.f32.mrb[0].mxu0
        %v3342 = vpop.f32.mrb[0].mxu0
        %v3343 = vadd.f32 %v3182, %v3342
        %v3344 = vpop.f32.mrb[0].mxu0
        %3345 = vmatprep.mubr.bf16.mxu0 %v1588
        %3346 = vmatmul.mubr.bf16.gmra.mrb[0].mxu0 %v1587
        %v3347 = vpop.f32.mrb[0].mxu0
        %v3348 = vadd.f32 %v3187, %v3347
        %v3349 = vpop.f32.mrb[0].mxu0
        %v3350 = vpop.f32.mrb[0].mxu0
        %v3351 = vadd.f32 %v3190, %v3350
        %v3352 = vpop.f32.mrb[0].mxu0
        %3353 = vmatprep.mubr.bf16.mxu0 %v1602
        %3354 = vmatmul.mubr.bf16.gmra.mrb[0].mxu0 %v1601
        %v3355 = vpop.f32.mrb[0].mxu0
        %v3356 = vadd.f32 %v3195, %v3355
        %v3357 = vpop.f32.mrb[0].mxu0
        %v3358 = vpop.f32.mrb[0].mxu0
        %v3359 = vadd.f32 %v3198, %v3358
        %v3360 = vpop.f32.mrb[0].mxu0
        %3361 = vmatprep.mubr.bf16.mxu0 %v1616
        %3362 = vmatmul.mubr.bf16.gmra.mrb[0].mxu0 %v1615
        %v3363 = vpop.f32.mrb[0].mxu0
        %v3364 = vadd.f32 %v3203, %v3363
        %v3365 = vpop.f32.mrb[0].mxu0
        %v3366 = vpop.f32.mrb[0].mxu0
        %v3367 = vadd.f32 %v3206, %v3366
        %v3368 = vpop.f32.mrb[0].mxu0
        %3369 = vmatprep.mubr.bf16.mxu0 %v1630
        %3370 = vmatmul.mubr.bf16.gmra.mrb[0].mxu0 %v1629
        %v3371 = vpop.f32.mrb[0].mxu0
        %v3372 = vadd.f32 %v3211, %v3371
        %v3373 = vpop.f32.mrb[0].mxu0
        %v3374 = vpop.f32.mrb[0].mxu0
        %v3375 = vadd.f32 %v3214, %v3374
        %v3376 = vpop.f32.mrb[0].mxu0
        %3377 = vmatprep.mubr.bf16.mxu0 %v1644
        %3378 = vmatmul.mubr.bf16.gmra.mrb[0].mxu0 %v1643
        %v3379 = vpop.f32.mrb[0].mxu0
        %v3380 = vadd.f32 %v3219, %v3379
        %v3381 = vpop.f32.mrb[0].mxu0
        %v3382 = vpop.f32.mrb[0].mxu0
        %v3383 = vadd.f32 %v3222, %v3382
        %v3384 = vpop.f32.mrb[0].mxu0
        %3385 = vmatprep.mubr.bf16.mxu0 %v1658
        %3386 = vmatmul.mubr.bf16.gmra.mrb[0].mxu0 %v1657
        %v3387 = vpop.f32.mrb[0].mxu0
        %v3388 = vadd.f32 %v3227, %v3387
        %v3389 = vpop.f32.mrb[0].mxu0
        %v3390 = vpop.f32.mrb[0].mxu0
        %v3391 = vadd.f32 %v3230, %v3390
        %v3392 = vpop.f32.mrb[0].mxu0
        %3393 = vmatprep.mubr.bf16.mxu0 %v1672
        %3394 = vmatmul.mubr.bf16.gmra.mrb[0].mxu0 %v1671
        %v3395 = vpop.f32.mrb[0].mxu0
        %v3396 = vadd.f32 %v3235, %v3395
        %v3397 = vpop.f32.mrb[0].mxu0
        %v3398 = vpop.f32.mrb[0].mxu0
        %v3399 = vadd.f32 %v3238, %v3398
        %v3400 = vpop.f32.mrb[0].mxu0
        %3401 = vmatprep.mubr.bf16.mxu0 %v1686
        %3402 = vmatmul.mubr.bf16.gmra.mrb[0].mxu0 %v1685
        %v3403 = vpop.f32.mrb[0].mxu0
        %v3404 = vadd.f32 %v3243, %v3403
        %v3405 = vpop.f32.mrb[0].mxu0
        %v3406 = vpop.f32.mrb[0].mxu0
        %v3407 = vadd.f32 %v3246, %v3406
        %v3408 = vpop.f32.mrb[0].mxu0
        %3409 = vmatprep.mubr.bf16.mxu0 %v1700
        %3410 = vmatmul.mubr.bf16.gmra.mrb[0].mxu0 %v1699
        %v3411 = vpop.f32.mrb[0].mxu0
        %v3412 = vadd.f32 %v3251, %v3411
        %v3413 = vpop.f32.mrb[0].mxu0
        %v3414 = vpop.f32.mrb[0].mxu0
        %v3415 = vadd.f32 %v3254, %v3414
        %v3416 = vpop.f32.mrb[0].mxu0
        %3417 = vmatprep.mubr.bf16.mxu0 %v1714
        %3418 = vmatmul.mubr.bf16.gmra.mrb[0].mxu0 %v1713
        %v3419 = vpop.f32.mrb[0].mxu0
        %v3420 = vadd.f32 %v3259, %v3419
        %v3421 = vpop.f32.mrb[0].mxu0
        %v3422 = vpop.f32.mrb[0].mxu0
        %v3423 = vadd.f32 %v3262, %v3422
        %v3424 = vpop.f32.mrb[0].mxu0
        %3425 = vmatprep.mubr.bf16.mxu0 %v1728
        %3426 = vmatmul.mubr.bf16.gmra.mrb[0].mxu0 %v1727
        %v3427 = vpop.f32.mrb[0].mxu0
        %v3428 = vadd.f32 %v3267, %v3427
        %v3429 = vpop.f32.mrb[0].mxu0
        %v3430 = vpop.f32.mrb[0].mxu0
        %v3431 = vadd.f32 %v3270, %v3430
        %v3432 = vpop.f32.mrb[0].mxu0
        %3433 = vdwg.mxu0
        %3434 = vmatprep.subr.bf16.mxu0 0
        %3435 = vmatpush1.bf16.msra.mxu0 %v2485
        %3436 = vmatprep.subr.bf16.mxu0 0
        %3437 = vmatpush1.bf16.msra.mxu0 %v2486
        %3438 = vmatprep.subr.bf16.mxu0 0
        %3439 = vmatpush1.bf16.msra.mxu0 %v2487
        %3440 = vmatprep.subr.bf16.mxu0 0
        %3441 = vmatpush1.bf16.msra.mxu0 %v2488
        %3442 = vmatprep.subr.bf16.mxu0 0
        %3443 = vmatpush1.bf16.msra.mxu0 %v2489
        %3444 = vmatprep.subr.bf16.mxu0 0
        %3445 = vmatpush1.bf16.msra.mxu0 %v2490
        %3446 = vmatprep.subr.bf16.mxu0 0
        %3447 = vmatpush1.bf16.msra.mxu0 %v2491
        %3448 = vmatprep.subr.bf16.mxu0 0
        %3449 = vmatpush1.bf16.msra.mxu0 %v2492
        %3450 = vmatprep.subr.bf16.mxu0 0
        %3451 = vmatpush1.bf16.msra.mxu0 %v2493
        %3452 = vmatprep.subr.bf16.mxu0 0
        %3453 = vmatpush1.bf16.msra.mxu0 %v2494
        %3454 = vmatprep.subr.bf16.mxu0 0
        %3455 = vmatpush1.bf16.msra.mxu0 %v2495
        %3456 = vmatprep.subr.bf16.mxu0 0
        %3457 = vmatpush1.bf16.msra.mxu0 %v2496
        %3458 = vmatprep.subr.bf16.mxu0 0
        %3459 = vmatpush1.bf16.msra.mxu0 %v2497
        %3460 = vmatprep.subr.bf16.mxu0 0
        %3461 = vmatpush1.bf16.msra.mxu0 %v2498
        %3462 = vmatprep.subr.bf16.mxu0 0
        %3463 = vmatpush1.bf16.msra.mxu0 %v2499
        %3464 = vmatprep.subr.bf16.mxu0 0
        %3465 = vmatpush1.bf16.msra.mxu0 %v2500
        %3466 = vmatprep.mubr.bf16.mxu0 %v1520
        %3467 = vmatmul.mubr.bf16.gmra.mrb[0].mxu0 %v1519
        %v3468 = vpop.f32.mrb[0].mxu0
        %v3469 = vadd.f32 %v3308, %v3468
        %v3470 = vpop.f32.mrb[0].mxu0
        %v3471 = vpop.f32.mrb[0].mxu0
        %v3472 = vadd.f32 %v3311, %v3471
        %v3473 = vpop.f32.mrb[0].mxu0
        %3474 = vmatprep.mubr.bf16.mxu0 %v1534
        %3475 = vmatmul.mubr.bf16.gmra.mrb[0].mxu0 %v1533
        %v3476 = vpop.f32.mrb[0].mxu0
        %v3477 = vadd.f32 %v3316, %v3476
        %v3478 = vpop.f32.mrb[0].mxu0
        %v3479 = vpop.f32.mrb[0].mxu0
        %v3480 = vadd.f32 %v3319, %v3479
        %v3481 = vpop.f32.mrb[0].mxu0
        %3482 = vmatprep.mubr.bf16.mxu0 %v1548
        %3483 = vmatmul.mubr.bf16.gmra.mrb[0].mxu0 %v1547
        %v3484 = vpop.f32.mrb[0].mxu0
        %v3485 = vadd.f32 %v3324, %v3484
        %v3486 = vpop.f32.mrb[0].mxu0
        %v3487 = vpop.f32.mrb[0].mxu0
        %v3488 = vadd.f32 %v3327, %v3487
        %v3489 = vpop.f32.mrb[0].mxu0
        %3490 = vmatprep.mubr.bf16.mxu0 %v1562
        %3491 = vmatmul.mubr.bf16.gmra.mrb[0].mxu0 %v1561
        %v3492 = vpop.f32.mrb[0].mxu0
        %v3493 = vadd.f32 %v3332, %v3492
        %v3494 = vpop.f32.mrb[0].mxu0
        %v3495 = vpop.f32.mrb[0].mxu0
        %v3496 = vadd.f32 %v3335, %v3495
        %v3497 = vpop.f32.mrb[0].mxu0
        %3498 = vmatprep.mubr.bf16.mxu0 %v1576
        %3499 = vmatmul.mubr.bf16.gmra.mrb[0].mxu0 %v1575
        %v3500 = vpop.f32.mrb[0].mxu0
        %v3501 = vadd.f32 %v3340, %v3500
        %v3502 = vpop.f32.mrb[0].mxu0
        %v3503 = vpop.f32.mrb[0].mxu0
        %v3504 = vadd.f32 %v3343, %v3503
        %v3505 = vpop.f32.mrb[0].mxu0
        %3506 = vmatprep.mubr.bf16.mxu0 %v1590
        %3507 = vmatmul.mubr.bf16.gmra.mrb[0].mxu0 %v1589
        %v3508 = vpop.f32.mrb[0].mxu0
        %v3509 = vadd.f32 %v3348, %v3508
        %v3510 = vpop.f32.mrb[0].mxu0
        %v3511 = vpop.f32.mrb[0].mxu0
        %v3512 = vadd.f32 %v3351, %v3511
        %v3513 = vpop.f32.mrb[0].mxu0
        %3514 = vmatprep.mubr.bf16.mxu0 %v1604
        %3515 = vmatmul.mubr.bf16.gmra.mrb[0].mxu0 %v1603
        %v3516 = vpop.f32.mrb[0].mxu0
        %v3517 = vadd.f32 %v3356, %v3516
        %v3518 = vpop.f32.mrb[0].mxu0
        %v3519 = vpop.f32.mrb[0].mxu0
        %v3520 = vadd.f32 %v3359, %v3519
        %v3521 = vpop.f32.mrb[0].mxu0
        %3522 = vmatprep.mubr.bf16.mxu0 %v1618
        %3523 = vmatmul.mubr.bf16.gmra.mrb[0].mxu0 %v1617
        %v3524 = vpop.f32.mrb[0].mxu0
        %v3525 = vadd.f32 %v3364, %v3524
        %v3526 = vpop.f32.mrb[0].mxu0
        %v3527 = vpop.f32.mrb[0].mxu0
        %v3528 = vadd.f32 %v3367, %v3527
        %v3529 = vpop.f32.mrb[0].mxu0
        %3530 = vmatprep.mubr.bf16.mxu0 %v1632
        %3531 = vmatmul.mubr.bf16.gmra.mrb[0].mxu0 %v1631
        %v3532 = vpop.f32.mrb[0].mxu0
        %v3533 = vadd.f32 %v3372, %v3532
        %v3534 = vpop.f32.mrb[0].mxu0
        %v3535 = vpop.f32.mrb[0].mxu0
        %v3536 = vadd.f32 %v3375, %v3535
        %v3537 = vpop.f32.mrb[0].mxu0
        %3538 = vmatprep.mubr.bf16.mxu0 %v1646
        %3539 = vmatmul.mubr.bf16.gmra.mrb[0].mxu0 %v1645
        %v3540 = vpop.f32.mrb[0].mxu0
        %v3541 = vadd.f32 %v3380, %v3540
        %v3542 = vpop.f32.mrb[0].mxu0
        %v3543 = vpop.f32.mrb[0].mxu0
        %v3544 = vadd.f32 %v3383, %v3543
        %v3545 = vpop.f32.mrb[0].mxu0
        %3546 = vmatprep.mubr.bf16.mxu0 %v1660
        %3547 = vmatmul.mubr.bf16.gmra.mrb[0].mxu0 %v1659
        %v3548 = vpop.f32.mrb[0].mxu0
        %v3549 = vadd.f32 %v3388, %v3548
        %v3550 = vpop.f32.mrb[0].mxu0
        %v3551 = vpop.f32.mrb[0].mxu0
        %v3552 = vadd.f32 %v3391, %v3551
        %v3553 = vpop.f32.mrb[0].mxu0
        %3554 = vmatprep.mubr.bf16.mxu0 %v1674
        %3555 = vmatmul.mubr.bf16.gmra.mrb[0].mxu0 %v1673
        %v3556 = vpop.f32.mrb[0].mxu0
        %v3557 = vadd.f32 %v3396, %v3556
        %v3558 = vpop.f32.mrb[0].mxu0
        %v3559 = vpop.f32.mrb[0].mxu0
        %v3560 = vadd.f32 %v3399, %v3559
        %v3561 = vpop.f32.mrb[0].mxu0
        %3562 = vmatprep.mubr.bf16.mxu0 %v1688
        %3563 = vmatmul.mubr.bf16.gmra.mrb[0].mxu0 %v1687
        %v3564 = vpop.f32.mrb[0].mxu0
        %v3565 = vadd.f32 %v3404, %v3564
        %v3566 = vpop.f32.mrb[0].mxu0
        %v3567 = vpop.f32.mrb[0].mxu0
        %v3568 = vadd.f32 %v3407, %v3567
        %v3569 = vpop.f32.mrb[0].mxu0
        %3570 = vmatprep.mubr.bf16.mxu0 %v1702
        %3571 = vmatmul.mubr.bf16.gmra.mrb[0].mxu0 %v1701
        %v3572 = vpop.f32.mrb[0].mxu0
        %v3573 = vadd.f32 %v3412, %v3572
        %v3574 = vpop.f32.mrb[0].mxu0
        %v3575 = vpop.f32.mrb[0].mxu0
        %v3576 = vadd.f32 %v3415, %v3575
        %v3577 = vpop.f32.mrb[0].mxu0
        %3578 = vmatprep.mubr.bf16.mxu0 %v1716
        %3579 = vmatmul.mubr.bf16.gmra.mrb[0].mxu0 %v1715
        %v3580 = vpop.f32.mrb[0].mxu0
        %v3581 = vadd.f32 %v3420, %v3580
        %v3582 = vpop.f32.mrb[0].mxu0
        %v3583 = vpop.f32.mrb[0].mxu0
        %v3584 = vadd.f32 %v3423, %v3583
        %v3585 = vpop.f32.mrb[0].mxu0
        %3586 = vmatprep.mubr.bf16.mxu0 %v1730
        %3587 = vmatmul.mubr.bf16.gmra.mrb[0].mxu0 %v1729
        %v3588 = vpop.f32.mrb[0].mxu0
        %v3589 = vadd.f32 %v3428, %v3588
        %v3590 = vpop.f32.mrb[0].mxu0
        %v3591 = vpop.f32.mrb[0].mxu0
        %v3592 = vadd.f32 %v3431, %v3591
        %v3593 = vpop.f32.mrb[0].mxu0
        %3594 = vdwg.mxu0
        %3595 = vmatprep.subr.bf16.mxu0 0
        %3596 = vmatpush1.bf16.msra.mxu0 %v2501
        %3597 = vmatprep.subr.bf16.mxu0 0
        %3598 = vmatpush1.bf16.msra.mxu0 %v2502
        %3599 = vmatprep.subr.bf16.mxu0 0
        %3600 = vmatpush1.bf16.msra.mxu0 %v2503
        %3601 = vmatprep.subr.bf16.mxu0 0
        %3602 = vmatpush1.bf16.msra.mxu0 %v2504
        %3603 = vmatprep.subr.bf16.mxu0 0
        %3604 = vmatpush1.bf16.msra.mxu0 %v2505
        %3605 = vmatprep.subr.bf16.mxu0 0
        %3606 = vmatpush1.bf16.msra.mxu0 %v2506
        %3607 = vmatprep.subr.bf16.mxu0 0
        %3608 = vmatpush1.bf16.msra.mxu0 %v2507
        %3609 = vmatprep.subr.bf16.mxu0 0
        %3610 = vmatpush1.bf16.msra.mxu0 %v2508
        %3611 = vmatprep.subr.bf16.mxu0 0
        %3612 = vmatpush1.bf16.msra.mxu0 %v2509
        %3613 = vmatprep.subr.bf16.mxu0 0
        %3614 = vmatpush1.bf16.msra.mxu0 %v2510
        %3615 = vmatprep.subr.bf16.mxu0 0
        %3616 = vmatpush1.bf16.msra.mxu0 %v2511
        %3617 = vmatprep.subr.bf16.mxu0 0
        %3618 = vmatpush1.bf16.msra.mxu0 %v2512
        %3619 = vmatprep.subr.bf16.mxu0 0
        %3620 = vmatpush1.bf16.msra.mxu0 %v2513
        %3621 = vmatprep.subr.bf16.mxu0 0
        %3622 = vmatpush1.bf16.msra.mxu0 %v2514
        %3623 = vmatprep.subr.bf16.mxu0 0
        %3624 = vmatpush1.bf16.msra.mxu0 %v2515
        %3625 = vmatprep.subr.bf16.mxu0 0
        %3626 = vmatpush1.bf16.msra.mxu0 %v2516
        %3627 = vmatprep.mubr.bf16.mxu0 %v1522
        %3628 = vmatmul.mubr.bf16.gmra.mrb[0].mxu0 %v1521
        %v3629 = vpop.f32.mrb[0].mxu0
        %v3630 = vadd.f32 %v3469, %v3629
        %v3631 = vpop.f32.mrb[0].mxu0
        %v3632 = vpop.f32.mrb[0].mxu0
        %v3633 = vadd.f32 %v3472, %v3632
        %v3634 = vpop.f32.mrb[0].mxu0
        %3635 = vmatprep.mubr.bf16.mxu0 %v1536
        %3636 = vmatmul.mubr.bf16.gmra.mrb[0].mxu0 %v1535
        %v3637 = vpop.f32.mrb[0].mxu0
        %v3638 = vadd.f32 %v3477, %v3637
        %v3639 = vpop.f32.mrb[0].mxu0
        %v3640 = vpop.f32.mrb[0].mxu0
        %v3641 = vadd.f32 %v3480, %v3640
        %v3642 = vpop.f32.mrb[0].mxu0
        %3643 = vmatprep.mubr.bf16.mxu0 %v1550
        %3644 = vmatmul.mubr.bf16.gmra.mrb[0].mxu0 %v1549
        %v3645 = vpop.f32.mrb[0].mxu0
        %v3646 = vadd.f32 %v3485, %v3645
        %v3647 = vpop.f32.mrb[0].mxu0
        %v3648 = vpop.f32.mrb[0].mxu0
        %v3649 = vadd.f32 %v3488, %v3648
        %v3650 = vpop.f32.mrb[0].mxu0
        %3651 = vmatprep.mubr.bf16.mxu0 %v1564
        %3652 = vmatmul.mubr.bf16.gmra.mrb[0].mxu0 %v1563
        %v3653 = vpop.f32.mrb[0].mxu0
        %v3654 = vadd.f32 %v3493, %v3653
        %v3655 = vpop.f32.mrb[0].mxu0
        %v3656 = vpop.f32.mrb[0].mxu0
        %v3657 = vadd.f32 %v3496, %v3656
        %v3658 = vpop.f32.mrb[0].mxu0
        %3659 = vmatprep.mubr.bf16.mxu0 %v1578
        %3660 = vmatmul.mubr.bf16.gmra.mrb[0].mxu0 %v1577
        %v3661 = vpop.f32.mrb[0].mxu0
        %v3662 = vadd.f32 %v3501, %v3661
        %v3663 = vpop.f32.mrb[0].mxu0
        %v3664 = vpop.f32.mrb[0].mxu0
        %v3665 = vadd.f32 %v3504, %v3664
        %v3666 = vpop.f32.mrb[0].mxu0
        %3667 = vmatprep.mubr.bf16.mxu0 %v1592
        %3668 = vmatmul.mubr.bf16.gmra.mrb[0].mxu0 %v1591
        %v3669 = vpop.f32.mrb[0].mxu0
        %v3670 = vadd.f32 %v3509, %v3669
        %v3671 = vpop.f32.mrb[0].mxu0
        %v3672 = vpop.f32.mrb[0].mxu0
        %v3673 = vadd.f32 %v3512, %v3672
        %v3674 = vpop.f32.mrb[0].mxu0
        %3675 = vmatprep.mubr.bf16.mxu0 %v1606
        %3676 = vmatmul.mubr.bf16.gmra.mrb[0].mxu0 %v1605
        %v3677 = vpop.f32.mrb[0].mxu0
        %v3678 = vadd.f32 %v3517, %v3677
        %v3679 = vpop.f32.mrb[0].mxu0
        %v3680 = vpop.f32.mrb[0].mxu0
        %v3681 = vadd.f32 %v3520, %v3680
        %v3682 = vpop.f32.mrb[0].mxu0
        %3683 = vmatprep.mubr.bf16.mxu0 %v1620
        %3684 = vmatmul.mubr.bf16.gmra.mrb[0].mxu0 %v1619
        %v3685 = vpop.f32.mrb[0].mxu0
        %v3686 = vadd.f32 %v3525, %v3685
        %v3687 = vpop.f32.mrb[0].mxu0
        %v3688 = vpop.f32.mrb[0].mxu0
        %v3689 = vadd.f32 %v3528, %v3688
        %v3690 = vpop.f32.mrb[0].mxu0
        %3691 = vmatprep.mubr.bf16.mxu0 %v1634
        %3692 = vmatmul.mubr.bf16.gmra.mrb[0].mxu0 %v1633
        %v3693 = vpop.f32.mrb[0].mxu0
        %v3694 = vadd.f32 %v3533, %v3693
        %v3695 = vpop.f32.mrb[0].mxu0
        %v3696 = vpop.f32.mrb[0].mxu0
        %v3697 = vadd.f32 %v3536, %v3696
        %v3698 = vpop.f32.mrb[0].mxu0
        %3699 = vmatprep.mubr.bf16.mxu0 %v1648
        %3700 = vmatmul.mubr.bf16.gmra.mrb[0].mxu0 %v1647
        %v3701 = vpop.f32.mrb[0].mxu0
        %v3702 = vadd.f32 %v3541, %v3701
        %v3703 = vpop.f32.mrb[0].mxu0
        %v3704 = vpop.f32.mrb[0].mxu0
        %v3705 = vadd.f32 %v3544, %v3704
        %v3706 = vpop.f32.mrb[0].mxu0
        %3707 = vmatprep.mubr.bf16.mxu0 %v1662
        %3708 = vmatmul.mubr.bf16.gmra.mrb[0].mxu0 %v1661
        %v3709 = vpop.f32.mrb[0].mxu0
        %v3710 = vadd.f32 %v3549, %v3709
        %v3711 = vpop.f32.mrb[0].mxu0
        %v3712 = vpop.f32.mrb[0].mxu0
        %v3713 = vadd.f32 %v3552, %v3712
        %v3714 = vpop.f32.mrb[0].mxu0
        %3715 = vmatprep.mubr.bf16.mxu0 %v1676
        %3716 = vmatmul.mubr.bf16.gmra.mrb[0].mxu0 %v1675
        %v3717 = vpop.f32.mrb[0].mxu0
        %v3718 = vadd.f32 %v3557, %v3717
        %v3719 = vpop.f32.mrb[0].mxu0
        %v3720 = vpop.f32.mrb[0].mxu0
        %v3721 = vadd.f32 %v3560, %v3720
        %v3722 = vpop.f32.mrb[0].mxu0
        %3723 = vmatprep.mubr.bf16.mxu0 %v1690
        %3724 = vmatmul.mubr.bf16.gmra.mrb[0].mxu0 %v1689
        %v3725 = vpop.f32.mrb[0].mxu0
        %v3726 = vadd.f32 %v3565, %v3725
        %v3727 = vpop.f32.mrb[0].mxu0
        %v3728 = vpop.f32.mrb[0].mxu0
        %v3729 = vadd.f32 %v3568, %v3728
        %v3730 = vpop.f32.mrb[0].mxu0
        %3731 = vmatprep.mubr.bf16.mxu0 %v1704
        %3732 = vmatmul.mubr.bf16.gmra.mrb[0].mxu0 %v1703
        %v3733 = vpop.f32.mrb[0].mxu0
        %v3734 = vadd.f32 %v3573, %v3733
        %v3735 = vpop.f32.mrb[0].mxu0
        %v3736 = vpop.f32.mrb[0].mxu0
        %v3737 = vadd.f32 %v3576, %v3736
        %v3738 = vpop.f32.mrb[0].mxu0
        %3739 = vmatprep.mubr.bf16.mxu0 %v1718
        %3740 = vmatmul.mubr.bf16.gmra.mrb[0].mxu0 %v1717
        %v3741 = vpop.f32.mrb[0].mxu0
        %v3742 = vadd.f32 %v3581, %v3741
        %v3743 = vpop.f32.mrb[0].mxu0
        %v3744 = vpop.f32.mrb[0].mxu0
        %v3745 = vadd.f32 %v3584, %v3744
        %v3746 = vpop.f32.mrb[0].mxu0
        %3747 = vmatprep.mubr.bf16.mxu0 %v1732
        %3748 = vmatmul.mubr.bf16.gmra.mrb[0].mxu0 %v1731
        %v3749 = vpop.f32.mrb[0].mxu0
        %v3750 = vadd.f32 %v3589, %v3749
        %v3751 = vpop.f32.mrb[0].mxu0
        %v3752 = vpop.f32.mrb[0].mxu0
        %v3753 = vadd.f32 %v3592, %v3752
        %v3754 = vpop.f32.mrb[0].mxu0
        %3755 = vdwg.mxu0
        %v3756 = vadd.f32 %v357, %v3630
        %v3757 = vadd.f32 %v358, %v3633
        %v3758 = vadd.f32 %v359, %v3638
        %v3759 = vadd.f32 %v360, %v3641
        %v3760 = vadd.f32 %v361, %v3646
        %v3761 = vadd.f32 %v362, %v3649
        %v3762 = vadd.f32 %v363, %v3654
        %v3763 = vadd.f32 %v364, %v3657
        %v3764 = vadd.f32 %v365, %v3662
        %v3765 = vadd.f32 %v366, %v3665
        %v3766 = vadd.f32 %v367, %v3670
        %v3767 = vadd.f32 %v368, %v3673
        %v3768 = vadd.f32 %v369, %v3678
        %v3769 = vadd.f32 %v370, %v3681
        %v3770 = vadd.f32 %v371, %v3686
        %v3771 = vadd.f32 %v372, %v3689
        %v3772 = vadd.f32 %v373, %v3694
        %v3773 = vadd.f32 %v374, %v3697
        %v3774 = vadd.f32 %v375, %v3702
        %v3775 = vadd.f32 %v376, %v3705
        %v3776 = vadd.f32 %v377, %v3710
        %v3777 = vadd.f32 %v378, %v3713
        %v3778 = vadd.f32 %v379, %v3718
        %v3779 = vadd.f32 %v380, %v3721
        %v3780 = vadd.f32 %v381, %v3726
        %v3781 = vadd.f32 %v382, %v3729
        %v3782 = vadd.f32 %v383, %v3734
        %v3783 = vadd.f32 %v384, %v3737
        %v3784 = vadd.f32 %v385, %v3742
        %v3785 = vadd.f32 %v386, %v3745
        %v3786 = vadd.f32 %v387, %v3750
        %v3787 = vadd.f32 %v388, %v3753
        %vm3788 = vcmask 523264
        %3789 = vst.msk [vmem:[#allocation2] sm:$0xff] %vm3788, %v3756
        %3790 = vst.msk [vmem:[#allocation2 + $0x8] sm:$0xff] %vm3788, %v3757
        %3791 = vst.msk [vmem:[#allocation2 + $0x10] sm:$0xff] %vm3788, %v3758
        %3792 = vst.msk [vmem:[#allocation2 + $0x18] sm:$0xff] %vm3788, %v3759
        %3793 = vst.msk [vmem:[#allocation2 + $0x20] sm:$0xff] %vm3788, %v3760
        %3794 = vst.msk [vmem:[#allocation2 + $0x28] sm:$0xff] %vm3788, %v3761
        %3795 = vst.msk [vmem:[#allocation2 + $0x30] sm:$0xff] %vm3788, %v3762
        %3796 = vst.msk [vmem:[#allocation2 + $0x38] sm:$0xff] %vm3788, %v3763
        %3797 = vst.msk [vmem:[#allocation2 + $0x40] sm:$0xff] %vm3788, %v3764
        %3798 = vst.msk [vmem:[#allocation2 + $0x48] sm:$0xff] %vm3788, %v3765
        %3799 = vst.msk [vmem:[#allocation2 + $0x50] sm:$0xff] %vm3788, %v3766
        %3800 = vst.msk [vmem:[#allocation2 + $0x58] sm:$0xff] %vm3788, %v3767
        %3801 = vst.msk [vmem:[#allocation2 + $0x60] sm:$0xff] %vm3788, %v3768
        %3802 = vst.msk [vmem:[#allocation2 + $0x68] sm:$0xff] %vm3788, %v3769
        %3803 = vst.msk [vmem:[#allocation2 + $0x70] sm:$0xff] %vm3788, %v3770
        %3804 = vst.msk [vmem:[#allocation2 + $0x78] sm:$0xff] %vm3788, %v3771
        %3805 = vst.msk [vmem:[#allocation2 + $0x80] sm:$0xff] %vm3788, %v3772
        %3806 = vst.msk [vmem:[#allocation2 + $0x88] sm:$0xff] %vm3788, %v3773
        %3807 = vst.msk [vmem:[#allocation2 + $0x90] sm:$0xff] %vm3788, %v3774
        %3808 = vst.msk [vmem:[#allocation2 + $0x98] sm:$0xff] %vm3788, %v3775
        %3809 = vst.msk [vmem:[#allocation2 + $0xa0] sm:$0xff] %vm3788, %v3776
        %3810 = vst.msk [vmem:[#allocation2 + $0xa8] sm:$0xff] %vm3788, %v3777
        %3811 = vst.msk [vmem:[#allocation2 + $0xb0] sm:$0xff] %vm3788, %v3778
        %3812 = vst.msk [vmem:[#allocation2 + $0xb8] sm:$0xff] %vm3788, %v3779
        %3813 = vst.msk [vmem:[#allocation2 + $0xc0] sm:$0xff] %vm3788, %v3780
        %3814 = vst.msk [vmem:[#allocation2 + $0xc8] sm:$0xff] %vm3788, %v3781
        %3815 = vst.msk [vmem:[#allocation2 + $0xd0] sm:$0xff] %vm3788, %v3782
        %3816 = vst.msk [vmem:[#allocation2 + $0xd8] sm:$0xff] %vm3788, %v3783
        %3817 = vst.msk [vmem:[#allocation2 + $0xe0] sm:$0xff] %vm3788, %v3784
        %3818 = vst.msk [vmem:[#allocation2 + $0xe8] sm:$0xff] %vm3788, %v3785
        %3819 = vst.msk [vmem:[#allocation2 + $0xf0] sm:$0xff] %vm3788, %v3786
        %3820 = vst.msk [vmem:[#allocation2 + $0xf8] sm:$0xff] %vm3788, %v3787
        // Predicated region
        $region41: #{basic_block_forward.3} parent=35 // pred_check
          %p3821 = pneg %p320
        $region42: #{basic_block_forward.3} parent=35 // pred_check_branch
          %3823 = sbr.rel (%p3821) target = $region44
        $region43: #{basic_block_forward.3} parent=35 // pred_region
          %v3824 = vld [vmem:[#allocation2] sm:$0xff]
          %v3825 = vld [vmem:[#allocation2 + $0x8] sm:$0xff]
          %v3826 = vld [vmem:[#allocation2 + $0x10] sm:$0xff]
          %v3827 = vld [vmem:[#allocation2 + $0x18] sm:$0xff]
          %v3828 = vld [vmem:[#allocation2 + $0x20] sm:$0xff]
          %v3829 = vld [vmem:[#allocation2 + $0x28] sm:$0xff]
          %v3830 = vld [vmem:[#allocation2 + $0x30] sm:$0xff]
          %v3831 = vld [vmem:[#allocation2 + $0x38] sm:$0xff]
          %v3832 = vld [vmem:[#allocation2 + $0x40] sm:$0xff]
          %v3833 = vld [vmem:[#allocation2 + $0x48] sm:$0xff]
          %v3834 = vld [vmem:[#allocation2 + $0x50] sm:$0xff]
          %v3835 = vld [vmem:[#allocation2 + $0x58] sm:$0xff]
          %v3836 = vld [vmem:[#allocation2 + $0x60] sm:$0xff]
          %v3837 = vld [vmem:[#allocation2 + $0x68] sm:$0xff]
          %v3838 = vld [vmem:[#allocation2 + $0x70] sm:$0xff]
          %v3839 = vld [vmem:[#allocation2 + $0x78] sm:$0xff]
          %v3840 = vld [vmem:[#allocation2 + $0x80] sm:$0xff]
          %v3841 = vld [vmem:[#allocation2 + $0x88] sm:$0xff]
          %v3842 = vld [vmem:[#allocation2 + $0x90] sm:$0xff]
          %v3843 = vld [vmem:[#allocation2 + $0x98] sm:$0xff]
          %v3844 = vld [vmem:[#allocation2 + $0xa0] sm:$0xff]
          %v3845 = vld [vmem:[#allocation2 + $0xa8] sm:$0xff]
          %v3846 = vld [vmem:[#allocation2 + $0xb0] sm:$0xff]
          %v3847 = vld [vmem:[#allocation2 + $0xb8] sm:$0xff]
          %v3848 = vld [vmem:[#allocation2 + $0xc0] sm:$0xff]
          %v3849 = vld [vmem:[#allocation2 + $0xc8] sm:$0xff]
          %v3850 = vld [vmem:[#allocation2 + $0xd0] sm:$0xff]
          %v3851 = vld [vmem:[#allocation2 + $0xd8] sm:$0xff]
          %v3852 = vld [vmem:[#allocation2 + $0xe0] sm:$0xff]
          %v3853 = vld [vmem:[#allocation2 + $0xe8] sm:$0xff]
          %v3854 = vld [vmem:[#allocation2 + $0xf0] sm:$0xff]
          %v3855 = vld [vmem:[#allocation2 + $0xf8] sm:$0xff]
          %v3856 = vld [vmem:[%s308] sm:$0x1]
          %v3858 = vlaneseq
          %v3859 = vshrl.u32 %v3858, 7
          %v3860 = vsub.s32 0, %v3859
          %v3861 = vrot.slane %v3856, %v3860
          %v3863 = vadd.f32 %v3824, %v3861
          %v3864 = vadd.f32 %v3825, %v3861
          %v3865 = vadd.f32 %v3826, %v3861
          %v3866 = vadd.f32 %v3827, %v3861
          %v3867 = vadd.f32 %v3828, %v3861
          %v3868 = vadd.f32 %v3829, %v3861
          %v3869 = vadd.f32 %v3830, %v3861
          %v3870 = vadd.f32 %v3831, %v3861
          %v3871 = vadd.f32 %v3832, %v3861
          %v3872 = vadd.f32 %v3833, %v3861
          %v3873 = vadd.f32 %v3834, %v3861
          %v3874 = vadd.f32 %v3835, %v3861
          %v3875 = vadd.f32 %v3836, %v3861
          %v3876 = vadd.f32 %v3837, %v3861
          %v3877 = vadd.f32 %v3838, %v3861
          %v3878 = vadd.f32 %v3839, %v3861
          %v3879 = vadd.f32 %v3840, %v3861
          %v3880 = vadd.f32 %v3841, %v3861
          %v3881 = vadd.f32 %v3842, %v3861
          %v3882 = vadd.f32 %v3843, %v3861
          %v3883 = vadd.f32 %v3844, %v3861
          %v3884 = vadd.f32 %v3845, %v3861
          %v3885 = vadd.f32 %v3846, %v3861
          %v3886 = vadd.f32 %v3847, %v3861
          %v3887 = vadd.f32 %v3848, %v3861
          %v3888 = vadd.f32 %v3849, %v3861
          %v3889 = vadd.f32 %v3850, %v3861
          %v3890 = vadd.f32 %v3851, %v3861
          %v3891 = vadd.f32 %v3852, %v3861
          %v3892 = vadd.f32 %v3853, %v3861
          %v3893 = vadd.f32 %v3854, %v3861
          %v3894 = vadd.f32 %v3855, %v3861
          %v3895 = vld [vmem:[%s316] sm:$0xff]
          %v3896 = vld [vmem:[%s316 + $0x8] sm:$0xff]
          %v3897 = vld [vmem:[%s316 + $0x10] sm:$0xff]
          %v3898 = vld [vmem:[%s316 + $0x18] sm:$0xff]
          %v3899 = vld [vmem:[%s316 + $0x20] sm:$0xff]
          %v3900 = vld [vmem:[%s316 + $0x28] sm:$0xff]
          %v3901 = vld [vmem:[%s316 + $0x30] sm:$0xff]
          %v3902 = vld [vmem:[%s316 + $0x38] sm:$0xff]
          %v3903 = vld [vmem:[%s316 + $0x40] sm:$0xff]
          %v3904 = vld [vmem:[%s316 + $0x48] sm:$0xff]
          %v3905 = vld [vmem:[%s316 + $0x50] sm:$0xff]
          %v3906 = vld [vmem:[%s316 + $0x58] sm:$0xff]
          %v3907 = vld [vmem:[%s316 + $0x60] sm:$0xff]
          %v3908 = vld [vmem:[%s316 + $0x68] sm:$0xff]
          %v3909 = vld [vmem:[%s316 + $0x70] sm:$0xff]
          %v3910 = vld [vmem:[%s316 + $0x78] sm:$0xff]
          %v3911 = vld [vmem:[%s316 + $0x80] sm:$0xff]
          %v3912 = vld [vmem:[%s316 + $0x88] sm:$0xff]
          %v3913 = vld [vmem:[%s316 + $0x90] sm:$0xff]
          %v3914 = vld [vmem:[%s316 + $0x98] sm:$0xff]
          %v3915 = vld [vmem:[%s316 + $0xa0] sm:$0xff]
          %v3916 = vld [vmem:[%s316 + $0xa8] sm:$0xff]
          %v3917 = vld [vmem:[%s316 + $0xb0] sm:$0xff]
          %v3918 = vld [vmem:[%s316 + $0xb8] sm:$0xff]
          %v3919 = vld [vmem:[%s316 + $0xc0] sm:$0xff]
          %v3920 = vld [vmem:[%s316 + $0xc8] sm:$0xff]
          %v3921 = vld [vmem:[%s316 + $0xd0] sm:$0xff]
          %v3922 = vld [vmem:[%s316 + $0xd8] sm:$0xff]
          %v3923 = vld [vmem:[%s316 + $0xe0] sm:$0xff]
          %v3924 = vld [vmem:[%s316 + $0xe8] sm:$0xff]
          %v3925 = vld [vmem:[%s316 + $0xf0] sm:$0xff]
          %v3926 = vld [vmem:[%s316 + $0xf8] sm:$0xff]
          %v3927 = vadd.f32 %v3863, %v3895
          %v3928 = vadd.f32 %v3864, %v3896
          %v3929 = vadd.f32 %v3865, %v3897
          %v3930 = vadd.f32 %v3866, %v3898
          %v3931 = vadd.f32 %v3867, %v3899
          %v3932 = vadd.f32 %v3868, %v3900
          %v3933 = vadd.f32 %v3869, %v3901
          %v3934 = vadd.f32 %v3870, %v3902
          %v3935 = vadd.f32 %v3871, %v3903
          %v3936 = vadd.f32 %v3872, %v3904
          %v3937 = vadd.f32 %v3873, %v3905
          %v3938 = vadd.f32 %v3874, %v3906
          %v3939 = vadd.f32 %v3875, %v3907
          %v3940 = vadd.f32 %v3876, %v3908
          %v3941 = vadd.f32 %v3877, %v3909
          %v3942 = vadd.f32 %v3878, %v3910
          %v3943 = vadd.f32 %v3879, %v3911
          %v3944 = vadd.f32 %v3880, %v3912
          %v3945 = vadd.f32 %v3881, %v3913
          %v3946 = vadd.f32 %v3882, %v3914
          %v3947 = vadd.f32 %v3883, %v3915
          %v3948 = vadd.f32 %v3884, %v3916
          %v3949 = vadd.f32 %v3885, %v3917
          %v3950 = vadd.f32 %v3886, %v3918
          %v3951 = vadd.f32 %v3887, %v3919
          %v3952 = vadd.f32 %v3888, %v3920
          %v3953 = vadd.f32 %v3889, %v3921
          %v3954 = vadd.f32 %v3890, %v3922
          %v3955 = vadd.f32 %v3891, %v3923
          %v3956 = vadd.f32 %v3892, %v3924
          %v3957 = vadd.f32 %v3893, %v3925
          %v3958 = vadd.f32 %v3894, %v3926
          %v3959 = vmax.f32 %v3927, 0.0
          %v3960 = vmax.f32 %v3928, 0.0
          %v3961 = vmax.f32 %v3929, 0.0
          %v3962 = vmax.f32 %v3930, 0.0
          %v3963 = vmax.f32 %v3931, 0.0
          %v3964 = vmax.f32 %v3932, 0.0
          %v3965 = vmax.f32 %v3933, 0.0
          %v3966 = vmax.f32 %v3934, 0.0
          %v3967 = vmax.f32 %v3935, 0.0
          %v3968 = vmax.f32 %v3936, 0.0
          %v3969 = vmax.f32 %v3937, 0.0
          %v3970 = vmax.f32 %v3938, 0.0
          %v3971 = vmax.f32 %v3939, 0.0
          %v3972 = vmax.f32 %v3940, 0.0
          %v3973 = vmax.f32 %v3941, 0.0
          %v3974 = vmax.f32 %v3942, 0.0
          %v3975 = vmax.f32 %v3943, 0.0
          %v3976 = vmax.f32 %v3944, 0.0
          %v3977 = vmax.f32 %v3945, 0.0
          %v3978 = vmax.f32 %v3946, 0.0
          %v3979 = vmax.f32 %v3947, 0.0
          %v3980 = vmax.f32 %v3948, 0.0
          %v3981 = vmax.f32 %v3949, 0.0
          %v3982 = vmax.f32 %v3950, 0.0
          %v3983 = vmax.f32 %v3951, 0.0
          %v3984 = vmax.f32 %v3952, 0.0
          %v3985 = vmax.f32 %v3953, 0.0
          %v3986 = vmax.f32 %v3954, 0.0
          %v3987 = vmax.f32 %v3955, 0.0
          %v3988 = vmax.f32 %v3956, 0.0
          %v3989 = vmax.f32 %v3957, 0.0
          %v3990 = vmax.f32 %v3958, 0.0
          %3991 = vst.msk [vmem:[%s284] sm:$0xff] %vm3788, %v3959
          %3992 = vst.msk [vmem:[%s284 + $0x8] sm:$0xff] %vm3788, %v3960
          %3993 = vst.msk [vmem:[%s284 + $0x10] sm:$0xff] %vm3788, %v3961
          %3994 = vst.msk [vmem:[%s284 + $0x18] sm:$0xff] %vm3788, %v3962
          %3995 = vst.msk [vmem:[%s284 + $0x20] sm:$0xff] %vm3788, %v3963
          %3996 = vst.msk [vmem:[%s284 + $0x28] sm:$0xff] %vm3788, %v3964
          %3997 = vst.msk [vmem:[%s284 + $0x30] sm:$0xff] %vm3788, %v3965
          %3998 = vst.msk [vmem:[%s284 + $0x38] sm:$0xff] %vm3788, %v3966
          %3999 = vst.msk [vmem:[%s284 + $0x40] sm:$0xff] %vm3788, %v3967
          %4000 = vst.msk [vmem:[%s284 + $0x48] sm:$0xff] %vm3788, %v3968
          %4001 = vst.msk [vmem:[%s284 + $0x50] sm:$0xff] %vm3788, %v3969
          %4002 = vst.msk [vmem:[%s284 + $0x58] sm:$0xff] %vm3788, %v3970
          %4003 = vst.msk [vmem:[%s284 + $0x60] sm:$0xff] %vm3788, %v3971
          %4004 = vst.msk [vmem:[%s284 + $0x68] sm:$0xff] %vm3788, %v3972
          %4005 = vst.msk [vmem:[%s284 + $0x70] sm:$0xff] %vm3788, %v3973
          %4006 = vst.msk [vmem:[%s284 + $0x78] sm:$0xff] %vm3788, %v3974
          %4007 = vst.msk [vmem:[%s284 + $0x80] sm:$0xff] %vm3788, %v3975
          %4008 = vst.msk [vmem:[%s284 + $0x88] sm:$0xff] %vm3788, %v3976
          %4009 = vst.msk [vmem:[%s284 + $0x90] sm:$0xff] %vm3788, %v3977
          %4010 = vst.msk [vmem:[%s284 + $0x98] sm:$0xff] %vm3788, %v3978
          %4011 = vst.msk [vmem:[%s284 + $0xa0] sm:$0xff] %vm3788, %v3979
          %4012 = vst.msk [vmem:[%s284 + $0xa8] sm:$0xff] %vm3788, %v3980
          %4013 = vst.msk [vmem:[%s284 + $0xb0] sm:$0xff] %vm3788, %v3981
          %4014 = vst.msk [vmem:[%s284 + $0xb8] sm:$0xff] %vm3788, %v3982
          %4015 = vst.msk [vmem:[%s284 + $0xc0] sm:$0xff] %vm3788, %v3983
          %4016 = vst.msk [vmem:[%s284 + $0xc8] sm:$0xff] %vm3788, %v3984
          %4017 = vst.msk [vmem:[%s284 + $0xd0] sm:$0xff] %vm3788, %v3985
          %4018 = vst.msk [vmem:[%s284 + $0xd8] sm:$0xff] %vm3788, %v3986
          %4019 = vst.msk [vmem:[%s284 + $0xe0] sm:$0xff] %vm3788, %v3987
          %4020 = vst.msk [vmem:[%s284 + $0xe8] sm:$0xff] %vm3788, %v3988
          %4021 = vst.msk [vmem:[%s284 + $0xf0] sm:$0xff] %vm3788, %v3989
          %4022 = vst.msk [vmem:[%s284 + $0xf8] sm:$0xff] %vm3788, %v3990
        $region44: #{basic_block_forward.3} parent=35 // pred_fallthru
          _
        %s4023 = sand.u32 %s157, 1
        %s4024 = scalar_lea.sflag [#allocation4], %s4023
        %s4025 = sand.u32 %s157, 1
        %s4026 = smul.addr %s4025, 256
        %s4027 = scalar_lea.vmem [#allocation3], %s4026
        // Predicated region
        $region45: #{basic_block_forward.3} parent=35 // pred_check
          %p4028 = pneg %p167
        $region46: #{basic_block_forward.3} parent=35 // pred_check_branch
          %4030 = sbr.rel (%p4028) target = $region48
        $region47: #{basic_block_forward.3} parent=35 // pred_region
          %s4031 = smul.u32 32, %s23
          %s4033 = ssub.s32 4096, 4096
          %4034 = vsyncadd %s4024, %s4033
          %s4035 = sadd.s32 %s24, %s4031
          %s4036 = smul.addr %s4035, 128
          %s4037 = scalar_lea.hbm %s4, %s4036
          %s4038 = sshll.u32 %s4027, 4
          %s4039 = int_to_ptr.vmem [resolvable:$true] %s4038
          %4044 = dma.vmem_to_hbm [thread:$0]  %s4039, 4096, %s4037, %s4024, 128, 128, 8
        $region48: #{basic_block_forward.3} parent=35 // pred_fallthru
          _
      $region36: #{basic_block_forward.3} parent=5 // pred_fallthru
        _
      %p4045 = scmp.le.s32.totalorder 2, %s13
      // Predicated region
      $region49: #{basic_block_forward.3} parent=5 // pred_check
        %p4046 = pneg %p4045
      $region50: #{basic_block_forward.3} parent=5 // pred_check_branch
        %4048 = sbr.rel (%p4046) target = $region52
      $region51: #{basic_block_forward.3} parent=5 // pred_region
        %s4049 = ssub.s32 %s13, 2
        // Predicated region
        $region53: #{basic_block_forward.3} parent=51 // pred_check
          %p4050 = pneg %p173
        $region54: #{basic_block_forward.3} parent=51 // pred_check_branch
          %4052 = sbr.rel (%p4050) target = $region56
        $region55: #{basic_block_forward.3} parent=51 // pred_region
          %s4053 = sand.u32 %s158, 1
          %s4054 = scalar_lea.sflag [#allocation4], %s4053
          %s4055 = sand.u32 %s158, 1
          %s4056 = smul.addr %s4055, 256
          %s4057 = scalar_lea.vmem [#allocation3], %s4056
          %4058 = dma.done %s4054, 4096
        $region56: #{basic_block_forward.3} parent=51 // pred_fallthru
          _
      $region52: #{basic_block_forward.3} parent=5 // pred_fallthru
        _
    $region6: #{basic_block_forward.3} parent=1 // loop_footer
      %s17 = sadd.s32 1, %s13
    $region7: #{basic_block_forward.3} parent=1 // loop_footer_branch
      %12 = sbr.rel target = $region3
    $region8: #{basic_block_forward.3} parent=1 // loop_exit
      _
    %4059 = vsyncpa [#allocation4], 1
    %s4060 = scalar_lea.sflag [#allocation4], 1
    %4061 = vsyncpa %s4060, 1

</llo_original>
